<compile_context>
chip_gen: v5e
topology: v5e:2x2
jax: 0.10.0
libtpu: 0.0.40
codegen_flags: <defaults>
</compile_context>

<pallas_src>
import numpy as np
import jax
import jax.numpy as jnp
from jax import lax
from jax.experimental import pallas as pl
from jax.experimental.pallas import tpu as pltpu

F32 = jnp.float32
BF16 = jnp.bfloat16
NEG_SLOPE = 0.01          # nn.LeakyReLU default negative_slope

# Configuration (consistent with the module's constraints: rep_dim % 16 == 0,
# `linear` == C_enc_last * 4 * 4, decoder starts from a 4x4 map).
B = 2
IN_CH = 3
H0 = W0 = 16
ENC_CH = (8, 16)
DEC_CH = (8, 4)
K = 3
PAD = 1
REP = 32
DEC_IN_CH = REP // 16          # 2
LINEAR = ENC_CH[-1] * 4 * 4    # 256
HW_LIN = 16                    # 4*4 bottleneck spatial positions


# --------------------------------------------------------------------------
# in-kernel helpers (traced into the single fused kernel)
# --------------------------------------------------------------------------
def _leaky(x):
    return jnp.where(x >= 0.0, x, NEG_SLOPE * x)


def _shift_cols(x, s):
    """y[:, m] = x[:, (m + s) % M] via two static lane slices + concat."""
    m = x.shape[1]
    s = s % m
    if s == 0:
        return x
    return jnp.concatenate([x[:, s:], x[:, :s]], axis=1)


def _conv_same(x, w_ref, msk_ref, w_dim, k=K, pad=PAD):
    """k x k, stride-1, zero-padded 'same' conv on a [Cin, M] activation.

    x columns are ordered (b, h, w); w_ref is [k*k, Cout, Cin] per-tap weights;
    msk_ref is [k*k, M] with the {0,1} boundary-validity mask of each tap.
    Implemented as k*k accumulated MXU matmuls over shifted+masked copies of x.
    """
    acc = None
    t = 0
    for dh in range(k):
        for dw in range(k):
            oh, ow = dh - pad, dw - pad
            xs = _shift_cols(x, oh * w_dim + ow)
            if oh != 0 or ow != 0:
                xs = xs * msk_ref[t:t + 1, :]
            y = jnp.dot(w_ref[t], xs, preferred_element_type=F32)
            acc = y if acc is None else acc + y
            t += 1
    return acc


def _bn_act(y, g_ref, b_ref, eps):
    """Training-mode BatchNorm2d (biased batch stats over B*H*W) + LeakyReLU.

    Folded to per-channel (scale, shift): only 2 full-width VPU ops touch [C, M].
    """
    inv_m = 1.0 / y.shape[1]
    mean = jnp.sum(y, axis=1, keepdims=True) * inv_m
    ex2 = jnp.sum(y * y, axis=1, keepdims=True) * inv_m
    var = jnp.maximum(ex2 - mean * mean, 0.0)            # one-pass variance
    scale = lax.rsqrt(var + eps) * g_ref[...]            # [C, 1]
    shift = b_ref[...] - mean * scale                    # [C, 1]
    return _leaky(y * scale + shift)


def _maxpool2x2(x, sel_ref, w_dim):
    """2x2 / stride-2 max-pool: shifted max + constant 0/1 column-selection matmul."""
    rm = jnp.maximum(x, _shift_cols(x, 1))
    pf = jnp.maximum(rm, _shift_cols(rm, w_dim))
    return jnp.dot(pf, sel_ref[...].astype(F32), preferred_element_type=F32)


def _upsample2x(x, up_ref):
    """Nearest-neighbour x2 upsample as a constant 0/1 column-duplication matmul."""
    return jnp.dot(x, up_ref[...].astype(F32), preferred_element_type=F32)


# --------------------------------------------------------------------------
# the single fused kernel
# --------------------------------------------------------------------------
def btae_kernel(x_ref,
                we0_ref, ge0_ref, be0_ref,
                we1_ref, ge1_ref, be1_ref,
                wl_ref, bl_ref,
                wd0_ref, gd0_ref, bd0_ref,
                wd1_ref, gd1_ref, bd1_ref,
                wo_ref,
                msk16_ref, msk8_ref, msk4_ref,
                sp0_ref, sp1_ref, up0_ref, up1_ref,
                rb_ref, dm_ref,
                out_ref):
    # ------------------------------- encoder -------------------------------
    x = x_ref[...]                                          # [3, 512]  cols (b, h, w)
    y = _conv_same(x, we0_ref, msk16_ref, W0)               # [8, 512]
    y = _bn_act(y, ge0_ref, be0_ref, 1e-4)                  # BN(eps=1e-4) + LeakyReLU
    x = _maxpool2x2(y, sp0_ref, W0)                         # [8, 128]  cols (b, h, w)

    y = _conv_same(x, we1_ref, msk8_ref, W0 // 2)           # [16, 128]
    y = _bn_act(y, ge1_ref, be1_ref, 1e-4)
    a = _maxpool2x2(y, sp1_ref, W0 // 2)                    # [16, 32]  cols (p, b)

    # -------------------- flatten (NCHW order) + Linear --------------------
    # zz[o, b] = sum_{p, c} WLprep[p, o, c] * a[c, p*B + b]   (NCHW flatten folded
    # into the pre-packed linear weight).  Bottleneck columns are (p, b)-ordered so
    # each position is one contiguous 2-column slice (no concat).
    zz = jnp.zeros((REP, B), F32)
    for p in range(HW_LIN):
        a_p = a[:, p * B:(p + 1) * B]                               # [16, B]
        zz = zz + jnp.dot(wl_ref[p], a_p, preferred_element_type=F32)   # [32, B]
    # torch: z = encoder(x); z = z.view(B, rep//16, 4, 4); z = LeakyReLU(z)
    # -> the activation acts on the LINEAR OUTPUT (the view is value-preserving).
    zz = _leaky(zz + bl_ref[...])                           # [32, B]

    # ------------- view(B, rep//16, 4, 4): de-flatten to [2, B*16] ----------
    zrep = jnp.dot(zz, rb_ref[...], preferred_element_type=F32)   # [32, 32]
    rows = [jnp.sum(zrep * dm_ref[c], axis=0, keepdims=True)
            for c in range(DEC_IN_CH)]
    xd = jnp.concatenate(rows, axis=0)                      # [2, 32]  cols (b, h, w)

    # ------------------------------- decoder -------------------------------
    # ConvTranspose2d(stride=1, pad=1) == Conv2d(pad=k-1-1=1) with flipped weights.
    y = _conv_same(xd, wd0_ref, msk4_ref, 4)                # [8, 32]
    y = _bn_act(y, gd0_ref, bd0_ref, 1e-5)                  # BN default eps
    y = _upsample2x(y, up0_ref)                             # nearest x2 -> [8, 128]

    y = _conv_same(y, wd1_ref, msk8_ref, 8)                 # [4, 128]
    y = _bn_act(y, gd1_ref, bd1_ref, 1e-5)
    y = _upsample2x(y, up1_ref)                             # nearest x2 -> [4, 512]

    y = _conv_same(y, wo_ref, msk16_ref, W0)                # output conv -> [3, 512]
    out_ref[...] = _leaky(y)                                # output activation


# --------------------------------------------------------------------------
# parameter / constant preparation (wrapper-side layout plumbing, tiny, one-off)
# --------------------------------------------------------------------------
def _conv_w_taps(w_oihw):
    """torch Conv2d weight [Cout, Cin, kh, kw] -> per-tap [kh*kw, Cout, Cin]."""
    cout, cin, kh, kw = w_oihw.shape
    return jnp.transpose(w_oihw, (2, 3, 0, 1)).reshape(kh * kw, cout, cin)


def _convT_w_taps(w_iohw):
    """ConvTranspose2d (stride=1) weight [Cin, Cout, kh, kw] -> equivalent Conv2d
    per-tap weights (spatial flip + channel swap)."""
    w_conv = jnp.transpose(w_iohw[:, :, ::-1, ::-1], (1, 0, 2, 3))
    return _conv_w_taps(w_conv)


def _linear_w_prep(w_torch):
    """Linear weight [rep, C*4*4] (torch NCHW-flatten order) -> [4*4, rep, C]."""
    return jnp.transpose(w_torch.reshape(REP, ENC_CH[-1], HW_LIN), (2, 0, 1))


def _conv_masks(bsz, h, w, k=K, pad=PAD):
    """{0,1} per-tap validity masks for a 'same' conv on (b, h, w)-ordered columns."""
    m = np.arange(bsz * h * w)
    p = m % (h * w)
    hh, ww = p // w, p % w
    out = np.zeros((k * k, bsz * h * w), np.float32)
    t = 0
    for dh in range(k):
        for dw in range(k):
            oh, ow = dh - pad, dw - pad
            out[t] = ((hh + oh >= 0) & (hh + oh < h) &
                      (ww + ow >= 0) & (ww + ow < w)).astype(np.float32)
            t += 1
    return out


def _pool_select(bsz, h, w):
    """0/1 matrix S [b*h*w, b*(h//2)*(w//2)], output columns ordered (b, ho, wo)."""
    ho, wo = h // 2, w // 2
    mo = np.arange(bsz * ho * wo)
    bb, rem = mo // (ho * wo), mo % (ho * wo)
    src = bb * h * w + (rem // wo) * 2 * w + (rem % wo) * 2
    return (np.arange(bsz * h * w)[:, None] == src[None, :]).astype(np.float32)


def _pool_select_pb(bsz, h, w):
    """Same 2x2 pooling selector, but output columns ordered (position, batch)."""
    ho, wo = h // 2, w // 2
    mo = np.arange(bsz * ho * wo)
    p, bb = mo // bsz, mo % bsz
    src = bb * h * w + (p // wo) * 2 * w + (p % wo) * 2
    return (np.arange(bsz * h * w)[:, None] == src[None, :]).astype(np.float32)


def _upsample_select(bsz, h, w):
    """0/1 matrix U [b*h*w, b*2h*2w] for nearest-neighbour x2: out = x @ U."""
    ho, wo = 2 * h, 2 * w
    mo = np.arange(bsz * ho * wo)
    bb, rem = mo // (ho * wo), mo % (ho * wo)
    src = bb * h * w + (rem // wo // 2) * w + (rem % wo) // 2
    return (np.arange(bsz * h * w)[:, None] == src[None, :]).astype(np.float32)


def _deflatten_consts():
    """Constants mapping the [rep, B] linear output to the decoder's [rep//16, B*16]
    input (torch .view(B, rep//16, 4, 4) with columns ordered (b, h, w))."""
    m = np.arange(B * HW_LIN)
    rbt = (m[None, :] // HW_LIN == np.arange(B)[:, None]).astype(np.float32)  # [B, 32]
    dm = np.zeros((DEC_IN_CH, REP, B * HW_LIN), np.float32)
    for c in range(DEC_IN_CH):
        dm[c, c * HW_LIN + (m % HW_LIN), m] = 1.0
    return rbt, dm


MSK16 = _conv_masks(B, 16, 16)      # shared by encoder conv0 and output conv
MSK8 = _conv_masks(B, 8, 8)         # shared by encoder conv1 and decoder conv1
MSK4 = _conv_masks(B, 4, 4)         # decoder conv0
SP0 = _pool_select(B, 16, 16)       # [512, 128], output cols (b, h, w)
SP1P = _pool_select_pb(B, 8, 8)     # [128, 32],  output cols (p, b)
UP0 = _upsample_select(B, 4, 4)     # [32, 128]
UP1 = _upsample_select(B, 8, 8)     # [128, 512]
RBT, DM = _deflatten_consts()


# --------------------------------------------------------------------------
# forward wrapper
# --------------------------------------------------------------------------
def bt_autoencoder_forward(params, x_nchw):
    b, c, h, w = x_nchw.shape
    # layout plumbing only (6 KiB): NCHW -> lane-dense [C, B*H*W], cols = (b, h, w)
    x_cm = jnp.transpose(x_nchw.astype(F32), (1, 0, 2, 3)).reshape(c, b * h * w)

    operands = (
        x_cm,
        _conv_w_taps(params["enc_conv0_w"]),
        params["enc_bn0_g"].reshape(-1, 1), params["enc_bn0_b"].reshape(-1, 1),
        _conv_w_taps(params["enc_conv1_w"]),
        params["enc_bn1_g"].reshape(-1, 1), params["enc_bn1_b"].reshape(-1, 1),
        _linear_w_prep(params["lin_w"]), params["lin_b"].reshape(-1, 1),
        _convT_w_taps(params["dec_convt0_w"]),
        params["dec_bn0_g"].reshape(-1, 1), params["dec_bn0_b"].reshape(-1, 1),
        _convT_w_taps(params["dec_convt1_w"]),
        params["dec_bn1_g"].reshape(-1, 1), params["dec_bn1_b"].reshape(-1, 1),
        _conv_w_taps(params["out_conv_w"]),
        jnp.asarray(MSK16), jnp.asarray(MSK8), jnp.asarray(MSK4),
        # 0/1 selection matrices shipped as bf16 (exact for 0/1), cast in-kernel:
        jnp.asarray(SP0, dtype=BF16), jnp.asarray(SP1P, dtype=BF16),
        jnp.asarray(UP0, dtype=BF16), jnp.asarray(UP1, dtype=BF16),
        jnp.asarray(RBT), jnp.asarray(DM),
    )

    out_cm = pl.pallas_call(
        btae_kernel,
        out_shape=jax.ShapeDtypeStruct((IN_CH, b * h * w), F32),
        in_specs=[pl.BlockSpec(memory_space=pltpu.MemorySpace.VMEM)
                  for _ in operands],
        out_specs=pl.BlockSpec(memory_space=pltpu.MemorySpace.VMEM),
        cost_estimate=pl.CostEstimate(
            flops=2_600_000, transcendentals=40, bytes_accessed=400_000),
    )(*operands)

    # layout plumbing: [C, (b, h, w)] -> NCHW
    return jnp.transpose(out_cm.reshape(IN_CH, b, h, w), (1, 0, 2, 3))


# --------------------------------------------------------------------------
# parameters
# --------------------------------------------------------------------------
def init_params(key):
    ks = jax.random.split(key, 16)

    def nrm(k, shape, scale=0.2):
        return (scale * jax.random.normal(k, shape)).astype(F32)

    return {
        # encoder ConvBlock 0: Conv2d(3->8, k3, p1, bias=False), BN(eps=1e-4)
        "enc_conv0_w": nrm(ks[0], (ENC_CH[0], IN_CH, K, K)),
        "enc_bn0_g": 1.0 + nrm(ks[1], (ENC_CH[0],), 0.05),
        "enc_bn0_b": nrm(ks[2], (ENC_CH[0],), 0.05),
        # encoder ConvBlock 1: Conv2d(8->16, k3, p1, bias=False), BN(eps=1e-4)
        "enc_conv1_w": nrm(ks[3], (ENC_CH[1], ENC_CH[0], K, K)),
        "enc_bn1_g": 1.0 + nrm(ks[4], (ENC_CH[1],), 0.05),
        "enc_bn1_b": nrm(ks[5], (ENC_CH[1],), 0.05),
        # Linear(256 -> 32)  (torch layout [out, in])
        "lin_w": nrm(ks[6], (REP, LINEAR), 0.05),
        "lin_b": nrm(ks[7], (REP,), 0.05),
        # decoder ConvTranspose2d(2->8, k3, s1, p1, bias=False), BN(eps=1e-5)
        "dec_convt0_w": nrm(ks[8], (DEC_IN_CH, DEC_CH[0], K, K)),
        "dec_bn0_g": 1.0 + nrm(ks[9], (DEC_CH[0],), 0.05),
        "dec_bn0_b": nrm(ks[10], (DEC_CH[0],), 0.05),
        # decoder ConvTranspose2d(8->4, k3, s1, p1, bias=False), BN(eps=1e-5)
        "dec_convt1_w": nrm(ks[11], (DEC_CH[0], DEC_CH[1], K, K)),
        "dec_bn1_g": 1.0 + nrm(ks[12], (DEC_CH[1],), 0.05),
        "dec_bn1_b": nrm(ks[13], (DEC_CH[1],), 0.05),
        # decoder output Conv2d(4->3, k3, p1, bias=False)
        "out_conv_w": nrm(ks[14], (IN_CH, DEC_CH[1], K, K)),
    }


# --------------------------------------------------------------------------
# main
# --------------------------------------------------------------------------
if __name__ == "__main__":
    key = jax.random.PRNGKey(0)
    pkey, xkey = jax.random.split(key)
    params = init_params(pkey)
    x = jax.random.normal(xkey, (B, IN_CH, H0, W0), F32)

    fwd = jax.jit(bt_autoencoder_forward)
    out = jax.block_until_ready(fwd(params, x))

    assert out.shape == (B, IN_CH, H0, W0), out.shape
    assert out.dtype == jnp.float32
    assert bool(jnp.all(jnp.isfinite(out)))
    print("KERNEL_OK")
</pallas_src>

<mosaic_0001>
module attributes {stable_mosaic.version = 11 : i64} {
  func.func @btae_kernel(%arg0: memref<3x512xf32, #tpu.memory_space<vmem>>, %arg1: memref<9x8x3xf32, #tpu.memory_space<vmem>>, %arg2: memref<8x1xf32, #tpu.memory_space<vmem>>, %arg3: memref<8x1xf32, #tpu.memory_space<vmem>>, %arg4: memref<9x16x8xf32, #tpu.memory_space<vmem>>, %arg5: memref<16x1xf32, #tpu.memory_space<vmem>>, %arg6: memref<16x1xf32, #tpu.memory_space<vmem>>, %arg7: memref<16x32x16xf32, #tpu.memory_space<vmem>>, %arg8: memref<32x1xf32, #tpu.memory_space<vmem>>, %arg9: memref<9x8x2xf32, #tpu.memory_space<vmem>>, %arg10: memref<8x1xf32, #tpu.memory_space<vmem>>, %arg11: memref<8x1xf32, #tpu.memory_space<vmem>>, %arg12: memref<9x4x8xf32, #tpu.memory_space<vmem>>, %arg13: memref<4x1xf32, #tpu.memory_space<vmem>>, %arg14: memref<4x1xf32, #tpu.memory_space<vmem>>, %arg15: memref<9x3x4xf32, #tpu.memory_space<vmem>>, %arg16: memref<9x512xf32, #tpu.memory_space<vmem>>, %arg17: memref<9x128xf32, #tpu.memory_space<vmem>>, %arg18: memref<9x32xf32, #tpu.memory_space<vmem>>, %arg19: memref<512x128xbf16, #tpu.memory_space<vmem>>, %arg20: memref<128x32xbf16, #tpu.memory_space<vmem>>, %arg21: memref<32x128xbf16, #tpu.memory_space<vmem>>, %arg22: memref<128x512xbf16, #tpu.memory_space<vmem>>, %arg23: memref<2x32xf32, #tpu.memory_space<vmem>>, %arg24: memref<2x32x32xf32, #tpu.memory_space<vmem>>, %arg25: memref<3x512xf32, #tpu.memory_space<vmem>>) attributes {dimension_semantics = [], scalar_prefetch = 0 : i64, scratch_operands = 0 : i64, tpu.core_type = #tpu.core_type<tc>} {
    %c0 = arith.constant 0 : index
    %c0_0 = arith.constant 0 : index
    %0 = vector.load %arg0[%c0, %c0_0] : memref<3x512xf32, #tpu.memory_space<vmem>>, vector<3x512xf32>
    %1 = vector.extract_strided_slice %0 {offsets = [0, 495], sizes = [3, 17], strides = [1, 1]} : vector<3x512xf32> to vector<3x17xf32>
    %2 = vector.extract_strided_slice %0 {offsets = [0, 0], sizes = [3, 495], strides = [1, 1]} : vector<3x512xf32> to vector<3x495xf32>
    %3 = tpu.concatenate %1, %2 in 1 : vector<3x17xf32>, vector<3x495xf32> -> vector<3x512xf32>
    %c0_1 = arith.constant 0 : index
    %c0_2 = arith.constant 0 : index
    %4 = vector.load %arg16[%c0_1, %c0_2] : memref<9x512xf32, #tpu.memory_space<vmem>>, vector<1x512xf32>
    %5 = vector.broadcast %4 : vector<1x512xf32> to vector<3x512xf32>
    %6 = arith.mulf %3, %5 : vector<3x512xf32>
    %c0_3 = arith.constant 0 : index
    %c0_4 = arith.constant 0 : index
    %c0_5 = arith.constant 0 : index
    %7 = vector.load %arg1[%c0_3, %c0_4, %c0_5] : memref<9x8x3xf32, #tpu.memory_space<vmem>>, vector<1x8x3xf32>
    %8 = vector.shape_cast %7 : vector<1x8x3xf32> to vector<8x3xf32>
    %cst = arith.constant dense<0.000000e+00> : vector<8x512xf32>
    %9 = tpu.matmul %8, %6, %cst {dimension_numbers = #tpu.dot_dimension_numbers<[1], [0], [0], [1], [0, 0, 1, 1], [], []>} : vector<8x3xf32>, vector<3x512xf32>, vector<8x512xf32> -> vector<8x512xf32>
    %10 = vector.extract_strided_slice %0 {offsets = [0, 496], sizes = [3, 16], strides = [1, 1]} : vector<3x512xf32> to vector<3x16xf32>
    %11 = vector.extract_strided_slice %0 {offsets = [0, 0], sizes = [3, 496], strides = [1, 1]} : vector<3x512xf32> to vector<3x496xf32>
    %12 = tpu.concatenate %10, %11 in 1 : vector<3x16xf32>, vector<3x496xf32> -> vector<3x512xf32>
    %c1 = arith.constant 1 : index
    %c0_6 = arith.constant 0 : index
    %13 = vector.load %arg16[%c1, %c0_6] : memref<9x512xf32, #tpu.memory_space<vmem>>, vector<1x512xf32>
    %14 = vector.broadcast %13 : vector<1x512xf32> to vector<3x512xf32>
    %15 = arith.mulf %12, %14 : vector<3x512xf32>
    %c1_7 = arith.constant 1 : index
    %c0_8 = arith.constant 0 : index
    %c0_9 = arith.constant 0 : index
    %16 = vector.load %arg1[%c1_7, %c0_8, %c0_9] : memref<9x8x3xf32, #tpu.memory_space<vmem>>, vector<1x8x3xf32>
    %17 = vector.shape_cast %16 : vector<1x8x3xf32> to vector<8x3xf32>
    %cst_10 = arith.constant dense<0.000000e+00> : vector<8x512xf32>
    %18 = tpu.matmul %17, %15, %cst_10 {dimension_numbers = #tpu.dot_dimension_numbers<[1], [0], [0], [1], [0, 0, 1, 1], [], []>} : vector<8x3xf32>, vector<3x512xf32>, vector<8x512xf32> -> vector<8x512xf32>
    %19 = arith.addf %9, %18 : vector<8x512xf32>
    %20 = vector.extract_strided_slice %0 {offsets = [0, 497], sizes = [3, 15], strides = [1, 1]} : vector<3x512xf32> to vector<3x15xf32>
    %21 = vector.extract_strided_slice %0 {offsets = [0, 0], sizes = [3, 497], strides = [1, 1]} : vector<3x512xf32> to vector<3x497xf32>
    %22 = tpu.concatenate %20, %21 in 1 : vector<3x15xf32>, vector<3x497xf32> -> vector<3x512xf32>
    %c2 = arith.constant 2 : index
    %c0_11 = arith.constant 0 : index
    %23 = vector.load %arg16[%c2, %c0_11] : memref<9x512xf32, #tpu.memory_space<vmem>>, vector<1x512xf32>
    %24 = vector.broadcast %23 : vector<1x512xf32> to vector<3x512xf32>
    %25 = arith.mulf %22, %24 : vector<3x512xf32>
    %c2_12 = arith.constant 2 : index
    %c0_13 = arith.constant 0 : index
    %c0_14 = arith.constant 0 : index
    %26 = vector.load %arg1[%c2_12, %c0_13, %c0_14] : memref<9x8x3xf32, #tpu.memory_space<vmem>>, vector<1x8x3xf32>
    %27 = vector.shape_cast %26 : vector<1x8x3xf32> to vector<8x3xf32>
    %cst_15 = arith.constant dense<0.000000e+00> : vector<8x512xf32>
    %28 = tpu.matmul %27, %25, %cst_15 {dimension_numbers = #tpu.dot_dimension_numbers<[1], [0], [0], [1], [0, 0, 1, 1], [], []>} : vector<8x3xf32>, vector<3x512xf32>, vector<8x512xf32> -> vector<8x512xf32>
    %29 = arith.addf %19, %28 : vector<8x512xf32>
    %30 = vector.extract_strided_slice %0 {offsets = [0, 511], sizes = [3, 1], strides = [1, 1]} : vector<3x512xf32> to vector<3x1xf32>
    %31 = vector.extract_strided_slice %0 {offsets = [0, 0], sizes = [3, 511], strides = [1, 1]} : vector<3x512xf32> to vector<3x511xf32>
    %32 = tpu.concatenate %30, %31 in 1 : vector<3x1xf32>, vector<3x511xf32> -> vector<3x512xf32>
    %c3 = arith.constant 3 : index
    %c0_16 = arith.constant 0 : index
    %33 = vector.load %arg16[%c3, %c0_16] : memref<9x512xf32, #tpu.memory_space<vmem>>, vector<1x512xf32>
    %34 = vector.broadcast %33 : vector<1x512xf32> to vector<3x512xf32>
    %35 = arith.mulf %32, %34 : vector<3x512xf32>
    %c3_17 = arith.constant 3 : index
    %c0_18 = arith.constant 0 : index
    %c0_19 = arith.constant 0 : index
    %36 = vector.load %arg1[%c3_17, %c0_18, %c0_19] : memref<9x8x3xf32, #tpu.memory_space<vmem>>, vector<1x8x3xf32>
    %37 = vector.shape_cast %36 : vector<1x8x3xf32> to vector<8x3xf32>
    %cst_20 = arith.constant dense<0.000000e+00> : vector<8x512xf32>
    %38 = tpu.matmul %37, %35, %cst_20 {dimension_numbers = #tpu.dot_dimension_numbers<[1], [0], [0], [1], [0, 0, 1, 1], [], []>} : vector<8x3xf32>, vector<3x512xf32>, vector<8x512xf32> -> vector<8x512xf32>
    %39 = arith.addf %29, %38 : vector<8x512xf32>
    %c4 = arith.constant 4 : index
    %c0_21 = arith.constant 0 : index
    %c0_22 = arith.constant 0 : index
    %40 = vector.load %arg1[%c4, %c0_21, %c0_22] : memref<9x8x3xf32, #tpu.memory_space<vmem>>, vector<1x8x3xf32>
    %41 = vector.shape_cast %40 : vector<1x8x3xf32> to vector<8x3xf32>
    %cst_23 = arith.constant dense<0.000000e+00> : vector<8x512xf32>
    %42 = tpu.matmul %41, %0, %cst_23 {dimension_numbers = #tpu.dot_dimension_numbers<[1], [0], [0], [1], [0, 0, 1, 1], [], []>} : vector<8x3xf32>, vector<3x512xf32>, vector<8x512xf32> -> vector<8x512xf32>
    %43 = arith.addf %39, %42 : vector<8x512xf32>
    %44 = vector.extract_strided_slice %0 {offsets = [0, 1], sizes = [3, 511], strides = [1, 1]} : vector<3x512xf32> to vector<3x511xf32>
    %45 = vector.extract_strided_slice %0 {offsets = [0, 0], sizes = [3, 1], strides = [1, 1]} : vector<3x512xf32> to vector<3x1xf32>
    %46 = tpu.concatenate %44, %45 in 1 : vector<3x511xf32>, vector<3x1xf32> -> vector<3x512xf32>
    %c5 = arith.constant 5 : index
    %c0_24 = arith.constant 0 : index
    %47 = vector.load %arg16[%c5, %c0_24] : memref<9x512xf32, #tpu.memory_space<vmem>>, vector<1x512xf32>
    %48 = vector.broadcast %47 : vector<1x512xf32> to vector<3x512xf32>
    %49 = arith.mulf %46, %48 : vector<3x512xf32>
    %c5_25 = arith.constant 5 : index
    %c0_26 = arith.constant 0 : index
    %c0_27 = arith.constant 0 : index
    %50 = vector.load %arg1[%c5_25, %c0_26, %c0_27] : memref<9x8x3xf32, #tpu.memory_space<vmem>>, vector<1x8x3xf32>
    %51 = vector.shape_cast %50 : vector<1x8x3xf32> to vector<8x3xf32>
    %cst_28 = arith.constant dense<0.000000e+00> : vector<8x512xf32>
    %52 = tpu.matmul %51, %49, %cst_28 {dimension_numbers = #tpu.dot_dimension_numbers<[1], [0], [0], [1], [0, 0, 1, 1], [], []>} : vector<8x3xf32>, vector<3x512xf32>, vector<8x512xf32> -> vector<8x512xf32>
    %53 = arith.addf %43, %52 : vector<8x512xf32>
    %54 = vector.extract_strided_slice %0 {offsets = [0, 15], sizes = [3, 497], strides = [1, 1]} : vector<3x512xf32> to vector<3x497xf32>
    %55 = vector.extract_strided_slice %0 {offsets = [0, 0], sizes = [3, 15], strides = [1, 1]} : vector<3x512xf32> to vector<3x15xf32>
    %56 = tpu.concatenate %54, %55 in 1 : vector<3x497xf32>, vector<3x15xf32> -> vector<3x512xf32>
    %c6 = arith.constant 6 : index
    %c0_29 = arith.constant 0 : index
    %57 = vector.load %arg16[%c6, %c0_29] : memref<9x512xf32, #tpu.memory_space<vmem>>, vector<1x512xf32>
    %58 = vector.broadcast %57 : vector<1x512xf32> to vector<3x512xf32>
    %59 = arith.mulf %56, %58 : vector<3x512xf32>
    %c6_30 = arith.constant 6 : index
    %c0_31 = arith.constant 0 : index
    %c0_32 = arith.constant 0 : index
    %60 = vector.load %arg1[%c6_30, %c0_31, %c0_32] : memref<9x8x3xf32, #tpu.memory_space<vmem>>, vector<1x8x3xf32>
    %61 = vector.shape_cast %60 : vector<1x8x3xf32> to vector<8x3xf32>
    %cst_33 = arith.constant dense<0.000000e+00> : vector<8x512xf32>
    %62 = tpu.matmul %61, %59, %cst_33 {dimension_numbers = #tpu.dot_dimension_numbers<[1], [0], [0], [1], [0, 0, 1, 1], [], []>} : vector<8x3xf32>, vector<3x512xf32>, vector<8x512xf32> -> vector<8x512xf32>
    %63 = arith.addf %53, %62 : vector<8x512xf32>
    %64 = vector.extract_strided_slice %0 {offsets = [0, 16], sizes = [3, 496], strides = [1, 1]} : vector<3x512xf32> to vector<3x496xf32>
    %65 = vector.extract_strided_slice %0 {offsets = [0, 0], sizes = [3, 16], strides = [1, 1]} : vector<3x512xf32> to vector<3x16xf32>
    %66 = tpu.concatenate %64, %65 in 1 : vector<3x496xf32>, vector<3x16xf32> -> vector<3x512xf32>
    %c7 = arith.constant 7 : index
    %c0_34 = arith.constant 0 : index
    %67 = vector.load %arg16[%c7, %c0_34] : memref<9x512xf32, #tpu.memory_space<vmem>>, vector<1x512xf32>
    %68 = vector.broadcast %67 : vector<1x512xf32> to vector<3x512xf32>
    %69 = arith.mulf %66, %68 : vector<3x512xf32>
    %c7_35 = arith.constant 7 : index
    %c0_36 = arith.constant 0 : index
    %c0_37 = arith.constant 0 : index
    %70 = vector.load %arg1[%c7_35, %c0_36, %c0_37] : memref<9x8x3xf32, #tpu.memory_space<vmem>>, vector<1x8x3xf32>
    %71 = vector.shape_cast %70 : vector<1x8x3xf32> to vector<8x3xf32>
    %cst_38 = arith.constant dense<0.000000e+00> : vector<8x512xf32>
    %72 = tpu.matmul %71, %69, %cst_38 {dimension_numbers = #tpu.dot_dimension_numbers<[1], [0], [0], [1], [0, 0, 1, 1], [], []>} : vector<8x3xf32>, vector<3x512xf32>, vector<8x512xf32> -> vector<8x512xf32>
    %73 = arith.addf %63, %72 : vector<8x512xf32>
    %74 = vector.extract_strided_slice %0 {offsets = [0, 17], sizes = [3, 495], strides = [1, 1]} : vector<3x512xf32> to vector<3x495xf32>
    %75 = vector.extract_strided_slice %0 {offsets = [0, 0], sizes = [3, 17], strides = [1, 1]} : vector<3x512xf32> to vector<3x17xf32>
    %76 = tpu.concatenate %74, %75 in 1 : vector<3x495xf32>, vector<3x17xf32> -> vector<3x512xf32>
    %c8 = arith.constant 8 : index
    %c0_39 = arith.constant 0 : index
    %77 = vector.load %arg16[%c8, %c0_39] : memref<9x512xf32, #tpu.memory_space<vmem>>, vector<1x512xf32>
    %78 = vector.broadcast %77 : vector<1x512xf32> to vector<3x512xf32>
    %79 = arith.mulf %76, %78 : vector<3x512xf32>
    %c8_40 = arith.constant 8 : index
    %c0_41 = arith.constant 0 : index
    %c0_42 = arith.constant 0 : index
    %80 = vector.load %arg1[%c8_40, %c0_41, %c0_42] : memref<9x8x3xf32, #tpu.memory_space<vmem>>, vector<1x8x3xf32>
    %81 = vector.shape_cast %80 : vector<1x8x3xf32> to vector<8x3xf32>
    %cst_43 = arith.constant dense<0.000000e+00> : vector<8x512xf32>
    %82 = tpu.matmul %81, %79, %cst_43 {dimension_numbers = #tpu.dot_dimension_numbers<[1], [0], [0], [1], [0, 0, 1, 1], [], []>} : vector<8x3xf32>, vector<3x512xf32>, vector<8x512xf32> -> vector<8x512xf32>
    %83 = arith.addf %73, %82 : vector<8x512xf32>
    %cst_44 = arith.constant dense<0.000000e+00> : vector<8xf32>
    %84 = vector.multi_reduction <add>, %83, %cst_44 [1] : vector<8x512xf32> to vector<8xf32>
    %85 = vector.shape_cast %84 : vector<8xf32> to vector<8x1xf32>
    %cst_45 = arith.constant 0.001953125 : f32
    %86 = vector.broadcast %cst_45 : f32 to vector<8x1xf32>
    %87 = arith.mulf %85, %86 : vector<8x1xf32>
    %88 = arith.mulf %83, %83 : vector<8x512xf32>
    %cst_46 = arith.constant dense<0.000000e+00> : vector<8xf32>
    %89 = vector.multi_reduction <add>, %88, %cst_46 [1] : vector<8x512xf32> to vector<8xf32>
    %90 = vector.shape_cast %89 : vector<8xf32> to vector<8x1xf32>
    %cst_47 = arith.constant 0.001953125 : f32
    %91 = vector.broadcast %cst_47 : f32 to vector<8x1xf32>
    %92 = arith.mulf %90, %91 : vector<8x1xf32>
    %93 = arith.mulf %87, %87 : vector<8x1xf32>
    %94 = arith.subf %92, %93 : vector<8x1xf32>
    %cst_48 = arith.constant 0.000000e+00 : f32
    %95 = vector.broadcast %cst_48 : f32 to vector<8x1xf32>
    %96 = arith.maximumf %94, %95 : vector<8x1xf32>
    %cst_49 = arith.constant 9.99999974E-5 : f32
    %97 = vector.broadcast %cst_49 : f32 to vector<8x1xf32>
    %98 = arith.addf %96, %97 : vector<8x1xf32>
    %99 = math.rsqrt %98 : vector<8x1xf32>
    %c0_50 = arith.constant 0 : index
    %c0_51 = arith.constant 0 : index
    %100 = vector.load %arg2[%c0_50, %c0_51] : memref<8x1xf32, #tpu.memory_space<vmem>>, vector<8x1xf32>
    %101 = arith.mulf %99, %100 : vector<8x1xf32>
    %c0_52 = arith.constant 0 : index
    %c0_53 = arith.constant 0 : index
    %102 = vector.load %arg3[%c0_52, %c0_53] : memref<8x1xf32, #tpu.memory_space<vmem>>, vector<8x1xf32>
    %103 = arith.mulf %87, %101 : vector<8x1xf32>
    %104 = arith.subf %102, %103 : vector<8x1xf32>
    %105 = vector.broadcast %101 : vector<8x1xf32> to vector<8x512xf32>
    %106 = arith.mulf %83, %105 : vector<8x512xf32>
    %107 = vector.broadcast %104 : vector<8x1xf32> to vector<8x512xf32>
    %108 = arith.addf %106, %107 : vector<8x512xf32>
    %cst_54 = arith.constant 0.000000e+00 : f32
    %109 = vector.broadcast %cst_54 : f32 to vector<8x512xf32>
    %110 = arith.cmpf oge, %108, %109 : vector<8x512xf32>
    %cst_55 = arith.constant 0.00999999977 : f32
    %111 = vector.broadcast %cst_55 : f32 to vector<8x512xf32>
    %112 = arith.mulf %111, %108 : vector<8x512xf32>
    %113 = arith.select %110, %108, %112 : vector<8x512xi1>, vector<8x512xf32>
    %114 = vector.extract_strided_slice %113 {offsets = [0, 1], sizes = [8, 511], strides = [1, 1]} : vector<8x512xf32> to vector<8x511xf32>
    %115 = vector.extract_strided_slice %113 {offsets = [0, 0], sizes = [8, 1], strides = [1, 1]} : vector<8x512xf32> to vector<8x1xf32>
    %116 = tpu.concatenate %114, %115 in 1 : vector<8x511xf32>, vector<8x1xf32> -> vector<8x512xf32>
    %117 = arith.maximumf %113, %116 : vector<8x512xf32>
    %118 = vector.extract_strided_slice %117 {offsets = [0, 16], sizes = [8, 496], strides = [1, 1]} : vector<8x512xf32> to vector<8x496xf32>
    %119 = vector.extract_strided_slice %117 {offsets = [0, 0], sizes = [8, 16], strides = [1, 1]} : vector<8x512xf32> to vector<8x16xf32>
    %120 = tpu.concatenate %118, %119 in 1 : vector<8x496xf32>, vector<8x16xf32> -> vector<8x512xf32>
    %121 = arith.maximumf %117, %120 : vector<8x512xf32>
    %c0_56 = arith.constant 0 : index
    %c0_57 = arith.constant 0 : index
    %122 = vector.load %arg19[%c0_56, %c0_57] : memref<512x128xbf16, #tpu.memory_space<vmem>>, vector<512x128xbf16>
    %123 = arith.extf %122 : vector<512x128xbf16> to vector<512x128xf32>
    %cst_58 = arith.constant dense<0.000000e+00> : vector<8x128xf32>
    %124 = tpu.matmul %121, %123, %cst_58 {dimension_numbers = #tpu.dot_dimension_numbers<[1], [0], [0], [1], [0, 0, 1, 1], [], []>} : vector<8x512xf32>, vector<512x128xf32>, vector<8x128xf32> -> vector<8x128xf32>
    %125 = vector.extract_strided_slice %124 {offsets = [0, 119], sizes = [8, 9], strides = [1, 1]} : vector<8x128xf32> to vector<8x9xf32>
    %126 = vector.extract_strided_slice %124 {offsets = [0, 0], sizes = [8, 119], strides = [1, 1]} : vector<8x128xf32> to vector<8x119xf32>
    %127 = tpu.concatenate %125, %126 in 1 : vector<8x9xf32>, vector<8x119xf32> -> vector<8x128xf32>
    %c0_59 = arith.constant 0 : index
    %c0_60 = arith.constant 0 : index
    %128 = vector.load %arg17[%c0_59, %c0_60] : memref<9x128xf32, #tpu.memory_space<vmem>>, vector<1x128xf32>
    %129 = vector.broadcast %128 : vector<1x128xf32> to vector<8x128xf32>
    %130 = arith.mulf %127, %129 : vector<8x128xf32>
    %c0_61 = arith.constant 0 : index
    %c0_62 = arith.constant 0 : index
    %c0_63 = arith.constant 0 : index
    %131 = vector.load %arg4[%c0_61, %c0_62, %c0_63] : memref<9x16x8xf32, #tpu.memory_space<vmem>>, vector<1x16x8xf32>
    %132 = vector.shape_cast %131 : vector<1x16x8xf32> to vector<16x8xf32>
    %cst_64 = arith.constant dense<0.000000e+00> : vector<16x128xf32>
    %133 = tpu.matmul %132, %130, %cst_64 {dimension_numbers = #tpu.dot_dimension_numbers<[1], [0], [0], [1], [0, 0, 1, 1], [], []>} : vector<16x8xf32>, vector<8x128xf32>, vector<16x128xf32> -> vector<16x128xf32>
    %134 = vector.extract_strided_slice %124 {offsets = [0, 120], sizes = [8, 8], strides = [1, 1]} : vector<8x128xf32> to vector<8x8xf32>
    %135 = vector.extract_strided_slice %124 {offsets = [0, 0], sizes = [8, 120], strides = [1, 1]} : vector<8x128xf32> to vector<8x120xf32>
    %136 = tpu.concatenate %134, %135 in 1 : vector<8x8xf32>, vector<8x120xf32> -> vector<8x128xf32>
    %c1_65 = arith.constant 1 : index
    %c0_66 = arith.constant 0 : index
    %137 = vector.load %arg17[%c1_65, %c0_66] : memref<9x128xf32, #tpu.memory_space<vmem>>, vector<1x128xf32>
    %138 = vector.broadcast %137 : vector<1x128xf32> to vector<8x128xf32>
    %139 = arith.mulf %136, %138 : vector<8x128xf32>
    %c1_67 = arith.constant 1 : index
    %c0_68 = arith.constant 0 : index
    %c0_69 = arith.constant 0 : index
    %140 = vector.load %arg4[%c1_67, %c0_68, %c0_69] : memref<9x16x8xf32, #tpu.memory_space<vmem>>, vector<1x16x8xf32>
    %141 = vector.shape_cast %140 : vector<1x16x8xf32> to vector<16x8xf32>
    %cst_70 = arith.constant dense<0.000000e+00> : vector<16x128xf32>
    %142 = tpu.matmul %141, %139, %cst_70 {dimension_numbers = #tpu.dot_dimension_numbers<[1], [0], [0], [1], [0, 0, 1, 1], [], []>} : vector<16x8xf32>, vector<8x128xf32>, vector<16x128xf32> -> vector<16x128xf32>
    %143 = arith.addf %133, %142 : vector<16x128xf32>
    %144 = vector.extract_strided_slice %124 {offsets = [0, 121], sizes = [8, 7], strides = [1, 1]} : vector<8x128xf32> to vector<8x7xf32>
    %145 = vector.extract_strided_slice %124 {offsets = [0, 0], sizes = [8, 121], strides = [1, 1]} : vector<8x128xf32> to vector<8x121xf32>
    %146 = tpu.concatenate %144, %145 in 1 : vector<8x7xf32>, vector<8x121xf32> -> vector<8x128xf32>
    %c2_71 = arith.constant 2 : index
    %c0_72 = arith.constant 0 : index
    %147 = vector.load %arg17[%c2_71, %c0_72] : memref<9x128xf32, #tpu.memory_space<vmem>>, vector<1x128xf32>
    %148 = vector.broadcast %147 : vector<1x128xf32> to vector<8x128xf32>
    %149 = arith.mulf %146, %148 : vector<8x128xf32>
    %c2_73 = arith.constant 2 : index
    %c0_74 = arith.constant 0 : index
    %c0_75 = arith.constant 0 : index
    %150 = vector.load %arg4[%c2_73, %c0_74, %c0_75] : memref<9x16x8xf32, #tpu.memory_space<vmem>>, vector<1x16x8xf32>
    %151 = vector.shape_cast %150 : vector<1x16x8xf32> to vector<16x8xf32>
    %cst_76 = arith.constant dense<0.000000e+00> : vector<16x128xf32>
    %152 = tpu.matmul %151, %149, %cst_76 {dimension_numbers = #tpu.dot_dimension_numbers<[1], [0], [0], [1], [0, 0, 1, 1], [], []>} : vector<16x8xf32>, vector<8x128xf32>, vector<16x128xf32> -> vector<16x128xf32>
    %153 = arith.addf %143, %152 : vector<16x128xf32>
    %154 = vector.extract_strided_slice %124 {offsets = [0, 127], sizes = [8, 1], strides = [1, 1]} : vector<8x128xf32> to vector<8x1xf32>
    %155 = vector.extract_strided_slice %124 {offsets = [0, 0], sizes = [8, 127], strides = [1, 1]} : vector<8x128xf32> to vector<8x127xf32>
    %156 = tpu.concatenate %154, %155 in 1 : vector<8x1xf32>, vector<8x127xf32> -> vector<8x128xf32>
    %c3_77 = arith.constant 3 : index
    %c0_78 = arith.constant 0 : index
    %157 = vector.load %arg17[%c3_77, %c0_78] : memref<9x128xf32, #tpu.memory_space<vmem>>, vector<1x128xf32>
    %158 = vector.broadcast %157 : vector<1x128xf32> to vector<8x128xf32>
    %159 = arith.mulf %156, %158 : vector<8x128xf32>
    %c3_79 = arith.constant 3 : index
    %c0_80 = arith.constant 0 : index
    %c0_81 = arith.constant 0 : index
    %160 = vector.load %arg4[%c3_79, %c0_80, %c0_81] : memref<9x16x8xf32, #tpu.memory_space<vmem>>, vector<1x16x8xf32>
    %161 = vector.shape_cast %160 : vector<1x16x8xf32> to vector<16x8xf32>
    %cst_82 = arith.constant dense<0.000000e+00> : vector<16x128xf32>
    %162 = tpu.matmul %161, %159, %cst_82 {dimension_numbers = #tpu.dot_dimension_numbers<[1], [0], [0], [1], [0, 0, 1, 1], [], []>} : vector<16x8xf32>, vector<8x128xf32>, vector<16x128xf32> -> vector<16x128xf32>
    %163 = arith.addf %153, %162 : vector<16x128xf32>
    %c4_83 = arith.constant 4 : index
    %c0_84 = arith.constant 0 : index
    %c0_85 = arith.constant 0 : index
    %164 = vector.load %arg4[%c4_83, %c0_84, %c0_85] : memref<9x16x8xf32, #tpu.memory_space<vmem>>, vector<1x16x8xf32>
    %165 = vector.shape_cast %164 : vector<1x16x8xf32> to vector<16x8xf32>
    %cst_86 = arith.constant dense<0.000000e+00> : vector<16x128xf32>
    %166 = tpu.matmul %165, %124, %cst_86 {dimension_numbers = #tpu.dot_dimension_numbers<[1], [0], [0], [1], [0, 0, 1, 1], [], []>} : vector<16x8xf32>, vector<8x128xf32>, vector<16x128xf32> -> vector<16x128xf32>
    %167 = arith.addf %163, %166 : vector<16x128xf32>
    %168 = vector.extract_strided_slice %124 {offsets = [0, 1], sizes = [8, 127], strides = [1, 1]} : vector<8x128xf32> to vector<8x127xf32>
    %169 = vector.extract_strided_slice %124 {offsets = [0, 0], sizes = [8, 1], strides = [1, 1]} : vector<8x128xf32> to vector<8x1xf32>
    %170 = tpu.concatenate %168, %169 in 1 : vector<8x127xf32>, vector<8x1xf32> -> vector<8x128xf32>
    %c5_87 = arith.constant 5 : index
    %c0_88 = arith.constant 0 : index
    %171 = vector.load %arg17[%c5_87, %c0_88] : memref<9x128xf32, #tpu.memory_space<vmem>>, vector<1x128xf32>
    %172 = vector.broadcast %171 : vector<1x128xf32> to vector<8x128xf32>
    %173 = arith.mulf %170, %172 : vector<8x128xf32>
    %c5_89 = arith.constant 5 : index
    %c0_90 = arith.constant 0 : index
    %c0_91 = arith.constant 0 : index
    %174 = vector.load %arg4[%c5_89, %c0_90, %c0_91] : memref<9x16x8xf32, #tpu.memory_space<vmem>>, vector<1x16x8xf32>
    %175 = vector.shape_cast %174 : vector<1x16x8xf32> to vector<16x8xf32>
    %cst_92 = arith.constant dense<0.000000e+00> : vector<16x128xf32>
    %176 = tpu.matmul %175, %173, %cst_92 {dimension_numbers = #tpu.dot_dimension_numbers<[1], [0], [0], [1], [0, 0, 1, 1], [], []>} : vector<16x8xf32>, vector<8x128xf32>, vector<16x128xf32> -> vector<16x128xf32>
    %177 = arith.addf %167, %176 : vector<16x128xf32>
    %178 = vector.extract_strided_slice %124 {offsets = [0, 7], sizes = [8, 121], strides = [1, 1]} : vector<8x128xf32> to vector<8x121xf32>
    %179 = vector.extract_strided_slice %124 {offsets = [0, 0], sizes = [8, 7], strides = [1, 1]} : vector<8x128xf32> to vector<8x7xf32>
    %180 = tpu.concatenate %178, %179 in 1 : vector<8x121xf32>, vector<8x7xf32> -> vector<8x128xf32>
    %c6_93 = arith.constant 6 : index
    %c0_94 = arith.constant 0 : index
    %181 = vector.load %arg17[%c6_93, %c0_94] : memref<9x128xf32, #tpu.memory_space<vmem>>, vector<1x128xf32>
    %182 = vector.broadcast %181 : vector<1x128xf32> to vector<8x128xf32>
    %183 = arith.mulf %180, %182 : vector<8x128xf32>
    %c6_95 = arith.constant 6 : index
    %c0_96 = arith.constant 0 : index
    %c0_97 = arith.constant 0 : index
    %184 = vector.load %arg4[%c6_95, %c0_96, %c0_97] : memref<9x16x8xf32, #tpu.memory_space<vmem>>, vector<1x16x8xf32>
    %185 = vector.shape_cast %184 : vector<1x16x8xf32> to vector<16x8xf32>
    %cst_98 = arith.constant dense<0.000000e+00> : vector<16x128xf32>
    %186 = tpu.matmul %185, %183, %cst_98 {dimension_numbers = #tpu.dot_dimension_numbers<[1], [0], [0], [1], [0, 0, 1, 1], [], []>} : vector<16x8xf32>, vector<8x128xf32>, vector<16x128xf32> -> vector<16x128xf32>
    %187 = arith.addf %177, %186 : vector<16x128xf32>
    %188 = vector.extract_strided_slice %124 {offsets = [0, 8], sizes = [8, 120], strides = [1, 1]} : vector<8x128xf32> to vector<8x120xf32>
    %189 = vector.extract_strided_slice %124 {offsets = [0, 0], sizes = [8, 8], strides = [1, 1]} : vector<8x128xf32> to vector<8x8xf32>
    %190 = tpu.concatenate %188, %189 in 1 : vector<8x120xf32>, vector<8x8xf32> -> vector<8x128xf32>
    %c7_99 = arith.constant 7 : index
    %c0_100 = arith.constant 0 : index
    %191 = vector.load %arg17[%c7_99, %c0_100] : memref<9x128xf32, #tpu.memory_space<vmem>>, vector<1x128xf32>
    %192 = vector.broadcast %191 : vector<1x128xf32> to vector<8x128xf32>
    %193 = arith.mulf %190, %192 : vector<8x128xf32>
    %c7_101 = arith.constant 7 : index
    %c0_102 = arith.constant 0 : index
    %c0_103 = arith.constant 0 : index
    %194 = vector.load %arg4[%c7_101, %c0_102, %c0_103] : memref<9x16x8xf32, #tpu.memory_space<vmem>>, vector<1x16x8xf32>
    %195 = vector.shape_cast %194 : vector<1x16x8xf32> to vector<16x8xf32>
    %cst_104 = arith.constant dense<0.000000e+00> : vector<16x128xf32>
    %196 = tpu.matmul %195, %193, %cst_104 {dimension_numbers = #tpu.dot_dimension_numbers<[1], [0], [0], [1], [0, 0, 1, 1], [], []>} : vector<16x8xf32>, vector<8x128xf32>, vector<16x128xf32> -> vector<16x128xf32>
    %197 = arith.addf %187, %196 : vector<16x128xf32>
    %198 = vector.extract_strided_slice %124 {offsets = [0, 9], sizes = [8, 119], strides = [1, 1]} : vector<8x128xf32> to vector<8x119xf32>
    %199 = vector.extract_strided_slice %124 {offsets = [0, 0], sizes = [8, 9], strides = [1, 1]} : vector<8x128xf32> to vector<8x9xf32>
    %200 = tpu.concatenate %198, %199 in 1 : vector<8x119xf32>, vector<8x9xf32> -> vector<8x128xf32>
    %c8_105 = arith.constant 8 : index
    %c0_106 = arith.constant 0 : index
    %201 = vector.load %arg17[%c8_105, %c0_106] : memref<9x128xf32, #tpu.memory_space<vmem>>, vector<1x128xf32>
    %202 = vector.broadcast %201 : vector<1x128xf32> to vector<8x128xf32>
    %203 = arith.mulf %200, %202 : vector<8x128xf32>
    %c8_107 = arith.constant 8 : index
    %c0_108 = arith.constant 0 : index
    %c0_109 = arith.constant 0 : index
    %204 = vector.load %arg4[%c8_107, %c0_108, %c0_109] : memref<9x16x8xf32, #tpu.memory_space<vmem>>, vector<1x16x8xf32>
    %205 = vector.shape_cast %204 : vector<1x16x8xf32> to vector<16x8xf32>
    %cst_110 = arith.constant dense<0.000000e+00> : vector<16x128xf32>
    %206 = tpu.matmul %205, %203, %cst_110 {dimension_numbers = #tpu.dot_dimension_numbers<[1], [0], [0], [1], [0, 0, 1, 1], [], []>} : vector<16x8xf32>, vector<8x128xf32>, vector<16x128xf32> -> vector<16x128xf32>
    %207 = arith.addf %197, %206 : vector<16x128xf32>
    %cst_111 = arith.constant dense<0.000000e+00> : vector<16xf32>
    %208 = vector.multi_reduction <add>, %207, %cst_111 [1] : vector<16x128xf32> to vector<16xf32>
    %209 = vector.shape_cast %208 : vector<16xf32> to vector<16x1xf32>
    %cst_112 = arith.constant 7.812500e-03 : f32
    %210 = vector.broadcast %cst_112 : f32 to vector<16x1xf32>
    %211 = arith.mulf %209, %210 : vector<16x1xf32>
    %212 = arith.mulf %207, %207 : vector<16x128xf32>
    %cst_113 = arith.constant dense<0.000000e+00> : vector<16xf32>
    %213 = vector.multi_reduction <add>, %212, %cst_113 [1] : vector<16x128xf32> to vector<16xf32>
    %214 = vector.shape_cast %213 : vector<16xf32> to vector<16x1xf32>
    %cst_114 = arith.constant 7.812500e-03 : f32
    %215 = vector.broadcast %cst_114 : f32 to vector<16x1xf32>
    %216 = arith.mulf %214, %215 : vector<16x1xf32>
    %217 = arith.mulf %211, %211 : vector<16x1xf32>
    %218 = arith.subf %216, %217 : vector<16x1xf32>
    %cst_115 = arith.constant 0.000000e+00 : f32
    %219 = vector.broadcast %cst_115 : f32 to vector<16x1xf32>
    %220 = arith.maximumf %218, %219 : vector<16x1xf32>
    %cst_116 = arith.constant 9.99999974E-5 : f32
    %221 = vector.broadcast %cst_116 : f32 to vector<16x1xf32>
    %222 = arith.addf %220, %221 : vector<16x1xf32>
    %223 = math.rsqrt %222 : vector<16x1xf32>
    %c0_117 = arith.constant 0 : index
    %c0_118 = arith.constant 0 : index
    %224 = vector.load %arg5[%c0_117, %c0_118] : memref<16x1xf32, #tpu.memory_space<vmem>>, vector<16x1xf32>
    %225 = arith.mulf %223, %224 : vector<16x1xf32>
    %c0_119 = arith.constant 0 : index
    %c0_120 = arith.constant 0 : index
    %226 = vector.load %arg6[%c0_119, %c0_120] : memref<16x1xf32, #tpu.memory_space<vmem>>, vector<16x1xf32>
    %227 = arith.mulf %211, %225 : vector<16x1xf32>
    %228 = arith.subf %226, %227 : vector<16x1xf32>
    %229 = vector.broadcast %225 : vector<16x1xf32> to vector<16x128xf32>
    %230 = arith.mulf %207, %229 : vector<16x128xf32>
    %231 = vector.broadcast %228 : vector<16x1xf32> to vector<16x128xf32>
    %232 = arith.addf %230, %231 : vector<16x128xf32>
    %cst_121 = arith.constant 0.000000e+00 : f32
    %233 = vector.broadcast %cst_121 : f32 to vector<16x128xf32>
    %234 = arith.cmpf oge, %232, %233 : vector<16x128xf32>
    %cst_122 = arith.constant 0.00999999977 : f32
    %235 = vector.broadcast %cst_122 : f32 to vector<16x128xf32>
    %236 = arith.mulf %235, %232 : vector<16x128xf32>
    %237 = arith.select %234, %232, %236 : vector<16x128xi1>, vector<16x128xf32>
    %238 = vector.extract_strided_slice %237 {offsets = [0, 1], sizes = [16, 127], strides = [1, 1]} : vector<16x128xf32> to vector<16x127xf32>
    %239 = vector.extract_strided_slice %237 {offsets = [0, 0], sizes = [16, 1], strides = [1, 1]} : vector<16x128xf32> to vector<16x1xf32>
    %240 = tpu.concatenate %238, %239 in 1 : vector<16x127xf32>, vector<16x1xf32> -> vector<16x128xf32>
    %241 = arith.maximumf %237, %240 : vector<16x128xf32>
    %242 = vector.extract_strided_slice %241 {offsets = [0, 8], sizes = [16, 120], strides = [1, 1]} : vector<16x128xf32> to vector<16x120xf32>
    %243 = vector.extract_strided_slice %241 {offsets = [0, 0], sizes = [16, 8], strides = [1, 1]} : vector<16x128xf32> to vector<16x8xf32>
    %244 = tpu.concatenate %242, %243 in 1 : vector<16x120xf32>, vector<16x8xf32> -> vector<16x128xf32>
    %245 = arith.maximumf %241, %244 : vector<16x128xf32>
    %c0_123 = arith.constant 0 : index
    %c0_124 = arith.constant 0 : index
    %246 = vector.load %arg20[%c0_123, %c0_124] : memref<128x32xbf16, #tpu.memory_space<vmem>>, vector<128x32xbf16>
    %247 = arith.extf %246 : vector<128x32xbf16> to vector<128x32xf32>
    %cst_125 = arith.constant dense<0.000000e+00> : vector<16x32xf32>
    %248 = tpu.matmul %245, %247, %cst_125 {dimension_numbers = #tpu.dot_dimension_numbers<[1], [0], [0], [1], [0, 0, 1, 1], [], []>} : vector<16x128xf32>, vector<128x32xf32>, vector<16x32xf32> -> vector<16x32xf32>
    %cst_126 = arith.constant 0.000000e+00 : f32
    %249 = vector.broadcast %cst_126 : f32 to vector<32x2xf32>
    %250 = vector.extract_strided_slice %248 {offsets = [0, 0], sizes = [16, 2], strides = [1, 1]} : vector<16x32xf32> to vector<16x2xf32>
    %c0_127 = arith.constant 0 : index
    %c0_128 = arith.constant 0 : index
    %c0_129 = arith.constant 0 : index
    %251 = vector.load %arg7[%c0_127, %c0_128, %c0_129] : memref<16x32x16xf32, #tpu.memory_space<vmem>>, vector<1x32x16xf32>
    %252 = vector.shape_cast %251 : vector<1x32x16xf32> to vector<32x16xf32>
    %cst_130 = arith.constant dense<0.000000e+00> : vector<32x2xf32>
    %253 = tpu.matmul %252, %250, %cst_130 {dimension_numbers = #tpu.dot_dimension_numbers<[1], [0], [0], [1], [0, 0, 1, 1], [], []>} : vector<32x16xf32>, vector<16x2xf32>, vector<32x2xf32> -> vector<32x2xf32>
    %254 = arith.addf %249, %253 : vector<32x2xf32>
    %255 = vector.extract_strided_slice %248 {offsets = [0, 2], sizes = [16, 2], strides = [1, 1]} : vector<16x32xf32> to vector<16x2xf32>
    %c1_131 = arith.constant 1 : index
    %c0_132 = arith.constant 0 : index
    %c0_133 = arith.constant 0 : index
    %256 = vector.load %arg7[%c1_131, %c0_132, %c0_133] : memref<16x32x16xf32, #tpu.memory_space<vmem>>, vector<1x32x16xf32>
    %257 = vector.shape_cast %256 : vector<1x32x16xf32> to vector<32x16xf32>
    %cst_134 = arith.constant dense<0.000000e+00> : vector<32x2xf32>
    %258 = tpu.matmul %257, %255, %cst_134 {dimension_numbers = #tpu.dot_dimension_numbers<[1], [0], [0], [1], [0, 0, 1, 1], [], []>} : vector<32x16xf32>, vector<16x2xf32>, vector<32x2xf32> -> vector<32x2xf32>
    %259 = arith.addf %254, %258 : vector<32x2xf32>
    %260 = vector.extract_strided_slice %248 {offsets = [0, 4], sizes = [16, 2], strides = [1, 1]} : vector<16x32xf32> to vector<16x2xf32>
    %c2_135 = arith.constant 2 : index
    %c0_136 = arith.constant 0 : index
    %c0_137 = arith.constant 0 : index
    %261 = vector.load %arg7[%c2_135, %c0_136, %c0_137] : memref<16x32x16xf32, #tpu.memory_space<vmem>>, vector<1x32x16xf32>
    %262 = vector.shape_cast %261 : vector<1x32x16xf32> to vector<32x16xf32>
    %cst_138 = arith.constant dense<0.000000e+00> : vector<32x2xf32>
    %263 = tpu.matmul %262, %260, %cst_138 {dimension_numbers = #tpu.dot_dimension_numbers<[1], [0], [0], [1], [0, 0, 1, 1], [], []>} : vector<32x16xf32>, vector<16x2xf32>, vector<32x2xf32> -> vector<32x2xf32>
    %264 = arith.addf %259, %263 : vector<32x2xf32>
    %265 = vector.extract_strided_slice %248 {offsets = [0, 6], sizes = [16, 2], strides = [1, 1]} : vector<16x32xf32> to vector<16x2xf32>
    %c3_139 = arith.constant 3 : index
    %c0_140 = arith.constant 0 : index
    %c0_141 = arith.constant 0 : index
    %266 = vector.load %arg7[%c3_139, %c0_140, %c0_141] : memref<16x32x16xf32, #tpu.memory_space<vmem>>, vector<1x32x16xf32>
    %267 = vector.shape_cast %266 : vector<1x32x16xf32> to vector<32x16xf32>
    %cst_142 = arith.constant dense<0.000000e+00> : vector<32x2xf32>
    %268 = tpu.matmul %267, %265, %cst_142 {dimension_numbers = #tpu.dot_dimension_numbers<[1], [0], [0], [1], [0, 0, 1, 1], [], []>} : vector<32x16xf32>, vector<16x2xf32>, vector<32x2xf32> -> vector<32x2xf32>
    %269 = arith.addf %264, %268 : vector<32x2xf32>
    %270 = vector.extract_strided_slice %248 {offsets = [0, 8], sizes = [16, 2], strides = [1, 1]} : vector<16x32xf32> to vector<16x2xf32>
    %c4_143 = arith.constant 4 : index
    %c0_144 = arith.constant 0 : index
    %c0_145 = arith.constant 0 : index
    %271 = vector.load %arg7[%c4_143, %c0_144, %c0_145] : memref<16x32x16xf32, #tpu.memory_space<vmem>>, vector<1x32x16xf32>
    %272 = vector.shape_cast %271 : vector<1x32x16xf32> to vector<32x16xf32>
    %cst_146 = arith.constant dense<0.000000e+00> : vector<32x2xf32>
    %273 = tpu.matmul %272, %270, %cst_146 {dimension_numbers = #tpu.dot_dimension_numbers<[1], [0], [0], [1], [0, 0, 1, 1], [], []>} : vector<32x16xf32>, vector<16x2xf32>, vector<32x2xf32> -> vector<32x2xf32>
    %274 = arith.addf %269, %273 : vector<32x2xf32>
    %275 = vector.extract_strided_slice %248 {offsets = [0, 10], sizes = [16, 2], strides = [1, 1]} : vector<16x32xf32> to vector<16x2xf32>
    %c5_147 = arith.constant 5 : index
    %c0_148 = arith.constant 0 : index
    %c0_149 = arith.constant 0 : index
    %276 = vector.load %arg7[%c5_147, %c0_148, %c0_149] : memref<16x32x16xf32, #tpu.memory_space<vmem>>, vector<1x32x16xf32>
    %277 = vector.shape_cast %276 : vector<1x32x16xf32> to vector<32x16xf32>
    %cst_150 = arith.constant dense<0.000000e+00> : vector<32x2xf32>
    %278 = tpu.matmul %277, %275, %cst_150 {dimension_numbers = #tpu.dot_dimension_numbers<[1], [0], [0], [1], [0, 0, 1, 1], [], []>} : vector<32x16xf32>, vector<16x2xf32>, vector<32x2xf32> -> vector<32x2xf32>
    %279 = arith.addf %274, %278 : vector<32x2xf32>
    %280 = vector.extract_strided_slice %248 {offsets = [0, 12], sizes = [16, 2], strides = [1, 1]} : vector<16x32xf32> to vector<16x2xf32>
    %c6_151 = arith.constant 6 : index
    %c0_152 = arith.constant 0 : index
    %c0_153 = arith.constant 0 : index
    %281 = vector.load %arg7[%c6_151, %c0_152, %c0_153] : memref<16x32x16xf32, #tpu.memory_space<vmem>>, vector<1x32x16xf32>
    %282 = vector.shape_cast %281 : vector<1x32x16xf32> to vector<32x16xf32>
    %cst_154 = arith.constant dense<0.000000e+00> : vector<32x2xf32>
    %283 = tpu.matmul %282, %280, %cst_154 {dimension_numbers = #tpu.dot_dimension_numbers<[1], [0], [0], [1], [0, 0, 1, 1], [], []>} : vector<32x16xf32>, vector<16x2xf32>, vector<32x2xf32> -> vector<32x2xf32>
    %284 = arith.addf %279, %283 : vector<32x2xf32>
    %285 = vector.extract_strided_slice %248 {offsets = [0, 14], sizes = [16, 2], strides = [1, 1]} : vector<16x32xf32> to vector<16x2xf32>
    %c7_155 = arith.constant 7 : index
    %c0_156 = arith.constant 0 : index
    %c0_157 = arith.constant 0 : index
    %286 = vector.load %arg7[%c7_155, %c0_156, %c0_157] : memref<16x32x16xf32, #tpu.memory_space<vmem>>, vector<1x32x16xf32>
    %287 = vector.shape_cast %286 : vector<1x32x16xf32> to vector<32x16xf32>
    %cst_158 = arith.constant dense<0.000000e+00> : vector<32x2xf32>
    %288 = tpu.matmul %287, %285, %cst_158 {dimension_numbers = #tpu.dot_dimension_numbers<[1], [0], [0], [1], [0, 0, 1, 1], [], []>} : vector<32x16xf32>, vector<16x2xf32>, vector<32x2xf32> -> vector<32x2xf32>
    %289 = arith.addf %284, %288 : vector<32x2xf32>
    %290 = vector.extract_strided_slice %248 {offsets = [0, 16], sizes = [16, 2], strides = [1, 1]} : vector<16x32xf32> to vector<16x2xf32>
    %c8_159 = arith.constant 8 : index
    %c0_160 = arith.constant 0 : index
    %c0_161 = arith.constant 0 : index
    %291 = vector.load %arg7[%c8_159, %c0_160, %c0_161] : memref<16x32x16xf32, #tpu.memory_space<vmem>>, vector<1x32x16xf32>
    %292 = vector.shape_cast %291 : vector<1x32x16xf32> to vector<32x16xf32>
    %cst_162 = arith.constant dense<0.000000e+00> : vector<32x2xf32>
    %293 = tpu.matmul %292, %290, %cst_162 {dimension_numbers = #tpu.dot_dimension_numbers<[1], [0], [0], [1], [0, 0, 1, 1], [], []>} : vector<32x16xf32>, vector<16x2xf32>, vector<32x2xf32> -> vector<32x2xf32>
    %294 = arith.addf %289, %293 : vector<32x2xf32>
    %295 = vector.extract_strided_slice %248 {offsets = [0, 18], sizes = [16, 2], strides = [1, 1]} : vector<16x32xf32> to vector<16x2xf32>
    %c9 = arith.constant 9 : index
    %c0_163 = arith.constant 0 : index
    %c0_164 = arith.constant 0 : index
    %296 = vector.load %arg7[%c9, %c0_163, %c0_164] : memref<16x32x16xf32, #tpu.memory_space<vmem>>, vector<1x32x16xf32>
    %297 = vector.shape_cast %296 : vector<1x32x16xf32> to vector<32x16xf32>
    %cst_165 = arith.constant dense<0.000000e+00> : vector<32x2xf32>
    %298 = tpu.matmul %297, %295, %cst_165 {dimension_numbers = #tpu.dot_dimension_numbers<[1], [0], [0], [1], [0, 0, 1, 1], [], []>} : vector<32x16xf32>, vector<16x2xf32>, vector<32x2xf32> -> vector<32x2xf32>
    %299 = arith.addf %294, %298 : vector<32x2xf32>
    %300 = vector.extract_strided_slice %248 {offsets = [0, 20], sizes = [16, 2], strides = [1, 1]} : vector<16x32xf32> to vector<16x2xf32>
    %c10 = arith.constant 10 : index
    %c0_166 = arith.constant 0 : index
    %c0_167 = arith.constant 0 : index
    %301 = vector.load %arg7[%c10, %c0_166, %c0_167] : memref<16x32x16xf32, #tpu.memory_space<vmem>>, vector<1x32x16xf32>
    %302 = vector.shape_cast %301 : vector<1x32x16xf32> to vector<32x16xf32>
    %cst_168 = arith.constant dense<0.000000e+00> : vector<32x2xf32>
    %303 = tpu.matmul %302, %300, %cst_168 {dimension_numbers = #tpu.dot_dimension_numbers<[1], [0], [0], [1], [0, 0, 1, 1], [], []>} : vector<32x16xf32>, vector<16x2xf32>, vector<32x2xf32> -> vector<32x2xf32>
    %304 = arith.addf %299, %303 : vector<32x2xf32>
    %305 = vector.extract_strided_slice %248 {offsets = [0, 22], sizes = [16, 2], strides = [1, 1]} : vector<16x32xf32> to vector<16x2xf32>
    %c11 = arith.constant 11 : index
    %c0_169 = arith.constant 0 : index
    %c0_170 = arith.constant 0 : index
    %306 = vector.load %arg7[%c11, %c0_169, %c0_170] : memref<16x32x16xf32, #tpu.memory_space<vmem>>, vector<1x32x16xf32>
    %307 = vector.shape_cast %306 : vector<1x32x16xf32> to vector<32x16xf32>
    %cst_171 = arith.constant dense<0.000000e+00> : vector<32x2xf32>
    %308 = tpu.matmul %307, %305, %cst_171 {dimension_numbers = #tpu.dot_dimension_numbers<[1], [0], [0], [1], [0, 0, 1, 1], [], []>} : vector<32x16xf32>, vector<16x2xf32>, vector<32x2xf32> -> vector<32x2xf32>
    %309 = arith.addf %304, %308 : vector<32x2xf32>
    %310 = vector.extract_strided_slice %248 {offsets = [0, 24], sizes = [16, 2], strides = [1, 1]} : vector<16x32xf32> to vector<16x2xf32>
    %c12 = arith.constant 12 : index
    %c0_172 = arith.constant 0 : index
    %c0_173 = arith.constant 0 : index
    %311 = vector.load %arg7[%c12, %c0_172, %c0_173] : memref<16x32x16xf32, #tpu.memory_space<vmem>>, vector<1x32x16xf32>
    %312 = vector.shape_cast %311 : vector<1x32x16xf32> to vector<32x16xf32>
    %cst_174 = arith.constant dense<0.000000e+00> : vector<32x2xf32>
    %313 = tpu.matmul %312, %310, %cst_174 {dimension_numbers = #tpu.dot_dimension_numbers<[1], [0], [0], [1], [0, 0, 1, 1], [], []>} : vector<32x16xf32>, vector<16x2xf32>, vector<32x2xf32> -> vector<32x2xf32>
    %314 = arith.addf %309, %313 : vector<32x2xf32>
    %315 = vector.extract_strided_slice %248 {offsets = [0, 26], sizes = [16, 2], strides = [1, 1]} : vector<16x32xf32> to vector<16x2xf32>
    %c13 = arith.constant 13 : index
    %c0_175 = arith.constant 0 : index
    %c0_176 = arith.constant 0 : index
    %316 = vector.load %arg7[%c13, %c0_175, %c0_176] : memref<16x32x16xf32, #tpu.memory_space<vmem>>, vector<1x32x16xf32>
    %317 = vector.shape_cast %316 : vector<1x32x16xf32> to vector<32x16xf32>
    %cst_177 = arith.constant dense<0.000000e+00> : vector<32x2xf32>
    %318 = tpu.matmul %317, %315, %cst_177 {dimension_numbers = #tpu.dot_dimension_numbers<[1], [0], [0], [1], [0, 0, 1, 1], [], []>} : vector<32x16xf32>, vector<16x2xf32>, vector<32x2xf32> -> vector<32x2xf32>
    %319 = arith.addf %314, %318 : vector<32x2xf32>
    %320 = vector.extract_strided_slice %248 {offsets = [0, 28], sizes = [16, 2], strides = [1, 1]} : vector<16x32xf32> to vector<16x2xf32>
    %c14 = arith.constant 14 : index
    %c0_178 = arith.constant 0 : index
    %c0_179 = arith.constant 0 : index
    %321 = vector.load %arg7[%c14, %c0_178, %c0_179] : memref<16x32x16xf32, #tpu.memory_space<vmem>>, vector<1x32x16xf32>
    %322 = vector.shape_cast %321 : vector<1x32x16xf32> to vector<32x16xf32>
    %cst_180 = arith.constant dense<0.000000e+00> : vector<32x2xf32>
    %323 = tpu.matmul %322, %320, %cst_180 {dimension_numbers = #tpu.dot_dimension_numbers<[1], [0], [0], [1], [0, 0, 1, 1], [], []>} : vector<32x16xf32>, vector<16x2xf32>, vector<32x2xf32> -> vector<32x2xf32>
    %324 = arith.addf %319, %323 : vector<32x2xf32>
    %325 = vector.extract_strided_slice %248 {offsets = [0, 30], sizes = [16, 2], strides = [1, 1]} : vector<16x32xf32> to vector<16x2xf32>
    %c15 = arith.constant 15 : index
    %c0_181 = arith.constant 0 : index
    %c0_182 = arith.constant 0 : index
    %326 = vector.load %arg7[%c15, %c0_181, %c0_182] : memref<16x32x16xf32, #tpu.memory_space<vmem>>, vector<1x32x16xf32>
    %327 = vector.shape_cast %326 : vector<1x32x16xf32> to vector<32x16xf32>
    %cst_183 = arith.constant dense<0.000000e+00> : vector<32x2xf32>
    %328 = tpu.matmul %327, %325, %cst_183 {dimension_numbers = #tpu.dot_dimension_numbers<[1], [0], [0], [1], [0, 0, 1, 1], [], []>} : vector<32x16xf32>, vector<16x2xf32>, vector<32x2xf32> -> vector<32x2xf32>
    %329 = arith.addf %324, %328 : vector<32x2xf32>
    %c0_184 = arith.constant 0 : index
    %c0_185 = arith.constant 0 : index
    %330 = vector.load %arg8[%c0_184, %c0_185] : memref<32x1xf32, #tpu.memory_space<vmem>>, vector<32x1xf32>
    %331 = vector.broadcast %330 : vector<32x1xf32> to vector<32x2xf32>
    %332 = arith.addf %329, %331 : vector<32x2xf32>
    %cst_186 = arith.constant 0.000000e+00 : f32
    %333 = vector.broadcast %cst_186 : f32 to vector<32x2xf32>
    %334 = arith.cmpf oge, %332, %333 : vector<32x2xf32>
    %cst_187 = arith.constant 0.00999999977 : f32
    %335 = vector.broadcast %cst_187 : f32 to vector<32x2xf32>
    %336 = arith.mulf %335, %332 : vector<32x2xf32>
    %337 = arith.select %334, %332, %336 : vector<32x2xi1>, vector<32x2xf32>
    %c0_188 = arith.constant 0 : index
    %c0_189 = arith.constant 0 : index
    %338 = vector.load %arg23[%c0_188, %c0_189] : memref<2x32xf32, #tpu.memory_space<vmem>>, vector<2x32xf32>
    %cst_190 = arith.constant dense<0.000000e+00> : vector<32x32xf32>
    %339 = tpu.matmul %337, %338, %cst_190 {dimension_numbers = #tpu.dot_dimension_numbers<[1], [0], [0], [1], [0, 0, 1, 1], [], []>} : vector<32x2xf32>, vector<2x32xf32>, vector<32x32xf32> -> vector<32x32xf32>
    %c0_191 = arith.constant 0 : index
    %c0_192 = arith.constant 0 : index
    %c0_193 = arith.constant 0 : index
    %340 = vector.load %arg24[%c0_191, %c0_192, %c0_193] : memref<2x32x32xf32, #tpu.memory_space<vmem>>, vector<1x32x32xf32>
    %341 = vector.shape_cast %340 : vector<1x32x32xf32> to vector<32x32xf32>
    %342 = arith.mulf %339, %341 : vector<32x32xf32>
    %cst_194 = arith.constant dense<0.000000e+00> : vector<32xf32>
    %343 = vector.multi_reduction <add>, %342, %cst_194 [0] : vector<32x32xf32> to vector<32xf32>
    %344 = vector.shape_cast %343 : vector<32xf32> to vector<1x32xf32>
    %c1_195 = arith.constant 1 : index
    %c0_196 = arith.constant 0 : index
    %c0_197 = arith.constant 0 : index
    %345 = vector.load %arg24[%c1_195, %c0_196, %c0_197] : memref<2x32x32xf32, #tpu.memory_space<vmem>>, vector<1x32x32xf32>
    %346 = vector.shape_cast %345 : vector<1x32x32xf32> to vector<32x32xf32>
    %347 = arith.mulf %339, %346 : vector<32x32xf32>
    %cst_198 = arith.constant dense<0.000000e+00> : vector<32xf32>
    %348 = vector.multi_reduction <add>, %347, %cst_198 [0] : vector<32x32xf32> to vector<32xf32>
    %349 = vector.shape_cast %348 : vector<32xf32> to vector<1x32xf32>
    %350 = tpu.concatenate %344, %349 in 0 : vector<1x32xf32>, vector<1x32xf32> -> vector<2x32xf32>
    %351 = vector.extract_strided_slice %350 {offsets = [0, 27], sizes = [2, 5], strides = [1, 1]} : vector<2x32xf32> to vector<2x5xf32>
    %352 = vector.extract_strided_slice %350 {offsets = [0, 0], sizes = [2, 27], strides = [1, 1]} : vector<2x32xf32> to vector<2x27xf32>
    %353 = tpu.concatenate %351, %352 in 1 : vector<2x5xf32>, vector<2x27xf32> -> vector<2x32xf32>
    %c0_199 = arith.constant 0 : index
    %c0_200 = arith.constant 0 : index
    %354 = vector.load %arg18[%c0_199, %c0_200] : memref<9x32xf32, #tpu.memory_space<vmem>>, vector<1x32xf32>
    %355 = vector.broadcast %354 : vector<1x32xf32> to vector<2x32xf32>
    %356 = arith.mulf %353, %355 : vector<2x32xf32>
    %c0_201 = arith.constant 0 : index
    %c0_202 = arith.constant 0 : index
    %c0_203 = arith.constant 0 : index
    %357 = vector.load %arg9[%c0_201, %c0_202, %c0_203] : memref<9x8x2xf32, #tpu.memory_space<vmem>>, vector<1x8x2xf32>
    %358 = vector.shape_cast %357 : vector<1x8x2xf32> to vector<8x2xf32>
    %cst_204 = arith.constant dense<0.000000e+00> : vector<8x32xf32>
    %359 = tpu.matmul %358, %356, %cst_204 {dimension_numbers = #tpu.dot_dimension_numbers<[1], [0], [0], [1], [0, 0, 1, 1], [], []>} : vector<8x2xf32>, vector<2x32xf32>, vector<8x32xf32> -> vector<8x32xf32>
    %360 = vector.extract_strided_slice %350 {offsets = [0, 28], sizes = [2, 4], strides = [1, 1]} : vector<2x32xf32> to vector<2x4xf32>
    %361 = vector.extract_strided_slice %350 {offsets = [0, 0], sizes = [2, 28], strides = [1, 1]} : vector<2x32xf32> to vector<2x28xf32>
    %362 = tpu.concatenate %360, %361 in 1 : vector<2x4xf32>, vector<2x28xf32> -> vector<2x32xf32>
    %c1_205 = arith.constant 1 : index
    %c0_206 = arith.constant 0 : index
    %363 = vector.load %arg18[%c1_205, %c0_206] : memref<9x32xf32, #tpu.memory_space<vmem>>, vector<1x32xf32>
    %364 = vector.broadcast %363 : vector<1x32xf32> to vector<2x32xf32>
    %365 = arith.mulf %362, %364 : vector<2x32xf32>
    %c1_207 = arith.constant 1 : index
    %c0_208 = arith.constant 0 : index
    %c0_209 = arith.constant 0 : index
    %366 = vector.load %arg9[%c1_207, %c0_208, %c0_209] : memref<9x8x2xf32, #tpu.memory_space<vmem>>, vector<1x8x2xf32>
    %367 = vector.shape_cast %366 : vector<1x8x2xf32> to vector<8x2xf32>
    %cst_210 = arith.constant dense<0.000000e+00> : vector<8x32xf32>
    %368 = tpu.matmul %367, %365, %cst_210 {dimension_numbers = #tpu.dot_dimension_numbers<[1], [0], [0], [1], [0, 0, 1, 1], [], []>} : vector<8x2xf32>, vector<2x32xf32>, vector<8x32xf32> -> vector<8x32xf32>
    %369 = arith.addf %359, %368 : vector<8x32xf32>
    %370 = vector.extract_strided_slice %350 {offsets = [0, 29], sizes = [2, 3], strides = [1, 1]} : vector<2x32xf32> to vector<2x3xf32>
    %371 = vector.extract_strided_slice %350 {offsets = [0, 0], sizes = [2, 29], strides = [1, 1]} : vector<2x32xf32> to vector<2x29xf32>
    %372 = tpu.concatenate %370, %371 in 1 : vector<2x3xf32>, vector<2x29xf32> -> vector<2x32xf32>
    %c2_211 = arith.constant 2 : index
    %c0_212 = arith.constant 0 : index
    %373 = vector.load %arg18[%c2_211, %c0_212] : memref<9x32xf32, #tpu.memory_space<vmem>>, vector<1x32xf32>
    %374 = vector.broadcast %373 : vector<1x32xf32> to vector<2x32xf32>
    %375 = arith.mulf %372, %374 : vector<2x32xf32>
    %c2_213 = arith.constant 2 : index
    %c0_214 = arith.constant 0 : index
    %c0_215 = arith.constant 0 : index
    %376 = vector.load %arg9[%c2_213, %c0_214, %c0_215] : memref<9x8x2xf32, #tpu.memory_space<vmem>>, vector<1x8x2xf32>
    %377 = vector.shape_cast %376 : vector<1x8x2xf32> to vector<8x2xf32>
    %cst_216 = arith.constant dense<0.000000e+00> : vector<8x32xf32>
    %378 = tpu.matmul %377, %375, %cst_216 {dimension_numbers = #tpu.dot_dimension_numbers<[1], [0], [0], [1], [0, 0, 1, 1], [], []>} : vector<8x2xf32>, vector<2x32xf32>, vector<8x32xf32> -> vector<8x32xf32>
    %379 = arith.addf %369, %378 : vector<8x32xf32>
    %380 = vector.extract_strided_slice %350 {offsets = [0, 31], sizes = [2, 1], strides = [1, 1]} : vector<2x32xf32> to vector<2x1xf32>
    %381 = vector.extract_strided_slice %350 {offsets = [0, 0], sizes = [2, 31], strides = [1, 1]} : vector<2x32xf32> to vector<2x31xf32>
    %382 = tpu.concatenate %380, %381 in 1 : vector<2x1xf32>, vector<2x31xf32> -> vector<2x32xf32>
    %c3_217 = arith.constant 3 : index
    %c0_218 = arith.constant 0 : index
    %383 = vector.load %arg18[%c3_217, %c0_218] : memref<9x32xf32, #tpu.memory_space<vmem>>, vector<1x32xf32>
    %384 = vector.broadcast %383 : vector<1x32xf32> to vector<2x32xf32>
    %385 = arith.mulf %382, %384 : vector<2x32xf32>
    %c3_219 = arith.constant 3 : index
    %c0_220 = arith.constant 0 : index
    %c0_221 = arith.constant 0 : index
    %386 = vector.load %arg9[%c3_219, %c0_220, %c0_221] : memref<9x8x2xf32, #tpu.memory_space<vmem>>, vector<1x8x2xf32>
    %387 = vector.shape_cast %386 : vector<1x8x2xf32> to vector<8x2xf32>
    %cst_222 = arith.constant dense<0.000000e+00> : vector<8x32xf32>
    %388 = tpu.matmul %387, %385, %cst_222 {dimension_numbers = #tpu.dot_dimension_numbers<[1], [0], [0], [1], [0, 0, 1, 1], [], []>} : vector<8x2xf32>, vector<2x32xf32>, vector<8x32xf32> -> vector<8x32xf32>
    %389 = arith.addf %379, %388 : vector<8x32xf32>
    %c4_223 = arith.constant 4 : index
    %c0_224 = arith.constant 0 : index
    %c0_225 = arith.constant 0 : index
    %390 = vector.load %arg9[%c4_223, %c0_224, %c0_225] : memref<9x8x2xf32, #tpu.memory_space<vmem>>, vector<1x8x2xf32>
    %391 = vector.shape_cast %390 : vector<1x8x2xf32> to vector<8x2xf32>
    %cst_226 = arith.constant dense<0.000000e+00> : vector<8x32xf32>
    %392 = tpu.matmul %391, %350, %cst_226 {dimension_numbers = #tpu.dot_dimension_numbers<[1], [0], [0], [1], [0, 0, 1, 1], [], []>} : vector<8x2xf32>, vector<2x32xf32>, vector<8x32xf32> -> vector<8x32xf32>
    %393 = arith.addf %389, %392 : vector<8x32xf32>
    %394 = vector.extract_strided_slice %350 {offsets = [0, 1], sizes = [2, 31], strides = [1, 1]} : vector<2x32xf32> to vector<2x31xf32>
    %395 = vector.extract_strided_slice %350 {offsets = [0, 0], sizes = [2, 1], strides = [1, 1]} : vector<2x32xf32> to vector<2x1xf32>
    %396 = tpu.concatenate %394, %395 in 1 : vector<2x31xf32>, vector<2x1xf32> -> vector<2x32xf32>
    %c5_227 = arith.constant 5 : index
    %c0_228 = arith.constant 0 : index
    %397 = vector.load %arg18[%c5_227, %c0_228] : memref<9x32xf32, #tpu.memory_space<vmem>>, vector<1x32xf32>
    %398 = vector.broadcast %397 : vector<1x32xf32> to vector<2x32xf32>
    %399 = arith.mulf %396, %398 : vector<2x32xf32>
    %c5_229 = arith.constant 5 : index
    %c0_230 = arith.constant 0 : index
    %c0_231 = arith.constant 0 : index
    %400 = vector.load %arg9[%c5_229, %c0_230, %c0_231] : memref<9x8x2xf32, #tpu.memory_space<vmem>>, vector<1x8x2xf32>
    %401 = vector.shape_cast %400 : vector<1x8x2xf32> to vector<8x2xf32>
    %cst_232 = arith.constant dense<0.000000e+00> : vector<8x32xf32>
    %402 = tpu.matmul %401, %399, %cst_232 {dimension_numbers = #tpu.dot_dimension_numbers<[1], [0], [0], [1], [0, 0, 1, 1], [], []>} : vector<8x2xf32>, vector<2x32xf32>, vector<8x32xf32> -> vector<8x32xf32>
    %403 = arith.addf %393, %402 : vector<8x32xf32>
    %404 = vector.extract_strided_slice %350 {offsets = [0, 3], sizes = [2, 29], strides = [1, 1]} : vector<2x32xf32> to vector<2x29xf32>
    %405 = vector.extract_strided_slice %350 {offsets = [0, 0], sizes = [2, 3], strides = [1, 1]} : vector<2x32xf32> to vector<2x3xf32>
    %406 = tpu.concatenate %404, %405 in 1 : vector<2x29xf32>, vector<2x3xf32> -> vector<2x32xf32>
    %c6_233 = arith.constant 6 : index
    %c0_234 = arith.constant 0 : index
    %407 = vector.load %arg18[%c6_233, %c0_234] : memref<9x32xf32, #tpu.memory_space<vmem>>, vector<1x32xf32>
    %408 = vector.broadcast %407 : vector<1x32xf32> to vector<2x32xf32>
    %409 = arith.mulf %406, %408 : vector<2x32xf32>
    %c6_235 = arith.constant 6 : index
    %c0_236 = arith.constant 0 : index
    %c0_237 = arith.constant 0 : index
    %410 = vector.load %arg9[%c6_235, %c0_236, %c0_237] : memref<9x8x2xf32, #tpu.memory_space<vmem>>, vector<1x8x2xf32>
    %411 = vector.shape_cast %410 : vector<1x8x2xf32> to vector<8x2xf32>
    %cst_238 = arith.constant dense<0.000000e+00> : vector<8x32xf32>
    %412 = tpu.matmul %411, %409, %cst_238 {dimension_numbers = #tpu.dot_dimension_numbers<[1], [0], [0], [1], [0, 0, 1, 1], [], []>} : vector<8x2xf32>, vector<2x32xf32>, vector<8x32xf32> -> vector<8x32xf32>
    %413 = arith.addf %403, %412 : vector<8x32xf32>
    %414 = vector.extract_strided_slice %350 {offsets = [0, 4], sizes = [2, 28], strides = [1, 1]} : vector<2x32xf32> to vector<2x28xf32>
    %415 = vector.extract_strided_slice %350 {offsets = [0, 0], sizes = [2, 4], strides = [1, 1]} : vector<2x32xf32> to vector<2x4xf32>
    %416 = tpu.concatenate %414, %415 in 1 : vector<2x28xf32>, vector<2x4xf32> -> vector<2x32xf32>
    %c7_239 = arith.constant 7 : index
    %c0_240 = arith.constant 0 : index
    %417 = vector.load %arg18[%c7_239, %c0_240] : memref<9x32xf32, #tpu.memory_space<vmem>>, vector<1x32xf32>
    %418 = vector.broadcast %417 : vector<1x32xf32> to vector<2x32xf32>
    %419 = arith.mulf %416, %418 : vector<2x32xf32>
    %c7_241 = arith.constant 7 : index
    %c0_242 = arith.constant 0 : index
    %c0_243 = arith.constant 0 : index
    %420 = vector.load %arg9[%c7_241, %c0_242, %c0_243] : memref<9x8x2xf32, #tpu.memory_space<vmem>>, vector<1x8x2xf32>
    %421 = vector.shape_cast %420 : vector<1x8x2xf32> to vector<8x2xf32>
    %cst_244 = arith.constant dense<0.000000e+00> : vector<8x32xf32>
    %422 = tpu.matmul %421, %419, %cst_244 {dimension_numbers = #tpu.dot_dimension_numbers<[1], [0], [0], [1], [0, 0, 1, 1], [], []>} : vector<8x2xf32>, vector<2x32xf32>, vector<8x32xf32> -> vector<8x32xf32>
    %423 = arith.addf %413, %422 : vector<8x32xf32>
    %424 = vector.extract_strided_slice %350 {offsets = [0, 5], sizes = [2, 27], strides = [1, 1]} : vector<2x32xf32> to vector<2x27xf32>
    %425 = vector.extract_strided_slice %350 {offsets = [0, 0], sizes = [2, 5], strides = [1, 1]} : vector<2x32xf32> to vector<2x5xf32>
    %426 = tpu.concatenate %424, %425 in 1 : vector<2x27xf32>, vector<2x5xf32> -> vector<2x32xf32>
    %c8_245 = arith.constant 8 : index
    %c0_246 = arith.constant 0 : index
    %427 = vector.load %arg18[%c8_245, %c0_246] : memref<9x32xf32, #tpu.memory_space<vmem>>, vector<1x32xf32>
    %428 = vector.broadcast %427 : vector<1x32xf32> to vector<2x32xf32>
    %429 = arith.mulf %426, %428 : vector<2x32xf32>
    %c8_247 = arith.constant 8 : index
    %c0_248 = arith.constant 0 : index
    %c0_249 = arith.constant 0 : index
    %430 = vector.load %arg9[%c8_247, %c0_248, %c0_249] : memref<9x8x2xf32, #tpu.memory_space<vmem>>, vector<1x8x2xf32>
    %431 = vector.shape_cast %430 : vector<1x8x2xf32> to vector<8x2xf32>
    %cst_250 = arith.constant dense<0.000000e+00> : vector<8x32xf32>
    %432 = tpu.matmul %431, %429, %cst_250 {dimension_numbers = #tpu.dot_dimension_numbers<[1], [0], [0], [1], [0, 0, 1, 1], [], []>} : vector<8x2xf32>, vector<2x32xf32>, vector<8x32xf32> -> vector<8x32xf32>
    %433 = arith.addf %423, %432 : vector<8x32xf32>
    %cst_251 = arith.constant dense<0.000000e+00> : vector<8xf32>
    %434 = vector.multi_reduction <add>, %433, %cst_251 [1] : vector<8x32xf32> to vector<8xf32>
    %435 = vector.shape_cast %434 : vector<8xf32> to vector<8x1xf32>
    %cst_252 = arith.constant 3.125000e-02 : f32
    %436 = vector.broadcast %cst_252 : f32 to vector<8x1xf32>
    %437 = arith.mulf %435, %436 : vector<8x1xf32>
    %438 = arith.mulf %433, %433 : vector<8x32xf32>
    %cst_253 = arith.constant dense<0.000000e+00> : vector<8xf32>
    %439 = vector.multi_reduction <add>, %438, %cst_253 [1] : vector<8x32xf32> to vector<8xf32>
    %440 = vector.shape_cast %439 : vector<8xf32> to vector<8x1xf32>
    %cst_254 = arith.constant 3.125000e-02 : f32
    %441 = vector.broadcast %cst_254 : f32 to vector<8x1xf32>
    %442 = arith.mulf %440, %441 : vector<8x1xf32>
    %443 = arith.mulf %437, %437 : vector<8x1xf32>
    %444 = arith.subf %442, %443 : vector<8x1xf32>
    %cst_255 = arith.constant 0.000000e+00 : f32
    %445 = vector.broadcast %cst_255 : f32 to vector<8x1xf32>
    %446 = arith.maximumf %444, %445 : vector<8x1xf32>
    %cst_256 = arith.constant 9.99999974E-6 : f32
    %447 = vector.broadcast %cst_256 : f32 to vector<8x1xf32>
    %448 = arith.addf %446, %447 : vector<8x1xf32>
    %449 = math.rsqrt %448 : vector<8x1xf32>
    %c0_257 = arith.constant 0 : index
    %c0_258 = arith.constant 0 : index
    %450 = vector.load %arg10[%c0_257, %c0_258] : memref<8x1xf32, #tpu.memory_space<vmem>>, vector<8x1xf32>
    %451 = arith.mulf %449, %450 : vector<8x1xf32>
    %c0_259 = arith.constant 0 : index
    %c0_260 = arith.constant 0 : index
    %452 = vector.load %arg11[%c0_259, %c0_260] : memref<8x1xf32, #tpu.memory_space<vmem>>, vector<8x1xf32>
    %453 = arith.mulf %437, %451 : vector<8x1xf32>
    %454 = arith.subf %452, %453 : vector<8x1xf32>
    %455 = vector.broadcast %451 : vector<8x1xf32> to vector<8x32xf32>
    %456 = arith.mulf %433, %455 : vector<8x32xf32>
    %457 = vector.broadcast %454 : vector<8x1xf32> to vector<8x32xf32>
    %458 = arith.addf %456, %457 : vector<8x32xf32>
    %cst_261 = arith.constant 0.000000e+00 : f32
    %459 = vector.broadcast %cst_261 : f32 to vector<8x32xf32>
    %460 = arith.cmpf oge, %458, %459 : vector<8x32xf32>
    %cst_262 = arith.constant 0.00999999977 : f32
    %461 = vector.broadcast %cst_262 : f32 to vector<8x32xf32>
    %462 = arith.mulf %461, %458 : vector<8x32xf32>
    %463 = arith.select %460, %458, %462 : vector<8x32xi1>, vector<8x32xf32>
    %c0_263 = arith.constant 0 : index
    %c0_264 = arith.constant 0 : index
    %464 = vector.load %arg21[%c0_263, %c0_264] : memref<32x128xbf16, #tpu.memory_space<vmem>>, vector<32x128xbf16>
    %465 = arith.extf %464 : vector<32x128xbf16> to vector<32x128xf32>
    %cst_265 = arith.constant dense<0.000000e+00> : vector<8x128xf32>
    %466 = tpu.matmul %463, %465, %cst_265 {dimension_numbers = #tpu.dot_dimension_numbers<[1], [0], [0], [1], [0, 0, 1, 1], [], []>} : vector<8x32xf32>, vector<32x128xf32>, vector<8x128xf32> -> vector<8x128xf32>
    %467 = vector.extract_strided_slice %466 {offsets = [0, 119], sizes = [8, 9], strides = [1, 1]} : vector<8x128xf32> to vector<8x9xf32>
    %468 = vector.extract_strided_slice %466 {offsets = [0, 0], sizes = [8, 119], strides = [1, 1]} : vector<8x128xf32> to vector<8x119xf32>
    %469 = tpu.concatenate %467, %468 in 1 : vector<8x9xf32>, vector<8x119xf32> -> vector<8x128xf32>
    %c0_266 = arith.constant 0 : index
    %c0_267 = arith.constant 0 : index
    %470 = vector.load %arg17[%c0_266, %c0_267] : memref<9x128xf32, #tpu.memory_space<vmem>>, vector<1x128xf32>
    %471 = vector.broadcast %470 : vector<1x128xf32> to vector<8x128xf32>
    %472 = arith.mulf %469, %471 : vector<8x128xf32>
    %c0_268 = arith.constant 0 : index
    %c0_269 = arith.constant 0 : index
    %c0_270 = arith.constant 0 : index
    %473 = vector.load %arg12[%c0_268, %c0_269, %c0_270] : memref<9x4x8xf32, #tpu.memory_space<vmem>>, vector<1x4x8xf32>
    %474 = vector.shape_cast %473 : vector<1x4x8xf32> to vector<4x8xf32>
    %cst_271 = arith.constant dense<0.000000e+00> : vector<4x128xf32>
    %475 = tpu.matmul %474, %472, %cst_271 {dimension_numbers = #tpu.dot_dimension_numbers<[1], [0], [0], [1], [0, 0, 1, 1], [], []>} : vector<4x8xf32>, vector<8x128xf32>, vector<4x128xf32> -> vector<4x128xf32>
    %476 = vector.extract_strided_slice %466 {offsets = [0, 120], sizes = [8, 8], strides = [1, 1]} : vector<8x128xf32> to vector<8x8xf32>
    %477 = vector.extract_strided_slice %466 {offsets = [0, 0], sizes = [8, 120], strides = [1, 1]} : vector<8x128xf32> to vector<8x120xf32>
    %478 = tpu.concatenate %476, %477 in 1 : vector<8x8xf32>, vector<8x120xf32> -> vector<8x128xf32>
    %c1_272 = arith.constant 1 : index
    %c0_273 = arith.constant 0 : index
    %479 = vector.load %arg17[%c1_272, %c0_273] : memref<9x128xf32, #tpu.memory_space<vmem>>, vector<1x128xf32>
    %480 = vector.broadcast %479 : vector<1x128xf32> to vector<8x128xf32>
    %481 = arith.mulf %478, %480 : vector<8x128xf32>
    %c1_274 = arith.constant 1 : index
    %c0_275 = arith.constant 0 : index
    %c0_276 = arith.constant 0 : index
    %482 = vector.load %arg12[%c1_274, %c0_275, %c0_276] : memref<9x4x8xf32, #tpu.memory_space<vmem>>, vector<1x4x8xf32>
    %483 = vector.shape_cast %482 : vector<1x4x8xf32> to vector<4x8xf32>
    %cst_277 = arith.constant dense<0.000000e+00> : vector<4x128xf32>
    %484 = tpu.matmul %483, %481, %cst_277 {dimension_numbers = #tpu.dot_dimension_numbers<[1], [0], [0], [1], [0, 0, 1, 1], [], []>} : vector<4x8xf32>, vector<8x128xf32>, vector<4x128xf32> -> vector<4x128xf32>
    %485 = arith.addf %475, %484 : vector<4x128xf32>
    %486 = vector.extract_strided_slice %466 {offsets = [0, 121], sizes = [8, 7], strides = [1, 1]} : vector<8x128xf32> to vector<8x7xf32>
    %487 = vector.extract_strided_slice %466 {offsets = [0, 0], sizes = [8, 121], strides = [1, 1]} : vector<8x128xf32> to vector<8x121xf32>
    %488 = tpu.concatenate %486, %487 in 1 : vector<8x7xf32>, vector<8x121xf32> -> vector<8x128xf32>
    %c2_278 = arith.constant 2 : index
    %c0_279 = arith.constant 0 : index
    %489 = vector.load %arg17[%c2_278, %c0_279] : memref<9x128xf32, #tpu.memory_space<vmem>>, vector<1x128xf32>
    %490 = vector.broadcast %489 : vector<1x128xf32> to vector<8x128xf32>
    %491 = arith.mulf %488, %490 : vector<8x128xf32>
    %c2_280 = arith.constant 2 : index
    %c0_281 = arith.constant 0 : index
    %c0_282 = arith.constant 0 : index
    %492 = vector.load %arg12[%c2_280, %c0_281, %c0_282] : memref<9x4x8xf32, #tpu.memory_space<vmem>>, vector<1x4x8xf32>
    %493 = vector.shape_cast %492 : vector<1x4x8xf32> to vector<4x8xf32>
    %cst_283 = arith.constant dense<0.000000e+00> : vector<4x128xf32>
    %494 = tpu.matmul %493, %491, %cst_283 {dimension_numbers = #tpu.dot_dimension_numbers<[1], [0], [0], [1], [0, 0, 1, 1], [], []>} : vector<4x8xf32>, vector<8x128xf32>, vector<4x128xf32> -> vector<4x128xf32>
    %495 = arith.addf %485, %494 : vector<4x128xf32>
    %496 = vector.extract_strided_slice %466 {offsets = [0, 127], sizes = [8, 1], strides = [1, 1]} : vector<8x128xf32> to vector<8x1xf32>
    %497 = vector.extract_strided_slice %466 {offsets = [0, 0], sizes = [8, 127], strides = [1, 1]} : vector<8x128xf32> to vector<8x127xf32>
    %498 = tpu.concatenate %496, %497 in 1 : vector<8x1xf32>, vector<8x127xf32> -> vector<8x128xf32>
    %c3_284 = arith.constant 3 : index
    %c0_285 = arith.constant 0 : index
    %499 = vector.load %arg17[%c3_284, %c0_285] : memref<9x128xf32, #tpu.memory_space<vmem>>, vector<1x128xf32>
    %500 = vector.broadcast %499 : vector<1x128xf32> to vector<8x128xf32>
    %501 = arith.mulf %498, %500 : vector<8x128xf32>
    %c3_286 = arith.constant 3 : index
    %c0_287 = arith.constant 0 : index
    %c0_288 = arith.constant 0 : index
    %502 = vector.load %arg12[%c3_286, %c0_287, %c0_288] : memref<9x4x8xf32, #tpu.memory_space<vmem>>, vector<1x4x8xf32>
    %503 = vector.shape_cast %502 : vector<1x4x8xf32> to vector<4x8xf32>
    %cst_289 = arith.constant dense<0.000000e+00> : vector<4x128xf32>
    %504 = tpu.matmul %503, %501, %cst_289 {dimension_numbers = #tpu.dot_dimension_numbers<[1], [0], [0], [1], [0, 0, 1, 1], [], []>} : vector<4x8xf32>, vector<8x128xf32>, vector<4x128xf32> -> vector<4x128xf32>
    %505 = arith.addf %495, %504 : vector<4x128xf32>
    %c4_290 = arith.constant 4 : index
    %c0_291 = arith.constant 0 : index
    %c0_292 = arith.constant 0 : index
    %506 = vector.load %arg12[%c4_290, %c0_291, %c0_292] : memref<9x4x8xf32, #tpu.memory_space<vmem>>, vector<1x4x8xf32>
    %507 = vector.shape_cast %506 : vector<1x4x8xf32> to vector<4x8xf32>
    %cst_293 = arith.constant dense<0.000000e+00> : vector<4x128xf32>
    %508 = tpu.matmul %507, %466, %cst_293 {dimension_numbers = #tpu.dot_dimension_numbers<[1], [0], [0], [1], [0, 0, 1, 1], [], []>} : vector<4x8xf32>, vector<8x128xf32>, vector<4x128xf32> -> vector<4x128xf32>
    %509 = arith.addf %505, %508 : vector<4x128xf32>
    %510 = vector.extract_strided_slice %466 {offsets = [0, 1], sizes = [8, 127], strides = [1, 1]} : vector<8x128xf32> to vector<8x127xf32>
    %511 = vector.extract_strided_slice %466 {offsets = [0, 0], sizes = [8, 1], strides = [1, 1]} : vector<8x128xf32> to vector<8x1xf32>
    %512 = tpu.concatenate %510, %511 in 1 : vector<8x127xf32>, vector<8x1xf32> -> vector<8x128xf32>
    %c5_294 = arith.constant 5 : index
    %c0_295 = arith.constant 0 : index
    %513 = vector.load %arg17[%c5_294, %c0_295] : memref<9x128xf32, #tpu.memory_space<vmem>>, vector<1x128xf32>
    %514 = vector.broadcast %513 : vector<1x128xf32> to vector<8x128xf32>
    %515 = arith.mulf %512, %514 : vector<8x128xf32>
    %c5_296 = arith.constant 5 : index
    %c0_297 = arith.constant 0 : index
    %c0_298 = arith.constant 0 : index
    %516 = vector.load %arg12[%c5_296, %c0_297, %c0_298] : memref<9x4x8xf32, #tpu.memory_space<vmem>>, vector<1x4x8xf32>
    %517 = vector.shape_cast %516 : vector<1x4x8xf32> to vector<4x8xf32>
    %cst_299 = arith.constant dense<0.000000e+00> : vector<4x128xf32>
    %518 = tpu.matmul %517, %515, %cst_299 {dimension_numbers = #tpu.dot_dimension_numbers<[1], [0], [0], [1], [0, 0, 1, 1], [], []>} : vector<4x8xf32>, vector<8x128xf32>, vector<4x128xf32> -> vector<4x128xf32>
    %519 = arith.addf %509, %518 : vector<4x128xf32>
    %520 = vector.extract_strided_slice %466 {offsets = [0, 7], sizes = [8, 121], strides = [1, 1]} : vector<8x128xf32> to vector<8x121xf32>
    %521 = vector.extract_strided_slice %466 {offsets = [0, 0], sizes = [8, 7], strides = [1, 1]} : vector<8x128xf32> to vector<8x7xf32>
    %522 = tpu.concatenate %520, %521 in 1 : vector<8x121xf32>, vector<8x7xf32> -> vector<8x128xf32>
    %c6_300 = arith.constant 6 : index
    %c0_301 = arith.constant 0 : index
    %523 = vector.load %arg17[%c6_300, %c0_301] : memref<9x128xf32, #tpu.memory_space<vmem>>, vector<1x128xf32>
    %524 = vector.broadcast %523 : vector<1x128xf32> to vector<8x128xf32>
    %525 = arith.mulf %522, %524 : vector<8x128xf32>
    %c6_302 = arith.constant 6 : index
    %c0_303 = arith.constant 0 : index
    %c0_304 = arith.constant 0 : index
    %526 = vector.load %arg12[%c6_302, %c0_303, %c0_304] : memref<9x4x8xf32, #tpu.memory_space<vmem>>, vector<1x4x8xf32>
    %527 = vector.shape_cast %526 : vector<1x4x8xf32> to vector<4x8xf32>
    %cst_305 = arith.constant dense<0.000000e+00> : vector<4x128xf32>
    %528 = tpu.matmul %527, %525, %cst_305 {dimension_numbers = #tpu.dot_dimension_numbers<[1], [0], [0], [1], [0, 0, 1, 1], [], []>} : vector<4x8xf32>, vector<8x128xf32>, vector<4x128xf32> -> vector<4x128xf32>
    %529 = arith.addf %519, %528 : vector<4x128xf32>
    %530 = vector.extract_strided_slice %466 {offsets = [0, 8], sizes = [8, 120], strides = [1, 1]} : vector<8x128xf32> to vector<8x120xf32>
    %531 = vector.extract_strided_slice %466 {offsets = [0, 0], sizes = [8, 8], strides = [1, 1]} : vector<8x128xf32> to vector<8x8xf32>
    %532 = tpu.concatenate %530, %531 in 1 : vector<8x120xf32>, vector<8x8xf32> -> vector<8x128xf32>
    %c7_306 = arith.constant 7 : index
    %c0_307 = arith.constant 0 : index
    %533 = vector.load %arg17[%c7_306, %c0_307] : memref<9x128xf32, #tpu.memory_space<vmem>>, vector<1x128xf32>
    %534 = vector.broadcast %533 : vector<1x128xf32> to vector<8x128xf32>
    %535 = arith.mulf %532, %534 : vector<8x128xf32>
    %c7_308 = arith.constant 7 : index
    %c0_309 = arith.constant 0 : index
    %c0_310 = arith.constant 0 : index
    %536 = vector.load %arg12[%c7_308, %c0_309, %c0_310] : memref<9x4x8xf32, #tpu.memory_space<vmem>>, vector<1x4x8xf32>
    %537 = vector.shape_cast %536 : vector<1x4x8xf32> to vector<4x8xf32>
    %cst_311 = arith.constant dense<0.000000e+00> : vector<4x128xf32>
    %538 = tpu.matmul %537, %535, %cst_311 {dimension_numbers = #tpu.dot_dimension_numbers<[1], [0], [0], [1], [0, 0, 1, 1], [], []>} : vector<4x8xf32>, vector<8x128xf32>, vector<4x128xf32> -> vector<4x128xf32>
    %539 = arith.addf %529, %538 : vector<4x128xf32>
    %540 = vector.extract_strided_slice %466 {offsets = [0, 9], sizes = [8, 119], strides = [1, 1]} : vector<8x128xf32> to vector<8x119xf32>
    %541 = vector.extract_strided_slice %466 {offsets = [0, 0], sizes = [8, 9], strides = [1, 1]} : vector<8x128xf32> to vector<8x9xf32>
    %542 = tpu.concatenate %540, %541 in 1 : vector<8x119xf32>, vector<8x9xf32> -> vector<8x128xf32>
    %c8_312 = arith.constant 8 : index
    %c0_313 = arith.constant 0 : index
    %543 = vector.load %arg17[%c8_312, %c0_313] : memref<9x128xf32, #tpu.memory_space<vmem>>, vector<1x128xf32>
    %544 = vector.broadcast %543 : vector<1x128xf32> to vector<8x128xf32>
    %545 = arith.mulf %542, %544 : vector<8x128xf32>
    %c8_314 = arith.constant 8 : index
    %c0_315 = arith.constant 0 : index
    %c0_316 = arith.constant 0 : index
    %546 = vector.load %arg12[%c8_314, %c0_315, %c0_316] : memref<9x4x8xf32, #tpu.memory_space<vmem>>, vector<1x4x8xf32>
    %547 = vector.shape_cast %546 : vector<1x4x8xf32> to vector<4x8xf32>
    %cst_317 = arith.constant dense<0.000000e+00> : vector<4x128xf32>
    %548 = tpu.matmul %547, %545, %cst_317 {dimension_numbers = #tpu.dot_dimension_numbers<[1], [0], [0], [1], [0, 0, 1, 1], [], []>} : vector<4x8xf32>, vector<8x128xf32>, vector<4x128xf32> -> vector<4x128xf32>
    %549 = arith.addf %539, %548 : vector<4x128xf32>
    %cst_318 = arith.constant dense<0.000000e+00> : vector<4xf32>
    %550 = vector.multi_reduction <add>, %549, %cst_318 [1] : vector<4x128xf32> to vector<4xf32>
    %551 = vector.shape_cast %550 : vector<4xf32> to vector<4x1xf32>
    %cst_319 = arith.constant 7.812500e-03 : f32
    %552 = vector.broadcast %cst_319 : f32 to vector<4x1xf32>
    %553 = arith.mulf %551, %552 : vector<4x1xf32>
    %554 = arith.mulf %549, %549 : vector<4x128xf32>
    %cst_320 = arith.constant dense<0.000000e+00> : vector<4xf32>
    %555 = vector.multi_reduction <add>, %554, %cst_320 [1] : vector<4x128xf32> to vector<4xf32>
    %556 = vector.shape_cast %555 : vector<4xf32> to vector<4x1xf32>
    %cst_321 = arith.constant 7.812500e-03 : f32
    %557 = vector.broadcast %cst_321 : f32 to vector<4x1xf32>
    %558 = arith.mulf %556, %557 : vector<4x1xf32>
    %559 = arith.mulf %553, %553 : vector<4x1xf32>
    %560 = arith.subf %558, %559 : vector<4x1xf32>
    %cst_322 = arith.constant 0.000000e+00 : f32
    %561 = vector.broadcast %cst_322 : f32 to vector<4x1xf32>
    %562 = arith.maximumf %560, %561 : vector<4x1xf32>
    %cst_323 = arith.constant 9.99999974E-6 : f32
    %563 = vector.broadcast %cst_323 : f32 to vector<4x1xf32>
    %564 = arith.addf %562, %563 : vector<4x1xf32>
    %565 = math.rsqrt %564 : vector<4x1xf32>
    %c0_324 = arith.constant 0 : index
    %c0_325 = arith.constant 0 : index
    %566 = vector.load %arg13[%c0_324, %c0_325] : memref<4x1xf32, #tpu.memory_space<vmem>>, vector<4x1xf32>
    %567 = arith.mulf %565, %566 : vector<4x1xf32>
    %c0_326 = arith.constant 0 : index
    %c0_327 = arith.constant 0 : index
    %568 = vector.load %arg14[%c0_326, %c0_327] : memref<4x1xf32, #tpu.memory_space<vmem>>, vector<4x1xf32>
    %569 = arith.mulf %553, %567 : vector<4x1xf32>
    %570 = arith.subf %568, %569 : vector<4x1xf32>
    %571 = vector.broadcast %567 : vector<4x1xf32> to vector<4x128xf32>
    %572 = arith.mulf %549, %571 : vector<4x128xf32>
    %573 = vector.broadcast %570 : vector<4x1xf32> to vector<4x128xf32>
    %574 = arith.addf %572, %573 : vector<4x128xf32>
    %cst_328 = arith.constant 0.000000e+00 : f32
    %575 = vector.broadcast %cst_328 : f32 to vector<4x128xf32>
    %576 = arith.cmpf oge, %574, %575 : vector<4x128xf32>
    %cst_329 = arith.constant 0.00999999977 : f32
    %577 = vector.broadcast %cst_329 : f32 to vector<4x128xf32>
    %578 = arith.mulf %577, %574 : vector<4x128xf32>
    %579 = arith.select %576, %574, %578 : vector<4x128xi1>, vector<4x128xf32>
    %c0_330 = arith.constant 0 : index
    %c0_331 = arith.constant 0 : index
    %580 = vector.load %arg22[%c0_330, %c0_331] : memref<128x512xbf16, #tpu.memory_space<vmem>>, vector<128x512xbf16>
    %581 = arith.extf %580 : vector<128x512xbf16> to vector<128x512xf32>
    %cst_332 = arith.constant dense<0.000000e+00> : vector<4x512xf32>
    %582 = tpu.matmul %579, %581, %cst_332 {dimension_numbers = #tpu.dot_dimension_numbers<[1], [0], [0], [1], [0, 0, 1, 1], [], []>} : vector<4x128xf32>, vector<128x512xf32>, vector<4x512xf32> -> vector<4x512xf32>
    %583 = vector.extract_strided_slice %582 {offsets = [0, 495], sizes = [4, 17], strides = [1, 1]} : vector<4x512xf32> to vector<4x17xf32>
    %584 = vector.extract_strided_slice %582 {offsets = [0, 0], sizes = [4, 495], strides = [1, 1]} : vector<4x512xf32> to vector<4x495xf32>
    %585 = tpu.concatenate %583, %584 in 1 : vector<4x17xf32>, vector<4x495xf32> -> vector<4x512xf32>
    %c0_333 = arith.constant 0 : index
    %c0_334 = arith.constant 0 : index
    %586 = vector.load %arg16[%c0_333, %c0_334] : memref<9x512xf32, #tpu.memory_space<vmem>>, vector<1x512xf32>
    %587 = vector.broadcast %586 : vector<1x512xf32> to vector<4x512xf32>
    %588 = arith.mulf %585, %587 : vector<4x512xf32>
    %c0_335 = arith.constant 0 : index
    %c0_336 = arith.constant 0 : index
    %c0_337 = arith.constant 0 : index
    %589 = vector.load %arg15[%c0_335, %c0_336, %c0_337] : memref<9x3x4xf32, #tpu.memory_space<vmem>>, vector<1x3x4xf32>
    %590 = vector.shape_cast %589 : vector<1x3x4xf32> to vector<3x4xf32>
    %cst_338 = arith.constant dense<0.000000e+00> : vector<3x512xf32>
    %591 = tpu.matmul %590, %588, %cst_338 {dimension_numbers = #tpu.dot_dimension_numbers<[1], [0], [0], [1], [0, 0, 1, 1], [], []>} : vector<3x4xf32>, vector<4x512xf32>, vector<3x512xf32> -> vector<3x512xf32>
    %592 = vector.extract_strided_slice %582 {offsets = [0, 496], sizes = [4, 16], strides = [1, 1]} : vector<4x512xf32> to vector<4x16xf32>
    %593 = vector.extract_strided_slice %582 {offsets = [0, 0], sizes = [4, 496], strides = [1, 1]} : vector<4x512xf32> to vector<4x496xf32>
    %594 = tpu.concatenate %592, %593 in 1 : vector<4x16xf32>, vector<4x496xf32> -> vector<4x512xf32>
    %c1_339 = arith.constant 1 : index
    %c0_340 = arith.constant 0 : index
    %595 = vector.load %arg16[%c1_339, %c0_340] : memref<9x512xf32, #tpu.memory_space<vmem>>, vector<1x512xf32>
    %596 = vector.broadcast %595 : vector<1x512xf32> to vector<4x512xf32>
    %597 = arith.mulf %594, %596 : vector<4x512xf32>
    %c1_341 = arith.constant 1 : index
    %c0_342 = arith.constant 0 : index
    %c0_343 = arith.constant 0 : index
    %598 = vector.load %arg15[%c1_341, %c0_342, %c0_343] : memref<9x3x4xf32, #tpu.memory_space<vmem>>, vector<1x3x4xf32>
    %599 = vector.shape_cast %598 : vector<1x3x4xf32> to vector<3x4xf32>
    %cst_344 = arith.constant dense<0.000000e+00> : vector<3x512xf32>
    %600 = tpu.matmul %599, %597, %cst_344 {dimension_numbers = #tpu.dot_dimension_numbers<[1], [0], [0], [1], [0, 0, 1, 1], [], []>} : vector<3x4xf32>, vector<4x512xf32>, vector<3x512xf32> -> vector<3x512xf32>
    %601 = arith.addf %591, %600 : vector<3x512xf32>
    %602 = vector.extract_strided_slice %582 {offsets = [0, 497], sizes = [4, 15], strides = [1, 1]} : vector<4x512xf32> to vector<4x15xf32>
    %603 = vector.extract_strided_slice %582 {offsets = [0, 0], sizes = [4, 497], strides = [1, 1]} : vector<4x512xf32> to vector<4x497xf32>
    %604 = tpu.concatenate %602, %603 in 1 : vector<4x15xf32>, vector<4x497xf32> -> vector<4x512xf32>
    %c2_345 = arith.constant 2 : index
    %c0_346 = arith.constant 0 : index
    %605 = vector.load %arg16[%c2_345, %c0_346] : memref<9x512xf32, #tpu.memory_space<vmem>>, vector<1x512xf32>
    %606 = vector.broadcast %605 : vector<1x512xf32> to vector<4x512xf32>
    %607 = arith.mulf %604, %606 : vector<4x512xf32>
    %c2_347 = arith.constant 2 : index
    %c0_348 = arith.constant 0 : index
    %c0_349 = arith.constant 0 : index
    %608 = vector.load %arg15[%c2_347, %c0_348, %c0_349] : memref<9x3x4xf32, #tpu.memory_space<vmem>>, vector<1x3x4xf32>
    %609 = vector.shape_cast %608 : vector<1x3x4xf32> to vector<3x4xf32>
    %cst_350 = arith.constant dense<0.000000e+00> : vector<3x512xf32>
    %610 = tpu.matmul %609, %607, %cst_350 {dimension_numbers = #tpu.dot_dimension_numbers<[1], [0], [0], [1], [0, 0, 1, 1], [], []>} : vector<3x4xf32>, vector<4x512xf32>, vector<3x512xf32> -> vector<3x512xf32>
    %611 = arith.addf %601, %610 : vector<3x512xf32>
    %612 = vector.extract_strided_slice %582 {offsets = [0, 511], sizes = [4, 1], strides = [1, 1]} : vector<4x512xf32> to vector<4x1xf32>
    %613 = vector.extract_strided_slice %582 {offsets = [0, 0], sizes = [4, 511], strides = [1, 1]} : vector<4x512xf32> to vector<4x511xf32>
    %614 = tpu.concatenate %612, %613 in 1 : vector<4x1xf32>, vector<4x511xf32> -> vector<4x512xf32>
    %c3_351 = arith.constant 3 : index
    %c0_352 = arith.constant 0 : index
    %615 = vector.load %arg16[%c3_351, %c0_352] : memref<9x512xf32, #tpu.memory_space<vmem>>, vector<1x512xf32>
    %616 = vector.broadcast %615 : vector<1x512xf32> to vector<4x512xf32>
    %617 = arith.mulf %614, %616 : vector<4x512xf32>
    %c3_353 = arith.constant 3 : index
    %c0_354 = arith.constant 0 : index
    %c0_355 = arith.constant 0 : index
    %618 = vector.load %arg15[%c3_353, %c0_354, %c0_355] : memref<9x3x4xf32, #tpu.memory_space<vmem>>, vector<1x3x4xf32>
    %619 = vector.shape_cast %618 : vector<1x3x4xf32> to vector<3x4xf32>
    %cst_356 = arith.constant dense<0.000000e+00> : vector<3x512xf32>
    %620 = tpu.matmul %619, %617, %cst_356 {dimension_numbers = #tpu.dot_dimension_numbers<[1], [0], [0], [1], [0, 0, 1, 1], [], []>} : vector<3x4xf32>, vector<4x512xf32>, vector<3x512xf32> -> vector<3x512xf32>
    %621 = arith.addf %611, %620 : vector<3x512xf32>
    %c4_357 = arith.constant 4 : index
    %c0_358 = arith.constant 0 : index
    %c0_359 = arith.constant 0 : index
    %622 = vector.load %arg15[%c4_357, %c0_358, %c0_359] : memref<9x3x4xf32, #tpu.memory_space<vmem>>, vector<1x3x4xf32>
    %623 = vector.shape_cast %622 : vector<1x3x4xf32> to vector<3x4xf32>
    %cst_360 = arith.constant dense<0.000000e+00> : vector<3x512xf32>
    %624 = tpu.matmul %623, %582, %cst_360 {dimension_numbers = #tpu.dot_dimension_numbers<[1], [0], [0], [1], [0, 0, 1, 1], [], []>} : vector<3x4xf32>, vector<4x512xf32>, vector<3x512xf32> -> vector<3x512xf32>
    %625 = arith.addf %621, %624 : vector<3x512xf32>
    %626 = vector.extract_strided_slice %582 {offsets = [0, 1], sizes = [4, 511], strides = [1, 1]} : vector<4x512xf32> to vector<4x511xf32>
    %627 = vector.extract_strided_slice %582 {offsets = [0, 0], sizes = [4, 1], strides = [1, 1]} : vector<4x512xf32> to vector<4x1xf32>
    %628 = tpu.concatenate %626, %627 in 1 : vector<4x511xf32>, vector<4x1xf32> -> vector<4x512xf32>
    %c5_361 = arith.constant 5 : index
    %c0_362 = arith.constant 0 : index
    %629 = vector.load %arg16[%c5_361, %c0_362] : memref<9x512xf32, #tpu.memory_space<vmem>>, vector<1x512xf32>
    %630 = vector.broadcast %629 : vector<1x512xf32> to vector<4x512xf32>
    %631 = arith.mulf %628, %630 : vector<4x512xf32>
    %c5_363 = arith.constant 5 : index
    %c0_364 = arith.constant 0 : index
    %c0_365 = arith.constant 0 : index
    %632 = vector.load %arg15[%c5_363, %c0_364, %c0_365] : memref<9x3x4xf32, #tpu.memory_space<vmem>>, vector<1x3x4xf32>
    %633 = vector.shape_cast %632 : vector<1x3x4xf32> to vector<3x4xf32>
    %cst_366 = arith.constant dense<0.000000e+00> : vector<3x512xf32>
    %634 = tpu.matmul %633, %631, %cst_366 {dimension_numbers = #tpu.dot_dimension_numbers<[1], [0], [0], [1], [0, 0, 1, 1], [], []>} : vector<3x4xf32>, vector<4x512xf32>, vector<3x512xf32> -> vector<3x512xf32>
    %635 = arith.addf %625, %634 : vector<3x512xf32>
    %636 = vector.extract_strided_slice %582 {offsets = [0, 15], sizes = [4, 497], strides = [1, 1]} : vector<4x512xf32> to vector<4x497xf32>
    %637 = vector.extract_strided_slice %582 {offsets = [0, 0], sizes = [4, 15], strides = [1, 1]} : vector<4x512xf32> to vector<4x15xf32>
    %638 = tpu.concatenate %636, %637 in 1 : vector<4x497xf32>, vector<4x15xf32> -> vector<4x512xf32>
    %c6_367 = arith.constant 6 : index
    %c0_368 = arith.constant 0 : index
    %639 = vector.load %arg16[%c6_367, %c0_368] : memref<9x512xf32, #tpu.memory_space<vmem>>, vector<1x512xf32>
    %640 = vector.broadcast %639 : vector<1x512xf32> to vector<4x512xf32>
    %641 = arith.mulf %638, %640 : vector<4x512xf32>
    %c6_369 = arith.constant 6 : index
    %c0_370 = arith.constant 0 : index
    %c0_371 = arith.constant 0 : index
    %642 = vector.load %arg15[%c6_369, %c0_370, %c0_371] : memref<9x3x4xf32, #tpu.memory_space<vmem>>, vector<1x3x4xf32>
    %643 = vector.shape_cast %642 : vector<1x3x4xf32> to vector<3x4xf32>
    %cst_372 = arith.constant dense<0.000000e+00> : vector<3x512xf32>
    %644 = tpu.matmul %643, %641, %cst_372 {dimension_numbers = #tpu.dot_dimension_numbers<[1], [0], [0], [1], [0, 0, 1, 1], [], []>} : vector<3x4xf32>, vector<4x512xf32>, vector<3x512xf32> -> vector<3x512xf32>
    %645 = arith.addf %635, %644 : vector<3x512xf32>
    %646 = vector.extract_strided_slice %582 {offsets = [0, 16], sizes = [4, 496], strides = [1, 1]} : vector<4x512xf32> to vector<4x496xf32>
    %647 = vector.extract_strided_slice %582 {offsets = [0, 0], sizes = [4, 16], strides = [1, 1]} : vector<4x512xf32> to vector<4x16xf32>
    %648 = tpu.concatenate %646, %647 in 1 : vector<4x496xf32>, vector<4x16xf32> -> vector<4x512xf32>
    %c7_373 = arith.constant 7 : index
    %c0_374 = arith.constant 0 : index
    %649 = vector.load %arg16[%c7_373, %c0_374] : memref<9x512xf32, #tpu.memory_space<vmem>>, vector<1x512xf32>
    %650 = vector.broadcast %649 : vector<1x512xf32> to vector<4x512xf32>
    %651 = arith.mulf %648, %650 : vector<4x512xf32>
    %c7_375 = arith.constant 7 : index
    %c0_376 = arith.constant 0 : index
    %c0_377 = arith.constant 0 : index
    %652 = vector.load %arg15[%c7_375, %c0_376, %c0_377] : memref<9x3x4xf32, #tpu.memory_space<vmem>>, vector<1x3x4xf32>
    %653 = vector.shape_cast %652 : vector<1x3x4xf32> to vector<3x4xf32>
    %cst_378 = arith.constant dense<0.000000e+00> : vector<3x512xf32>
    %654 = tpu.matmul %653, %651, %cst_378 {dimension_numbers = #tpu.dot_dimension_numbers<[1], [0], [0], [1], [0, 0, 1, 1], [], []>} : vector<3x4xf32>, vector<4x512xf32>, vector<3x512xf32> -> vector<3x512xf32>
    %655 = arith.addf %645, %654 : vector<3x512xf32>
    %656 = vector.extract_strided_slice %582 {offsets = [0, 17], sizes = [4, 495], strides = [1, 1]} : vector<4x512xf32> to vector<4x495xf32>
    %657 = vector.extract_strided_slice %582 {offsets = [0, 0], sizes = [4, 17], strides = [1, 1]} : vector<4x512xf32> to vector<4x17xf32>
    %658 = tpu.concatenate %656, %657 in 1 : vector<4x495xf32>, vector<4x17xf32> -> vector<4x512xf32>
    %c8_379 = arith.constant 8 : index
    %c0_380 = arith.constant 0 : index
    %659 = vector.load %arg16[%c8_379, %c0_380] : memref<9x512xf32, #tpu.memory_space<vmem>>, vector<1x512xf32>
    %660 = vector.broadcast %659 : vector<1x512xf32> to vector<4x512xf32>
    %661 = arith.mulf %658, %660 : vector<4x512xf32>
    %c8_381 = arith.constant 8 : index
    %c0_382 = arith.constant 0 : index
    %c0_383 = arith.constant 0 : index
    %662 = vector.load %arg15[%c8_381, %c0_382, %c0_383] : memref<9x3x4xf32, #tpu.memory_space<vmem>>, vector<1x3x4xf32>
    %663 = vector.shape_cast %662 : vector<1x3x4xf32> to vector<3x4xf32>
    %cst_384 = arith.constant dense<0.000000e+00> : vector<3x512xf32>
    %664 = tpu.matmul %663, %661, %cst_384 {dimension_numbers = #tpu.dot_dimension_numbers<[1], [0], [0], [1], [0, 0, 1, 1], [], []>} : vector<3x4xf32>, vector<4x512xf32>, vector<3x512xf32> -> vector<3x512xf32>
    %665 = arith.addf %655, %664 : vector<3x512xf32>
    %cst_385 = arith.constant 0.000000e+00 : f32
    %666 = vector.broadcast %cst_385 : f32 to vector<3x512xf32>
    %667 = arith.cmpf oge, %665, %666 : vector<3x512xf32>
    %cst_386 = arith.constant 0.00999999977 : f32
    %668 = vector.broadcast %cst_386 : f32 to vector<3x512xf32>
    %669 = arith.mulf %668, %665 : vector<3x512xf32>
    %670 = arith.select %667, %665, %669 : vector<3x512xi1>, vector<3x512xf32>
    %c0_387 = arith.constant 0 : index
    %c0_388 = arith.constant 0 : index
    %671 = vector.load %arg25[%c0_387, %c0_388] : memref<3x512xf32, #tpu.memory_space<vmem>>, vector<3x512xf32>
    tpu.vector_store %arg25[%c0_387, %c0_388], %670 {strides = array<i32>} : memref<3x512xf32, #tpu.memory_space<vmem>>, vector<3x512xf32>,
    return
  }
}

</mosaic_0001>

<llo_original>
// kernel: bt_autoencoder_forward.1
$region0: #{bt_autoencoder_forward.1}
  #allocation0 [shape = 'u32[]', space=smem, size = 0x4, offset = 0x4, fixed_abs, tag = 'smem constant byte address 0x4 - core index']
  #allocation1 [shape = 'u32[72,128]{1,0:T(1,128)}', space=vmem, size = 0x9000, scoped, tag = 'internal scratch']
  %s0 = inlined_call_operand.vmem [shape: f32[3,512], index: 0, kind: input, shape index: {}]
  %s1 = inlined_call_operand.vmem [shape: f32[9,8,3], index: 1, kind: input, shape index: {}]
  %s2 = inlined_call_operand.vmem [shape: f32[8,1], index: 2, kind: input, shape index: {}]
  %s3 = inlined_call_operand.vmem [shape: f32[8,1], index: 3, kind: input, shape index: {}]
  %s4 = inlined_call_operand.vmem [shape: f32[9,16,8], index: 4, kind: input, shape index: {}]
  %s5 = inlined_call_operand.vmem [shape: f32[16,1], index: 5, kind: input, shape index: {}]
  %s6 = inlined_call_operand.vmem [shape: f32[16,1], index: 6, kind: input, shape index: {}]
  %s7 = inlined_call_operand.vmem [shape: f32[16,32,16], index: 7, kind: input, shape index: {}]
  %s8 = inlined_call_operand.vmem [shape: f32[32,1], index: 8, kind: input, shape index: {}]
  %s9 = inlined_call_operand.vmem [shape: f32[9,8,2], index: 9, kind: input, shape index: {}]
  %s10 = inlined_call_operand.vmem [shape: f32[8,1], index: 10, kind: input, shape index: {}]
  %s11 = inlined_call_operand.vmem [shape: f32[8,1], index: 11, kind: input, shape index: {}]
  %s12 = inlined_call_operand.vmem [shape: f32[9,4,8], index: 12, kind: input, shape index: {}]
  %s13 = inlined_call_operand.vmem [shape: f32[4,1], index: 13, kind: input, shape index: {}]
  %s14 = inlined_call_operand.vmem [shape: f32[4,1], index: 14, kind: input, shape index: {}]
  %s15 = inlined_call_operand.vmem [shape: f32[9,3,4], index: 15, kind: input, shape index: {}]
  %s16 = inlined_call_operand.vmem [shape: f32[9,512], index: 16, kind: input, shape index: {}]
  %s17 = inlined_call_operand.vmem [shape: f32[9,128], index: 17, kind: input, shape index: {}]
  %s18 = inlined_call_operand.vmem [shape: f32[9,32], index: 18, kind: input, shape index: {}]
  %s19 = inlined_call_operand.vmem [shape: bf16[512,128], index: 19, kind: input, shape index: {}]
  %s20 = inlined_call_operand.vmem [shape: bf16[128,32], index: 20, kind: input, shape index: {}]
  %s21 = inlined_call_operand.vmem [shape: bf16[32,128], index: 21, kind: input, shape index: {}]
  %s22 = inlined_call_operand.vmem [shape: bf16[128,512], index: 22, kind: input, shape index: {}]
  %s23 = inlined_call_operand.vmem [shape: f32[2,32], index: 23, kind: input, shape index: {}]
  %s24 = inlined_call_operand.vmem [shape: f32[2,32,32], index: 24, kind: input, shape index: {}]
  %s25 = inlined_call_operand.vmem [shape: f32[3,512], index: 25, kind: output, shape index: {}]
  %s26 = sld [smem:[#allocation0]]
  $region110: #{bt_autoencoder_forward.1} parent=0
    _
  %s28 = ssub.s32 1, %s26
  %s29 = scalar_select 0, %s28, %s26
  // Predicated region
  $region2: #{bt_autoencoder_forward.1} parent=0 // pred_check
    _
  $region3: #{bt_autoencoder_forward.1} parent=0 // pred_check_branch
    %31 = sbr.rel (0) target = $region5
  $region4: #{bt_autoencoder_forward.1} parent=0 // pred_region
    _
  $region5: #{bt_autoencoder_forward.1} parent=0 // pred_fallthru
    _
  // Predicated region
  $region6: #{bt_autoencoder_forward.1} parent=0 // pred_check
    _
  $region7: #{bt_autoencoder_forward.1} parent=0 // pred_check_branch
    %33 = sbr.rel (0) target = $region9
  $region8: #{bt_autoencoder_forward.1} parent=0 // pred_region
    _
  $region9: #{bt_autoencoder_forward.1} parent=0 // pred_fallthru
    _
  // Predicated region
  $region10: #{bt_autoencoder_forward.1} parent=0 // pred_check
    _
  $region11: #{bt_autoencoder_forward.1} parent=0 // pred_check_branch
    %35 = sbr.rel (0) target = $region13
  $region12: #{bt_autoencoder_forward.1} parent=0 // pred_region
    _
  $region13: #{bt_autoencoder_forward.1} parent=0 // pred_fallthru
    _
  // Predicated region
  $region14: #{bt_autoencoder_forward.1} parent=0 // pred_check
    _
  $region15: #{bt_autoencoder_forward.1} parent=0 // pred_check_branch
    %37 = sbr.rel (0) target = $region17
  $region16: #{bt_autoencoder_forward.1} parent=0 // pred_region
    _
  $region17: #{bt_autoencoder_forward.1} parent=0 // pred_fallthru
    _
  // Predicated region
  $region18: #{bt_autoencoder_forward.1} parent=0 // pred_check
    _
  $region19: #{bt_autoencoder_forward.1} parent=0 // pred_check_branch
    %39 = sbr.rel (0) target = $region21
  $region20: #{bt_autoencoder_forward.1} parent=0 // pred_region
    _
  $region21: #{bt_autoencoder_forward.1} parent=0 // pred_fallthru
    _
  // Predicated region
  $region22: #{bt_autoencoder_forward.1} parent=0 // pred_check
    _
  $region23: #{bt_autoencoder_forward.1} parent=0 // pred_check_branch
    %41 = sbr.rel (0) target = $region25
  $region24: #{bt_autoencoder_forward.1} parent=0 // pred_region
    _
  $region25: #{bt_autoencoder_forward.1} parent=0 // pred_fallthru
    _
  // Predicated region
  $region26: #{bt_autoencoder_forward.1} parent=0 // pred_check
    _
  $region27: #{bt_autoencoder_forward.1} parent=0 // pred_check_branch
    %43 = sbr.rel (0) target = $region29
  $region28: #{bt_autoencoder_forward.1} parent=0 // pred_region
    _
  $region29: #{bt_autoencoder_forward.1} parent=0 // pred_fallthru
    _
  // Predicated region
  $region30: #{bt_autoencoder_forward.1} parent=0 // pred_check
    _
  $region31: #{bt_autoencoder_forward.1} parent=0 // pred_check_branch
    %45 = sbr.rel (0) target = $region33
  $region32: #{bt_autoencoder_forward.1} parent=0 // pred_region
    _
  $region33: #{bt_autoencoder_forward.1} parent=0 // pred_fallthru
    _
  // Predicated region
  $region34: #{bt_autoencoder_forward.1} parent=0 // pred_check
    _
  $region35: #{bt_autoencoder_forward.1} parent=0 // pred_check_branch
    %47 = sbr.rel (0) target = $region37
  $region36: #{bt_autoencoder_forward.1} parent=0 // pred_region
    _
  $region37: #{bt_autoencoder_forward.1} parent=0 // pred_fallthru
    _
  // Predicated region
  $region38: #{bt_autoencoder_forward.1} parent=0 // pred_check
    _
  $region39: #{bt_autoencoder_forward.1} parent=0 // pred_check_branch
    %49 = sbr.rel (0) target = $region41
  $region40: #{bt_autoencoder_forward.1} parent=0 // pred_region
    _
  $region41: #{bt_autoencoder_forward.1} parent=0 // pred_fallthru
    _
  // Predicated region
  $region42: #{bt_autoencoder_forward.1} parent=0 // pred_check
    _
  $region43: #{bt_autoencoder_forward.1} parent=0 // pred_check_branch
    %51 = sbr.rel (0) target = $region45
  $region44: #{bt_autoencoder_forward.1} parent=0 // pred_region
    _
  $region45: #{bt_autoencoder_forward.1} parent=0 // pred_fallthru
    _
  // Predicated region
  $region46: #{bt_autoencoder_forward.1} parent=0 // pred_check
    _
  $region47: #{bt_autoencoder_forward.1} parent=0 // pred_check_branch
    %53 = sbr.rel (0) target = $region49
  $region48: #{bt_autoencoder_forward.1} parent=0 // pred_region
    _
  $region49: #{bt_autoencoder_forward.1} parent=0 // pred_fallthru
    _
  // Predicated region
  $region50: #{bt_autoencoder_forward.1} parent=0 // pred_check
    _
  $region51: #{bt_autoencoder_forward.1} parent=0 // pred_check_branch
    %55 = sbr.rel (0) target = $region53
  $region52: #{bt_autoencoder_forward.1} parent=0 // pred_region
    _
  $region53: #{bt_autoencoder_forward.1} parent=0 // pred_fallthru
    _
  // Predicated region
  $region54: #{bt_autoencoder_forward.1} parent=0 // pred_check
    _
  $region55: #{bt_autoencoder_forward.1} parent=0 // pred_check_branch
    %57 = sbr.rel (0) target = $region57
  $region56: #{bt_autoencoder_forward.1} parent=0 // pred_region
    _
  $region57: #{bt_autoencoder_forward.1} parent=0 // pred_fallthru
    _
  // Predicated region
  $region58: #{bt_autoencoder_forward.1} parent=0 // pred_check
    _
  $region59: #{bt_autoencoder_forward.1} parent=0 // pred_check_branch
    %59 = sbr.rel (0) target = $region61
  $region60: #{bt_autoencoder_forward.1} parent=0 // pred_region
    _
  $region61: #{bt_autoencoder_forward.1} parent=0 // pred_fallthru
    _
  // Predicated region
  $region62: #{bt_autoencoder_forward.1} parent=0 // pred_check
    _
  $region63: #{bt_autoencoder_forward.1} parent=0 // pred_check_branch
    %61 = sbr.rel (0) target = $region65
  $region64: #{bt_autoencoder_forward.1} parent=0 // pred_region
    _
  $region65: #{bt_autoencoder_forward.1} parent=0 // pred_fallthru
    _
  // Predicated region
  $region66: #{bt_autoencoder_forward.1} parent=0 // pred_check
    _
  $region67: #{bt_autoencoder_forward.1} parent=0 // pred_check_branch
    %63 = sbr.rel (0) target = $region69
  $region68: #{bt_autoencoder_forward.1} parent=0 // pred_region
    _
  $region69: #{bt_autoencoder_forward.1} parent=0 // pred_fallthru
    _
  // Predicated region
  $region70: #{bt_autoencoder_forward.1} parent=0 // pred_check
    _
  $region71: #{bt_autoencoder_forward.1} parent=0 // pred_check_branch
    %65 = sbr.rel (0) target = $region73
  $region72: #{bt_autoencoder_forward.1} parent=0 // pred_region
    _
  $region73: #{bt_autoencoder_forward.1} parent=0 // pred_fallthru
    _
  // Predicated region
  $region74: #{bt_autoencoder_forward.1} parent=0 // pred_check
    _
  $region75: #{bt_autoencoder_forward.1} parent=0 // pred_check_branch
    %67 = sbr.rel (0) target = $region77
  $region76: #{bt_autoencoder_forward.1} parent=0 // pred_region
    _
  $region77: #{bt_autoencoder_forward.1} parent=0 // pred_fallthru
    _
  // Predicated region
  $region78: #{bt_autoencoder_forward.1} parent=0 // pred_check
    _
  $region79: #{bt_autoencoder_forward.1} parent=0 // pred_check_branch
    %69 = sbr.rel (0) target = $region81
  $region80: #{bt_autoencoder_forward.1} parent=0 // pred_region
    _
  $region81: #{bt_autoencoder_forward.1} parent=0 // pred_fallthru
    _
  // Predicated region
  $region82: #{bt_autoencoder_forward.1} parent=0 // pred_check
    _
  $region83: #{bt_autoencoder_forward.1} parent=0 // pred_check_branch
    %71 = sbr.rel (0) target = $region85
  $region84: #{bt_autoencoder_forward.1} parent=0 // pred_region
    _
  $region85: #{bt_autoencoder_forward.1} parent=0 // pred_fallthru
    _
  // Predicated region
  $region86: #{bt_autoencoder_forward.1} parent=0 // pred_check
    _
  $region87: #{bt_autoencoder_forward.1} parent=0 // pred_check_branch
    %73 = sbr.rel (0) target = $region89
  $region88: #{bt_autoencoder_forward.1} parent=0 // pred_region
    _
  $region89: #{bt_autoencoder_forward.1} parent=0 // pred_fallthru
    _
  // Predicated region
  $region90: #{bt_autoencoder_forward.1} parent=0 // pred_check
    _
  $region91: #{bt_autoencoder_forward.1} parent=0 // pred_check_branch
    %75 = sbr.rel (0) target = $region93
  $region92: #{bt_autoencoder_forward.1} parent=0 // pred_region
    _
  $region93: #{bt_autoencoder_forward.1} parent=0 // pred_fallthru
    _
  // Predicated region
  $region94: #{bt_autoencoder_forward.1} parent=0 // pred_check
    _
  $region95: #{bt_autoencoder_forward.1} parent=0 // pred_check_branch
    %77 = sbr.rel (0) target = $region97
  $region96: #{bt_autoencoder_forward.1} parent=0 // pred_region
    _
  $region97: #{bt_autoencoder_forward.1} parent=0 // pred_fallthru
    _
  // Predicated region
  $region98: #{bt_autoencoder_forward.1} parent=0 // pred_check
    _
  $region99: #{bt_autoencoder_forward.1} parent=0 // pred_check_branch
    %79 = sbr.rel (0) target = $region101
  $region100: #{bt_autoencoder_forward.1} parent=0 // pred_region
    _
  $region101: #{bt_autoencoder_forward.1} parent=0 // pred_fallthru
    _
  %v80 = vld [vmem:[%s0] sm:$0x77]
  %v81 = vld [vmem:[%s0 + $0x8] sm:$0x77]
  %83 = vst [vmem:[#allocation1] ss:$2 sm:$0xff] %v81
  %v84 = vld.sshfl [vmem:[#allocation1 + $0x8] sm:$0xff pattern:$0x75316420]
  %85 = vrot.lane.b32.xlu0 %v84, 17
  %v86 = vpop.permute.xlu0 %85
  %89 = vst [vmem:[#allocation1] ss:$2 sm:$0xff] %v80
  %s90 = scalar_lea.vmem [#allocation1], 16
  %91 = vst [vmem:[%s90] ss:$2 sm:$0xff] %v81
  %v92 = vld.sshfl [vmem:[#allocation1] sm:$0xff pattern:$0x75316420]
  %v93 = vld.sshfl [vmem:[#allocation1 + $0x8] sm:$0xff pattern:$0x75316420]
  %v94 = vld.sshfl [vmem:[#allocation1 + $0x10] sm:$0xff pattern:$0x75316420]
  %v95 = vld.sshfl [vmem:[#allocation1 + $0x18] sm:$0xff pattern:$0x75316420]
  %96 = vrot.lane.b32.xlu0 %v92, 17
  %v97 = vpop.permute.xlu0 %96
  %98 = vrot.lane.b32.xlu0 %v93, 17
  %v99 = vpop.permute.xlu0 %98
  %100 = vrot.lane.b32.xlu0 %v94, 17
  %v101 = vpop.permute.xlu0 %100
  %102 = vrot.lane.b32.xlu0 %v95, 17
  %v103 = vpop.permute.xlu0 %102
  %vm104 = vcmask 138240
  %v105 = vsel %vm104, %v97, %v99
  %v106 = vsel %vm104, %v99, %v101
  %v107 = vsel %vm104, %v101, %v103
  %v112 = vsel %vm104, %v86, %v97
  %v113 = vld [vmem:[%s16] ss:$8 sm:$0xf]
  %v115 = vperm.slane %v113, 0
  %v116 = vperm.slane %v113, 1
  %v117 = vperm.slane %v113, 2
  %v118 = vperm.slane %v113, 3
  %v123 = vmul.f32 %v112, %v115
  %v124 = vmul.f32 %v105, %v116
  %v125 = vmul.f32 %v106, %v117
  %v126 = vmul.f32 %v107, %v118
  %v127 = vld [vmem:[%s1] sm:$0xff]
  %128 = vst [vmem:[#allocation1] ss:$2 sm:$0xff] %v81
  %v129 = vld.sshfl [vmem:[#allocation1 + $0x8] sm:$0xff pattern:$0x75316420]
  %130 = vrot.lane.b32.xlu0 %v129, 16
  %v131 = vpop.permute.xlu0 %130
  %133 = vst [vmem:[#allocation1] ss:$2 sm:$0xff] %v80
  %s134 = scalar_lea.vmem [#allocation1], 16
  %135 = vst [vmem:[%s134] ss:$2 sm:$0xff] %v81
  %v136 = vld.sshfl [vmem:[#allocation1] sm:$0xff pattern:$0x75316420]
  %v137 = vld.sshfl [vmem:[#allocation1 + $0x8] sm:$0xff pattern:$0x75316420]
  %v138 = vld.sshfl [vmem:[#allocation1 + $0x10] sm:$0xff pattern:$0x75316420]
  %v139 = vld.sshfl [vmem:[#allocation1 + $0x18] sm:$0xff pattern:$0x75316420]
  %140 = vrot.lane.b32.xlu0 %v136, 16
  %v141 = vpop.permute.xlu0 %140
  %142 = vrot.lane.b32.xlu0 %v137, 16
  %v143 = vpop.permute.xlu0 %142
  %144 = vrot.lane.b32.xlu0 %v138, 16
  %v145 = vpop.permute.xlu0 %144
  %146 = vrot.lane.b32.xlu0 %v139, 16
  %v147 = vpop.permute.xlu0 %146
  %vm148 = vcmask 130048
  %v149 = vsel %vm148, %v141, %v143
  %v150 = vsel %vm148, %v143, %v145
  %v151 = vsel %vm148, %v145, %v147
  %v156 = vsel %vm148, %v131, %v141
  %s157 = scalar_lea.vmem %s16, 1
  %v158 = vld [vmem:[%s157] ss:$8 sm:$0xf]
  %v160 = vperm.slane %v158, 0
  %v161 = vperm.slane %v158, 1
  %v162 = vperm.slane %v158, 2
  %v163 = vperm.slane %v158, 3
  %v168 = vmul.f32 %v156, %v160
  %v169 = vmul.f32 %v149, %v161
  %v170 = vmul.f32 %v150, %v162
  %v171 = vmul.f32 %v151, %v163
  %s172 = scalar_lea.vmem %s1, 8
  %v173 = vld [vmem:[%s172] sm:$0xff]
  %vm174 = vcmask 23552
  %v176 = vsel %vm174, %v173, 0
  %vm178 = vcmask 1042432
  %v180 = vsel %vm178, %v168, 0
  %v183 = vsel %vm178, %v169, 0
  %v186 = vsel %vm178, %v170, 0
  %v189 = vsel %vm178, %v171, 0
  %191 = vmatpush.msra.mxu0 0.0
  %192 = vmatpush.msra.mxu0 0.0
  %193 = vmatpush.msra.mxu0 0.0
  %194 = vmatpush.msra.mxu0 0.0
  %195 = vmatpush.msra.mxu0 0.0
  %196 = vmatpush.msra.mxu0 0.0
  %197 = vmatpush.msra.mxu0 0.0
  %198 = vmatpush.msra.mxu0 0.0
  %199 = vmatpush.msra.mxu0 0.0
  %200 = vmatpush.msra.mxu0 0.0
  %201 = vmatpush.msra.mxu0 0.0
  %202 = vmatpush.msra.mxu0 0.0
  %203 = vmatpush.msra.mxu0 0.0
  %204 = vmatpush.msra.mxu0 0.0
  %205 = vmatpush.msra.mxu0 0.0
  %206 = vmatpush.msra.mxu0 %v180
  %207 = vmatmul.f32.gmra.mxu0 %v176
  %v208 = vpop.f32.mrf.mxu0
  %v209 = vadd.f32 0.0, %v208
  %210 = vdwg.mxu0
  %211 = vmatpush.msra.mxu0 0.0
  %212 = vmatpush.msra.mxu0 0.0
  %213 = vmatpush.msra.mxu0 0.0
  %214 = vmatpush.msra.mxu0 0.0
  %215 = vmatpush.msra.mxu0 0.0
  %216 = vmatpush.msra.mxu0 0.0
  %217 = vmatpush.msra.mxu0 0.0
  %218 = vmatpush.msra.mxu0 0.0
  %219 = vmatpush.msra.mxu0 0.0
  %220 = vmatpush.msra.mxu0 0.0
  %221 = vmatpush.msra.mxu0 0.0
  %222 = vmatpush.msra.mxu0 0.0
  %223 = vmatpush.msra.mxu0 0.0
  %224 = vmatpush.msra.mxu0 0.0
  %225 = vmatpush.msra.mxu0 0.0
  %226 = vmatpush.msra.mxu0 %v183
  %227 = vmatmul.f32.gmra.mxu0 %v176
  %v228 = vpop.f32.mrf.mxu0
  %v229 = vadd.f32 0.0, %v228
  %230 = vdwg.mxu0
  %231 = vmatpush.msra.mxu0 0.0
  %232 = vmatpush.msra.mxu0 0.0
  %233 = vmatpush.msra.mxu0 0.0
  %234 = vmatpush.msra.mxu0 0.0
  %235 = vmatpush.msra.mxu0 0.0
  %236 = vmatpush.msra.mxu0 0.0
  %237 = vmatpush.msra.mxu0 0.0
  %238 = vmatpush.msra.mxu0 0.0
  %239 = vmatpush.msra.mxu0 0.0
  %240 = vmatpush.msra.mxu0 0.0
  %241 = vmatpush.msra.mxu0 0.0
  %242 = vmatpush.msra.mxu0 0.0
  %243 = vmatpush.msra.mxu0 0.0
  %244 = vmatpush.msra.mxu0 0.0
  %245 = vmatpush.msra.mxu0 0.0
  %246 = vmatpush.msra.mxu0 %v186
  %247 = vmatmul.f32.gmra.mxu0 %v176
  %v248 = vpop.f32.mrf.mxu0
  %v249 = vadd.f32 0.0, %v248
  %250 = vdwg.mxu0
  %251 = vmatpush.msra.mxu0 0.0
  %252 = vmatpush.msra.mxu0 0.0
  %253 = vmatpush.msra.mxu0 0.0
  %254 = vmatpush.msra.mxu0 0.0
  %255 = vmatpush.msra.mxu0 0.0
  %256 = vmatpush.msra.mxu0 0.0
  %257 = vmatpush.msra.mxu0 0.0
  %258 = vmatpush.msra.mxu0 0.0
  %259 = vmatpush.msra.mxu0 0.0
  %260 = vmatpush.msra.mxu0 0.0
  %261 = vmatpush.msra.mxu0 0.0
  %262 = vmatpush.msra.mxu0 0.0
  %263 = vmatpush.msra.mxu0 0.0
  %264 = vmatpush.msra.mxu0 0.0
  %265 = vmatpush.msra.mxu0 0.0
  %266 = vmatpush.msra.mxu0 %v189
  %267 = vmatmul.f32.gmra.mxu0 %v176
  %v268 = vpop.f32.mrf.mxu0
  %v269 = vadd.f32 0.0, %v268
  %270 = vdwg.mxu0
  %v272 = vsel %vm174, %v127, 0
  %v275 = vsel %vm178, %v123, 0
  %v278 = vsel %vm178, %v124, 0
  %v281 = vsel %vm178, %v125, 0
  %v284 = vsel %vm178, %v126, 0
  %286 = vmatpush.msra.mxu0 0.0
  %287 = vmatpush.msra.mxu0 0.0
  %288 = vmatpush.msra.mxu0 0.0
  %289 = vmatpush.msra.mxu0 0.0
  %290 = vmatpush.msra.mxu0 0.0
  %291 = vmatpush.msra.mxu0 0.0
  %292 = vmatpush.msra.mxu0 0.0
  %293 = vmatpush.msra.mxu0 0.0
  %294 = vmatpush.msra.mxu0 0.0
  %295 = vmatpush.msra.mxu0 0.0
  %296 = vmatpush.msra.mxu0 0.0
  %297 = vmatpush.msra.mxu0 0.0
  %298 = vmatpush.msra.mxu0 0.0
  %299 = vmatpush.msra.mxu0 0.0
  %300 = vmatpush.msra.mxu0 0.0
  %301 = vmatpush.msra.mxu0 %v275
  %302 = vmatmul.f32.gmra.mxu0 %v272
  %v303 = vpop.f32.mrf.mxu0
  %v304 = vadd.f32 %v209, %v303
  %305 = vdwg.mxu0
  %306 = vmatpush.msra.mxu0 0.0
  %307 = vmatpush.msra.mxu0 0.0
  %308 = vmatpush.msra.mxu0 0.0
  %309 = vmatpush.msra.mxu0 0.0
  %310 = vmatpush.msra.mxu0 0.0
  %311 = vmatpush.msra.mxu0 0.0
  %312 = vmatpush.msra.mxu0 0.0
  %313 = vmatpush.msra.mxu0 0.0
  %314 = vmatpush.msra.mxu0 0.0
  %315 = vmatpush.msra.mxu0 0.0
  %316 = vmatpush.msra.mxu0 0.0
  %317 = vmatpush.msra.mxu0 0.0
  %318 = vmatpush.msra.mxu0 0.0
  %319 = vmatpush.msra.mxu0 0.0
  %320 = vmatpush.msra.mxu0 0.0
  %321 = vmatpush.msra.mxu0 %v278
  %322 = vmatmul.f32.gmra.mxu0 %v272
  %v323 = vpop.f32.mrf.mxu0
  %v324 = vadd.f32 %v229, %v323
  %325 = vdwg.mxu0
  %326 = vmatpush.msra.mxu0 0.0
  %327 = vmatpush.msra.mxu0 0.0
  %328 = vmatpush.msra.mxu0 0.0
  %329 = vmatpush.msra.mxu0 0.0
  %330 = vmatpush.msra.mxu0 0.0
  %331 = vmatpush.msra.mxu0 0.0
  %332 = vmatpush.msra.mxu0 0.0
  %333 = vmatpush.msra.mxu0 0.0
  %334 = vmatpush.msra.mxu0 0.0
  %335 = vmatpush.msra.mxu0 0.0
  %336 = vmatpush.msra.mxu0 0.0
  %337 = vmatpush.msra.mxu0 0.0
  %338 = vmatpush.msra.mxu0 0.0
  %339 = vmatpush.msra.mxu0 0.0
  %340 = vmatpush.msra.mxu0 0.0
  %341 = vmatpush.msra.mxu0 %v281
  %342 = vmatmul.f32.gmra.mxu0 %v272
  %v343 = vpop.f32.mrf.mxu0
  %v344 = vadd.f32 %v249, %v343
  %345 = vdwg.mxu0
  %346 = vmatpush.msra.mxu0 0.0
  %347 = vmatpush.msra.mxu0 0.0
  %348 = vmatpush.msra.mxu0 0.0
  %349 = vmatpush.msra.mxu0 0.0
  %350 = vmatpush.msra.mxu0 0.0
  %351 = vmatpush.msra.mxu0 0.0
  %352 = vmatpush.msra.mxu0 0.0
  %353 = vmatpush.msra.mxu0 0.0
  %354 = vmatpush.msra.mxu0 0.0
  %355 = vmatpush.msra.mxu0 0.0
  %356 = vmatpush.msra.mxu0 0.0
  %357 = vmatpush.msra.mxu0 0.0
  %358 = vmatpush.msra.mxu0 0.0
  %359 = vmatpush.msra.mxu0 0.0
  %360 = vmatpush.msra.mxu0 0.0
  %361 = vmatpush.msra.mxu0 %v284
  %362 = vmatmul.f32.gmra.mxu0 %v272
  %v363 = vpop.f32.mrf.mxu0
  %v364 = vadd.f32 %v269, %v363
  %365 = vdwg.mxu0
  %366 = vst [vmem:[#allocation1] ss:$2 sm:$0xff] %v81
  %v367 = vld.sshfl [vmem:[#allocation1 + $0x8] sm:$0xff pattern:$0x75316420]
  %368 = vrot.lane.b32.xlu0 %v367, 15
  %v369 = vpop.permute.xlu0 %368
  %371 = vst [vmem:[#allocation1] ss:$2 sm:$0xff] %v80
  %s372 = scalar_lea.vmem [#allocation1], 16
  %373 = vst [vmem:[%s372] ss:$2 sm:$0xff] %v81
  %v374 = vld.sshfl [vmem:[#allocation1] sm:$0xff pattern:$0x75316420]
  %v375 = vld.sshfl [vmem:[#allocation1 + $0x8] sm:$0xff pattern:$0x75316420]
  %v376 = vld.sshfl [vmem:[#allocation1 + $0x10] sm:$0xff pattern:$0x75316420]
  %v377 = vld.sshfl [vmem:[#allocation1 + $0x18] sm:$0xff pattern:$0x75316420]
  %378 = vrot.lane.b32.xlu0 %v374, 15
  %v379 = vpop.permute.xlu0 %378
  %380 = vrot.lane.b32.xlu0 %v375, 15
  %v381 = vpop.permute.xlu0 %380
  %382 = vrot.lane.b32.xlu0 %v376, 15
  %v383 = vpop.permute.xlu0 %382
  %384 = vrot.lane.b32.xlu0 %v377, 15
  %v385 = vpop.permute.xlu0 %384
  %vm386 = vcmask 121856
  %v387 = vsel %vm386, %v379, %v381
  %v388 = vsel %vm386, %v381, %v383
  %v389 = vsel %vm386, %v383, %v385
  %v394 = vsel %vm386, %v369, %v379
  %s395 = scalar_lea.vmem %s16, 2
  %v396 = vld [vmem:[%s395] ss:$8 sm:$0xf]
  %v398 = vperm.slane %v396, 0
  %v399 = vperm.slane %v396, 1
  %v400 = vperm.slane %v396, 2
  %v401 = vperm.slane %v396, 3
  %v406 = vmul.f32 %v394, %v398
  %v407 = vmul.f32 %v387, %v399
  %v408 = vmul.f32 %v388, %v400
  %v409 = vmul.f32 %v389, %v401
  %s410 = scalar_lea.vmem %s1, 16
  %v411 = vld [vmem:[%s410] sm:$0xff]
  %v413 = vsel %vm174, %v411, 0
  %v416 = vsel %vm178, %v406, 0
  %v419 = vsel %vm178, %v407, 0
  %v422 = vsel %vm178, %v408, 0
  %v425 = vsel %vm178, %v409, 0
  %427 = vmatpush.msra.mxu0 0.0
  %428 = vmatpush.msra.mxu0 0.0
  %429 = vmatpush.msra.mxu0 0.0
  %430 = vmatpush.msra.mxu0 0.0
  %431 = vmatpush.msra.mxu0 0.0
  %432 = vmatpush.msra.mxu0 0.0
  %433 = vmatpush.msra.mxu0 0.0
  %434 = vmatpush.msra.mxu0 0.0
  %435 = vmatpush.msra.mxu0 0.0
  %436 = vmatpush.msra.mxu0 0.0
  %437 = vmatpush.msra.mxu0 0.0
  %438 = vmatpush.msra.mxu0 0.0
  %439 = vmatpush.msra.mxu0 0.0
  %440 = vmatpush.msra.mxu0 0.0
  %441 = vmatpush.msra.mxu0 0.0
  %442 = vmatpush.msra.mxu0 %v416
  %443 = vmatmul.f32.gmra.mxu0 %v413
  %v444 = vpop.f32.mrf.mxu0
  %v445 = vadd.f32 0.0, %v444
  %446 = vdwg.mxu0
  %447 = vmatpush.msra.mxu0 0.0
  %448 = vmatpush.msra.mxu0 0.0
  %449 = vmatpush.msra.mxu0 0.0
  %450 = vmatpush.msra.mxu0 0.0
  %451 = vmatpush.msra.mxu0 0.0
  %452 = vmatpush.msra.mxu0 0.0
  %453 = vmatpush.msra.mxu0 0.0
  %454 = vmatpush.msra.mxu0 0.0
  %455 = vmatpush.msra.mxu0 0.0
  %456 = vmatpush.msra.mxu0 0.0
  %457 = vmatpush.msra.mxu0 0.0
  %458 = vmatpush.msra.mxu0 0.0
  %459 = vmatpush.msra.mxu0 0.0
  %460 = vmatpush.msra.mxu0 0.0
  %461 = vmatpush.msra.mxu0 0.0
  %462 = vmatpush.msra.mxu0 %v419
  %463 = vmatmul.f32.gmra.mxu0 %v413
  %v464 = vpop.f32.mrf.mxu0
  %v465 = vadd.f32 0.0, %v464
  %466 = vdwg.mxu0
  %467 = vmatpush.msra.mxu0 0.0
  %468 = vmatpush.msra.mxu0 0.0
  %469 = vmatpush.msra.mxu0 0.0
  %470 = vmatpush.msra.mxu0 0.0
  %471 = vmatpush.msra.mxu0 0.0
  %472 = vmatpush.msra.mxu0 0.0
  %473 = vmatpush.msra.mxu0 0.0
  %474 = vmatpush.msra.mxu0 0.0
  %475 = vmatpush.msra.mxu0 0.0
  %476 = vmatpush.msra.mxu0 0.0
  %477 = vmatpush.msra.mxu0 0.0
  %478 = vmatpush.msra.mxu0 0.0
  %479 = vmatpush.msra.mxu0 0.0
  %480 = vmatpush.msra.mxu0 0.0
  %481 = vmatpush.msra.mxu0 0.0
  %482 = vmatpush.msra.mxu0 %v422
  %483 = vmatmul.f32.gmra.mxu0 %v413
  %v484 = vpop.f32.mrf.mxu0
  %v485 = vadd.f32 0.0, %v484
  %486 = vdwg.mxu0
  %487 = vmatpush.msra.mxu0 0.0
  %488 = vmatpush.msra.mxu0 0.0
  %489 = vmatpush.msra.mxu0 0.0
  %490 = vmatpush.msra.mxu0 0.0
  %491 = vmatpush.msra.mxu0 0.0
  %492 = vmatpush.msra.mxu0 0.0
  %493 = vmatpush.msra.mxu0 0.0
  %494 = vmatpush.msra.mxu0 0.0
  %495 = vmatpush.msra.mxu0 0.0
  %496 = vmatpush.msra.mxu0 0.0
  %497 = vmatpush.msra.mxu0 0.0
  %498 = vmatpush.msra.mxu0 0.0
  %499 = vmatpush.msra.mxu0 0.0
  %500 = vmatpush.msra.mxu0 0.0
  %501 = vmatpush.msra.mxu0 0.0
  %502 = vmatpush.msra.mxu0 %v425
  %503 = vmatmul.f32.gmra.mxu0 %v413
  %v504 = vpop.f32.mrf.mxu0
  %v505 = vadd.f32 0.0, %v504
  %506 = vdwg.mxu0
  %v507 = vadd.f32 %v304, %v445
  %v508 = vadd.f32 %v324, %v465
  %v509 = vadd.f32 %v344, %v485
  %v510 = vadd.f32 %v364, %v505
  %511 = vst [vmem:[#allocation1] ss:$2 sm:$0xff] %v81
  %v512 = vld.sshfl [vmem:[#allocation1 + $0x8] sm:$0xff pattern:$0x75316420]
  %513 = vrot.lane.b32.xlu0 %v512, 1
  %v514 = vpop.permute.xlu0 %513
  %516 = vst [vmem:[#allocation1] ss:$2 sm:$0xff] %v80
  %s517 = scalar_lea.vmem [#allocation1], 16
  %518 = vst [vmem:[%s517] ss:$2 sm:$0xff] %v81
  %v519 = vld.sshfl [vmem:[#allocation1] sm:$0xff pattern:$0x75316420]
  %v520 = vld.sshfl [vmem:[#allocation1 + $0x8] sm:$0xff pattern:$0x75316420]
  %v521 = vld.sshfl [vmem:[#allocation1 + $0x10] sm:$0xff pattern:$0x75316420]
  %v522 = vld.sshfl [vmem:[#allocation1 + $0x18] sm:$0xff pattern:$0x75316420]
  %523 = vrot.lane.b32.xlu0 %v519, 1
  %v524 = vpop.permute.xlu0 %523
  %525 = vrot.lane.b32.xlu0 %v520, 1
  %v526 = vpop.permute.xlu0 %525
  %527 = vrot.lane.b32.xlu0 %v521, 1
  %v528 = vpop.permute.xlu0 %527
  %529 = vrot.lane.b32.xlu0 %v522, 1
  %v530 = vpop.permute.xlu0 %529
  %vm531 = vcmask 7168
  %v532 = vsel %vm531, %v524, %v526
  %v533 = vsel %vm531, %v526, %v528
  %v534 = vsel %vm531, %v528, %v530
  %v539 = vsel %vm531, %v514, %v524
  %s540 = scalar_lea.vmem %s16, 3
  %v541 = vld [vmem:[%s540] ss:$8 sm:$0xf]
  %v543 = vperm.slane %v541, 0
  %v544 = vperm.slane %v541, 1
  %v545 = vperm.slane %v541, 2
  %v546 = vperm.slane %v541, 3
  %v551 = vmul.f32 %v539, %v543
  %v552 = vmul.f32 %v532, %v544
  %v553 = vmul.f32 %v533, %v545
  %v554 = vmul.f32 %v534, %v546
  %s555 = scalar_lea.vmem %s1, 24
  %v556 = vld [vmem:[%s555] sm:$0xff]
  %v558 = vsel %vm174, %v556, 0
  %v561 = vsel %vm178, %v551, 0
  %v564 = vsel %vm178, %v552, 0
  %v567 = vsel %vm178, %v553, 0
  %v570 = vsel %vm178, %v554, 0
  %572 = vmatpush.msra.mxu0 0.0
  %573 = vmatpush.msra.mxu0 0.0
  %574 = vmatpush.msra.mxu0 0.0
  %575 = vmatpush.msra.mxu0 0.0
  %576 = vmatpush.msra.mxu0 0.0
  %577 = vmatpush.msra.mxu0 0.0
  %578 = vmatpush.msra.mxu0 0.0
  %579 = vmatpush.msra.mxu0 0.0
  %580 = vmatpush.msra.mxu0 0.0
  %581 = vmatpush.msra.mxu0 0.0
  %582 = vmatpush.msra.mxu0 0.0
  %583 = vmatpush.msra.mxu0 0.0
  %584 = vmatpush.msra.mxu0 0.0
  %585 = vmatpush.msra.mxu0 0.0
  %586 = vmatpush.msra.mxu0 0.0
  %587 = vmatpush.msra.mxu0 %v561
  %588 = vmatmul.f32.gmra.mxu0 %v558
  %v589 = vpop.f32.mrf.mxu0
  %v590 = vadd.f32 0.0, %v589
  %591 = vdwg.mxu0
  %592 = vmatpush.msra.mxu0 0.0
  %593 = vmatpush.msra.mxu0 0.0
  %594 = vmatpush.msra.mxu0 0.0
  %595 = vmatpush.msra.mxu0 0.0
  %596 = vmatpush.msra.mxu0 0.0
  %597 = vmatpush.msra.mxu0 0.0
  %598 = vmatpush.msra.mxu0 0.0
  %599 = vmatpush.msra.mxu0 0.0
  %600 = vmatpush.msra.mxu0 0.0
  %601 = vmatpush.msra.mxu0 0.0
  %602 = vmatpush.msra.mxu0 0.0
  %603 = vmatpush.msra.mxu0 0.0
  %604 = vmatpush.msra.mxu0 0.0
  %605 = vmatpush.msra.mxu0 0.0
  %606 = vmatpush.msra.mxu0 0.0
  %607 = vmatpush.msra.mxu0 %v564
  %608 = vmatmul.f32.gmra.mxu0 %v558
  %v609 = vpop.f32.mrf.mxu0
  %v610 = vadd.f32 0.0, %v609
  %611 = vdwg.mxu0
  %612 = vmatpush.msra.mxu0 0.0
  %613 = vmatpush.msra.mxu0 0.0
  %614 = vmatpush.msra.mxu0 0.0
  %615 = vmatpush.msra.mxu0 0.0
  %616 = vmatpush.msra.mxu0 0.0
  %617 = vmatpush.msra.mxu0 0.0
  %618 = vmatpush.msra.mxu0 0.0
  %619 = vmatpush.msra.mxu0 0.0
  %620 = vmatpush.msra.mxu0 0.0
  %621 = vmatpush.msra.mxu0 0.0
  %622 = vmatpush.msra.mxu0 0.0
  %623 = vmatpush.msra.mxu0 0.0
  %624 = vmatpush.msra.mxu0 0.0
  %625 = vmatpush.msra.mxu0 0.0
  %626 = vmatpush.msra.mxu0 0.0
  %627 = vmatpush.msra.mxu0 %v567
  %628 = vmatmul.f32.gmra.mxu0 %v558
  %v629 = vpop.f32.mrf.mxu0
  %v630 = vadd.f32 0.0, %v629
  %631 = vdwg.mxu0
  %632 = vmatpush.msra.mxu0 0.0
  %633 = vmatpush.msra.mxu0 0.0
  %634 = vmatpush.msra.mxu0 0.0
  %635 = vmatpush.msra.mxu0 0.0
  %636 = vmatpush.msra.mxu0 0.0
  %637 = vmatpush.msra.mxu0 0.0
  %638 = vmatpush.msra.mxu0 0.0
  %639 = vmatpush.msra.mxu0 0.0
  %640 = vmatpush.msra.mxu0 0.0
  %641 = vmatpush.msra.mxu0 0.0
  %642 = vmatpush.msra.mxu0 0.0
  %643 = vmatpush.msra.mxu0 0.0
  %644 = vmatpush.msra.mxu0 0.0
  %645 = vmatpush.msra.mxu0 0.0
  %646 = vmatpush.msra.mxu0 0.0
  %647 = vmatpush.msra.mxu0 %v570
  %648 = vmatmul.f32.gmra.mxu0 %v558
  %v649 = vpop.f32.mrf.mxu0
  %v650 = vadd.f32 0.0, %v649
  %651 = vdwg.mxu0
  %v652 = vadd.f32 %v507, %v590
  %v653 = vadd.f32 %v508, %v610
  %v654 = vadd.f32 %v509, %v630
  %v655 = vadd.f32 %v510, %v650
  %s656 = scalar_lea.vmem %s1, 32
  %v657 = vld [vmem:[%s656] sm:$0xff]
  %658 = vst [vmem:[#allocation1] ss:$2 sm:$0xff] %v80
  %s659 = scalar_lea.vmem [#allocation1], 16
  %660 = vst [vmem:[%s659] ss:$2 sm:$0xff] %v81
  %v661 = vld.sshfl [vmem:[#allocation1] sm:$0xff pattern:$0x75316420]
  %v662 = vld.sshfl [vmem:[#allocation1 + $0x8] sm:$0xff pattern:$0x75316420]
  %v663 = vld.sshfl [vmem:[#allocation1 + $0x10] sm:$0xff pattern:$0x75316420]
  %v664 = vld.sshfl [vmem:[#allocation1 + $0x18] sm:$0xff pattern:$0x75316420]
  %v666 = vsel %vm174, %v657, 0
  %v668 = vsel %vm178, %v661, 0
  %v670 = vsel %vm178, %v662, 0
  %v672 = vsel %vm178, %v663, 0
  %v674 = vsel %vm178, %v664, 0
  %676 = vmatpush.msra.mxu0 0.0
  %677 = vmatpush.msra.mxu0 0.0
  %678 = vmatpush.msra.mxu0 0.0
  %679 = vmatpush.msra.mxu0 0.0
  %680 = vmatpush.msra.mxu0 0.0
  %681 = vmatpush.msra.mxu0 0.0
  %682 = vmatpush.msra.mxu0 0.0
  %683 = vmatpush.msra.mxu0 0.0
  %684 = vmatpush.msra.mxu0 0.0
  %685 = vmatpush.msra.mxu0 0.0
  %686 = vmatpush.msra.mxu0 0.0
  %687 = vmatpush.msra.mxu0 0.0
  %688 = vmatpush.msra.mxu0 0.0
  %689 = vmatpush.msra.mxu0 0.0
  %690 = vmatpush.msra.mxu0 0.0
  %691 = vmatpush.msra.mxu0 %v668
  %692 = vmatmul.f32.gmra.mxu0 %v666
  %v693 = vpop.f32.mrf.mxu0
  %v694 = vadd.f32 0.0, %v693
  %695 = vdwg.mxu0
  %696 = vmatpush.msra.mxu0 0.0
  %697 = vmatpush.msra.mxu0 0.0
  %698 = vmatpush.msra.mxu0 0.0
  %699 = vmatpush.msra.mxu0 0.0
  %700 = vmatpush.msra.mxu0 0.0
  %701 = vmatpush.msra.mxu0 0.0
  %702 = vmatpush.msra.mxu0 0.0
  %703 = vmatpush.msra.mxu0 0.0
  %704 = vmatpush.msra.mxu0 0.0
  %705 = vmatpush.msra.mxu0 0.0
  %706 = vmatpush.msra.mxu0 0.0
  %707 = vmatpush.msra.mxu0 0.0
  %708 = vmatpush.msra.mxu0 0.0
  %709 = vmatpush.msra.mxu0 0.0
  %710 = vmatpush.msra.mxu0 0.0
  %711 = vmatpush.msra.mxu0 %v670
  %712 = vmatmul.f32.gmra.mxu0 %v666
  %v713 = vpop.f32.mrf.mxu0
  %v714 = vadd.f32 0.0, %v713
  %715 = vdwg.mxu0
  %716 = vmatpush.msra.mxu0 0.0
  %717 = vmatpush.msra.mxu0 0.0
  %718 = vmatpush.msra.mxu0 0.0
  %719 = vmatpush.msra.mxu0 0.0
  %720 = vmatpush.msra.mxu0 0.0
  %721 = vmatpush.msra.mxu0 0.0
  %722 = vmatpush.msra.mxu0 0.0
  %723 = vmatpush.msra.mxu0 0.0
  %724 = vmatpush.msra.mxu0 0.0
  %725 = vmatpush.msra.mxu0 0.0
  %726 = vmatpush.msra.mxu0 0.0
  %727 = vmatpush.msra.mxu0 0.0
  %728 = vmatpush.msra.mxu0 0.0
  %729 = vmatpush.msra.mxu0 0.0
  %730 = vmatpush.msra.mxu0 0.0
  %731 = vmatpush.msra.mxu0 %v672
  %732 = vmatmul.f32.gmra.mxu0 %v666
  %v733 = vpop.f32.mrf.mxu0
  %v734 = vadd.f32 0.0, %v733
  %735 = vdwg.mxu0
  %736 = vmatpush.msra.mxu0 0.0
  %737 = vmatpush.msra.mxu0 0.0
  %738 = vmatpush.msra.mxu0 0.0
  %739 = vmatpush.msra.mxu0 0.0
  %740 = vmatpush.msra.mxu0 0.0
  %741 = vmatpush.msra.mxu0 0.0
  %742 = vmatpush.msra.mxu0 0.0
  %743 = vmatpush.msra.mxu0 0.0
  %744 = vmatpush.msra.mxu0 0.0
  %745 = vmatpush.msra.mxu0 0.0
  %746 = vmatpush.msra.mxu0 0.0
  %747 = vmatpush.msra.mxu0 0.0
  %748 = vmatpush.msra.mxu0 0.0
  %749 = vmatpush.msra.mxu0 0.0
  %750 = vmatpush.msra.mxu0 0.0
  %751 = vmatpush.msra.mxu0 %v674
  %752 = vmatmul.f32.gmra.mxu0 %v666
  %v753 = vpop.f32.mrf.mxu0
  %v754 = vadd.f32 0.0, %v753
  %755 = vdwg.mxu0
  %v756 = vadd.f32 %v652, %v694
  %v757 = vadd.f32 %v653, %v714
  %v758 = vadd.f32 %v654, %v734
  %v759 = vadd.f32 %v655, %v754
  %760 = vst [vmem:[#allocation1] ss:$2 sm:$0xff] %v80
  %s761 = scalar_lea.vmem [#allocation1], 16
  %762 = vst [vmem:[%s761] ss:$2 sm:$0xff] %v81
  %v763 = vld.sshfl [vmem:[#allocation1] sm:$0xff pattern:$0x75316420]
  %v764 = vld.sshfl [vmem:[#allocation1 + $0x8] sm:$0xff pattern:$0x75316420]
  %v765 = vld.sshfl [vmem:[#allocation1 + $0x10] sm:$0xff pattern:$0x75316420]
  %v766 = vld.sshfl [vmem:[#allocation1 + $0x18] sm:$0xff pattern:$0x75316420]
  %767 = vrot.lane.b32.xlu0 %v763, 127
  %v768 = vpop.permute.xlu0 %767
  %769 = vrot.lane.b32.xlu0 %v764, 127
  %v770 = vpop.permute.xlu0 %769
  %771 = vrot.lane.b32.xlu0 %v765, 127
  %v772 = vpop.permute.xlu0 %771
  %773 = vrot.lane.b32.xlu0 %v766, 127
  %v774 = vpop.permute.xlu0 %773
  %vm775 = vcmask 1039360
  %v776 = vsel %vm775, %v768, %v770
  %v777 = vsel %vm775, %v770, %v772
  %v778 = vsel %vm775, %v772, %v774
  %783 = vst [vmem:[#allocation1] ss:$2 sm:$0xff] %v80
  %v784 = vld.sshfl [vmem:[#allocation1] sm:$0xff pattern:$0x75316420]
  %785 = vrot.lane.b32.xlu0 %v784, 127
  %v786 = vpop.permute.xlu0 %785
  %v788 = vsel %vm775, %v774, %v786
  %s789 = scalar_lea.vmem %s16, 5
  %v790 = vld [vmem:[%s789] ss:$8 sm:$0xf]
  %v792 = vperm.slane %v790, 0
  %v793 = vperm.slane %v790, 1
  %v794 = vperm.slane %v790, 2
  %v795 = vperm.slane %v790, 3
  %v800 = vmul.f32 %v776, %v792
  %v801 = vmul.f32 %v777, %v793
  %v802 = vmul.f32 %v778, %v794
  %v803 = vmul.f32 %v788, %v795
  %s804 = scalar_lea.vmem %s1, 40
  %v805 = vld [vmem:[%s804] sm:$0xff]
  %v807 = vsel %vm174, %v805, 0
  %v810 = vsel %vm178, %v800, 0
  %v813 = vsel %vm178, %v801, 0
  %v816 = vsel %vm178, %v802, 0
  %v819 = vsel %vm178, %v803, 0
  %821 = vmatpush.msra.mxu0 0.0
  %822 = vmatpush.msra.mxu0 0.0
  %823 = vmatpush.msra.mxu0 0.0
  %824 = vmatpush.msra.mxu0 0.0
  %825 = vmatpush.msra.mxu0 0.0
  %826 = vmatpush.msra.mxu0 0.0
  %827 = vmatpush.msra.mxu0 0.0
  %828 = vmatpush.msra.mxu0 0.0
  %829 = vmatpush.msra.mxu0 0.0
  %830 = vmatpush.msra.mxu0 0.0
  %831 = vmatpush.msra.mxu0 0.0
  %832 = vmatpush.msra.mxu0 0.0
  %833 = vmatpush.msra.mxu0 0.0
  %834 = vmatpush.msra.mxu0 0.0
  %835 = vmatpush.msra.mxu0 0.0
  %836 = vmatpush.msra.mxu0 %v810
  %837 = vmatmul.f32.gmra.mxu0 %v807
  %v838 = vpop.f32.mrf.mxu0
  %v839 = vadd.f32 0.0, %v838
  %840 = vdwg.mxu0
  %841 = vmatpush.msra.mxu0 0.0
  %842 = vmatpush.msra.mxu0 0.0
  %843 = vmatpush.msra.mxu0 0.0
  %844 = vmatpush.msra.mxu0 0.0
  %845 = vmatpush.msra.mxu0 0.0
  %846 = vmatpush.msra.mxu0 0.0
  %847 = vmatpush.msra.mxu0 0.0
  %848 = vmatpush.msra.mxu0 0.0
  %849 = vmatpush.msra.mxu0 0.0
  %850 = vmatpush.msra.mxu0 0.0
  %851 = vmatpush.msra.mxu0 0.0
  %852 = vmatpush.msra.mxu0 0.0
  %853 = vmatpush.msra.mxu0 0.0
  %854 = vmatpush.msra.mxu0 0.0
  %855 = vmatpush.msra.mxu0 0.0
  %856 = vmatpush.msra.mxu0 %v813
  %857 = vmatmul.f32.gmra.mxu0 %v807
  %v858 = vpop.f32.mrf.mxu0
  %v859 = vadd.f32 0.0, %v858
  %860 = vdwg.mxu0
  %861 = vmatpush.msra.mxu0 0.0
  %862 = vmatpush.msra.mxu0 0.0
  %863 = vmatpush.msra.mxu0 0.0
  %864 = vmatpush.msra.mxu0 0.0
  %865 = vmatpush.msra.mxu0 0.0
  %866 = vmatpush.msra.mxu0 0.0
  %867 = vmatpush.msra.mxu0 0.0
  %868 = vmatpush.msra.mxu0 0.0
  %869 = vmatpush.msra.mxu0 0.0
  %870 = vmatpush.msra.mxu0 0.0
  %871 = vmatpush.msra.mxu0 0.0
  %872 = vmatpush.msra.mxu0 0.0
  %873 = vmatpush.msra.mxu0 0.0
  %874 = vmatpush.msra.mxu0 0.0
  %875 = vmatpush.msra.mxu0 0.0
  %876 = vmatpush.msra.mxu0 %v816
  %877 = vmatmul.f32.gmra.mxu0 %v807
  %v878 = vpop.f32.mrf.mxu0
  %v879 = vadd.f32 0.0, %v878
  %880 = vdwg.mxu0
  %881 = vmatpush.msra.mxu0 0.0
  %882 = vmatpush.msra.mxu0 0.0
  %883 = vmatpush.msra.mxu0 0.0
  %884 = vmatpush.msra.mxu0 0.0
  %885 = vmatpush.msra.mxu0 0.0
  %886 = vmatpush.msra.mxu0 0.0
  %887 = vmatpush.msra.mxu0 0.0
  %888 = vmatpush.msra.mxu0 0.0
  %889 = vmatpush.msra.mxu0 0.0
  %890 = vmatpush.msra.mxu0 0.0
  %891 = vmatpush.msra.mxu0 0.0
  %892 = vmatpush.msra.mxu0 0.0
  %893 = vmatpush.msra.mxu0 0.0
  %894 = vmatpush.msra.mxu0 0.0
  %895 = vmatpush.msra.mxu0 0.0
  %896 = vmatpush.msra.mxu0 %v819
  %897 = vmatmul.f32.gmra.mxu0 %v807
  %v898 = vpop.f32.mrf.mxu0
  %v899 = vadd.f32 0.0, %v898
  %900 = vdwg.mxu0
  %v901 = vadd.f32 %v756, %v839
  %v902 = vadd.f32 %v757, %v859
  %v903 = vadd.f32 %v758, %v879
  %v904 = vadd.f32 %v759, %v899
  %905 = vst [vmem:[#allocation1] ss:$2 sm:$0xff] %v80
  %s906 = scalar_lea.vmem [#allocation1], 16
  %907 = vst [vmem:[%s906] ss:$2 sm:$0xff] %v81
  %v908 = vld.sshfl [vmem:[#allocation1] sm:$0xff pattern:$0x75316420]
  %v909 = vld.sshfl [vmem:[#allocation1 + $0x8] sm:$0xff pattern:$0x75316420]
  %v910 = vld.sshfl [vmem:[#allocation1 + $0x10] sm:$0xff pattern:$0x75316420]
  %v911 = vld.sshfl [vmem:[#allocation1 + $0x18] sm:$0xff pattern:$0x75316420]
  %912 = vrot.lane.b32.xlu0 %v908, 113
  %v913 = vpop.permute.xlu0 %912
  %914 = vrot.lane.b32.xlu0 %v909, 113
  %v915 = vpop.permute.xlu0 %914
  %916 = vrot.lane.b32.xlu0 %v910, 113
  %v917 = vpop.permute.xlu0 %916
  %918 = vrot.lane.b32.xlu0 %v911, 113
  %v919 = vpop.permute.xlu0 %918
  %vm920 = vcmask 924672
  %v921 = vsel %vm920, %v913, %v915
  %v922 = vsel %vm920, %v915, %v917
  %v923 = vsel %vm920, %v917, %v919
  %928 = vst [vmem:[#allocation1] ss:$2 sm:$0xff] %v80
  %v929 = vld.sshfl [vmem:[#allocation1] sm:$0xff pattern:$0x75316420]
  %930 = vrot.lane.b32.xlu0 %v929, 113
  %v931 = vpop.permute.xlu0 %930
  %v933 = vsel %vm920, %v919, %v931
  %s934 = scalar_lea.vmem %s16, 6
  %v935 = vld [vmem:[%s934] ss:$8 sm:$0xf]
  %v937 = vperm.slane %v935, 0
  %v938 = vperm.slane %v935, 1
  %v939 = vperm.slane %v935, 2
  %v940 = vperm.slane %v935, 3
  %v945 = vmul.f32 %v921, %v937
  %v946 = vmul.f32 %v922, %v938
  %v947 = vmul.f32 %v923, %v939
  %v948 = vmul.f32 %v933, %v940
  %s949 = scalar_lea.vmem %s1, 48
  %v950 = vld [vmem:[%s949] sm:$0xff]
  %v952 = vsel %vm174, %v950, 0
  %v955 = vsel %vm178, %v945, 0
  %v958 = vsel %vm178, %v946, 0
  %v961 = vsel %vm178, %v947, 0
  %v964 = vsel %vm178, %v948, 0
  %966 = vmatpush.msra.mxu0 0.0
  %967 = vmatpush.msra.mxu0 0.0
  %968 = vmatpush.msra.mxu0 0.0
  %969 = vmatpush.msra.mxu0 0.0
  %970 = vmatpush.msra.mxu0 0.0
  %971 = vmatpush.msra.mxu0 0.0
  %972 = vmatpush.msra.mxu0 0.0
  %973 = vmatpush.msra.mxu0 0.0
  %974 = vmatpush.msra.mxu0 0.0
  %975 = vmatpush.msra.mxu0 0.0
  %976 = vmatpush.msra.mxu0 0.0
  %977 = vmatpush.msra.mxu0 0.0
  %978 = vmatpush.msra.mxu0 0.0
  %979 = vmatpush.msra.mxu0 0.0
  %980 = vmatpush.msra.mxu0 0.0
  %981 = vmatpush.msra.mxu0 %v955
  %982 = vmatmul.f32.gmra.mxu0 %v952
  %v983 = vpop.f32.mrf.mxu0
  %v984 = vadd.f32 0.0, %v983
  %985 = vdwg.mxu0
  %986 = vmatpush.msra.mxu0 0.0
  %987 = vmatpush.msra.mxu0 0.0
  %988 = vmatpush.msra.mxu0 0.0
  %989 = vmatpush.msra.mxu0 0.0
  %990 = vmatpush.msra.mxu0 0.0
  %991 = vmatpush.msra.mxu0 0.0
  %992 = vmatpush.msra.mxu0 0.0
  %993 = vmatpush.msra.mxu0 0.0
  %994 = vmatpush.msra.mxu0 0.0
  %995 = vmatpush.msra.mxu0 0.0
  %996 = vmatpush.msra.mxu0 0.0
  %997 = vmatpush.msra.mxu0 0.0
  %998 = vmatpush.msra.mxu0 0.0
  %999 = vmatpush.msra.mxu0 0.0
  %1000 = vmatpush.msra.mxu0 0.0
  %1001 = vmatpush.msra.mxu0 %v958
  %1002 = vmatmul.f32.gmra.mxu0 %v952
  %v1003 = vpop.f32.mrf.mxu0
  %v1004 = vadd.f32 0.0, %v1003
  %1005 = vdwg.mxu0
  %1006 = vmatpush.msra.mxu0 0.0
  %1007 = vmatpush.msra.mxu0 0.0
  %1008 = vmatpush.msra.mxu0 0.0
  %1009 = vmatpush.msra.mxu0 0.0
  %1010 = vmatpush.msra.mxu0 0.0
  %1011 = vmatpush.msra.mxu0 0.0
  %1012 = vmatpush.msra.mxu0 0.0
  %1013 = vmatpush.msra.mxu0 0.0
  %1014 = vmatpush.msra.mxu0 0.0
  %1015 = vmatpush.msra.mxu0 0.0
  %1016 = vmatpush.msra.mxu0 0.0
  %1017 = vmatpush.msra.mxu0 0.0
  %1018 = vmatpush.msra.mxu0 0.0
  %1019 = vmatpush.msra.mxu0 0.0
  %1020 = vmatpush.msra.mxu0 0.0
  %1021 = vmatpush.msra.mxu0 %v961
  %1022 = vmatmul.f32.gmra.mxu0 %v952
  %v1023 = vpop.f32.mrf.mxu0
  %v1024 = vadd.f32 0.0, %v1023
  %1025 = vdwg.mxu0
  %1026 = vmatpush.msra.mxu0 0.0
  %1027 = vmatpush.msra.mxu0 0.0
  %1028 = vmatpush.msra.mxu0 0.0
  %1029 = vmatpush.msra.mxu0 0.0
  %1030 = vmatpush.msra.mxu0 0.0
  %1031 = vmatpush.msra.mxu0 0.0
  %1032 = vmatpush.msra.mxu0 0.0
  %1033 = vmatpush.msra.mxu0 0.0
  %1034 = vmatpush.msra.mxu0 0.0
  %1035 = vmatpush.msra.mxu0 0.0
  %1036 = vmatpush.msra.mxu0 0.0
  %1037 = vmatpush.msra.mxu0 0.0
  %1038 = vmatpush.msra.mxu0 0.0
  %1039 = vmatpush.msra.mxu0 0.0
  %1040 = vmatpush.msra.mxu0 0.0
  %1041 = vmatpush.msra.mxu0 %v964
  %1042 = vmatmul.f32.gmra.mxu0 %v952
  %v1043 = vpop.f32.mrf.mxu0
  %v1044 = vadd.f32 0.0, %v1043
  %1045 = vdwg.mxu0
  %v1046 = vadd.f32 %v901, %v984
  %v1047 = vadd.f32 %v902, %v1004
  %v1048 = vadd.f32 %v903, %v1024
  %v1049 = vadd.f32 %v904, %v1044
  %1050 = vst [vmem:[#allocation1] ss:$2 sm:$0xff] %v80
  %s1051 = scalar_lea.vmem [#allocation1], 16
  %1052 = vst [vmem:[%s1051] ss:$2 sm:$0xff] %v81
  %v1053 = vld.sshfl [vmem:[#allocation1] sm:$0xff pattern:$0x75316420]
  %v1054 = vld.sshfl [vmem:[#allocation1 + $0x8] sm:$0xff pattern:$0x75316420]
  %v1055 = vld.sshfl [vmem:[#allocation1 + $0x10] sm:$0xff pattern:$0x75316420]
  %v1056 = vld.sshfl [vmem:[#allocation1 + $0x18] sm:$0xff pattern:$0x75316420]
  %1057 = vrot.lane.b32.xlu0 %v1053, 112
  %v1058 = vpop.permute.xlu0 %1057
  %1059 = vrot.lane.b32.xlu0 %v1054, 112
  %v1060 = vpop.permute.xlu0 %1059
  %1061 = vrot.lane.b32.xlu0 %v1055, 112
  %v1062 = vpop.permute.xlu0 %1061
  %1063 = vrot.lane.b32.xlu0 %v1056, 112
  %v1064 = vpop.permute.xlu0 %1063
  %vm1065 = vcmask 916480
  %v1066 = vsel %vm1065, %v1058, %v1060
  %v1067 = vsel %vm1065, %v1060, %v1062
  %v1068 = vsel %vm1065, %v1062, %v1064
  %1073 = vst [vmem:[#allocation1] ss:$2 sm:$0xff] %v80
  %v1074 = vld.sshfl [vmem:[#allocation1] sm:$0xff pattern:$0x75316420]
  %1075 = vrot.lane.b32.xlu0 %v1074, 112
  %v1076 = vpop.permute.xlu0 %1075
  %v1078 = vsel %vm1065, %v1064, %v1076
  %s1079 = scalar_lea.vmem %s16, 7
  %v1080 = vld [vmem:[%s1079] ss:$8 sm:$0xf]
  %v1082 = vperm.slane %v1080, 0
  %v1083 = vperm.slane %v1080, 1
  %v1084 = vperm.slane %v1080, 2
  %v1085 = vperm.slane %v1080, 3
  %v1090 = vmul.f32 %v1066, %v1082
  %v1091 = vmul.f32 %v1067, %v1083
  %v1092 = vmul.f32 %v1068, %v1084
  %v1093 = vmul.f32 %v1078, %v1085
  %s1094 = scalar_lea.vmem %s1, 56
  %v1095 = vld [vmem:[%s1094] sm:$0xff]
  %v1097 = vsel %vm174, %v1095, 0
  %v1100 = vsel %vm178, %v1090, 0
  %v1103 = vsel %vm178, %v1091, 0
  %v1106 = vsel %vm178, %v1092, 0
  %v1109 = vsel %vm178, %v1093, 0
  %1111 = vmatpush.msra.mxu0 0.0
  %1112 = vmatpush.msra.mxu0 0.0
  %1113 = vmatpush.msra.mxu0 0.0
  %1114 = vmatpush.msra.mxu0 0.0
  %1115 = vmatpush.msra.mxu0 0.0
  %1116 = vmatpush.msra.mxu0 0.0
  %1117 = vmatpush.msra.mxu0 0.0
  %1118 = vmatpush.msra.mxu0 0.0
  %1119 = vmatpush.msra.mxu0 0.0
  %1120 = vmatpush.msra.mxu0 0.0
  %1121 = vmatpush.msra.mxu0 0.0
  %1122 = vmatpush.msra.mxu0 0.0
  %1123 = vmatpush.msra.mxu0 0.0
  %1124 = vmatpush.msra.mxu0 0.0
  %1125 = vmatpush.msra.mxu0 0.0
  %1126 = vmatpush.msra.mxu0 %v1100
  %1127 = vmatmul.f32.gmra.mxu0 %v1097
  %v1128 = vpop.f32.mrf.mxu0
  %v1129 = vadd.f32 0.0, %v1128
  %1130 = vdwg.mxu0
  %1131 = vmatpush.msra.mxu0 0.0
  %1132 = vmatpush.msra.mxu0 0.0
  %1133 = vmatpush.msra.mxu0 0.0
  %1134 = vmatpush.msra.mxu0 0.0
  %1135 = vmatpush.msra.mxu0 0.0
  %1136 = vmatpush.msra.mxu0 0.0
  %1137 = vmatpush.msra.mxu0 0.0
  %1138 = vmatpush.msra.mxu0 0.0
  %1139 = vmatpush.msra.mxu0 0.0
  %1140 = vmatpush.msra.mxu0 0.0
  %1141 = vmatpush.msra.mxu0 0.0
  %1142 = vmatpush.msra.mxu0 0.0
  %1143 = vmatpush.msra.mxu0 0.0
  %1144 = vmatpush.msra.mxu0 0.0
  %1145 = vmatpush.msra.mxu0 0.0
  %1146 = vmatpush.msra.mxu0 %v1103
  %1147 = vmatmul.f32.gmra.mxu0 %v1097
  %v1148 = vpop.f32.mrf.mxu0
  %v1149 = vadd.f32 0.0, %v1148
  %1150 = vdwg.mxu0
  %1151 = vmatpush.msra.mxu0 0.0
  %1152 = vmatpush.msra.mxu0 0.0
  %1153 = vmatpush.msra.mxu0 0.0
  %1154 = vmatpush.msra.mxu0 0.0
  %1155 = vmatpush.msra.mxu0 0.0
  %1156 = vmatpush.msra.mxu0 0.0
  %1157 = vmatpush.msra.mxu0 0.0
  %1158 = vmatpush.msra.mxu0 0.0
  %1159 = vmatpush.msra.mxu0 0.0
  %1160 = vmatpush.msra.mxu0 0.0
  %1161 = vmatpush.msra.mxu0 0.0
  %1162 = vmatpush.msra.mxu0 0.0
  %1163 = vmatpush.msra.mxu0 0.0
  %1164 = vmatpush.msra.mxu0 0.0
  %1165 = vmatpush.msra.mxu0 0.0
  %1166 = vmatpush.msra.mxu0 %v1106
  %1167 = vmatmul.f32.gmra.mxu0 %v1097
  %v1168 = vpop.f32.mrf.mxu0
  %v1169 = vadd.f32 0.0, %v1168
  %1170 = vdwg.mxu0
  %1171 = vmatpush.msra.mxu0 0.0
  %1172 = vmatpush.msra.mxu0 0.0
  %1173 = vmatpush.msra.mxu0 0.0
  %1174 = vmatpush.msra.mxu0 0.0
  %1175 = vmatpush.msra.mxu0 0.0
  %1176 = vmatpush.msra.mxu0 0.0
  %1177 = vmatpush.msra.mxu0 0.0
  %1178 = vmatpush.msra.mxu0 0.0
  %1179 = vmatpush.msra.mxu0 0.0
  %1180 = vmatpush.msra.mxu0 0.0
  %1181 = vmatpush.msra.mxu0 0.0
  %1182 = vmatpush.msra.mxu0 0.0
  %1183 = vmatpush.msra.mxu0 0.0
  %1184 = vmatpush.msra.mxu0 0.0
  %1185 = vmatpush.msra.mxu0 0.0
  %1186 = vmatpush.msra.mxu0 %v1109
  %1187 = vmatmul.f32.gmra.mxu0 %v1097
  %v1188 = vpop.f32.mrf.mxu0
  %v1189 = vadd.f32 0.0, %v1188
  %1190 = vdwg.mxu0
  %v1191 = vadd.f32 %v1046, %v1129
  %v1192 = vadd.f32 %v1047, %v1149
  %v1193 = vadd.f32 %v1048, %v1169
  %v1194 = vadd.f32 %v1049, %v1189
  %1195 = vst [vmem:[#allocation1] ss:$2 sm:$0xff] %v80
  %s1196 = scalar_lea.vmem [#allocation1], 16
  %1197 = vst [vmem:[%s1196] ss:$2 sm:$0xff] %v81
  %v1198 = vld.sshfl [vmem:[#allocation1] sm:$0xff pattern:$0x75316420]
  %v1199 = vld.sshfl [vmem:[#allocation1 + $0x8] sm:$0xff pattern:$0x75316420]
  %v1200 = vld.sshfl [vmem:[#allocation1 + $0x10] sm:$0xff pattern:$0x75316420]
  %v1201 = vld.sshfl [vmem:[#allocation1 + $0x18] sm:$0xff pattern:$0x75316420]
  %1202 = vrot.lane.b32.xlu0 %v1198, 111
  %v1203 = vpop.permute.xlu0 %1202
  %1204 = vrot.lane.b32.xlu0 %v1199, 111
  %v1205 = vpop.permute.xlu0 %1204
  %1206 = vrot.lane.b32.xlu0 %v1200, 111
  %v1207 = vpop.permute.xlu0 %1206
  %1208 = vrot.lane.b32.xlu0 %v1201, 111
  %v1209 = vpop.permute.xlu0 %1208
  %vm1210 = vcmask 908288
  %v1211 = vsel %vm1210, %v1203, %v1205
  %v1212 = vsel %vm1210, %v1205, %v1207
  %v1213 = vsel %vm1210, %v1207, %v1209
  %1218 = vst [vmem:[#allocation1] ss:$2 sm:$0xff] %v80
  %v1219 = vld.sshfl [vmem:[#allocation1] sm:$0xff pattern:$0x75316420]
  %1220 = vrot.lane.b32.xlu0 %v1219, 111
  %v1221 = vpop.permute.xlu0 %1220
  %v1223 = vsel %vm1210, %v1209, %v1221
  %s1224 = scalar_lea.vmem %s16, 32
  %v1225 = vld [vmem:[%s1224] ss:$8 sm:$0xf]
  %v1227 = vperm.slane %v1225, 0
  %v1228 = vperm.slane %v1225, 1
  %v1229 = vperm.slane %v1225, 2
  %v1230 = vperm.slane %v1225, 3
  %v1235 = vmul.f32 %v1211, %v1227
  %v1236 = vmul.f32 %v1212, %v1228
  %v1237 = vmul.f32 %v1213, %v1229
  %v1238 = vmul.f32 %v1223, %v1230
  %s1239 = scalar_lea.vmem %s1, 64
  %v1240 = vld [vmem:[%s1239] sm:$0xff]
  %v1242 = vsel %vm174, %v1240, 0
  %v1245 = vsel %vm178, %v1235, 0
  %v1248 = vsel %vm178, %v1236, 0
  %v1251 = vsel %vm178, %v1237, 0
  %v1254 = vsel %vm178, %v1238, 0
  %1256 = vmatpush.msra.mxu0 0.0
  %1257 = vmatpush.msra.mxu0 0.0
  %1258 = vmatpush.msra.mxu0 0.0
  %1259 = vmatpush.msra.mxu0 0.0
  %1260 = vmatpush.msra.mxu0 0.0
  %1261 = vmatpush.msra.mxu0 0.0
  %1262 = vmatpush.msra.mxu0 0.0
  %1263 = vmatpush.msra.mxu0 0.0
  %1264 = vmatpush.msra.mxu0 0.0
  %1265 = vmatpush.msra.mxu0 0.0
  %1266 = vmatpush.msra.mxu0 0.0
  %1267 = vmatpush.msra.mxu0 0.0
  %1268 = vmatpush.msra.mxu0 0.0
  %1269 = vmatpush.msra.mxu0 0.0
  %1270 = vmatpush.msra.mxu0 0.0
  %1271 = vmatpush.msra.mxu0 %v1245
  %1272 = vmatmul.f32.gmra.mxu0 %v1242
  %v1273 = vpop.f32.mrf.mxu0
  %v1274 = vadd.f32 0.0, %v1273
  %1275 = vdwg.mxu0
  %1276 = vmatpush.msra.mxu0 0.0
  %1277 = vmatpush.msra.mxu0 0.0
  %1278 = vmatpush.msra.mxu0 0.0
  %1279 = vmatpush.msra.mxu0 0.0
  %1280 = vmatpush.msra.mxu0 0.0
  %1281 = vmatpush.msra.mxu0 0.0
  %1282 = vmatpush.msra.mxu0 0.0
  %1283 = vmatpush.msra.mxu0 0.0
  %1284 = vmatpush.msra.mxu0 0.0
  %1285 = vmatpush.msra.mxu0 0.0
  %1286 = vmatpush.msra.mxu0 0.0
  %1287 = vmatpush.msra.mxu0 0.0
  %1288 = vmatpush.msra.mxu0 0.0
  %1289 = vmatpush.msra.mxu0 0.0
  %1290 = vmatpush.msra.mxu0 0.0
  %1291 = vmatpush.msra.mxu0 %v1248
  %1292 = vmatmul.f32.gmra.mxu0 %v1242
  %v1293 = vpop.f32.mrf.mxu0
  %v1294 = vadd.f32 0.0, %v1293
  %1295 = vdwg.mxu0
  %1296 = vmatpush.msra.mxu0 0.0
  %1297 = vmatpush.msra.mxu0 0.0
  %1298 = vmatpush.msra.mxu0 0.0
  %1299 = vmatpush.msra.mxu0 0.0
  %1300 = vmatpush.msra.mxu0 0.0
  %1301 = vmatpush.msra.mxu0 0.0
  %1302 = vmatpush.msra.mxu0 0.0
  %1303 = vmatpush.msra.mxu0 0.0
  %1304 = vmatpush.msra.mxu0 0.0
  %1305 = vmatpush.msra.mxu0 0.0
  %1306 = vmatpush.msra.mxu0 0.0
  %1307 = vmatpush.msra.mxu0 0.0
  %1308 = vmatpush.msra.mxu0 0.0
  %1309 = vmatpush.msra.mxu0 0.0
  %1310 = vmatpush.msra.mxu0 0.0
  %1311 = vmatpush.msra.mxu0 %v1251
  %1312 = vmatmul.f32.gmra.mxu0 %v1242
  %v1313 = vpop.f32.mrf.mxu0
  %v1314 = vadd.f32 0.0, %v1313
  %1315 = vdwg.mxu0
  %1316 = vmatpush.msra.mxu0 0.0
  %1317 = vmatpush.msra.mxu0 0.0
  %1318 = vmatpush.msra.mxu0 0.0
  %1319 = vmatpush.msra.mxu0 0.0
  %1320 = vmatpush.msra.mxu0 0.0
  %1321 = vmatpush.msra.mxu0 0.0
  %1322 = vmatpush.msra.mxu0 0.0
  %1323 = vmatpush.msra.mxu0 0.0
  %1324 = vmatpush.msra.mxu0 0.0
  %1325 = vmatpush.msra.mxu0 0.0
  %1326 = vmatpush.msra.mxu0 0.0
  %1327 = vmatpush.msra.mxu0 0.0
  %1328 = vmatpush.msra.mxu0 0.0
  %1329 = vmatpush.msra.mxu0 0.0
  %1330 = vmatpush.msra.mxu0 0.0
  %1331 = vmatpush.msra.mxu0 %v1254
  %1332 = vmatmul.f32.gmra.mxu0 %v1242
  %v1333 = vpop.f32.mrf.mxu0
  %v1334 = vadd.f32 0.0, %v1333
  %1335 = vdwg.mxu0
  %v1336 = vadd.f32 %v1191, %v1274
  %v1337 = vadd.f32 %v1192, %v1294
  %v1338 = vadd.f32 %v1193, %v1314
  %v1339 = vadd.f32 %v1194, %v1334
  %v1340 = vadd.f32 %v1336, %v1337
  %v1341 = vadd.f32 %v1340, %v1338
  %v1342 = vadd.f32 %v1341, %v1339
  %1343 = vadd.xlane.f32.xlu0 %v1342
  %v1344 = vpop.xlane.xlu0 %1343
  %v1345 = vmul.f32 %v1344, 0.001953125
  %v1346 = vmul.f32 %v1336, %v1336
  %v1347 = vmul.f32 %v1337, %v1337
  %v1348 = vmul.f32 %v1338, %v1338
  %v1349 = vmul.f32 %v1339, %v1339
  %v1350 = vadd.f32 %v1346, %v1347
  %v1351 = vadd.f32 %v1350, %v1348
  %v1352 = vadd.f32 %v1351, %v1349
  %1353 = vadd.xlane.f32.xlu0 %v1352
  %v1354 = vpop.xlane.xlu0 %1353
  %v1355 = vmul.f32 %v1354, 0.001953125
  %v1356 = vmul.f32 %v1345, %v1345
  %v1357 = vsub.f32 %v1355, %v1356
  %v1358 = vmax.f32 %v1357, 0.0
  %v1359 = vadd.f32 %v1358, 0.0001
  %v1360 = vrsqrt.pop %v1359
  %v1361 = vmul.f32 %v1360, %v1359
  %v1362 = vmul.f32 %v1361, %v1360
  %v1363 = vmul.f32 0.5, %v1362
  %v1364 = vsub.f32 1.5, %v1363
  %v1365 = vmul.f32 %v1360, %v1364
  %vm1366 = vweird.f32 %v1359
  %vm1367 = vweird.f32 %v1360
  %vm1368 = vmor %vm1366, %vm1367
  %v1369 = vsel %vm1368, %v1360, %v1365
  %v1370 = vld [vmem:[%s2] sm:$0xff]
  %v1371 = vmul.f32 %v1369, %v1370
  %v1372 = vld [vmem:[%s3] sm:$0xff]
  %v1373 = vmul.f32 %v1345, %v1371
  %v1374 = vsub.f32 %v1372, %v1373
  %1376 = vset.pattern.permute.xlu0 0
  %1377 = vperm.xlu0 %1376, %v1371
  %v1378 = vpop.permute.xlu0 %1377
  %v1380 = vmul.f32 %v1336, %v1378
  %v1381 = vmul.f32 %v1337, %v1378
  %v1382 = vmul.f32 %v1338, %v1378
  %v1383 = vmul.f32 %v1339, %v1378
  %1385 = vset.pattern.permute.xlu0 0
  %1386 = vperm.xlu0 %1385, %v1374
  %v1387 = vpop.permute.xlu0 %1386
  %v1389 = vadd.f32 %v1380, %v1387
  %v1390 = vadd.f32 %v1381, %v1387
  %v1391 = vadd.f32 %v1382, %v1387
  %v1392 = vadd.f32 %v1383, %v1387
  %vm1393 = vcmp.ge.f32.partialorder %v1389, 0.0
  %vm1394 = vcmp.ge.f32.partialorder %v1390, 0.0
  %vm1395 = vcmp.ge.f32.partialorder %v1391, 0.0
  %vm1396 = vcmp.ge.f32.partialorder %v1392, 0.0
  %v1397 = vmul.f32 %v1389, 0.01
  %v1398 = vmul.f32 %v1390, 0.01
  %v1399 = vmul.f32 %v1391, 0.01
  %v1400 = vmul.f32 %v1392, 0.01
  %v1401 = vsel %vm1393, %v1389, %v1397
  %v1402 = vsel %vm1394, %v1390, %v1398
  %v1403 = vsel %vm1395, %v1391, %v1399
  %v1404 = vsel %vm1396, %v1392, %v1400
  %1409 = vrot.lane.b32.xlu0 %v1401, 127
  %v1410 = vpop.permute.xlu0 %1409
  %1411 = vrot.lane.b32.xlu0 %v1402, 127
  %v1412 = vpop.permute.xlu0 %1411
  %1413 = vrot.lane.b32.xlu0 %v1403, 127
  %v1414 = vpop.permute.xlu0 %1413
  %1415 = vrot.lane.b32.xlu0 %v1404, 127
  %v1416 = vpop.permute.xlu0 %1415
  %v1417 = vsel %vm775, %v1410, %v1412
  %v1418 = vsel %vm775, %v1412, %v1414
  %v1419 = vsel %vm775, %v1414, %v1416
  %v1425 = vsel %vm775, %v1416, %v1410
  %v1426 = vmax.f32 %v1401, %v1417
  %v1427 = vmax.f32 %v1402, %v1418
  %v1428 = vmax.f32 %v1403, %v1419
  %v1429 = vmax.f32 %v1404, %v1425
  %1434 = vrot.lane.b32.xlu0 %v1426, 112
  %v1435 = vpop.permute.xlu0 %1434
  %1436 = vrot.lane.b32.xlu0 %v1427, 112
  %v1437 = vpop.permute.xlu0 %1436
  %1438 = vrot.lane.b32.xlu0 %v1428, 112
  %v1439 = vpop.permute.xlu0 %1438
  %1440 = vrot.lane.b32.xlu0 %v1429, 112
  %v1441 = vpop.permute.xlu0 %1440
  %v1442 = vsel %vm1065, %v1435, %v1437
  %v1443 = vsel %vm1065, %v1437, %v1439
  %v1444 = vsel %vm1065, %v1439, %v1441
  %v1450 = vsel %vm1065, %v1441, %v1435
  %v1451 = vmax.f32 %v1426, %v1442
  %v1452 = vmax.f32 %v1427, %v1443
  %v1453 = vmax.f32 %v1428, %v1444
  %v1454 = vmax.f32 %v1429, %v1450
  %v1455 = vld [vmem:[%s19] sm:$0xf]
  %v1456 = vld [vmem:[%s19 + $0x4] sm:$0xf]
  %v1457 = vld [vmem:[%s19 + $0x8] sm:$0xf]
  %v1458 = vld [vmem:[%s19 + $0xc] sm:$0xf]
  %v1459 = vld [vmem:[%s19 + $0x10] sm:$0xf]
  %v1460 = vld [vmem:[%s19 + $0x14] sm:$0xf]
  %v1461 = vld [vmem:[%s19 + $0x18] sm:$0xf]
  %v1462 = vld [vmem:[%s19 + $0x1c] sm:$0xf]
  %v1463 = vld [vmem:[%s19 + $0x20] sm:$0xf]
  %v1464 = vld [vmem:[%s19 + $0x24] sm:$0xf]
  %v1465 = vld [vmem:[%s19 + $0x28] sm:$0xf]
  %v1466 = vld [vmem:[%s19 + $0x2c] sm:$0xf]
  %v1467 = vld [vmem:[%s19 + $0x30] sm:$0xf]
  %v1468 = vld [vmem:[%s19 + $0x34] sm:$0xf]
  %v1469 = vld [vmem:[%s19 + $0x38] sm:$0xf]
  %v1470 = vld [vmem:[%s19 + $0x3c] sm:$0xf]
  %v1471 = vld [vmem:[%s19 + $0x40] sm:$0xf]
  %v1472 = vld [vmem:[%s19 + $0x44] sm:$0xf]
  %v1473 = vld [vmem:[%s19 + $0x48] sm:$0xf]
  %v1474 = vld [vmem:[%s19 + $0x4c] sm:$0xf]
  %v1475 = vld [vmem:[%s19 + $0x50] sm:$0xf]
  %v1476 = vld [vmem:[%s19 + $0x54] sm:$0xf]
  %v1477 = vld [vmem:[%s19 + $0x58] sm:$0xf]
  %v1478 = vld [vmem:[%s19 + $0x5c] sm:$0xf]
  %v1479 = vld [vmem:[%s19 + $0x60] sm:$0xf]
  %v1480 = vld [vmem:[%s19 + $0x64] sm:$0xf]
  %v1481 = vld [vmem:[%s19 + $0x68] sm:$0xf]
  %v1482 = vld [vmem:[%s19 + $0x6c] sm:$0xf]
  %v1483 = vld [vmem:[%s19 + $0x70] sm:$0xf]
  %v1484 = vld [vmem:[%s19 + $0x74] sm:$0xf]
  %v1485 = vld [vmem:[%s19 + $0x78] sm:$0xf]
  %v1486 = vld [vmem:[%s19 + $0x7c] sm:$0xf]
  %v1487 = vld [vmem:[%s19 + $0x80] sm:$0xf]
  %v1488 = vld [vmem:[%s19 + $0x84] sm:$0xf]
  %v1489 = vld [vmem:[%s19 + $0x88] sm:$0xf]
  %v1490 = vld [vmem:[%s19 + $0x8c] sm:$0xf]
  %v1491 = vld [vmem:[%s19 + $0x90] sm:$0xf]
  %v1492 = vld [vmem:[%s19 + $0x94] sm:$0xf]
  %v1493 = vld [vmem:[%s19 + $0x98] sm:$0xf]
  %v1494 = vld [vmem:[%s19 + $0x9c] sm:$0xf]
  %v1495 = vld [vmem:[%s19 + $0xa0] sm:$0xf]
  %v1496 = vld [vmem:[%s19 + $0xa4] sm:$0xf]
  %v1497 = vld [vmem:[%s19 + $0xa8] sm:$0xf]
  %v1498 = vld [vmem:[%s19 + $0xac] sm:$0xf]
  %v1499 = vld [vmem:[%s19 + $0xb0] sm:$0xf]
  %v1500 = vld [vmem:[%s19 + $0xb4] sm:$0xf]
  %v1501 = vld [vmem:[%s19 + $0xb8] sm:$0xf]
  %v1502 = vld [vmem:[%s19 + $0xbc] sm:$0xf]
  %v1503 = vld [vmem:[%s19 + $0xc0] sm:$0xf]
  %v1504 = vld [vmem:[%s19 + $0xc4] sm:$0xf]
  %v1505 = vld [vmem:[%s19 + $0xc8] sm:$0xf]
  %v1506 = vld [vmem:[%s19 + $0xcc] sm:$0xf]
  %v1507 = vld [vmem:[%s19 + $0xd0] sm:$0xf]
  %v1508 = vld [vmem:[%s19 + $0xd4] sm:$0xf]
  %v1509 = vld [vmem:[%s19 + $0xd8] sm:$0xf]
  %v1510 = vld [vmem:[%s19 + $0xdc] sm:$0xf]
  %v1511 = vld [vmem:[%s19 + $0xe0] sm:$0xf]
  %v1512 = vld [vmem:[%s19 + $0xe4] sm:$0xf]
  %v1513 = vld [vmem:[%s19 + $0xe8] sm:$0xf]
  %v1514 = vld [vmem:[%s19 + $0xec] sm:$0xf]
  %v1515 = vld [vmem:[%s19 + $0xf0] sm:$0xf]
  %v1516 = vld [vmem:[%s19 + $0xf4] sm:$0xf]
  %v1517 = vld [vmem:[%s19 + $0xf8] sm:$0xf]
  %v1518 = vld [vmem:[%s19 + $0xfc] sm:$0xf]
  %v1519 = vunpack.c.l.bf16 %v1455
  %v1520 = vunpack.c.l.bf16 %v1456
  %v1521 = vunpack.c.l.bf16 %v1457
  %v1522 = vunpack.c.l.bf16 %v1458
  %v1523 = vunpack.c.l.bf16 %v1459
  %v1524 = vunpack.c.l.bf16 %v1460
  %v1525 = vunpack.c.l.bf16 %v1461
  %v1526 = vunpack.c.l.bf16 %v1462
  %v1527 = vunpack.c.l.bf16 %v1463
  %v1528 = vunpack.c.l.bf16 %v1464
  %v1529 = vunpack.c.l.bf16 %v1465
  %v1530 = vunpack.c.l.bf16 %v1466
  %v1531 = vunpack.c.l.bf16 %v1467
  %v1532 = vunpack.c.l.bf16 %v1468
  %v1533 = vunpack.c.l.bf16 %v1469
  %v1534 = vunpack.c.l.bf16 %v1470
  %v1535 = vunpack.c.l.bf16 %v1471
  %v1536 = vunpack.c.l.bf16 %v1472
  %v1537 = vunpack.c.l.bf16 %v1473
  %v1538 = vunpack.c.l.bf16 %v1474
  %v1539 = vunpack.c.l.bf16 %v1475
  %v1540 = vunpack.c.l.bf16 %v1476
  %v1541 = vunpack.c.l.bf16 %v1477
  %v1542 = vunpack.c.l.bf16 %v1478
  %v1543 = vunpack.c.l.bf16 %v1479
  %v1544 = vunpack.c.l.bf16 %v1480
  %v1545 = vunpack.c.l.bf16 %v1481
  %v1546 = vunpack.c.l.bf16 %v1482
  %v1547 = vunpack.c.l.bf16 %v1483
  %v1548 = vunpack.c.l.bf16 %v1484
  %v1549 = vunpack.c.l.bf16 %v1485
  %v1550 = vunpack.c.l.bf16 %v1486
  %v1551 = vunpack.c.l.bf16 %v1487
  %v1552 = vunpack.c.l.bf16 %v1488
  %v1553 = vunpack.c.l.bf16 %v1489
  %v1554 = vunpack.c.l.bf16 %v1490
  %v1555 = vunpack.c.l.bf16 %v1491
  %v1556 = vunpack.c.l.bf16 %v1492
  %v1557 = vunpack.c.l.bf16 %v1493
  %v1558 = vunpack.c.l.bf16 %v1494
  %v1559 = vunpack.c.l.bf16 %v1495
  %v1560 = vunpack.c.l.bf16 %v1496
  %v1561 = vunpack.c.l.bf16 %v1497
  %v1562 = vunpack.c.l.bf16 %v1498
  %v1563 = vunpack.c.l.bf16 %v1499
  %v1564 = vunpack.c.l.bf16 %v1500
  %v1565 = vunpack.c.l.bf16 %v1501
  %v1566 = vunpack.c.l.bf16 %v1502
  %v1567 = vunpack.c.l.bf16 %v1503
  %v1568 = vunpack.c.l.bf16 %v1504
  %v1569 = vunpack.c.l.bf16 %v1505
  %v1570 = vunpack.c.l.bf16 %v1506
  %v1571 = vunpack.c.l.bf16 %v1507
  %v1572 = vunpack.c.l.bf16 %v1508
  %v1573 = vunpack.c.l.bf16 %v1509
  %v1574 = vunpack.c.l.bf16 %v1510
  %v1575 = vunpack.c.l.bf16 %v1511
  %v1576 = vunpack.c.l.bf16 %v1512
  %v1577 = vunpack.c.l.bf16 %v1513
  %v1578 = vunpack.c.l.bf16 %v1514
  %v1579 = vunpack.c.l.bf16 %v1515
  %v1580 = vunpack.c.l.bf16 %v1516
  %v1581 = vunpack.c.l.bf16 %v1517
  %v1582 = vunpack.c.l.bf16 %v1518
  %1583 = vmatpush.msra.mxu0 %v1534
  %1584 = vmatpush.msra.mxu0 %v1533
  %1585 = vmatpush.msra.mxu0 %v1532
  %1586 = vmatpush.msra.mxu0 %v1531
  %1587 = vmatpush.msra.mxu0 %v1530
  %1588 = vmatpush.msra.mxu0 %v1529
  %1589 = vmatpush.msra.mxu0 %v1528
  %1590 = vmatpush.msra.mxu0 %v1527
  %1591 = vmatpush.msra.mxu0 %v1526
  %1592 = vmatpush.msra.mxu0 %v1525
  %1593 = vmatpush.msra.mxu0 %v1524
  %1594 = vmatpush.msra.mxu0 %v1523
  %1595 = vmatpush.msra.mxu0 %v1522
  %1596 = vmatpush.msra.mxu0 %v1521
  %1597 = vmatpush.msra.mxu0 %v1520
  %1598 = vmatpush.msra.mxu0 %v1519
  %1599 = vmatmul.f32.gmra.mxu0 %v1451
  %v1600 = vpop.f32.mrf.mxu0
  %v1601 = vadd.f32 0.0, %v1600
  %1602 = vdwg.mxu0
  %1603 = vmatpush.msra.mxu0 %v1550
  %1604 = vmatpush.msra.mxu0 %v1549
  %1605 = vmatpush.msra.mxu0 %v1548
  %1606 = vmatpush.msra.mxu0 %v1547
  %1607 = vmatpush.msra.mxu0 %v1546
  %1608 = vmatpush.msra.mxu0 %v1545
  %1609 = vmatpush.msra.mxu0 %v1544
  %1610 = vmatpush.msra.mxu0 %v1543
  %1611 = vmatpush.msra.mxu0 %v1542
  %1612 = vmatpush.msra.mxu0 %v1541
  %1613 = vmatpush.msra.mxu0 %v1540
  %1614 = vmatpush.msra.mxu0 %v1539
  %1615 = vmatpush.msra.mxu0 %v1538
  %1616 = vmatpush.msra.mxu0 %v1537
  %1617 = vmatpush.msra.mxu0 %v1536
  %1618 = vmatpush.msra.mxu0 %v1535
  %1619 = vmatmul.f32.gmra.mxu0 %v1452
  %v1620 = vpop.f32.mrf.mxu0
  %v1621 = vadd.f32 %v1601, %v1620
  %1622 = vdwg.mxu0
  %1623 = vmatpush.msra.mxu0 %v1566
  %1624 = vmatpush.msra.mxu0 %v1565
  %1625 = vmatpush.msra.mxu0 %v1564
  %1626 = vmatpush.msra.mxu0 %v1563
  %1627 = vmatpush.msra.mxu0 %v1562
  %1628 = vmatpush.msra.mxu0 %v1561
  %1629 = vmatpush.msra.mxu0 %v1560
  %1630 = vmatpush.msra.mxu0 %v1559
  %1631 = vmatpush.msra.mxu0 %v1558
  %1632 = vmatpush.msra.mxu0 %v1557
  %1633 = vmatpush.msra.mxu0 %v1556
  %1634 = vmatpush.msra.mxu0 %v1555
  %1635 = vmatpush.msra.mxu0 %v1554
  %1636 = vmatpush.msra.mxu0 %v1553
  %1637 = vmatpush.msra.mxu0 %v1552
  %1638 = vmatpush.msra.mxu0 %v1551
  %1639 = vmatmul.f32.gmra.mxu0 %v1453
  %v1640 = vpop.f32.mrf.mxu0
  %v1641 = vadd.f32 %v1621, %v1640
  %1642 = vdwg.mxu0
  %1643 = vmatpush.msra.mxu0 %v1582
  %1644 = vmatpush.msra.mxu0 %v1581
  %1645 = vmatpush.msra.mxu0 %v1580
  %1646 = vmatpush.msra.mxu0 %v1579
  %1647 = vmatpush.msra.mxu0 %v1578
  %1648 = vmatpush.msra.mxu0 %v1577
  %1649 = vmatpush.msra.mxu0 %v1576
  %1650 = vmatpush.msra.mxu0 %v1575
  %1651 = vmatpush.msra.mxu0 %v1574
  %1652 = vmatpush.msra.mxu0 %v1573
  %1653 = vmatpush.msra.mxu0 %v1572
  %1654 = vmatpush.msra.mxu0 %v1571
  %1655 = vmatpush.msra.mxu0 %v1570
  %1656 = vmatpush.msra.mxu0 %v1569
  %1657 = vmatpush.msra.mxu0 %v1568
  %1658 = vmatpush.msra.mxu0 %v1567
  %1659 = vmatmul.f32.gmra.mxu0 %v1454
  %v1660 = vpop.f32.mrf.mxu0
  %v1661 = vadd.f32 %v1641, %v1660
  %1662 = vdwg.mxu0
  %1664 = vrot.lane.b32.xlu0 %v1661, 9
  %v1665 = vpop.permute.xlu0 %1664
  %v1667 = vld [vmem:[%s17] sm:$0x1]
  %v1668 = vperm.slane %v1667, 0
  %v1669 = vmul.f32 %v1665, %v1668
  %v1670 = vld [vmem:[%s4] sm:$0xff]
  %v1671 = vld [vmem:[%s4 + $0x8] sm:$0xff]
  %1672 = vrot.lane.b32.xlu0 %v1661, 8
  %v1673 = vpop.permute.xlu0 %1672
  %vm1675 = vcmask 64512
  %v1676 = vld [vmem:[%s17 + $0x1] sm:$0x1]
  %v1677 = vperm.slane %v1676, 0
  %v1678 = vmul.f32 %v1673, %v1677
  %s1679 = scalar_lea.vmem %s4, 16
  %v1680 = vld [vmem:[%s1679] sm:$0xff]
  %v1681 = vld [vmem:[%s1679 + $0x8] sm:$0xff]
  %v1683 = vsel %vm1675, %v1680, 0
  %v1686 = vsel %vm1675, %v1681, 0
  %1688 = vmatpush.msra.mxu0 0.0
  %1689 = vmatpush.msra.mxu0 0.0
  %1690 = vmatpush.msra.mxu0 0.0
  %1691 = vmatpush.msra.mxu0 0.0
  %1692 = vmatpush.msra.mxu0 0.0
  %1693 = vmatpush.msra.mxu0 0.0
  %1694 = vmatpush.msra.mxu0 0.0
  %1695 = vmatpush.msra.mxu0 0.0
  %1696 = vmatpush.msra.mxu0 0.0
  %1697 = vmatpush.msra.mxu0 0.0
  %1698 = vmatpush.msra.mxu0 0.0
  %1699 = vmatpush.msra.mxu0 0.0
  %1700 = vmatpush.msra.mxu0 0.0
  %1701 = vmatpush.msra.mxu0 0.0
  %1702 = vmatpush.msra.mxu0 0.0
  %1703 = vmatpush.msra.mxu0 %v1678
  %1704 = vmatmul.f32.gmra.mxu0 %v1683
  %v1705 = vpop.f32.mrf.mxu0
  %v1706 = vadd.f32 0.0, %v1705
  %1707 = vmatmul.f32.gmra.mxu0 %v1686
  %v1708 = vpop.f32.mrf.mxu0
  %v1709 = vadd.f32 0.0, %v1708
  %1710 = vdwg.mxu0
  %v1712 = vsel %vm1675, %v1670, 0
  %v1715 = vsel %vm1675, %v1671, 0
  %1717 = vmatpush.msra.mxu0 0.0
  %1718 = vmatpush.msra.mxu0 0.0
  %1719 = vmatpush.msra.mxu0 0.0
  %1720 = vmatpush.msra.mxu0 0.0
  %1721 = vmatpush.msra.mxu0 0.0
  %1722 = vmatpush.msra.mxu0 0.0
  %1723 = vmatpush.msra.mxu0 0.0
  %1724 = vmatpush.msra.mxu0 0.0
  %1725 = vmatpush.msra.mxu0 0.0
  %1726 = vmatpush.msra.mxu0 0.0
  %1727 = vmatpush.msra.mxu0 0.0
  %1728 = vmatpush.msra.mxu0 0.0
  %1729 = vmatpush.msra.mxu0 0.0
  %1730 = vmatpush.msra.mxu0 0.0
  %1731 = vmatpush.msra.mxu0 0.0
  %1732 = vmatpush.msra.mxu0 %v1669
  %1733 = vmatmul.f32.gmra.mxu0 %v1712
  %v1734 = vpop.f32.mrf.mxu0
  %v1735 = vadd.f32 %v1706, %v1734
  %1736 = vmatmul.f32.gmra.mxu0 %v1715
  %v1737 = vpop.f32.mrf.mxu0
  %v1738 = vadd.f32 %v1709, %v1737
  %1739 = vdwg.mxu0
  %1740 = vrot.lane.b32.xlu0 %v1661, 7
  %v1741 = vpop.permute.xlu0 %1740
  %v1743 = vld [vmem:[%s17 + $0x2] sm:$0x1]
  %v1744 = vperm.slane %v1743, 0
  %v1745 = vmul.f32 %v1741, %v1744
  %s1746 = scalar_lea.vmem %s4, 32
  %v1747 = vld [vmem:[%s1746] sm:$0xff]
  %v1748 = vld [vmem:[%s1746 + $0x8] sm:$0xff]
  %v1750 = vsel %vm1675, %v1747, 0
  %v1753 = vsel %vm1675, %v1748, 0
  %1755 = vmatpush.msra.mxu0 0.0
  %1756 = vmatpush.msra.mxu0 0.0
  %1757 = vmatpush.msra.mxu0 0.0
  %1758 = vmatpush.msra.mxu0 0.0
  %1759 = vmatpush.msra.mxu0 0.0
  %1760 = vmatpush.msra.mxu0 0.0
  %1761 = vmatpush.msra.mxu0 0.0
  %1762 = vmatpush.msra.mxu0 0.0
  %1763 = vmatpush.msra.mxu0 0.0
  %1764 = vmatpush.msra.mxu0 0.0
  %1765 = vmatpush.msra.mxu0 0.0
  %1766 = vmatpush.msra.mxu0 0.0
  %1767 = vmatpush.msra.mxu0 0.0
  %1768 = vmatpush.msra.mxu0 0.0
  %1769 = vmatpush.msra.mxu0 0.0
  %1770 = vmatpush.msra.mxu0 %v1745
  %1771 = vmatmul.f32.gmra.mxu0 %v1750
  %v1772 = vpop.f32.mrf.mxu0
  %v1773 = vadd.f32 0.0, %v1772
  %1774 = vmatmul.f32.gmra.mxu0 %v1753
  %v1775 = vpop.f32.mrf.mxu0
  %v1776 = vadd.f32 0.0, %v1775
  %1777 = vdwg.mxu0
  %v1778 = vadd.f32 %v1735, %v1773
  %v1779 = vadd.f32 %v1738, %v1776
  %1780 = vrot.lane.b32.xlu0 %v1661, 1
  %v1781 = vpop.permute.xlu0 %1780
  %v1783 = vld [vmem:[%s17 + $0x3] sm:$0x1]
  %v1784 = vperm.slane %v1783, 0
  %v1785 = vmul.f32 %v1781, %v1784
  %s1786 = scalar_lea.vmem %s4, 48
  %v1787 = vld [vmem:[%s1786] sm:$0xff]
  %v1788 = vld [vmem:[%s1786 + $0x8] sm:$0xff]
  %v1790 = vsel %vm1675, %v1787, 0
  %v1793 = vsel %vm1675, %v1788, 0
  %1795 = vmatpush.msra.mxu0 0.0
  %1796 = vmatpush.msra.mxu0 0.0
  %1797 = vmatpush.msra.mxu0 0.0
  %1798 = vmatpush.msra.mxu0 0.0
  %1799 = vmatpush.msra.mxu0 0.0
  %1800 = vmatpush.msra.mxu0 0.0
  %1801 = vmatpush.msra.mxu0 0.0
  %1802 = vmatpush.msra.mxu0 0.0
  %1803 = vmatpush.msra.mxu0 0.0
  %1804 = vmatpush.msra.mxu0 0.0
  %1805 = vmatpush.msra.mxu0 0.0
  %1806 = vmatpush.msra.mxu0 0.0
  %1807 = vmatpush.msra.mxu0 0.0
  %1808 = vmatpush.msra.mxu0 0.0
  %1809 = vmatpush.msra.mxu0 0.0
  %1810 = vmatpush.msra.mxu0 %v1785
  %1811 = vmatmul.f32.gmra.mxu0 %v1790
  %v1812 = vpop.f32.mrf.mxu0
  %v1813 = vadd.f32 0.0, %v1812
  %1814 = vmatmul.f32.gmra.mxu0 %v1793
  %v1815 = vpop.f32.mrf.mxu0
  %v1816 = vadd.f32 0.0, %v1815
  %1817 = vdwg.mxu0
  %v1818 = vadd.f32 %v1778, %v1813
  %v1819 = vadd.f32 %v1779, %v1816
  %s1820 = scalar_lea.vmem %s4, 64
  %v1821 = vld [vmem:[%s1820] sm:$0xff]
  %v1822 = vld [vmem:[%s1820 + $0x8] sm:$0xff]
  %v1824 = vsel %vm1675, %v1821, 0
  %v1827 = vsel %vm1675, %v1822, 0
  %1829 = vmatpush.msra.mxu0 0.0
  %1830 = vmatpush.msra.mxu0 0.0
  %1831 = vmatpush.msra.mxu0 0.0
  %1832 = vmatpush.msra.mxu0 0.0
  %1833 = vmatpush.msra.mxu0 0.0
  %1834 = vmatpush.msra.mxu0 0.0
  %1835 = vmatpush.msra.mxu0 0.0
  %1836 = vmatpush.msra.mxu0 0.0
  %1837 = vmatpush.msra.mxu0 0.0
  %1838 = vmatpush.msra.mxu0 0.0
  %1839 = vmatpush.msra.mxu0 0.0
  %1840 = vmatpush.msra.mxu0 0.0
  %1841 = vmatpush.msra.mxu0 0.0
  %1842 = vmatpush.msra.mxu0 0.0
  %1843 = vmatpush.msra.mxu0 0.0
  %1844 = vmatpush.msra.mxu0 %v1661
  %1845 = vmatmul.f32.gmra.mxu0 %v1824
  %v1846 = vpop.f32.mrf.mxu0
  %v1847 = vadd.f32 0.0, %v1846
  %1848 = vmatmul.f32.gmra.mxu0 %v1827
  %v1849 = vpop.f32.mrf.mxu0
  %v1850 = vadd.f32 0.0, %v1849
  %1851 = vdwg.mxu0
  %v1852 = vadd.f32 %v1818, %v1847
  %v1853 = vadd.f32 %v1819, %v1850
  %1854 = vrot.lane.b32.xlu0 %v1661, 127
  %v1855 = vpop.permute.xlu0 %1854
  %v1857 = vld [vmem:[%s17 + $0x5] sm:$0x1]
  %v1858 = vperm.slane %v1857, 0
  %v1859 = vmul.f32 %v1855, %v1858
  %s1860 = scalar_lea.vmem %s4, 80
  %v1861 = vld [vmem:[%s1860] sm:$0xff]
  %v1862 = vld [vmem:[%s1860 + $0x8] sm:$0xff]
  %v1864 = vsel %vm1675, %v1861, 0
  %v1867 = vsel %vm1675, %v1862, 0
  %1869 = vmatpush.msra.mxu0 0.0
  %1870 = vmatpush.msra.mxu0 0.0
  %1871 = vmatpush.msra.mxu0 0.0
  %1872 = vmatpush.msra.mxu0 0.0
  %1873 = vmatpush.msra.mxu0 0.0
  %1874 = vmatpush.msra.mxu0 0.0
  %1875 = vmatpush.msra.mxu0 0.0
  %1876 = vmatpush.msra.mxu0 0.0
  %1877 = vmatpush.msra.mxu0 0.0
  %1878 = vmatpush.msra.mxu0 0.0
  %1879 = vmatpush.msra.mxu0 0.0
  %1880 = vmatpush.msra.mxu0 0.0
  %1881 = vmatpush.msra.mxu0 0.0
  %1882 = vmatpush.msra.mxu0 0.0
  %1883 = vmatpush.msra.mxu0 0.0
  %1884 = vmatpush.msra.mxu0 %v1859
  %1885 = vmatmul.f32.gmra.mxu0 %v1864
  %v1886 = vpop.f32.mrf.mxu0
  %v1887 = vadd.f32 0.0, %v1886
  %1888 = vmatmul.f32.gmra.mxu0 %v1867
  %v1889 = vpop.f32.mrf.mxu0
  %v1890 = vadd.f32 0.0, %v1889
  %1891 = vdwg.mxu0
  %v1892 = vadd.f32 %v1852, %v1887
  %v1893 = vadd.f32 %v1853, %v1890
  %1894 = vrot.lane.b32.xlu0 %v1661, 121
  %v1895 = vpop.permute.xlu0 %1894
  %v1897 = vld [vmem:[%s17 + $0x6] sm:$0x1]
  %v1898 = vperm.slane %v1897, 0
  %v1899 = vmul.f32 %v1895, %v1898
  %s1900 = scalar_lea.vmem %s4, 96
  %v1901 = vld [vmem:[%s1900] sm:$0xff]
  %v1902 = vld [vmem:[%s1900 + $0x8] sm:$0xff]
  %v1904 = vsel %vm1675, %v1901, 0
  %v1907 = vsel %vm1675, %v1902, 0
  %1909 = vmatpush.msra.mxu0 0.0
  %1910 = vmatpush.msra.mxu0 0.0
  %1911 = vmatpush.msra.mxu0 0.0
  %1912 = vmatpush.msra.mxu0 0.0
  %1913 = vmatpush.msra.mxu0 0.0
  %1914 = vmatpush.msra.mxu0 0.0
  %1915 = vmatpush.msra.mxu0 0.0
  %1916 = vmatpush.msra.mxu0 0.0
  %1917 = vmatpush.msra.mxu0 0.0
  %1918 = vmatpush.msra.mxu0 0.0
  %1919 = vmatpush.msra.mxu0 0.0
  %1920 = vmatpush.msra.mxu0 0.0
  %1921 = vmatpush.msra.mxu0 0.0
  %1922 = vmatpush.msra.mxu0 0.0
  %1923 = vmatpush.msra.mxu0 0.0
  %1924 = vmatpush.msra.mxu0 %v1899
  %1925 = vmatmul.f32.gmra.mxu0 %v1904
  %v1926 = vpop.f32.mrf.mxu0
  %v1927 = vadd.f32 0.0, %v1926
  %1928 = vmatmul.f32.gmra.mxu0 %v1907
  %v1929 = vpop.f32.mrf.mxu0
  %v1930 = vadd.f32 0.0, %v1929
  %1931 = vdwg.mxu0
  %v1932 = vadd.f32 %v1892, %v1927
  %v1933 = vadd.f32 %v1893, %v1930
  %1934 = vrot.lane.b32.xlu0 %v1661, 120
  %v1935 = vpop.permute.xlu0 %1934
  %v1937 = vld [vmem:[%s17 + $0x7] sm:$0x1]
  %v1938 = vperm.slane %v1937, 0
  %v1939 = vmul.f32 %v1935, %v1938
  %s1940 = scalar_lea.vmem %s4, 112
  %v1941 = vld [vmem:[%s1940] sm:$0xff]
  %v1942 = vld [vmem:[%s1940 + $0x8] sm:$0xff]
  %v1944 = vsel %vm1675, %v1941, 0
  %v1947 = vsel %vm1675, %v1942, 0
  %1949 = vmatpush.msra.mxu0 0.0
  %1950 = vmatpush.msra.mxu0 0.0
  %1951 = vmatpush.msra.mxu0 0.0
  %1952 = vmatpush.msra.mxu0 0.0
  %1953 = vmatpush.msra.mxu0 0.0
  %1954 = vmatpush.msra.mxu0 0.0
  %1955 = vmatpush.msra.mxu0 0.0
  %1956 = vmatpush.msra.mxu0 0.0
  %1957 = vmatpush.msra.mxu0 0.0
  %1958 = vmatpush.msra.mxu0 0.0
  %1959 = vmatpush.msra.mxu0 0.0
  %1960 = vmatpush.msra.mxu0 0.0
  %1961 = vmatpush.msra.mxu0 0.0
  %1962 = vmatpush.msra.mxu0 0.0
  %1963 = vmatpush.msra.mxu0 0.0
  %1964 = vmatpush.msra.mxu0 %v1939
  %1965 = vmatmul.f32.gmra.mxu0 %v1944
  %v1966 = vpop.f32.mrf.mxu0
  %v1967 = vadd.f32 0.0, %v1966
  %1968 = vmatmul.f32.gmra.mxu0 %v1947
  %v1969 = vpop.f32.mrf.mxu0
  %v1970 = vadd.f32 0.0, %v1969
  %1971 = vdwg.mxu0
  %v1972 = vadd.f32 %v1932, %v1967
  %v1973 = vadd.f32 %v1933, %v1970
  %1974 = vrot.lane.b32.xlu0 %v1661, 119
  %v1975 = vpop.permute.xlu0 %1974
  %v1977 = vld [vmem:[%s17 + $0x8] sm:$0x1]
  %v1978 = vperm.slane %v1977, 0
  %v1979 = vmul.f32 %v1975, %v1978
  %s1980 = scalar_lea.vmem %s4, 128
  %v1981 = vld [vmem:[%s1980] sm:$0xff]
  %v1982 = vld [vmem:[%s1980 + $0x8] sm:$0xff]
  %v1984 = vsel %vm1675, %v1981, 0
  %v1987 = vsel %vm1675, %v1982, 0
  %1989 = vmatpush.msra.mxu0 0.0
  %1990 = vmatpush.msra.mxu0 0.0
  %1991 = vmatpush.msra.mxu0 0.0
  %1992 = vmatpush.msra.mxu0 0.0
  %1993 = vmatpush.msra.mxu0 0.0
  %1994 = vmatpush.msra.mxu0 0.0
  %1995 = vmatpush.msra.mxu0 0.0
  %1996 = vmatpush.msra.mxu0 0.0
  %1997 = vmatpush.msra.mxu0 0.0
  %1998 = vmatpush.msra.mxu0 0.0
  %1999 = vmatpush.msra.mxu0 0.0
  %2000 = vmatpush.msra.mxu0 0.0
  %2001 = vmatpush.msra.mxu0 0.0
  %2002 = vmatpush.msra.mxu0 0.0
  %2003 = vmatpush.msra.mxu0 0.0
  %2004 = vmatpush.msra.mxu0 %v1979
  %2005 = vmatmul.f32.gmra.mxu0 %v1984
  %v2006 = vpop.f32.mrf.mxu0
  %v2007 = vadd.f32 0.0, %v2006
  %2008 = vmatmul.f32.gmra.mxu0 %v1987
  %v2009 = vpop.f32.mrf.mxu0
  %v2010 = vadd.f32 0.0, %v2009
  %2011 = vdwg.mxu0
  %v2012 = vadd.f32 %v1972, %v2007
  %v2013 = vadd.f32 %v1973, %v2010
  %2014 = vadd.xlane.f32.xlu0 %v2012
  %v2015 = vpop.xlane.xlu0 %2014
  %2016 = vadd.xlane.f32.xlu0 %v2013
  %v2017 = vpop.xlane.xlu0 %2016
  %v2018 = vmul.f32 %v2015, 0.0078125
  %v2019 = vmul.f32 %v2017, 0.0078125
  %v2020 = vmul.f32 %v2012, %v2012
  %v2021 = vmul.f32 %v2013, %v2013
  %2022 = vadd.xlane.f32.xlu0 %v2020
  %v2023 = vpop.xlane.xlu0 %2022
  %2024 = vadd.xlane.f32.xlu0 %v2021
  %v2025 = vpop.xlane.xlu0 %2024
  %v2026 = vmul.f32 %v2023, 0.0078125
  %v2027 = vmul.f32 %v2025, 0.0078125
  %v2028 = vmul.f32 %v2018, %v2018
  %v2029 = vmul.f32 %v2019, %v2019
  %v2030 = vsub.f32 %v2026, %v2028
  %v2031 = vsub.f32 %v2027, %v2029
  %v2032 = vmax.f32 %v2030, 0.0
  %v2033 = vmax.f32 %v2031, 0.0
  %v2034 = vadd.f32 %v2032, 0.0001
  %v2035 = vadd.f32 %v2033, 0.0001
  %v2036 = vrsqrt.pop %v2034
  %v2037 = vmul.f32 %v2036, %v2034
  %v2038 = vmul.f32 %v2037, %v2036
  %v2039 = vmul.f32 0.5, %v2038
  %v2040 = vsub.f32 1.5, %v2039
  %v2041 = vmul.f32 %v2036, %v2040
  %vm2042 = vweird.f32 %v2034
  %vm2043 = vweird.f32 %v2036
  %vm2044 = vmor %vm2042, %vm2043
  %v2045 = vsel %vm2044, %v2036, %v2041
  %v2046 = vrsqrt.pop %v2035
  %v2047 = vmul.f32 %v2046, %v2035
  %v2048 = vmul.f32 %v2047, %v2046
  %v2049 = vmul.f32 0.5, %v2048
  %v2050 = vsub.f32 1.5, %v2049
  %v2051 = vmul.f32 %v2046, %v2050
  %vm2052 = vweird.f32 %v2035
  %vm2053 = vweird.f32 %v2046
  %vm2054 = vmor %vm2052, %vm2053
  %v2055 = vsel %vm2054, %v2046, %v2051
  %v2056 = vld [vmem:[%s5] sm:$0xff]
  %v2057 = vld [vmem:[%s5 + $0x8] sm:$0xff]
  %v2058 = vmul.f32 %v2045, %v2056
  %v2059 = vmul.f32 %v2055, %v2057
  %v2060 = vld [vmem:[%s6] sm:$0xff]
  %v2061 = vld [vmem:[%s6 + $0x8] sm:$0xff]
  %v2062 = vmul.f32 %v2018, %v2058
  %v2063 = vmul.f32 %v2019, %v2059
  %v2064 = vsub.f32 %v2060, %v2062
  %v2065 = vsub.f32 %v2061, %v2063
  %2067 = vset.pattern.permute.xlu0 0
  %2068 = vperm.xlu0 %2067, %v2058
  %v2069 = vpop.permute.xlu0 %2068
  %2072 = vset.pattern.permute.xlu0 0
  %2073 = vperm.xlu0 %2072, %v2059
  %v2074 = vpop.permute.xlu0 %2073
  %v2076 = vmul.f32 %v2012, %v2069
  %v2077 = vmul.f32 %v2013, %v2074
  %2079 = vset.pattern.permute.xlu0 0
  %2080 = vperm.xlu0 %2079, %v2064
  %v2081 = vpop.permute.xlu0 %2080
  %2084 = vset.pattern.permute.xlu0 0
  %2085 = vperm.xlu0 %2084, %v2065
  %v2086 = vpop.permute.xlu0 %2085
  %v2088 = vadd.f32 %v2076, %v2081
  %v2089 = vadd.f32 %v2077, %v2086
  %vm2090 = vcmp.ge.f32.partialorder %v2088, 0.0
  %vm2091 = vcmp.ge.f32.partialorder %v2089, 0.0
  %v2092 = vmul.f32 %v2088, 0.01
  %v2093 = vmul.f32 %v2089, 0.01
  %v2094 = vsel %vm2090, %v2088, %v2092
  %v2095 = vsel %vm2091, %v2089, %v2093
  %2098 = vrot.lane.b32.xlu0 %v2094, 127
  %v2099 = vpop.permute.xlu0 %2098
  %2100 = vrot.lane.b32.xlu0 %v2095, 127
  %v2101 = vpop.permute.xlu0 %2100
  %v2104 = vmax.f32 %v2094, %v2099
  %v2105 = vmax.f32 %v2095, %v2101
  %2108 = vrot.lane.b32.xlu0 %v2104, 120
  %v2109 = vpop.permute.xlu0 %2108
  %2110 = vrot.lane.b32.xlu0 %v2105, 120
  %v2111 = vpop.permute.xlu0 %2110
  %v2114 = vmax.f32 %v2104, %v2109
  %v2115 = vmax.f32 %v2105, %v2111
  %v2116 = vld [vmem:[%s20] sm:$0xf]
  %v2117 = vld [vmem:[%s20 + $0x4] sm:$0xf]
  %v2118 = vld [vmem:[%s20 + $0x8] sm:$0xf]
  %v2119 = vld [vmem:[%s20 + $0xc] sm:$0xf]
  %v2120 = vld [vmem:[%s20 + $0x10] sm:$0xf]
  %v2121 = vld [vmem:[%s20 + $0x14] sm:$0xf]
  %v2122 = vld [vmem:[%s20 + $0x18] sm:$0xf]
  %v2123 = vld [vmem:[%s20 + $0x1c] sm:$0xf]
  %v2124 = vld [vmem:[%s20 + $0x20] sm:$0xf]
  %v2125 = vld [vmem:[%s20 + $0x24] sm:$0xf]
  %v2126 = vld [vmem:[%s20 + $0x28] sm:$0xf]
  %v2127 = vld [vmem:[%s20 + $0x2c] sm:$0xf]
  %v2128 = vld [vmem:[%s20 + $0x30] sm:$0xf]
  %v2129 = vld [vmem:[%s20 + $0x34] sm:$0xf]
  %v2130 = vld [vmem:[%s20 + $0x38] sm:$0xf]
  %v2131 = vld [vmem:[%s20 + $0x3c] sm:$0xf]
  %v2132 = vunpack.c.l.bf16 %v2116
  %v2133 = vunpack.c.l.bf16 %v2117
  %v2134 = vunpack.c.l.bf16 %v2118
  %v2135 = vunpack.c.l.bf16 %v2119
  %v2136 = vunpack.c.l.bf16 %v2120
  %v2137 = vunpack.c.l.bf16 %v2121
  %v2138 = vunpack.c.l.bf16 %v2122
  %v2139 = vunpack.c.l.bf16 %v2123
  %v2140 = vunpack.c.l.bf16 %v2124
  %v2141 = vunpack.c.l.bf16 %v2125
  %v2142 = vunpack.c.l.bf16 %v2126
  %v2143 = vunpack.c.l.bf16 %v2127
  %v2144 = vunpack.c.l.bf16 %v2128
  %v2145 = vunpack.c.l.bf16 %v2129
  %v2146 = vunpack.c.l.bf16 %v2130
  %v2147 = vunpack.c.l.bf16 %v2131
  %2148 = vmatpush.msra.mxu0 %v2147
  %2149 = vmatpush.msra.mxu0 %v2146
  %2150 = vmatpush.msra.mxu0 %v2145
  %2151 = vmatpush.msra.mxu0 %v2144
  %2152 = vmatpush.msra.mxu0 %v2143
  %2153 = vmatpush.msra.mxu0 %v2142
  %2154 = vmatpush.msra.mxu0 %v2141
  %2155 = vmatpush.msra.mxu0 %v2140
  %2156 = vmatpush.msra.mxu0 %v2139
  %2157 = vmatpush.msra.mxu0 %v2138
  %2158 = vmatpush.msra.mxu0 %v2137
  %2159 = vmatpush.msra.mxu0 %v2136
  %2160 = vmatpush.msra.mxu0 %v2135
  %2161 = vmatpush.msra.mxu0 %v2134
  %2162 = vmatpush.msra.mxu0 %v2133
  %2163 = vmatpush.msra.mxu0 %v2132
  %2164 = vmatmul.f32.gmra.mxu0 %v2114
  %v2165 = vpop.f32.mrf.mxu0
  %v2166 = vadd.f32 0.0, %v2165
  %2167 = vmatmul.f32.gmra.mxu0 %v2115
  %v2168 = vpop.f32.mrf.mxu0
  %v2169 = vadd.f32 0.0, %v2168
  %2170 = vdwg.mxu0
  %v2171 = vld [vmem:[%s7] sm:$0xff]
  %v2172 = vld [vmem:[%s7 + $0x8] sm:$0xff]
  %v2173 = vld [vmem:[%s7 + $0x10] sm:$0xff]
  %v2174 = vld [vmem:[%s7 + $0x18] sm:$0xff]
  %s2175 = scalar_lea.vmem %s7, 32
  %v2176 = vld [vmem:[%s2175] sm:$0xff]
  %v2177 = vld [vmem:[%s2175 + $0x8] sm:$0xff]
  %v2178 = vld [vmem:[%s2175 + $0x10] sm:$0xff]
  %v2179 = vld [vmem:[%s2175 + $0x18] sm:$0xff]
  %2182 = vrot.lane.b32.xlu0 %v2166, 126
  %v2183 = vpop.permute.xlu0 %2182
  %2184 = vrot.lane.b32.xlu0 %v2169, 126
  %v2185 = vpop.permute.xlu0 %2184
  %v2189 = vsel %vm148, %v2176, 0
  %v2192 = vsel %vm148, %v2177, 0
  %v2195 = vsel %vm148, %v2178, 0
  %v2198 = vsel %vm148, %v2179, 0
  %2200 = vmatpush.msra.mxu0 0.0
  %2201 = vmatpush.msra.mxu0 0.0
  %2202 = vmatpush.msra.mxu0 0.0
  %2203 = vmatpush.msra.mxu0 0.0
  %2204 = vmatpush.msra.mxu0 0.0
  %2205 = vmatpush.msra.mxu0 0.0
  %2206 = vmatpush.msra.mxu0 0.0
  %2207 = vmatpush.msra.mxu0 0.0
  %2208 = vmatpush.msra.mxu0 0.0
  %2209 = vmatpush.msra.mxu0 0.0
  %2210 = vmatpush.msra.mxu0 0.0
  %2211 = vmatpush.msra.mxu0 0.0
  %2212 = vmatpush.msra.mxu0 0.0
  %2213 = vmatpush.msra.mxu0 0.0
  %2214 = vmatpush.msra.mxu0 %v2185
  %2215 = vmatpush.msra.mxu0 %v2183
  %2216 = vmatmul.f32.gmra.mxu0 %v2189
  %v2217 = vpop.f32.mrf.mxu0
  %v2218 = vadd.f32 0.0, %v2217
  %2219 = vmatmul.f32.gmra.mxu0 %v2192
  %v2220 = vpop.f32.mrf.mxu0
  %v2221 = vadd.f32 0.0, %v2220
  %2222 = vmatmul.f32.gmra.mxu0 %v2195
  %v2223 = vpop.f32.mrf.mxu0
  %v2224 = vadd.f32 0.0, %v2223
  %2225 = vmatmul.f32.gmra.mxu0 %v2198
  %v2226 = vpop.f32.mrf.mxu0
  %v2227 = vadd.f32 0.0, %v2226
  %2228 = vdwg.mxu0
  %v2230 = vsel %vm148, %v2171, 0
  %v2233 = vsel %vm148, %v2172, 0
  %v2236 = vsel %vm148, %v2173, 0
  %v2239 = vsel %vm148, %v2174, 0
  %2241 = vmatpush.msra.mxu0 0.0
  %2242 = vmatpush.msra.mxu0 0.0
  %2243 = vmatpush.msra.mxu0 0.0
  %2244 = vmatpush.msra.mxu0 0.0
  %2245 = vmatpush.msra.mxu0 0.0
  %2246 = vmatpush.msra.mxu0 0.0
  %2247 = vmatpush.msra.mxu0 0.0
  %2248 = vmatpush.msra.mxu0 0.0
  %2249 = vmatpush.msra.mxu0 0.0
  %2250 = vmatpush.msra.mxu0 0.0
  %2251 = vmatpush.msra.mxu0 0.0
  %2252 = vmatpush.msra.mxu0 0.0
  %2253 = vmatpush.msra.mxu0 0.0
  %2254 = vmatpush.msra.mxu0 0.0
  %2255 = vmatpush.msra.mxu0 %v2169
  %2256 = vmatpush.msra.mxu0 %v2166
  %2257 = vmatmul.f32.gmra.mxu0 %v2230
  %v2258 = vpop.f32.mrf.mxu0
  %v2259 = vadd.f32 %v2218, %v2258
  %2260 = vmatmul.f32.gmra.mxu0 %v2233
  %v2261 = vpop.f32.mrf.mxu0
  %v2262 = vadd.f32 %v2221, %v2261
  %2263 = vmatmul.f32.gmra.mxu0 %v2236
  %v2264 = vpop.f32.mrf.mxu0
  %v2265 = vadd.f32 %v2224, %v2264
  %2266 = vmatmul.f32.gmra.mxu0 %v2239
  %v2267 = vpop.f32.mrf.mxu0
  %v2268 = vadd.f32 %v2227, %v2267
  %2269 = vdwg.mxu0
  %s2270 = scalar_lea.vmem %s7, 64
  %v2271 = vld [vmem:[%s2270] sm:$0xff]
  %v2272 = vld [vmem:[%s2270 + $0x8] sm:$0xff]
  %v2273 = vld [vmem:[%s2270 + $0x10] sm:$0xff]
  %v2274 = vld [vmem:[%s2270 + $0x18] sm:$0xff]
  %2275 = vrot.lane.b32.xlu0 %v2166, 124
  %v2276 = vpop.permute.xlu0 %2275
  %2277 = vrot.lane.b32.xlu0 %v2169, 124
  %v2278 = vpop.permute.xlu0 %2277
  %v2282 = vsel %vm148, %v2271, 0
  %v2285 = vsel %vm148, %v2272, 0
  %v2288 = vsel %vm148, %v2273, 0
  %v2291 = vsel %vm148, %v2274, 0
  %2293 = vmatpush.msra.mxu0 0.0
  %2294 = vmatpush.msra.mxu0 0.0
  %2295 = vmatpush.msra.mxu0 0.0
  %2296 = vmatpush.msra.mxu0 0.0
  %2297 = vmatpush.msra.mxu0 0.0
  %2298 = vmatpush.msra.mxu0 0.0
  %2299 = vmatpush.msra.mxu0 0.0
  %2300 = vmatpush.msra.mxu0 0.0
  %2301 = vmatpush.msra.mxu0 0.0
  %2302 = vmatpush.msra.mxu0 0.0
  %2303 = vmatpush.msra.mxu0 0.0
  %2304 = vmatpush.msra.mxu0 0.0
  %2305 = vmatpush.msra.mxu0 0.0
  %2306 = vmatpush.msra.mxu0 0.0
  %2307 = vmatpush.msra.mxu0 %v2278
  %2308 = vmatpush.msra.mxu0 %v2276
  %2309 = vmatmul.f32.gmra.mxu0 %v2282
  %v2310 = vpop.f32.mrf.mxu0
  %v2311 = vadd.f32 0.0, %v2310
  %2312 = vmatmul.f32.gmra.mxu0 %v2285
  %v2313 = vpop.f32.mrf.mxu0
  %v2314 = vadd.f32 0.0, %v2313
  %2315 = vmatmul.f32.gmra.mxu0 %v2288
  %v2316 = vpop.f32.mrf.mxu0
  %v2317 = vadd.f32 0.0, %v2316
  %2318 = vmatmul.f32.gmra.mxu0 %v2291
  %v2319 = vpop.f32.mrf.mxu0
  %v2320 = vadd.f32 0.0, %v2319
  %2321 = vdwg.mxu0
  %v2322 = vadd.f32 %v2259, %v2311
  %v2323 = vadd.f32 %v2262, %v2314
  %v2324 = vadd.f32 %v2265, %v2317
  %v2325 = vadd.f32 %v2268, %v2320
  %s2326 = scalar_lea.vmem %s7, 96
  %v2327 = vld [vmem:[%s2326] sm:$0xff]
  %v2328 = vld [vmem:[%s2326 + $0x8] sm:$0xff]
  %v2329 = vld [vmem:[%s2326 + $0x10] sm:$0xff]
  %v2330 = vld [vmem:[%s2326 + $0x18] sm:$0xff]
  %2331 = vrot.lane.b32.xlu0 %v2166, 122
  %v2332 = vpop.permute.xlu0 %2331
  %2333 = vrot.lane.b32.xlu0 %v2169, 122
  %v2334 = vpop.permute.xlu0 %2333
  %v2338 = vsel %vm148, %v2327, 0
  %v2341 = vsel %vm148, %v2328, 0
  %v2344 = vsel %vm148, %v2329, 0
  %v2347 = vsel %vm148, %v2330, 0
  %2349 = vmatpush.msra.mxu0 0.0
  %2350 = vmatpush.msra.mxu0 0.0
  %2351 = vmatpush.msra.mxu0 0.0
  %2352 = vmatpush.msra.mxu0 0.0
  %2353 = vmatpush.msra.mxu0 0.0
  %2354 = vmatpush.msra.mxu0 0.0
  %2355 = vmatpush.msra.mxu0 0.0
  %2356 = vmatpush.msra.mxu0 0.0
  %2357 = vmatpush.msra.mxu0 0.0
  %2358 = vmatpush.msra.mxu0 0.0
  %2359 = vmatpush.msra.mxu0 0.0
  %2360 = vmatpush.msra.mxu0 0.0
  %2361 = vmatpush.msra.mxu0 0.0
  %2362 = vmatpush.msra.mxu0 0.0
  %2363 = vmatpush.msra.mxu0 %v2334
  %2364 = vmatpush.msra.mxu0 %v2332
  %2365 = vmatmul.f32.gmra.mxu0 %v2338
  %v2366 = vpop.f32.mrf.mxu0
  %v2367 = vadd.f32 0.0, %v2366
  %2368 = vmatmul.f32.gmra.mxu0 %v2341
  %v2369 = vpop.f32.mrf.mxu0
  %v2370 = vadd.f32 0.0, %v2369
  %2371 = vmatmul.f32.gmra.mxu0 %v2344
  %v2372 = vpop.f32.mrf.mxu0
  %v2373 = vadd.f32 0.0, %v2372
  %2374 = vmatmul.f32.gmra.mxu0 %v2347
  %v2375 = vpop.f32.mrf.mxu0
  %v2376 = vadd.f32 0.0, %v2375
  %2377 = vdwg.mxu0
  %v2378 = vadd.f32 %v2322, %v2367
  %v2379 = vadd.f32 %v2323, %v2370
  %v2380 = vadd.f32 %v2324, %v2373
  %v2381 = vadd.f32 %v2325, %v2376
  %s2382 = scalar_lea.vmem %s7, 128
  %v2383 = vld [vmem:[%s2382] sm:$0xff]
  %v2384 = vld [vmem:[%s2382 + $0x8] sm:$0xff]
  %v2385 = vld [vmem:[%s2382 + $0x10] sm:$0xff]
  %v2386 = vld [vmem:[%s2382 + $0x18] sm:$0xff]
  %2387 = vrot.lane.b32.xlu0 %v2166, 120
  %v2388 = vpop.permute.xlu0 %2387
  %2389 = vrot.lane.b32.xlu0 %v2169, 120
  %v2390 = vpop.permute.xlu0 %2389
  %v2394 = vsel %vm148, %v2383, 0
  %v2397 = vsel %vm148, %v2384, 0
  %v2400 = vsel %vm148, %v2385, 0
  %v2403 = vsel %vm148, %v2386, 0
  %2405 = vmatpush.msra.mxu0 0.0
  %2406 = vmatpush.msra.mxu0 0.0
  %2407 = vmatpush.msra.mxu0 0.0
  %2408 = vmatpush.msra.mxu0 0.0
  %2409 = vmatpush.msra.mxu0 0.0
  %2410 = vmatpush.msra.mxu0 0.0
  %2411 = vmatpush.msra.mxu0 0.0
  %2412 = vmatpush.msra.mxu0 0.0
  %2413 = vmatpush.msra.mxu0 0.0
  %2414 = vmatpush.msra.mxu0 0.0
  %2415 = vmatpush.msra.mxu0 0.0
  %2416 = vmatpush.msra.mxu0 0.0
  %2417 = vmatpush.msra.mxu0 0.0
  %2418 = vmatpush.msra.mxu0 0.0
  %2419 = vmatpush.msra.mxu0 %v2390
  %2420 = vmatpush.msra.mxu0 %v2388
  %2421 = vmatmul.f32.gmra.mxu0 %v2394
  %v2422 = vpop.f32.mrf.mxu0
  %v2423 = vadd.f32 0.0, %v2422
  %2424 = vmatmul.f32.gmra.mxu0 %v2397
  %v2425 = vpop.f32.mrf.mxu0
  %v2426 = vadd.f32 0.0, %v2425
  %2427 = vmatmul.f32.gmra.mxu0 %v2400
  %v2428 = vpop.f32.mrf.mxu0
  %v2429 = vadd.f32 0.0, %v2428
  %2430 = vmatmul.f32.gmra.mxu0 %v2403
  %v2431 = vpop.f32.mrf.mxu0
  %v2432 = vadd.f32 0.0, %v2431
  %2433 = vdwg.mxu0
  %v2434 = vadd.f32 %v2378, %v2423
  %v2435 = vadd.f32 %v2379, %v2426
  %v2436 = vadd.f32 %v2380, %v2429
  %v2437 = vadd.f32 %v2381, %v2432
  %s2438 = scalar_lea.vmem %s7, 160
  %v2439 = vld [vmem:[%s2438] sm:$0xff]
  %v2440 = vld [vmem:[%s2438 + $0x8] sm:$0xff]
  %v2441 = vld [vmem:[%s2438 + $0x10] sm:$0xff]
  %v2442 = vld [vmem:[%s2438 + $0x18] sm:$0xff]
  %2443 = vrot.lane.b32.xlu0 %v2166, 118
  %v2444 = vpop.permute.xlu0 %2443
  %2445 = vrot.lane.b32.xlu0 %v2169, 118
  %v2446 = vpop.permute.xlu0 %2445
  %v2450 = vsel %vm148, %v2439, 0
  %v2453 = vsel %vm148, %v2440, 0
  %v2456 = vsel %vm148, %v2441, 0
  %v2459 = vsel %vm148, %v2442, 0
  %2461 = vmatpush.msra.mxu0 0.0
  %2462 = vmatpush.msra.mxu0 0.0
  %2463 = vmatpush.msra.mxu0 0.0
  %2464 = vmatpush.msra.mxu0 0.0
  %2465 = vmatpush.msra.mxu0 0.0
  %2466 = vmatpush.msra.mxu0 0.0
  %2467 = vmatpush.msra.mxu0 0.0
  %2468 = vmatpush.msra.mxu0 0.0
  %2469 = vmatpush.msra.mxu0 0.0
  %2470 = vmatpush.msra.mxu0 0.0
  %2471 = vmatpush.msra.mxu0 0.0
  %2472 = vmatpush.msra.mxu0 0.0
  %2473 = vmatpush.msra.mxu0 0.0
  %2474 = vmatpush.msra.mxu0 0.0
  %2475 = vmatpush.msra.mxu0 %v2446
  %2476 = vmatpush.msra.mxu0 %v2444
  %2477 = vmatmul.f32.gmra.mxu0 %v2450
  %v2478 = vpop.f32.mrf.mxu0
  %v2479 = vadd.f32 0.0, %v2478
  %2480 = vmatmul.f32.gmra.mxu0 %v2453
  %v2481 = vpop.f32.mrf.mxu0
  %v2482 = vadd.f32 0.0, %v2481
  %2483 = vmatmul.f32.gmra.mxu0 %v2456
  %v2484 = vpop.f32.mrf.mxu0
  %v2485 = vadd.f32 0.0, %v2484
  %2486 = vmatmul.f32.gmra.mxu0 %v2459
  %v2487 = vpop.f32.mrf.mxu0
  %v2488 = vadd.f32 0.0, %v2487
  %2489 = vdwg.mxu0
  %v2490 = vadd.f32 %v2434, %v2479
  %v2491 = vadd.f32 %v2435, %v2482
  %v2492 = vadd.f32 %v2436, %v2485
  %v2493 = vadd.f32 %v2437, %v2488
  %s2494 = scalar_lea.vmem %s7, 192
  %v2495 = vld [vmem:[%s2494] sm:$0xff]
  %v2496 = vld [vmem:[%s2494 + $0x8] sm:$0xff]
  %v2497 = vld [vmem:[%s2494 + $0x10] sm:$0xff]
  %v2498 = vld [vmem:[%s2494 + $0x18] sm:$0xff]
  %2499 = vrot.lane.b32.xlu0 %v2166, 116
  %v2500 = vpop.permute.xlu0 %2499
  %2501 = vrot.lane.b32.xlu0 %v2169, 116
  %v2502 = vpop.permute.xlu0 %2501
  %v2506 = vsel %vm148, %v2495, 0
  %v2509 = vsel %vm148, %v2496, 0
  %v2512 = vsel %vm148, %v2497, 0
  %v2515 = vsel %vm148, %v2498, 0
  %2517 = vmatpush.msra.mxu0 0.0
  %2518 = vmatpush.msra.mxu0 0.0
  %2519 = vmatpush.msra.mxu0 0.0
  %2520 = vmatpush.msra.mxu0 0.0
  %2521 = vmatpush.msra.mxu0 0.0
  %2522 = vmatpush.msra.mxu0 0.0
  %2523 = vmatpush.msra.mxu0 0.0
  %2524 = vmatpush.msra.mxu0 0.0
  %2525 = vmatpush.msra.mxu0 0.0
  %2526 = vmatpush.msra.mxu0 0.0
  %2527 = vmatpush.msra.mxu0 0.0
  %2528 = vmatpush.msra.mxu0 0.0
  %2529 = vmatpush.msra.mxu0 0.0
  %2530 = vmatpush.msra.mxu0 0.0
  %2531 = vmatpush.msra.mxu0 %v2502
  %2532 = vmatpush.msra.mxu0 %v2500
  %2533 = vmatmul.f32.gmra.mxu0 %v2506
  %v2534 = vpop.f32.mrf.mxu0
  %v2535 = vadd.f32 0.0, %v2534
  %2536 = vmatmul.f32.gmra.mxu0 %v2509
  %v2537 = vpop.f32.mrf.mxu0
  %v2538 = vadd.f32 0.0, %v2537
  %2539 = vmatmul.f32.gmra.mxu0 %v2512
  %v2540 = vpop.f32.mrf.mxu0
  %v2541 = vadd.f32 0.0, %v2540
  %2542 = vmatmul.f32.gmra.mxu0 %v2515
  %v2543 = vpop.f32.mrf.mxu0
  %v2544 = vadd.f32 0.0, %v2543
  %2545 = vdwg.mxu0
  %v2546 = vadd.f32 %v2490, %v2535
  %v2547 = vadd.f32 %v2491, %v2538
  %v2548 = vadd.f32 %v2492, %v2541
  %v2549 = vadd.f32 %v2493, %v2544
  %s2550 = scalar_lea.vmem %s7, 224
  %v2551 = vld [vmem:[%s2550] sm:$0xff]
  %v2552 = vld [vmem:[%s2550 + $0x8] sm:$0xff]
  %v2553 = vld [vmem:[%s2550 + $0x10] sm:$0xff]
  %v2554 = vld [vmem:[%s2550 + $0x18] sm:$0xff]
  %2555 = vrot.lane.b32.xlu0 %v2166, 114
  %v2556 = vpop.permute.xlu0 %2555
  %2557 = vrot.lane.b32.xlu0 %v2169, 114
  %v2558 = vpop.permute.xlu0 %2557
  %v2562 = vsel %vm148, %v2551, 0
  %v2565 = vsel %vm148, %v2552, 0
  %v2568 = vsel %vm148, %v2553, 0
  %v2571 = vsel %vm148, %v2554, 0
  %2573 = vmatpush.msra.mxu0 0.0
  %2574 = vmatpush.msra.mxu0 0.0
  %2575 = vmatpush.msra.mxu0 0.0
  %2576 = vmatpush.msra.mxu0 0.0
  %2577 = vmatpush.msra.mxu0 0.0
  %2578 = vmatpush.msra.mxu0 0.0
  %2579 = vmatpush.msra.mxu0 0.0
  %2580 = vmatpush.msra.mxu0 0.0
  %2581 = vmatpush.msra.mxu0 0.0
  %2582 = vmatpush.msra.mxu0 0.0
  %2583 = vmatpush.msra.mxu0 0.0
  %2584 = vmatpush.msra.mxu0 0.0
  %2585 = vmatpush.msra.mxu0 0.0
  %2586 = vmatpush.msra.mxu0 0.0
  %2587 = vmatpush.msra.mxu0 %v2558
  %2588 = vmatpush.msra.mxu0 %v2556
  %2589 = vmatmul.f32.gmra.mxu0 %v2562
  %v2590 = vpop.f32.mrf.mxu0
  %v2591 = vadd.f32 0.0, %v2590
  %2592 = vmatmul.f32.gmra.mxu0 %v2565
  %v2593 = vpop.f32.mrf.mxu0
  %v2594 = vadd.f32 0.0, %v2593
  %2595 = vmatmul.f32.gmra.mxu0 %v2568
  %v2596 = vpop.f32.mrf.mxu0
  %v2597 = vadd.f32 0.0, %v2596
  %2598 = vmatmul.f32.gmra.mxu0 %v2571
  %v2599 = vpop.f32.mrf.mxu0
  %v2600 = vadd.f32 0.0, %v2599
  %2601 = vdwg.mxu0
  %v2602 = vadd.f32 %v2546, %v2591
  %v2603 = vadd.f32 %v2547, %v2594
  %v2604 = vadd.f32 %v2548, %v2597
  %v2605 = vadd.f32 %v2549, %v2600
  %s2606 = scalar_lea.vmem %s7, 256
  %v2607 = vld [vmem:[%s2606] sm:$0xff]
  %v2608 = vld [vmem:[%s2606 + $0x8] sm:$0xff]
  %v2609 = vld [vmem:[%s2606 + $0x10] sm:$0xff]
  %v2610 = vld [vmem:[%s2606 + $0x18] sm:$0xff]
  %2611 = vrot.lane.b32.xlu0 %v2166, 112
  %v2612 = vpop.permute.xlu0 %2611
  %2613 = vrot.lane.b32.xlu0 %v2169, 112
  %v2614 = vpop.permute.xlu0 %2613
  %v2618 = vsel %vm148, %v2607, 0
  %v2621 = vsel %vm148, %v2608, 0
  %v2624 = vsel %vm148, %v2609, 0
  %v2627 = vsel %vm148, %v2610, 0
  %2629 = vmatpush.msra.mxu0 0.0
  %2630 = vmatpush.msra.mxu0 0.0
  %2631 = vmatpush.msra.mxu0 0.0
  %2632 = vmatpush.msra.mxu0 0.0
  %2633 = vmatpush.msra.mxu0 0.0
  %2634 = vmatpush.msra.mxu0 0.0
  %2635 = vmatpush.msra.mxu0 0.0
  %2636 = vmatpush.msra.mxu0 0.0
  %2637 = vmatpush.msra.mxu0 0.0
  %2638 = vmatpush.msra.mxu0 0.0
  %2639 = vmatpush.msra.mxu0 0.0
  %2640 = vmatpush.msra.mxu0 0.0
  %2641 = vmatpush.msra.mxu0 0.0
  %2642 = vmatpush.msra.mxu0 0.0
  %2643 = vmatpush.msra.mxu0 %v2614
  %2644 = vmatpush.msra.mxu0 %v2612
  %2645 = vmatmul.f32.gmra.mxu0 %v2618
  %v2646 = vpop.f32.mrf.mxu0
  %v2647 = vadd.f32 0.0, %v2646
  %2648 = vmatmul.f32.gmra.mxu0 %v2621
  %v2649 = vpop.f32.mrf.mxu0
  %v2650 = vadd.f32 0.0, %v2649
  %2651 = vmatmul.f32.gmra.mxu0 %v2624
  %v2652 = vpop.f32.mrf.mxu0
  %v2653 = vadd.f32 0.0, %v2652
  %2654 = vmatmul.f32.gmra.mxu0 %v2627
  %v2655 = vpop.f32.mrf.mxu0
  %v2656 = vadd.f32 0.0, %v2655
  %2657 = vdwg.mxu0
  %v2658 = vadd.f32 %v2602, %v2647
  %v2659 = vadd.f32 %v2603, %v2650
  %v2660 = vadd.f32 %v2604, %v2653
  %v2661 = vadd.f32 %v2605, %v2656
  %s2662 = scalar_lea.vmem %s7, 288
  %v2663 = vld [vmem:[%s2662] sm:$0xff]
  %v2664 = vld [vmem:[%s2662 + $0x8] sm:$0xff]
  %v2665 = vld [vmem:[%s2662 + $0x10] sm:$0xff]
  %v2666 = vld [vmem:[%s2662 + $0x18] sm:$0xff]
  %2667 = vrot.lane.b32.xlu0 %v2166, 110
  %v2668 = vpop.permute.xlu0 %2667
  %2669 = vrot.lane.b32.xlu0 %v2169, 110
  %v2670 = vpop.permute.xlu0 %2669
  %v2674 = vsel %vm148, %v2663, 0
  %v2677 = vsel %vm148, %v2664, 0
  %v2680 = vsel %vm148, %v2665, 0
  %v2683 = vsel %vm148, %v2666, 0
  %2685 = vmatpush.msra.mxu0 0.0
  %2686 = vmatpush.msra.mxu0 0.0
  %2687 = vmatpush.msra.mxu0 0.0
  %2688 = vmatpush.msra.mxu0 0.0
  %2689 = vmatpush.msra.mxu0 0.0
  %2690 = vmatpush.msra.mxu0 0.0
  %2691 = vmatpush.msra.mxu0 0.0
  %2692 = vmatpush.msra.mxu0 0.0
  %2693 = vmatpush.msra.mxu0 0.0
  %2694 = vmatpush.msra.mxu0 0.0
  %2695 = vmatpush.msra.mxu0 0.0
  %2696 = vmatpush.msra.mxu0 0.0
  %2697 = vmatpush.msra.mxu0 0.0
  %2698 = vmatpush.msra.mxu0 0.0
  %2699 = vmatpush.msra.mxu0 %v2670
  %2700 = vmatpush.msra.mxu0 %v2668
  %2701 = vmatmul.f32.gmra.mxu0 %v2674
  %v2702 = vpop.f32.mrf.mxu0
  %v2703 = vadd.f32 0.0, %v2702
  %2704 = vmatmul.f32.gmra.mxu0 %v2677
  %v2705 = vpop.f32.mrf.mxu0
  %v2706 = vadd.f32 0.0, %v2705
  %2707 = vmatmul.f32.gmra.mxu0 %v2680
  %v2708 = vpop.f32.mrf.mxu0
  %v2709 = vadd.f32 0.0, %v2708
  %2710 = vmatmul.f32.gmra.mxu0 %v2683
  %v2711 = vpop.f32.mrf.mxu0
  %v2712 = vadd.f32 0.0, %v2711
  %2713 = vdwg.mxu0
  %v2714 = vadd.f32 %v2658, %v2703
  %v2715 = vadd.f32 %v2659, %v2706
  %v2716 = vadd.f32 %v2660, %v2709
  %v2717 = vadd.f32 %v2661, %v2712
  %s2718 = scalar_lea.vmem %s7, 320
  %v2719 = vld [vmem:[%s2718] sm:$0xff]
  %v2720 = vld [vmem:[%s2718 + $0x8] sm:$0xff]
  %v2721 = vld [vmem:[%s2718 + $0x10] sm:$0xff]
  %v2722 = vld [vmem:[%s2718 + $0x18] sm:$0xff]
  %2723 = vrot.lane.b32.xlu0 %v2166, 108
  %v2724 = vpop.permute.xlu0 %2723
  %2725 = vrot.lane.b32.xlu0 %v2169, 108
  %v2726 = vpop.permute.xlu0 %2725
  %v2730 = vsel %vm148, %v2719, 0
  %v2733 = vsel %vm148, %v2720, 0
  %v2736 = vsel %vm148, %v2721, 0
  %v2739 = vsel %vm148, %v2722, 0
  %2741 = vmatpush.msra.mxu0 0.0
  %2742 = vmatpush.msra.mxu0 0.0
  %2743 = vmatpush.msra.mxu0 0.0
  %2744 = vmatpush.msra.mxu0 0.0
  %2745 = vmatpush.msra.mxu0 0.0
  %2746 = vmatpush.msra.mxu0 0.0
  %2747 = vmatpush.msra.mxu0 0.0
  %2748 = vmatpush.msra.mxu0 0.0
  %2749 = vmatpush.msra.mxu0 0.0
  %2750 = vmatpush.msra.mxu0 0.0
  %2751 = vmatpush.msra.mxu0 0.0
  %2752 = vmatpush.msra.mxu0 0.0
  %2753 = vmatpush.msra.mxu0 0.0
  %2754 = vmatpush.msra.mxu0 0.0
  %2755 = vmatpush.msra.mxu0 %v2726
  %2756 = vmatpush.msra.mxu0 %v2724
  %2757 = vmatmul.f32.gmra.mxu0 %v2730
  %v2758 = vpop.f32.mrf.mxu0
  %v2759 = vadd.f32 0.0, %v2758
  %2760 = vmatmul.f32.gmra.mxu0 %v2733
  %v2761 = vpop.f32.mrf.mxu0
  %v2762 = vadd.f32 0.0, %v2761
  %2763 = vmatmul.f32.gmra.mxu0 %v2736
  %v2764 = vpop.f32.mrf.mxu0
  %v2765 = vadd.f32 0.0, %v2764
  %2766 = vmatmul.f32.gmra.mxu0 %v2739
  %v2767 = vpop.f32.mrf.mxu0
  %v2768 = vadd.f32 0.0, %v2767
  %2769 = vdwg.mxu0
  %v2770 = vadd.f32 %v2714, %v2759
  %v2771 = vadd.f32 %v2715, %v2762
  %v2772 = vadd.f32 %v2716, %v2765
  %v2773 = vadd.f32 %v2717, %v2768
  %s2774 = scalar_lea.vmem %s7, 352
  %v2775 = vld [vmem:[%s2774] sm:$0xff]
  %v2776 = vld [vmem:[%s2774 + $0x8] sm:$0xff]
  %v2777 = vld [vmem:[%s2774 + $0x10] sm:$0xff]
  %v2778 = vld [vmem:[%s2774 + $0x18] sm:$0xff]
  %2779 = vrot.lane.b32.xlu0 %v2166, 106
  %v2780 = vpop.permute.xlu0 %2779
  %2781 = vrot.lane.b32.xlu0 %v2169, 106
  %v2782 = vpop.permute.xlu0 %2781
  %v2786 = vsel %vm148, %v2775, 0
  %v2789 = vsel %vm148, %v2776, 0
  %v2792 = vsel %vm148, %v2777, 0
  %v2795 = vsel %vm148, %v2778, 0
  %2797 = vmatpush.msra.mxu0 0.0
  %2798 = vmatpush.msra.mxu0 0.0
  %2799 = vmatpush.msra.mxu0 0.0
  %2800 = vmatpush.msra.mxu0 0.0
  %2801 = vmatpush.msra.mxu0 0.0
  %2802 = vmatpush.msra.mxu0 0.0
  %2803 = vmatpush.msra.mxu0 0.0
  %2804 = vmatpush.msra.mxu0 0.0
  %2805 = vmatpush.msra.mxu0 0.0
  %2806 = vmatpush.msra.mxu0 0.0
  %2807 = vmatpush.msra.mxu0 0.0
  %2808 = vmatpush.msra.mxu0 0.0
  %2809 = vmatpush.msra.mxu0 0.0
  %2810 = vmatpush.msra.mxu0 0.0
  %2811 = vmatpush.msra.mxu0 %v2782
  %2812 = vmatpush.msra.mxu0 %v2780
  %2813 = vmatmul.f32.gmra.mxu0 %v2786
  %v2814 = vpop.f32.mrf.mxu0
  %v2815 = vadd.f32 0.0, %v2814
  %2816 = vmatmul.f32.gmra.mxu0 %v2789
  %v2817 = vpop.f32.mrf.mxu0
  %v2818 = vadd.f32 0.0, %v2817
  %2819 = vmatmul.f32.gmra.mxu0 %v2792
  %v2820 = vpop.f32.mrf.mxu0
  %v2821 = vadd.f32 0.0, %v2820
  %2822 = vmatmul.f32.gmra.mxu0 %v2795
  %v2823 = vpop.f32.mrf.mxu0
  %v2824 = vadd.f32 0.0, %v2823
  %2825 = vdwg.mxu0
  %v2826 = vadd.f32 %v2770, %v2815
  %v2827 = vadd.f32 %v2771, %v2818
  %v2828 = vadd.f32 %v2772, %v2821
  %v2829 = vadd.f32 %v2773, %v2824
  %s2830 = scalar_lea.vmem %s7, 384
  %v2831 = vld [vmem:[%s2830] sm:$0xff]
  %v2832 = vld [vmem:[%s2830 + $0x8] sm:$0xff]
  %v2833 = vld [vmem:[%s2830 + $0x10] sm:$0xff]
  %v2834 = vld [vmem:[%s2830 + $0x18] sm:$0xff]
  %2835 = vrot.lane.b32.xlu0 %v2166, 104
  %v2836 = vpop.permute.xlu0 %2835
  %2837 = vrot.lane.b32.xlu0 %v2169, 104
  %v2838 = vpop.permute.xlu0 %2837
  %v2842 = vsel %vm148, %v2831, 0
  %v2845 = vsel %vm148, %v2832, 0
  %v2848 = vsel %vm148, %v2833, 0
  %v2851 = vsel %vm148, %v2834, 0
  %2853 = vmatpush.msra.mxu0 0.0
  %2854 = vmatpush.msra.mxu0 0.0
  %2855 = vmatpush.msra.mxu0 0.0
  %2856 = vmatpush.msra.mxu0 0.0
  %2857 = vmatpush.msra.mxu0 0.0
  %2858 = vmatpush.msra.mxu0 0.0
  %2859 = vmatpush.msra.mxu0 0.0
  %2860 = vmatpush.msra.mxu0 0.0
  %2861 = vmatpush.msra.mxu0 0.0
  %2862 = vmatpush.msra.mxu0 0.0
  %2863 = vmatpush.msra.mxu0 0.0
  %2864 = vmatpush.msra.mxu0 0.0
  %2865 = vmatpush.msra.mxu0 0.0
  %2866 = vmatpush.msra.mxu0 0.0
  %2867 = vmatpush.msra.mxu0 %v2838
  %2868 = vmatpush.msra.mxu0 %v2836
  %2869 = vmatmul.f32.gmra.mxu0 %v2842
  %v2870 = vpop.f32.mrf.mxu0
  %v2871 = vadd.f32 0.0, %v2870
  %2872 = vmatmul.f32.gmra.mxu0 %v2845
  %v2873 = vpop.f32.mrf.mxu0
  %v2874 = vadd.f32 0.0, %v2873
  %2875 = vmatmul.f32.gmra.mxu0 %v2848
  %v2876 = vpop.f32.mrf.mxu0
  %v2877 = vadd.f32 0.0, %v2876
  %2878 = vmatmul.f32.gmra.mxu0 %v2851
  %v2879 = vpop.f32.mrf.mxu0
  %v2880 = vadd.f32 0.0, %v2879
  %2881 = vdwg.mxu0
  %v2882 = vadd.f32 %v2826, %v2871
  %v2883 = vadd.f32 %v2827, %v2874
  %v2884 = vadd.f32 %v2828, %v2877
  %v2885 = vadd.f32 %v2829, %v2880
  %s2886 = scalar_lea.vmem %s7, 416
  %v2887 = vld [vmem:[%s2886] sm:$0xff]
  %v2888 = vld [vmem:[%s2886 + $0x8] sm:$0xff]
  %v2889 = vld [vmem:[%s2886 + $0x10] sm:$0xff]
  %v2890 = vld [vmem:[%s2886 + $0x18] sm:$0xff]
  %2891 = vrot.lane.b32.xlu0 %v2166, 102
  %v2892 = vpop.permute.xlu0 %2891
  %2893 = vrot.lane.b32.xlu0 %v2169, 102
  %v2894 = vpop.permute.xlu0 %2893
  %v2898 = vsel %vm148, %v2887, 0
  %v2901 = vsel %vm148, %v2888, 0
  %v2904 = vsel %vm148, %v2889, 0
  %v2907 = vsel %vm148, %v2890, 0
  %2909 = vmatpush.msra.mxu0 0.0
  %2910 = vmatpush.msra.mxu0 0.0
  %2911 = vmatpush.msra.mxu0 0.0
  %2912 = vmatpush.msra.mxu0 0.0
  %2913 = vmatpush.msra.mxu0 0.0
  %2914 = vmatpush.msra.mxu0 0.0
  %2915 = vmatpush.msra.mxu0 0.0
  %2916 = vmatpush.msra.mxu0 0.0
  %2917 = vmatpush.msra.mxu0 0.0
  %2918 = vmatpush.msra.mxu0 0.0
  %2919 = vmatpush.msra.mxu0 0.0
  %2920 = vmatpush.msra.mxu0 0.0
  %2921 = vmatpush.msra.mxu0 0.0
  %2922 = vmatpush.msra.mxu0 0.0
  %2923 = vmatpush.msra.mxu0 %v2894
  %2924 = vmatpush.msra.mxu0 %v2892
  %2925 = vmatmul.f32.gmra.mxu0 %v2898
  %v2926 = vpop.f32.mrf.mxu0
  %v2927 = vadd.f32 0.0, %v2926
  %2928 = vmatmul.f32.gmra.mxu0 %v2901
  %v2929 = vpop.f32.mrf.mxu0
  %v2930 = vadd.f32 0.0, %v2929
  %2931 = vmatmul.f32.gmra.mxu0 %v2904
  %v2932 = vpop.f32.mrf.mxu0
  %v2933 = vadd.f32 0.0, %v2932
  %2934 = vmatmul.f32.gmra.mxu0 %v2907
  %v2935 = vpop.f32.mrf.mxu0
  %v2936 = vadd.f32 0.0, %v2935
  %2937 = vdwg.mxu0
  %v2938 = vadd.f32 %v2882, %v2927
  %v2939 = vadd.f32 %v2883, %v2930
  %v2940 = vadd.f32 %v2884, %v2933
  %v2941 = vadd.f32 %v2885, %v2936
  %s2942 = scalar_lea.vmem %s7, 448
  %v2943 = vld [vmem:[%s2942] sm:$0xff]
  %v2944 = vld [vmem:[%s2942 + $0x8] sm:$0xff]
  %v2945 = vld [vmem:[%s2942 + $0x10] sm:$0xff]
  %v2946 = vld [vmem:[%s2942 + $0x18] sm:$0xff]
  %2947 = vrot.lane.b32.xlu0 %v2166, 100
  %v2948 = vpop.permute.xlu0 %2947
  %2949 = vrot.lane.b32.xlu0 %v2169, 100
  %v2950 = vpop.permute.xlu0 %2949
  %v2954 = vsel %vm148, %v2943, 0
  %v2957 = vsel %vm148, %v2944, 0
  %v2960 = vsel %vm148, %v2945, 0
  %v2963 = vsel %vm148, %v2946, 0
  %2965 = vmatpush.msra.mxu0 0.0
  %2966 = vmatpush.msra.mxu0 0.0
  %2967 = vmatpush.msra.mxu0 0.0
  %2968 = vmatpush.msra.mxu0 0.0
  %2969 = vmatpush.msra.mxu0 0.0
  %2970 = vmatpush.msra.mxu0 0.0
  %2971 = vmatpush.msra.mxu0 0.0
  %2972 = vmatpush.msra.mxu0 0.0
  %2973 = vmatpush.msra.mxu0 0.0
  %2974 = vmatpush.msra.mxu0 0.0
  %2975 = vmatpush.msra.mxu0 0.0
  %2976 = vmatpush.msra.mxu0 0.0
  %2977 = vmatpush.msra.mxu0 0.0
  %2978 = vmatpush.msra.mxu0 0.0
  %2979 = vmatpush.msra.mxu0 %v2950
  %2980 = vmatpush.msra.mxu0 %v2948
  %2981 = vmatmul.f32.gmra.mxu0 %v2954
  %v2982 = vpop.f32.mrf.mxu0
  %v2983 = vadd.f32 0.0, %v2982
  %2984 = vmatmul.f32.gmra.mxu0 %v2957
  %v2985 = vpop.f32.mrf.mxu0
  %v2986 = vadd.f32 0.0, %v2985
  %2987 = vmatmul.f32.gmra.mxu0 %v2960
  %v2988 = vpop.f32.mrf.mxu0
  %v2989 = vadd.f32 0.0, %v2988
  %2990 = vmatmul.f32.gmra.mxu0 %v2963
  %v2991 = vpop.f32.mrf.mxu0
  %v2992 = vadd.f32 0.0, %v2991
  %2993 = vdwg.mxu0
  %v2994 = vadd.f32 %v2938, %v2983
  %v2995 = vadd.f32 %v2939, %v2986
  %v2996 = vadd.f32 %v2940, %v2989
  %v2997 = vadd.f32 %v2941, %v2992
  %s2998 = scalar_lea.vmem %s7, 480
  %v2999 = vld [vmem:[%s2998] sm:$0xff]
  %v3000 = vld [vmem:[%s2998 + $0x8] sm:$0xff]
  %v3001 = vld [vmem:[%s2998 + $0x10] sm:$0xff]
  %v3002 = vld [vmem:[%s2998 + $0x18] sm:$0xff]
  %3003 = vrot.lane.b32.xlu0 %v2166, 98
  %v3004 = vpop.permute.xlu0 %3003
  %3005 = vrot.lane.b32.xlu0 %v2169, 98
  %v3006 = vpop.permute.xlu0 %3005
  %v3010 = vsel %vm148, %v2999, 0
  %v3013 = vsel %vm148, %v3000, 0
  %v3016 = vsel %vm148, %v3001, 0
  %v3019 = vsel %vm148, %v3002, 0
  %3021 = vmatpush.msra.mxu0 0.0
  %3022 = vmatpush.msra.mxu0 0.0
  %3023 = vmatpush.msra.mxu0 0.0
  %3024 = vmatpush.msra.mxu0 0.0
  %3025 = vmatpush.msra.mxu0 0.0
  %3026 = vmatpush.msra.mxu0 0.0
  %3027 = vmatpush.msra.mxu0 0.0
  %3028 = vmatpush.msra.mxu0 0.0
  %3029 = vmatpush.msra.mxu0 0.0
  %3030 = vmatpush.msra.mxu0 0.0
  %3031 = vmatpush.msra.mxu0 0.0
  %3032 = vmatpush.msra.mxu0 0.0
  %3033 = vmatpush.msra.mxu0 0.0
  %3034 = vmatpush.msra.mxu0 0.0
  %3035 = vmatpush.msra.mxu0 %v3006
  %3036 = vmatpush.msra.mxu0 %v3004
  %3037 = vmatmul.f32.gmra.mxu0 %v3010
  %v3038 = vpop.f32.mrf.mxu0
  %v3039 = vadd.f32 0.0, %v3038
  %3040 = vmatmul.f32.gmra.mxu0 %v3013
  %v3041 = vpop.f32.mrf.mxu0
  %v3042 = vadd.f32 0.0, %v3041
  %3043 = vmatmul.f32.gmra.mxu0 %v3016
  %v3044 = vpop.f32.mrf.mxu0
  %v3045 = vadd.f32 0.0, %v3044
  %3046 = vmatmul.f32.gmra.mxu0 %v3019
  %v3047 = vpop.f32.mrf.mxu0
  %v3048 = vadd.f32 0.0, %v3047
  %3049 = vdwg.mxu0
  %v3050 = vadd.f32 %v2994, %v3039
  %v3051 = vadd.f32 %v2995, %v3042
  %v3052 = vadd.f32 %v2996, %v3045
  %v3053 = vadd.f32 %v2997, %v3048
  %v3054 = vld [vmem:[%s8] sm:$0xff]
  %v3055 = vld [vmem:[%s8 + $0x8] sm:$0xff]
  %v3056 = vld [vmem:[%s8 + $0x10] sm:$0xff]
  %v3057 = vld [vmem:[%s8 + $0x18] sm:$0xff]
  %3059 = vset.pattern.permute.xlu0 0
  %3060 = vperm.xlu0 %3059, %v3054
  %v3061 = vpop.permute.xlu0 %3060
  %3064 = vset.pattern.permute.xlu0 0
  %3065 = vperm.xlu0 %3064, %v3055
  %v3066 = vpop.permute.xlu0 %3065
  %3069 = vset.pattern.permute.xlu0 0
  %3070 = vperm.xlu0 %3069, %v3056
  %v3071 = vpop.permute.xlu0 %3070
  %3074 = vset.pattern.permute.xlu0 0
  %3075 = vperm.xlu0 %3074, %v3057
  %v3076 = vpop.permute.xlu0 %3075
  %v3078 = vadd.f32 %v3050, %v3061
  %v3079 = vadd.f32 %v3051, %v3066
  %v3080 = vadd.f32 %v3052, %v3071
  %v3081 = vadd.f32 %v3053, %v3076
  %vm3082 = vcmp.ge.f32.partialorder %v3078, 0.0
  %vm3083 = vcmp.ge.f32.partialorder %v3079, 0.0
  %vm3084 = vcmp.ge.f32.partialorder %v3080, 0.0
  %vm3085 = vcmp.ge.f32.partialorder %v3081, 0.0
  %v3086 = vmul.f32 %v3078, 0.01
  %v3087 = vmul.f32 %v3079, 0.01
  %v3088 = vmul.f32 %v3080, 0.01
  %v3089 = vmul.f32 %v3081, 0.01
  %v3090 = vsel %vm3082, %v3078, %v3086
  %v3091 = vsel %vm3083, %v3079, %v3087
  %v3092 = vsel %vm3084, %v3080, %v3088
  %v3093 = vsel %vm3085, %v3081, %v3089
  %v3094 = vld [vmem:[%s23] sm:$0x3]
  %vm3095 = vcmask 15360
  %v3097 = vsel %vm3095, %v3090, 0
  %v3100 = vsel %vm3095, %v3091, 0
  %v3103 = vsel %vm3095, %v3092, 0
  %v3106 = vsel %vm3095, %v3093, 0
  %vm3108 = vcmask 1041408
  %v3110 = vsel %vm3108, %v3094, 0
  %3112 = vmatpush.msra.mxu0 0.0
  %3113 = vmatpush.msra.mxu0 0.0
  %3114 = vmatpush.msra.mxu0 0.0
  %3115 = vmatpush.msra.mxu0 0.0
  %3116 = vmatpush.msra.mxu0 0.0
  %3117 = vmatpush.msra.mxu0 0.0
  %3118 = vmatpush.msra.mxu0 0.0
  %3119 = vmatpush.msra.mxu0 0.0
  %3120 = vmatpush.msra.mxu0 0.0
  %3121 = vmatpush.msra.mxu0 0.0
  %3122 = vmatpush.msra.mxu0 0.0
  %3123 = vmatpush.msra.mxu0 0.0
  %3124 = vmatpush.msra.mxu0 0.0
  %3125 = vmatpush.msra.mxu0 0.0
  %3126 = vmatpush.msra.mxu0 0.0
  %3127 = vmatpush.msra.mxu0 %v3110
  %3128 = vmatmul.f32.gmra.mxu0 %v3097
  %v3129 = vpop.f32.mrf.mxu0
  %v3130 = vadd.f32 0.0, %v3129
  %3131 = vmatmul.f32.gmra.mxu0 %v3100
  %v3132 = vpop.f32.mrf.mxu0
  %v3133 = vadd.f32 0.0, %v3132
  %3134 = vmatmul.f32.gmra.mxu0 %v3103
  %v3135 = vpop.f32.mrf.mxu0
  %v3136 = vadd.f32 0.0, %v3135
  %3137 = vmatmul.f32.gmra.mxu0 %v3106
  %v3138 = vpop.f32.mrf.mxu0
  %v3139 = vadd.f32 0.0, %v3138
  %3140 = vdwg.mxu0
  %v3141 = vld [vmem:[%s24] sm:$0xff]
  %v3142 = vld [vmem:[%s24 + $0x8] sm:$0xff]
  %v3143 = vld [vmem:[%s24 + $0x10] sm:$0xff]
  %v3144 = vld [vmem:[%s24 + $0x18] sm:$0xff]
  %v3145 = vmul.f32 %v3130, %v3141
  %v3146 = vmul.f32 %v3133, %v3142
  %v3147 = vmul.f32 %v3136, %v3143
  %v3148 = vmul.f32 %v3139, %v3144
  %vm3149 = vcmask 261120
  %v3150 = vsel %vm3149, %v3145, 0.0
  %v3151 = vsel %vm3149, %v3146, 0.0
  %v3152 = vadd.f32 %v3150, %v3151
  %v3153 = vsel %vm3149, %v3147, 0.0
  %v3154 = vadd.f32 %v3152, %v3153
  %v3155 = vsel %vm3149, %v3148, 0.0
  %v3156 = vadd.f32 %v3154, %v3155
  %v3157 = vrot.slane %v3156, 4
  %v3158 = vadd.f32 %v3156, %v3157
  %v3159 = vrot.slane %v3158, 2
  %v3160 = vadd.f32 %v3158, %v3159
  %v3161 = vrot.slane %v3160, 1
  %v3162 = vadd.f32 %v3160, %v3161
  %s3163 = scalar_lea.vmem %s24, 32
  %v3164 = vld [vmem:[%s3163] sm:$0xff]
  %v3165 = vld [vmem:[%s3163 + $0x8] sm:$0xff]
  %v3166 = vld [vmem:[%s3163 + $0x10] sm:$0xff]
  %v3167 = vld [vmem:[%s3163 + $0x18] sm:$0xff]
  %v3168 = vmul.f32 %v3130, %v3164
  %v3169 = vmul.f32 %v3133, %v3165
  %v3170 = vmul.f32 %v3136, %v3166
  %v3171 = vmul.f32 %v3139, %v3167
  %v3172 = vsel %vm3149, %v3168, 0.0
  %v3173 = vsel %vm3149, %v3169, 0.0
  %v3174 = vadd.f32 %v3172, %v3173
  %v3175 = vsel %vm3149, %v3170, 0.0
  %v3176 = vadd.f32 %v3174, %v3175
  %v3177 = vsel %vm3149, %v3171, 0.0
  %v3178 = vadd.f32 %v3176, %v3177
  %v3179 = vrot.slane %v3178, 4
  %v3180 = vadd.f32 %v3178, %v3179
  %v3181 = vrot.slane %v3180, 2
  %v3182 = vadd.f32 %v3180, %v3181
  %v3183 = vrot.slane %v3182, 1
  %v3184 = vadd.f32 %v3182, %v3183
  %vm3185 = vcmask 1040384
  %v3186 = vsel %vm3185, %v3162, %v3184
  %3188 = vrot.lane.b32.xlu0 %v3186, 101
  %v3189 = vpop.permute.xlu0 %3188
  %3191 = vrot.lane.b32.xlu0 %v3186, 5
  %v3192 = vpop.permute.xlu0 %3191
  %vm3194 = vcmask 39936
  %v3195 = vsel %vm3194, %v3189, %v3192
  %v3196 = vld [vmem:[%s18] sm:$0x1]
  %v3197 = vperm.slane %v3196, 0
  %v3198 = vmul.f32 %v3195, %v3197
  %v3199 = vld [vmem:[%s9] sm:$0xff]
  %3200 = vrot.lane.b32.xlu0 %v3186, 100
  %v3201 = vpop.permute.xlu0 %3200
  %3203 = vrot.lane.b32.xlu0 %v3186, 4
  %v3204 = vpop.permute.xlu0 %3203
  %vm3206 = vcmask 31744
  %v3207 = vsel %vm3206, %v3201, %v3204
  %v3208 = vld [vmem:[%s18 + $0x1] sm:$0x1]
  %v3209 = vperm.slane %v3208, 0
  %v3210 = vmul.f32 %v3207, %v3209
  %s3211 = scalar_lea.vmem %s9, 8
  %v3212 = vld [vmem:[%s3211] sm:$0xff]
  %v3214 = vsel %vm3095, %v3212, 0
  %v3217 = vsel %vm3108, %v3210, 0
  %3219 = vmatpush.msra.mxu0 0.0
  %3220 = vmatpush.msra.mxu0 0.0
  %3221 = vmatpush.msra.mxu0 0.0
  %3222 = vmatpush.msra.mxu0 0.0
  %3223 = vmatpush.msra.mxu0 0.0
  %3224 = vmatpush.msra.mxu0 0.0
  %3225 = vmatpush.msra.mxu0 0.0
  %3226 = vmatpush.msra.mxu0 0.0
  %3227 = vmatpush.msra.mxu0 0.0
  %3228 = vmatpush.msra.mxu0 0.0
  %3229 = vmatpush.msra.mxu0 0.0
  %3230 = vmatpush.msra.mxu0 0.0
  %3231 = vmatpush.msra.mxu0 0.0
  %3232 = vmatpush.msra.mxu0 0.0
  %3233 = vmatpush.msra.mxu0 0.0
  %3234 = vmatpush.msra.mxu0 %v3217
  %3235 = vmatmul.f32.gmra.mxu0 %v3214
  %v3236 = vpop.f32.mrf.mxu0
  %v3237 = vadd.f32 0.0, %v3236
  %3238 = vdwg.mxu0
  %v3240 = vsel %vm3095, %v3199, 0
  %v3243 = vsel %vm3108, %v3198, 0
  %3245 = vmatpush.msra.mxu0 0.0
  %3246 = vmatpush.msra.mxu0 0.0
  %3247 = vmatpush.msra.mxu0 0.0
  %3248 = vmatpush.msra.mxu0 0.0
  %3249 = vmatpush.msra.mxu0 0.0
  %3250 = vmatpush.msra.mxu0 0.0
  %3251 = vmatpush.msra.mxu0 0.0
  %3252 = vmatpush.msra.mxu0 0.0
  %3253 = vmatpush.msra.mxu0 0.0
  %3254 = vmatpush.msra.mxu0 0.0
  %3255 = vmatpush.msra.mxu0 0.0
  %3256 = vmatpush.msra.mxu0 0.0
  %3257 = vmatpush.msra.mxu0 0.0
  %3258 = vmatpush.msra.mxu0 0.0
  %3259 = vmatpush.msra.mxu0 0.0
  %3260 = vmatpush.msra.mxu0 %v3243
  %3261 = vmatmul.f32.gmra.mxu0 %v3240
  %v3262 = vpop.f32.mrf.mxu0
  %v3263 = vadd.f32 %v3237, %v3262
  %3264 = vdwg.mxu0
  %3265 = vrot.lane.b32.xlu0 %v3186, 99
  %v3266 = vpop.permute.xlu0 %3265
  %3268 = vrot.lane.b32.xlu0 %v3186, 3
  %v3269 = vpop.permute.xlu0 %3268
  %v3271 = vsel %vm174, %v3266, %v3269
  %v3272 = vld [vmem:[%s18 + $0x2] sm:$0x1]
  %v3273 = vperm.slane %v3272, 0
  %v3274 = vmul.f32 %v3271, %v3273
  %s3275 = scalar_lea.vmem %s9, 16
  %v3276 = vld [vmem:[%s3275] sm:$0xff]
  %v3278 = vsel %vm3095, %v3276, 0
  %v3281 = vsel %vm3108, %v3274, 0
  %3283 = vmatpush.msra.mxu0 0.0
  %3284 = vmatpush.msra.mxu0 0.0
  %3285 = vmatpush.msra.mxu0 0.0
  %3286 = vmatpush.msra.mxu0 0.0
  %3287 = vmatpush.msra.mxu0 0.0
  %3288 = vmatpush.msra.mxu0 0.0
  %3289 = vmatpush.msra.mxu0 0.0
  %3290 = vmatpush.msra.mxu0 0.0
  %3291 = vmatpush.msra.mxu0 0.0
  %3292 = vmatpush.msra.mxu0 0.0
  %3293 = vmatpush.msra.mxu0 0.0
  %3294 = vmatpush.msra.mxu0 0.0
  %3295 = vmatpush.msra.mxu0 0.0
  %3296 = vmatpush.msra.mxu0 0.0
  %3297 = vmatpush.msra.mxu0 0.0
  %3298 = vmatpush.msra.mxu0 %v3281
  %3299 = vmatmul.f32.gmra.mxu0 %v3278
  %v3300 = vpop.f32.mrf.mxu0
  %v3301 = vadd.f32 0.0, %v3300
  %3302 = vdwg.mxu0
  %v3303 = vadd.f32 %v3263, %v3301
  %3304 = vrot.lane.b32.xlu0 %v3186, 97
  %v3305 = vpop.permute.xlu0 %3304
  %3307 = vrot.lane.b32.xlu0 %v3186, 1
  %v3308 = vpop.permute.xlu0 %3307
  %v3310 = vsel %vm531, %v3305, %v3308
  %v3311 = vld [vmem:[%s18 + $0x3] sm:$0x1]
  %v3312 = vperm.slane %v3311, 0
  %v3313 = vmul.f32 %v3310, %v3312
  %s3314 = scalar_lea.vmem %s9, 24
  %v3315 = vld [vmem:[%s3314] sm:$0xff]
  %v3317 = vsel %vm3095, %v3315, 0
  %v3320 = vsel %vm3108, %v3313, 0
  %3322 = vmatpush.msra.mxu0 0.0
  %3323 = vmatpush.msra.mxu0 0.0
  %3324 = vmatpush.msra.mxu0 0.0
  %3325 = vmatpush.msra.mxu0 0.0
  %3326 = vmatpush.msra.mxu0 0.0
  %3327 = vmatpush.msra.mxu0 0.0
  %3328 = vmatpush.msra.mxu0 0.0
  %3329 = vmatpush.msra.mxu0 0.0
  %3330 = vmatpush.msra.mxu0 0.0
  %3331 = vmatpush.msra.mxu0 0.0
  %3332 = vmatpush.msra.mxu0 0.0
  %3333 = vmatpush.msra.mxu0 0.0
  %3334 = vmatpush.msra.mxu0 0.0
  %3335 = vmatpush.msra.mxu0 0.0
  %3336 = vmatpush.msra.mxu0 0.0
  %3337 = vmatpush.msra.mxu0 %v3320
  %3338 = vmatmul.f32.gmra.mxu0 %v3317
  %v3339 = vpop.f32.mrf.mxu0
  %v3340 = vadd.f32 0.0, %v3339
  %3341 = vdwg.mxu0
  %v3342 = vadd.f32 %v3303, %v3340
  %s3343 = scalar_lea.vmem %s9, 32
  %v3344 = vld [vmem:[%s3343] sm:$0xff]
  %v3346 = vsel %vm3095, %v3344, 0
  %v3348 = vsel %vm3108, %v3186, 0
  %3350 = vmatpush.msra.mxu0 0.0
  %3351 = vmatpush.msra.mxu0 0.0
  %3352 = vmatpush.msra.mxu0 0.0
  %3353 = vmatpush.msra.mxu0 0.0
  %3354 = vmatpush.msra.mxu0 0.0
  %3355 = vmatpush.msra.mxu0 0.0
  %3356 = vmatpush.msra.mxu0 0.0
  %3357 = vmatpush.msra.mxu0 0.0
  %3358 = vmatpush.msra.mxu0 0.0
  %3359 = vmatpush.msra.mxu0 0.0
  %3360 = vmatpush.msra.mxu0 0.0
  %3361 = vmatpush.msra.mxu0 0.0
  %3362 = vmatpush.msra.mxu0 0.0
  %3363 = vmatpush.msra.mxu0 0.0
  %3364 = vmatpush.msra.mxu0 0.0
  %3365 = vmatpush.msra.mxu0 %v3348
  %3366 = vmatmul.f32.gmra.mxu0 %v3346
  %v3367 = vpop.f32.mrf.mxu0
  %v3368 = vadd.f32 0.0, %v3367
  %3369 = vdwg.mxu0
  %v3370 = vadd.f32 %v3342, %v3368
  %3371 = vrot.lane.b32.xlu0 %v3186, 127
  %v3372 = vpop.permute.xlu0 %3371
  %3374 = vrot.lane.b32.xlu0 %v3186, 31
  %v3375 = vpop.permute.xlu0 %3374
  %vm3377 = vcmask 252928
  %v3378 = vsel %vm3377, %v3372, %v3375
  %v3379 = vld [vmem:[%s18 + $0x5] sm:$0x1]
  %v3380 = vperm.slane %v3379, 0
  %v3381 = vmul.f32 %v3378, %v3380
  %s3382 = scalar_lea.vmem %s9, 40
  %v3383 = vld [vmem:[%s3382] sm:$0xff]
  %v3385 = vsel %vm3095, %v3383, 0
  %v3388 = vsel %vm3108, %v3381, 0
  %3390 = vmatpush.msra.mxu0 0.0
  %3391 = vmatpush.msra.mxu0 0.0
  %3392 = vmatpush.msra.mxu0 0.0
  %3393 = vmatpush.msra.mxu0 0.0
  %3394 = vmatpush.msra.mxu0 0.0
  %3395 = vmatpush.msra.mxu0 0.0
  %3396 = vmatpush.msra.mxu0 0.0
  %3397 = vmatpush.msra.mxu0 0.0
  %3398 = vmatpush.msra.mxu0 0.0
  %3399 = vmatpush.msra.mxu0 0.0
  %3400 = vmatpush.msra.mxu0 0.0
  %3401 = vmatpush.msra.mxu0 0.0
  %3402 = vmatpush.msra.mxu0 0.0
  %3403 = vmatpush.msra.mxu0 0.0
  %3404 = vmatpush.msra.mxu0 0.0
  %3405 = vmatpush.msra.mxu0 %v3388
  %3406 = vmatmul.f32.gmra.mxu0 %v3385
  %v3407 = vpop.f32.mrf.mxu0
  %v3408 = vadd.f32 0.0, %v3407
  %3409 = vdwg.mxu0
  %v3410 = vadd.f32 %v3370, %v3408
  %3411 = vrot.lane.b32.xlu0 %v3186, 125
  %v3412 = vpop.permute.xlu0 %3411
  %3414 = vrot.lane.b32.xlu0 %v3186, 29
  %v3415 = vpop.permute.xlu0 %3414
  %vm3417 = vcmask 236544
  %v3418 = vsel %vm3417, %v3412, %v3415
  %v3419 = vld [vmem:[%s18 + $0x6] sm:$0x1]
  %v3420 = vperm.slane %v3419, 0
  %v3421 = vmul.f32 %v3418, %v3420
  %s3422 = scalar_lea.vmem %s9, 48
  %v3423 = vld [vmem:[%s3422] sm:$0xff]
  %v3425 = vsel %vm3095, %v3423, 0
  %v3428 = vsel %vm3108, %v3421, 0
  %3430 = vmatpush.msra.mxu0 0.0
  %3431 = vmatpush.msra.mxu0 0.0
  %3432 = vmatpush.msra.mxu0 0.0
  %3433 = vmatpush.msra.mxu0 0.0
  %3434 = vmatpush.msra.mxu0 0.0
  %3435 = vmatpush.msra.mxu0 0.0
  %3436 = vmatpush.msra.mxu0 0.0
  %3437 = vmatpush.msra.mxu0 0.0
  %3438 = vmatpush.msra.mxu0 0.0
  %3439 = vmatpush.msra.mxu0 0.0
  %3440 = vmatpush.msra.mxu0 0.0
  %3441 = vmatpush.msra.mxu0 0.0
  %3442 = vmatpush.msra.mxu0 0.0
  %3443 = vmatpush.msra.mxu0 0.0
  %3444 = vmatpush.msra.mxu0 0.0
  %3445 = vmatpush.msra.mxu0 %v3428
  %3446 = vmatmul.f32.gmra.mxu0 %v3425
  %v3447 = vpop.f32.mrf.mxu0
  %v3448 = vadd.f32 0.0, %v3447
  %3449 = vdwg.mxu0
  %v3450 = vadd.f32 %v3410, %v3448
  %3451 = vrot.lane.b32.xlu0 %v3186, 124
  %v3452 = vpop.permute.xlu0 %3451
  %3454 = vrot.lane.b32.xlu0 %v3186, 28
  %v3455 = vpop.permute.xlu0 %3454
  %vm3457 = vcmask 228352
  %v3458 = vsel %vm3457, %v3452, %v3455
  %v3459 = vld [vmem:[%s18 + $0x7] sm:$0x1]
  %v3460 = vperm.slane %v3459, 0
  %v3461 = vmul.f32 %v3458, %v3460
  %s3462 = scalar_lea.vmem %s9, 56
  %v3463 = vld [vmem:[%s3462] sm:$0xff]
  %v3465 = vsel %vm3095, %v3463, 0
  %v3468 = vsel %vm3108, %v3461, 0
  %3470 = vmatpush.msra.mxu0 0.0
  %3471 = vmatpush.msra.mxu0 0.0
  %3472 = vmatpush.msra.mxu0 0.0
  %3473 = vmatpush.msra.mxu0 0.0
  %3474 = vmatpush.msra.mxu0 0.0
  %3475 = vmatpush.msra.mxu0 0.0
  %3476 = vmatpush.msra.mxu0 0.0
  %3477 = vmatpush.msra.mxu0 0.0
  %3478 = vmatpush.msra.mxu0 0.0
  %3479 = vmatpush.msra.mxu0 0.0
  %3480 = vmatpush.msra.mxu0 0.0
  %3481 = vmatpush.msra.mxu0 0.0
  %3482 = vmatpush.msra.mxu0 0.0
  %3483 = vmatpush.msra.mxu0 0.0
  %3484 = vmatpush.msra.mxu0 0.0
  %3485 = vmatpush.msra.mxu0 %v3468
  %3486 = vmatmul.f32.gmra.mxu0 %v3465
  %v3487 = vpop.f32.mrf.mxu0
  %v3488 = vadd.f32 0.0, %v3487
  %3489 = vdwg.mxu0
  %v3490 = vadd.f32 %v3450, %v3488
  %3491 = vrot.lane.b32.xlu0 %v3186, 123
  %v3492 = vpop.permute.xlu0 %3491
  %3494 = vrot.lane.b32.xlu0 %v3186, 27
  %v3495 = vpop.permute.xlu0 %3494
  %vm3497 = vcmask 220160
  %v3498 = vsel %vm3497, %v3492, %v3495
  %v3499 = vld [vmem:[%s18 + $0x8] sm:$0x1]
  %v3500 = vperm.slane %v3499, 0
  %v3501 = vmul.f32 %v3498, %v3500
  %s3502 = scalar_lea.vmem %s9, 64
  %v3503 = vld [vmem:[%s3502] sm:$0xff]
  %v3505 = vsel %vm3095, %v3503, 0
  %v3508 = vsel %vm3108, %v3501, 0
  %3510 = vmatpush.msra.mxu0 0.0
  %3511 = vmatpush.msra.mxu0 0.0
  %3512 = vmatpush.msra.mxu0 0.0
  %3513 = vmatpush.msra.mxu0 0.0
  %3514 = vmatpush.msra.mxu0 0.0
  %3515 = vmatpush.msra.mxu0 0.0
  %3516 = vmatpush.msra.mxu0 0.0
  %3517 = vmatpush.msra.mxu0 0.0
  %3518 = vmatpush.msra.mxu0 0.0
  %3519 = vmatpush.msra.mxu0 0.0
  %3520 = vmatpush.msra.mxu0 0.0
  %3521 = vmatpush.msra.mxu0 0.0
  %3522 = vmatpush.msra.mxu0 0.0
  %3523 = vmatpush.msra.mxu0 0.0
  %3524 = vmatpush.msra.mxu0 0.0
  %3525 = vmatpush.msra.mxu0 %v3508
  %3526 = vmatmul.f32.gmra.mxu0 %v3505
  %v3527 = vpop.f32.mrf.mxu0
  %v3528 = vadd.f32 0.0, %v3527
  %3529 = vdwg.mxu0
  %v3530 = vadd.f32 %v3490, %v3528
  %v3531 = vsel %vm3149, %v3530, 0.0
  %3532 = vadd.xlane.f32.xlu0 %v3531
  %v3533 = vpop.xlane.xlu0 %3532
  %v3534 = vmul.f32 %v3533, 0.03125
  %v3535 = vmul.f32 %v3530, %v3530
  %v3536 = vsel %vm3149, %v3535, 0.0
  %3537 = vadd.xlane.f32.xlu0 %v3536
  %v3538 = vpop.xlane.xlu0 %3537
  %v3539 = vmul.f32 %v3538, 0.03125
  %v3540 = vmul.f32 %v3534, %v3534
  %v3541 = vsub.f32 %v3539, %v3540
  %v3542 = vmax.f32 %v3541, 0.0
  %v3543 = vadd.f32 %v3542, 1e-05
  %v3544 = vrsqrt.pop %v3543
  %v3545 = vmul.f32 %v3544, %v3543
  %v3546 = vmul.f32 %v3545, %v3544
  %v3547 = vmul.f32 0.5, %v3546
  %v3548 = vsub.f32 1.5, %v3547
  %v3549 = vmul.f32 %v3544, %v3548
  %vm3550 = vweird.f32 %v3543
  %vm3551 = vweird.f32 %v3544
  %vm3552 = vmor %vm3550, %vm3551
  %v3553 = vsel %vm3552, %v3544, %v3549
  %v3554 = vld [vmem:[%s10] sm:$0xff]
  %v3555 = vmul.f32 %v3553, %v3554
  %v3556 = vld [vmem:[%s11] sm:$0xff]
  %v3557 = vmul.f32 %v3534, %v3555
  %v3558 = vsub.f32 %v3556, %v3557
  %3560 = vset.pattern.permute.xlu0 0
  %3561 = vperm.xlu0 %3560, %v3555
  %v3562 = vpop.permute.xlu0 %3561
  %v3564 = vmul.f32 %v3530, %v3562
  %3566 = vset.pattern.permute.xlu0 0
  %3567 = vperm.xlu0 %3566, %v3558
  %v3568 = vpop.permute.xlu0 %3567
  %v3570 = vadd.f32 %v3564, %v3568
  %vm3571 = vcmp.ge.f32.partialorder %v3570, 0.0
  %v3572 = vmul.f32 %v3570, 0.01
  %v3573 = vsel %vm3571, %v3570, %v3572
  %v3574 = vld [vmem:[%s21] sm:$0xf]
  %v3575 = vld [vmem:[%s21 + $0x4] sm:$0xf]
  %v3576 = vld [vmem:[%s21 + $0x8] sm:$0xf]
  %v3577 = vld [vmem:[%s21 + $0xc] sm:$0xf]
  %v3578 = vunpack.c.l.bf16 %v3574
  %v3579 = vunpack.c.l.bf16 %v3575
  %v3580 = vunpack.c.l.bf16 %v3576
  %v3581 = vunpack.c.l.bf16 %v3577
  %v3583 = vsel %vm3149, %v3573, 0
  %3585 = vmatpush.msra.mxu0 0.0
  %3586 = vmatpush.msra.mxu0 0.0
  %3587 = vmatpush.msra.mxu0 0.0
  %3588 = vmatpush.msra.mxu0 0.0
  %3589 = vmatpush.msra.mxu0 0.0
  %3590 = vmatpush.msra.mxu0 0.0
  %3591 = vmatpush.msra.mxu0 0.0
  %3592 = vmatpush.msra.mxu0 0.0
  %3593 = vmatpush.msra.mxu0 0.0
  %3594 = vmatpush.msra.mxu0 0.0
  %3595 = vmatpush.msra.mxu0 0.0
  %3596 = vmatpush.msra.mxu0 0.0
  %3597 = vmatpush.msra.mxu0 %v3581
  %3598 = vmatpush.msra.mxu0 %v3580
  %3599 = vmatpush.msra.mxu0 %v3579
  %3600 = vmatpush.msra.mxu0 %v3578
  %3601 = vmatmul.f32.gmra.mxu0 %v3583
  %v3602 = vpop.f32.mrf.mxu0
  %v3603 = vadd.f32 0.0, %v3602
  %3604 = vdwg.mxu0
  %3606 = vrot.lane.b32.xlu0 %v3603, 9
  %v3607 = vpop.permute.xlu0 %3606
  %v3609 = vmul.f32 %v3607, %v1668
  %v3610 = vld [vmem:[%s12] sm:$0xf]
  %3611 = vrot.lane.b32.xlu0 %v3603, 8
  %v3612 = vpop.permute.xlu0 %3611
  %v3614 = vmul.f32 %v3612, %v1677
  %s3615 = scalar_lea.vmem %s12, 4
  %v3616 = vld [vmem:[%s3615] sm:$0xf]
  %v3618 = vsel %vm1675, %v3616, 0
  %3620 = vmatpush.msra.mxu0 0.0
  %3621 = vmatpush.msra.mxu0 0.0
  %3622 = vmatpush.msra.mxu0 0.0
  %3623 = vmatpush.msra.mxu0 0.0
  %3624 = vmatpush.msra.mxu0 0.0
  %3625 = vmatpush.msra.mxu0 0.0
  %3626 = vmatpush.msra.mxu0 0.0
  %3627 = vmatpush.msra.mxu0 0.0
  %3628 = vmatpush.msra.mxu0 0.0
  %3629 = vmatpush.msra.mxu0 0.0
  %3630 = vmatpush.msra.mxu0 0.0
  %3631 = vmatpush.msra.mxu0 0.0
  %3632 = vmatpush.msra.mxu0 0.0
  %3633 = vmatpush.msra.mxu0 0.0
  %3634 = vmatpush.msra.mxu0 0.0
  %3635 = vmatpush.msra.mxu0 %v3614
  %3636 = vmatmul.f32.gmra.mxu0 %v3618
  %v3637 = vpop.f32.mrf.mxu0
  %v3638 = vadd.f32 0.0, %v3637
  %3639 = vdwg.mxu0
  %v3641 = vsel %vm1675, %v3610, 0
  %3643 = vmatpush.msra.mxu0 0.0
  %3644 = vmatpush.msra.mxu0 0.0
  %3645 = vmatpush.msra.mxu0 0.0
  %3646 = vmatpush.msra.mxu0 0.0
  %3647 = vmatpush.msra.mxu0 0.0
  %3648 = vmatpush.msra.mxu0 0.0
  %3649 = vmatpush.msra.mxu0 0.0
  %3650 = vmatpush.msra.mxu0 0.0
  %3651 = vmatpush.msra.mxu0 0.0
  %3652 = vmatpush.msra.mxu0 0.0
  %3653 = vmatpush.msra.mxu0 0.0
  %3654 = vmatpush.msra.mxu0 0.0
  %3655 = vmatpush.msra.mxu0 0.0
  %3656 = vmatpush.msra.mxu0 0.0
  %3657 = vmatpush.msra.mxu0 0.0
  %3658 = vmatpush.msra.mxu0 %v3609
  %3659 = vmatmul.f32.gmra.mxu0 %v3641
  %v3660 = vpop.f32.mrf.mxu0
  %v3661 = vadd.f32 %v3638, %v3660
  %3662 = vdwg.mxu0
  %3663 = vrot.lane.b32.xlu0 %v3603, 7
  %v3664 = vpop.permute.xlu0 %3663
  %v3666 = vmul.f32 %v3664, %v1744
  %s3667 = scalar_lea.vmem %s12, 8
  %v3668 = vld [vmem:[%s3667] sm:$0xf]
  %v3670 = vsel %vm1675, %v3668, 0
  %3672 = vmatpush.msra.mxu0 0.0
  %3673 = vmatpush.msra.mxu0 0.0
  %3674 = vmatpush.msra.mxu0 0.0
  %3675 = vmatpush.msra.mxu0 0.0
  %3676 = vmatpush.msra.mxu0 0.0
  %3677 = vmatpush.msra.mxu0 0.0
  %3678 = vmatpush.msra.mxu0 0.0
  %3679 = vmatpush.msra.mxu0 0.0
  %3680 = vmatpush.msra.mxu0 0.0
  %3681 = vmatpush.msra.mxu0 0.0
  %3682 = vmatpush.msra.mxu0 0.0
  %3683 = vmatpush.msra.mxu0 0.0
  %3684 = vmatpush.msra.mxu0 0.0
  %3685 = vmatpush.msra.mxu0 0.0
  %3686 = vmatpush.msra.mxu0 0.0
  %3687 = vmatpush.msra.mxu0 %v3666
  %3688 = vmatmul.f32.gmra.mxu0 %v3670
  %v3689 = vpop.f32.mrf.mxu0
  %v3690 = vadd.f32 0.0, %v3689
  %3691 = vdwg.mxu0
  %v3692 = vadd.f32 %v3661, %v3690
  %3693 = vrot.lane.b32.xlu0 %v3603, 1
  %v3694 = vpop.permute.xlu0 %3693
  %v3696 = vmul.f32 %v3694, %v1784
  %s3697 = scalar_lea.vmem %s12, 12
  %v3698 = vld [vmem:[%s3697] sm:$0xf]
  %v3700 = vsel %vm1675, %v3698, 0
  %3702 = vmatpush.msra.mxu0 0.0
  %3703 = vmatpush.msra.mxu0 0.0
  %3704 = vmatpush.msra.mxu0 0.0
  %3705 = vmatpush.msra.mxu0 0.0
  %3706 = vmatpush.msra.mxu0 0.0
  %3707 = vmatpush.msra.mxu0 0.0
  %3708 = vmatpush.msra.mxu0 0.0
  %3709 = vmatpush.msra.mxu0 0.0
  %3710 = vmatpush.msra.mxu0 0.0
  %3711 = vmatpush.msra.mxu0 0.0
  %3712 = vmatpush.msra.mxu0 0.0
  %3713 = vmatpush.msra.mxu0 0.0
  %3714 = vmatpush.msra.mxu0 0.0
  %3715 = vmatpush.msra.mxu0 0.0
  %3716 = vmatpush.msra.mxu0 0.0
  %3717 = vmatpush.msra.mxu0 %v3696
  %3718 = vmatmul.f32.gmra.mxu0 %v3700
  %v3719 = vpop.f32.mrf.mxu0
  %v3720 = vadd.f32 0.0, %v3719
  %3721 = vdwg.mxu0
  %v3722 = vadd.f32 %v3692, %v3720
  %s3723 = scalar_lea.vmem %s12, 16
  %v3724 = vld [vmem:[%s3723] sm:$0xf]
  %v3726 = vsel %vm1675, %v3724, 0
  %3728 = vmatpush.msra.mxu0 0.0
  %3729 = vmatpush.msra.mxu0 0.0
  %3730 = vmatpush.msra.mxu0 0.0
  %3731 = vmatpush.msra.mxu0 0.0
  %3732 = vmatpush.msra.mxu0 0.0
  %3733 = vmatpush.msra.mxu0 0.0
  %3734 = vmatpush.msra.mxu0 0.0
  %3735 = vmatpush.msra.mxu0 0.0
  %3736 = vmatpush.msra.mxu0 0.0
  %3737 = vmatpush.msra.mxu0 0.0
  %3738 = vmatpush.msra.mxu0 0.0
  %3739 = vmatpush.msra.mxu0 0.0
  %3740 = vmatpush.msra.mxu0 0.0
  %3741 = vmatpush.msra.mxu0 0.0
  %3742 = vmatpush.msra.mxu0 0.0
  %3743 = vmatpush.msra.mxu0 %v3603
  %3744 = vmatmul.f32.gmra.mxu0 %v3726
  %v3745 = vpop.f32.mrf.mxu0
  %v3746 = vadd.f32 0.0, %v3745
  %3747 = vdwg.mxu0
  %v3748 = vadd.f32 %v3722, %v3746
  %3749 = vrot.lane.b32.xlu0 %v3603, 127
  %v3750 = vpop.permute.xlu0 %3749
  %v3752 = vmul.f32 %v3750, %v1858
  %s3753 = scalar_lea.vmem %s12, 20
  %v3754 = vld [vmem:[%s3753] sm:$0xf]
  %v3756 = vsel %vm1675, %v3754, 0
  %3758 = vmatpush.msra.mxu0 0.0
  %3759 = vmatpush.msra.mxu0 0.0
  %3760 = vmatpush.msra.mxu0 0.0
  %3761 = vmatpush.msra.mxu0 0.0
  %3762 = vmatpush.msra.mxu0 0.0
  %3763 = vmatpush.msra.mxu0 0.0
  %3764 = vmatpush.msra.mxu0 0.0
  %3765 = vmatpush.msra.mxu0 0.0
  %3766 = vmatpush.msra.mxu0 0.0
  %3767 = vmatpush.msra.mxu0 0.0
  %3768 = vmatpush.msra.mxu0 0.0
  %3769 = vmatpush.msra.mxu0 0.0
  %3770 = vmatpush.msra.mxu0 0.0
  %3771 = vmatpush.msra.mxu0 0.0
  %3772 = vmatpush.msra.mxu0 0.0
  %3773 = vmatpush.msra.mxu0 %v3752
  %3774 = vmatmul.f32.gmra.mxu0 %v3756
  %v3775 = vpop.f32.mrf.mxu0
  %v3776 = vadd.f32 0.0, %v3775
  %3777 = vdwg.mxu0
  %v3778 = vadd.f32 %v3748, %v3776
  %3779 = vrot.lane.b32.xlu0 %v3603, 121
  %v3780 = vpop.permute.xlu0 %3779
  %v3782 = vmul.f32 %v3780, %v1898
  %s3783 = scalar_lea.vmem %s12, 24
  %v3784 = vld [vmem:[%s3783] sm:$0xf]
  %v3786 = vsel %vm1675, %v3784, 0
  %3788 = vmatpush.msra.mxu0 0.0
  %3789 = vmatpush.msra.mxu0 0.0
  %3790 = vmatpush.msra.mxu0 0.0
  %3791 = vmatpush.msra.mxu0 0.0
  %3792 = vmatpush.msra.mxu0 0.0
  %3793 = vmatpush.msra.mxu0 0.0
  %3794 = vmatpush.msra.mxu0 0.0
  %3795 = vmatpush.msra.mxu0 0.0
  %3796 = vmatpush.msra.mxu0 0.0
  %3797 = vmatpush.msra.mxu0 0.0
  %3798 = vmatpush.msra.mxu0 0.0
  %3799 = vmatpush.msra.mxu0 0.0
  %3800 = vmatpush.msra.mxu0 0.0
  %3801 = vmatpush.msra.mxu0 0.0
  %3802 = vmatpush.msra.mxu0 0.0
  %3803 = vmatpush.msra.mxu0 %v3782
  %3804 = vmatmul.f32.gmra.mxu0 %v3786
  %v3805 = vpop.f32.mrf.mxu0
  %v3806 = vadd.f32 0.0, %v3805
  %3807 = vdwg.mxu0
  %v3808 = vadd.f32 %v3778, %v3806
  %3809 = vrot.lane.b32.xlu0 %v3603, 120
  %v3810 = vpop.permute.xlu0 %3809
  %v3812 = vmul.f32 %v3810, %v1938
  %s3813 = scalar_lea.vmem %s12, 28
  %v3814 = vld [vmem:[%s3813] sm:$0xf]
  %v3816 = vsel %vm1675, %v3814, 0
  %3818 = vmatpush.msra.mxu0 0.0
  %3819 = vmatpush.msra.mxu0 0.0
  %3820 = vmatpush.msra.mxu0 0.0
  %3821 = vmatpush.msra.mxu0 0.0
  %3822 = vmatpush.msra.mxu0 0.0
  %3823 = vmatpush.msra.mxu0 0.0
  %3824 = vmatpush.msra.mxu0 0.0
  %3825 = vmatpush.msra.mxu0 0.0
  %3826 = vmatpush.msra.mxu0 0.0
  %3827 = vmatpush.msra.mxu0 0.0
  %3828 = vmatpush.msra.mxu0 0.0
  %3829 = vmatpush.msra.mxu0 0.0
  %3830 = vmatpush.msra.mxu0 0.0
  %3831 = vmatpush.msra.mxu0 0.0
  %3832 = vmatpush.msra.mxu0 0.0
  %3833 = vmatpush.msra.mxu0 %v3812
  %3834 = vmatmul.f32.gmra.mxu0 %v3816
  %v3835 = vpop.f32.mrf.mxu0
  %v3836 = vadd.f32 0.0, %v3835
  %3837 = vdwg.mxu0
  %v3838 = vadd.f32 %v3808, %v3836
  %3839 = vrot.lane.b32.xlu0 %v3603, 119
  %v3840 = vpop.permute.xlu0 %3839
  %v3842 = vmul.f32 %v3840, %v1978
  %s3843 = scalar_lea.vmem %s12, 32
  %v3844 = vld [vmem:[%s3843] sm:$0xf]
  %v3846 = vsel %vm1675, %v3844, 0
  %3848 = vmatpush.msra.mxu0 0.0
  %3849 = vmatpush.msra.mxu0 0.0
  %3850 = vmatpush.msra.mxu0 0.0
  %3851 = vmatpush.msra.mxu0 0.0
  %3852 = vmatpush.msra.mxu0 0.0
  %3853 = vmatpush.msra.mxu0 0.0
  %3854 = vmatpush.msra.mxu0 0.0
  %3855 = vmatpush.msra.mxu0 0.0
  %3856 = vmatpush.msra.mxu0 0.0
  %3857 = vmatpush.msra.mxu0 0.0
  %3858 = vmatpush.msra.mxu0 0.0
  %3859 = vmatpush.msra.mxu0 0.0
  %3860 = vmatpush.msra.mxu0 0.0
  %3861 = vmatpush.msra.mxu0 0.0
  %3862 = vmatpush.msra.mxu0 0.0
  %3863 = vmatpush.msra.mxu0 %v3842
  %3864 = vmatmul.f32.gmra.mxu0 %v3846
  %v3865 = vpop.f32.mrf.mxu0
  %v3866 = vadd.f32 0.0, %v3865
  %3867 = vdwg.mxu0
  %v3868 = vadd.f32 %v3838, %v3866
  %vm3869 = vcmask 1043456
  %v3870 = vsel %vm3869, %v3868, 0.0
  %3871 = vadd.xlane.f32.xlu0 %v3870
  %v3872 = vpop.xlane.xlu0 %3871
  %v3873 = vmul.f32 %v3872, 0.0078125
  %v3874 = vmul.f32 %v3868, %v3868
  %v3875 = vsel %vm3869, %v3874, 0.0
  %3876 = vadd.xlane.f32.xlu0 %v3875
  %v3877 = vpop.xlane.xlu0 %3876
  %v3878 = vmul.f32 %v3877, 0.0078125
  %v3879 = vmul.f32 %v3873, %v3873
  %v3880 = vsub.f32 %v3878, %v3879
  %v3881 = vmax.f32 %v3880, 0.0
  %v3882 = vadd.f32 %v3881, 1e-05
  %v3883 = vrsqrt.pop %v3882
  %v3884 = vmul.f32 %v3883, %v3882
  %v3885 = vmul.f32 %v3884, %v3883
  %v3886 = vmul.f32 0.5, %v3885
  %v3887 = vsub.f32 1.5, %v3886
  %v3888 = vmul.f32 %v3883, %v3887
  %vm3889 = vweird.f32 %v3882
  %vm3890 = vweird.f32 %v3883
  %vm3891 = vmor %vm3889, %vm3890
  %v3892 = vsel %vm3891, %v3883, %v3888
  %v3893 = vld [vmem:[%s13] sm:$0xf]
  %v3894 = vmul.f32 %v3892, %v3893
  %v3895 = vld [vmem:[%s14] sm:$0xf]
  %v3896 = vmul.f32 %v3873, %v3894
  %v3897 = vsub.f32 %v3895, %v3896
  %3899 = vset.pattern.permute.xlu0 0
  %3900 = vperm.xlu0 %3899, %v3894
  %v3901 = vpop.permute.xlu0 %3900
  %v3903 = vmul.f32 %v3868, %v3901
  %3905 = vset.pattern.permute.xlu0 0
  %3906 = vperm.xlu0 %3905, %v3897
  %v3907 = vpop.permute.xlu0 %3906
  %v3909 = vadd.f32 %v3903, %v3907
  %vm3910 = vcmp.ge.f32.partialorder %v3909, 0.0
  %v3911 = vmul.f32 %v3909, 0.01
  %v3912 = vsel %vm3910, %v3909, %v3911
  %v3913 = vld [vmem:[%s22] sm:$0xff]
  %v3914 = vld [vmem:[%s22 + $0x8] sm:$0xff]
  %v3915 = vld [vmem:[%s22 + $0x10] sm:$0xff]
  %v3916 = vld [vmem:[%s22 + $0x18] sm:$0xff]
  %v3917 = vld [vmem:[%s22 + $0x20] sm:$0xff]
  %v3918 = vld [vmem:[%s22 + $0x28] sm:$0xff]
  %v3919 = vld [vmem:[%s22 + $0x30] sm:$0xff]
  %v3920 = vld [vmem:[%s22 + $0x38] sm:$0xff]
  %v3921 = vld [vmem:[%s22 + $0x40] sm:$0xff]
  %v3922 = vld [vmem:[%s22 + $0x48] sm:$0xff]
  %v3923 = vld [vmem:[%s22 + $0x50] sm:$0xff]
  %v3924 = vld [vmem:[%s22 + $0x58] sm:$0xff]
  %v3925 = vld [vmem:[%s22 + $0x60] sm:$0xff]
  %v3926 = vld [vmem:[%s22 + $0x68] sm:$0xff]
  %v3927 = vld [vmem:[%s22 + $0x70] sm:$0xff]
  %v3928 = vld [vmem:[%s22 + $0x78] sm:$0xff]
  %v3929 = vld [vmem:[%s22 + $0x80] sm:$0xff]
  %v3930 = vld [vmem:[%s22 + $0x88] sm:$0xff]
  %v3931 = vld [vmem:[%s22 + $0x90] sm:$0xff]
  %v3932 = vld [vmem:[%s22 + $0x98] sm:$0xff]
  %v3933 = vld [vmem:[%s22 + $0xa0] sm:$0xff]
  %v3934 = vld [vmem:[%s22 + $0xa8] sm:$0xff]
  %v3935 = vld [vmem:[%s22 + $0xb0] sm:$0xff]
  %v3936 = vld [vmem:[%s22 + $0xb8] sm:$0xff]
  %v3937 = vld [vmem:[%s22 + $0xc0] sm:$0xff]
  %v3938 = vld [vmem:[%s22 + $0xc8] sm:$0xff]
  %v3939 = vld [vmem:[%s22 + $0xd0] sm:$0xff]
  %v3940 = vld [vmem:[%s22 + $0xd8] sm:$0xff]
  %v3941 = vld [vmem:[%s22 + $0xe0] sm:$0xff]
  %v3942 = vld [vmem:[%s22 + $0xe8] sm:$0xff]
  %v3943 = vld [vmem:[%s22 + $0xf0] sm:$0xff]
  %v3944 = vld [vmem:[%s22 + $0xf8] sm:$0xff]
  %v3945 = vunpack.c.l.bf16 %v3913
  %v3946 = vunpack.c.h.bf16 %v3913
  %v3947 = vunpack.c.l.bf16 %v3914
  %v3948 = vunpack.c.h.bf16 %v3914
  %v3949 = vunpack.c.l.bf16 %v3915
  %v3950 = vunpack.c.h.bf16 %v3915
  %v3951 = vunpack.c.l.bf16 %v3916
  %v3952 = vunpack.c.h.bf16 %v3916
  %v3953 = vunpack.c.l.bf16 %v3917
  %v3954 = vunpack.c.h.bf16 %v3917
  %v3955 = vunpack.c.l.bf16 %v3918
  %v3956 = vunpack.c.h.bf16 %v3918
  %v3957 = vunpack.c.l.bf16 %v3919
  %v3958 = vunpack.c.h.bf16 %v3919
  %v3959 = vunpack.c.l.bf16 %v3920
  %v3960 = vunpack.c.h.bf16 %v3920
  %v3961 = vunpack.c.l.bf16 %v3921
  %v3962 = vunpack.c.h.bf16 %v3921
  %v3963 = vunpack.c.l.bf16 %v3922
  %v3964 = vunpack.c.h.bf16 %v3922
  %v3965 = vunpack.c.l.bf16 %v3923
  %v3966 = vunpack.c.h.bf16 %v3923
  %v3967 = vunpack.c.l.bf16 %v3924
  %v3968 = vunpack.c.h.bf16 %v3924
  %v3969 = vunpack.c.l.bf16 %v3925
  %v3970 = vunpack.c.h.bf16 %v3925
  %v3971 = vunpack.c.l.bf16 %v3926
  %v3972 = vunpack.c.h.bf16 %v3926
  %v3973 = vunpack.c.l.bf16 %v3927
  %v3974 = vunpack.c.h.bf16 %v3927
  %v3975 = vunpack.c.l.bf16 %v3928
  %v3976 = vunpack.c.h.bf16 %v3928
  %v3977 = vunpack.c.l.bf16 %v3929
  %v3978 = vunpack.c.h.bf16 %v3929
  %v3979 = vunpack.c.l.bf16 %v3930
  %v3980 = vunpack.c.h.bf16 %v3930
  %v3981 = vunpack.c.l.bf16 %v3931
  %v3982 = vunpack.c.h.bf16 %v3931
  %v3983 = vunpack.c.l.bf16 %v3932
  %v3984 = vunpack.c.h.bf16 %v3932
  %v3985 = vunpack.c.l.bf16 %v3933
  %v3986 = vunpack.c.h.bf16 %v3933
  %v3987 = vunpack.c.l.bf16 %v3934
  %v3988 = vunpack.c.h.bf16 %v3934
  %v3989 = vunpack.c.l.bf16 %v3935
  %v3990 = vunpack.c.h.bf16 %v3935
  %v3991 = vunpack.c.l.bf16 %v3936
  %v3992 = vunpack.c.h.bf16 %v3936
  %v3993 = vunpack.c.l.bf16 %v3937
  %v3994 = vunpack.c.h.bf16 %v3937
  %v3995 = vunpack.c.l.bf16 %v3938
  %v3996 = vunpack.c.h.bf16 %v3938
  %v3997 = vunpack.c.l.bf16 %v3939
  %v3998 = vunpack.c.h.bf16 %v3939
  %v3999 = vunpack.c.l.bf16 %v3940
  %v4000 = vunpack.c.h.bf16 %v3940
  %v4001 = vunpack.c.l.bf16 %v3941
  %v4002 = vunpack.c.h.bf16 %v3941
  %v4003 = vunpack.c.l.bf16 %v3942
  %v4004 = vunpack.c.h.bf16 %v3942
  %v4005 = vunpack.c.l.bf16 %v3943
  %v4006 = vunpack.c.h.bf16 %v3943
  %v4007 = vunpack.c.l.bf16 %v3944
  %v4008 = vunpack.c.h.bf16 %v3944
  %4009 = vmatpush.msra.mxu0 %v4005
  %4010 = vmatpush.msra.mxu0 %v4001
  %4011 = vmatpush.msra.mxu0 %v3997
  %4012 = vmatpush.msra.mxu0 %v3993
  %4013 = vmatpush.msra.mxu0 %v3989
  %4014 = vmatpush.msra.mxu0 %v3985
  %4015 = vmatpush.msra.mxu0 %v3981
  %4016 = vmatpush.msra.mxu0 %v3977
  %4017 = vmatpush.msra.mxu0 %v3973
  %4018 = vmatpush.msra.mxu0 %v3969
  %4019 = vmatpush.msra.mxu0 %v3965
  %4020 = vmatpush.msra.mxu0 %v3961
  %4021 = vmatpush.msra.mxu0 %v3957
  %4022 = vmatpush.msra.mxu0 %v3953
  %4023 = vmatpush.msra.mxu0 %v3949
  %4024 = vmatpush.msra.mxu0 %v3945
  %4025 = vmatmul.f32.gmra.mxu0 %v3912
  %v4026 = vpop.f32.mrf.mxu0
  %v4027 = vadd.f32 0.0, %v4026
  %4028 = vdwg.mxu0
  %4029 = vmatpush.msra.mxu0 %v4006
  %4030 = vmatpush.msra.mxu0 %v4002
  %4031 = vmatpush.msra.mxu0 %v3998
  %4032 = vmatpush.msra.mxu0 %v3994
  %4033 = vmatpush.msra.mxu0 %v3990
  %4034 = vmatpush.msra.mxu0 %v3986
  %4035 = vmatpush.msra.mxu0 %v3982
  %4036 = vmatpush.msra.mxu0 %v3978
  %4037 = vmatpush.msra.mxu0 %v3974
  %4038 = vmatpush.msra.mxu0 %v3970
  %4039 = vmatpush.msra.mxu0 %v3966
  %4040 = vmatpush.msra.mxu0 %v3962
  %4041 = vmatpush.msra.mxu0 %v3958
  %4042 = vmatpush.msra.mxu0 %v3954
  %4043 = vmatpush.msra.mxu0 %v3950
  %4044 = vmatpush.msra.mxu0 %v3946
  %4045 = vmatmul.f32.gmra.mxu0 %v3912
  %v4046 = vpop.f32.mrf.mxu0
  %v4047 = vadd.f32 0.0, %v4046
  %4048 = vdwg.mxu0
  %4049 = vmatpush.msra.mxu0 %v4007
  %4050 = vmatpush.msra.mxu0 %v4003
  %4051 = vmatpush.msra.mxu0 %v3999
  %4052 = vmatpush.msra.mxu0 %v3995
  %4053 = vmatpush.msra.mxu0 %v3991
  %4054 = vmatpush.msra.mxu0 %v3987
  %4055 = vmatpush.msra.mxu0 %v3983
  %4056 = vmatpush.msra.mxu0 %v3979
  %4057 = vmatpush.msra.mxu0 %v3975
  %4058 = vmatpush.msra.mxu0 %v3971
  %4059 = vmatpush.msra.mxu0 %v3967
  %4060 = vmatpush.msra.mxu0 %v3963
  %4061 = vmatpush.msra.mxu0 %v3959
  %4062 = vmatpush.msra.mxu0 %v3955
  %4063 = vmatpush.msra.mxu0 %v3951
  %4064 = vmatpush.msra.mxu0 %v3947
  %4065 = vmatmul.f32.gmra.mxu0 %v3912
  %v4066 = vpop.f32.mrf.mxu0
  %v4067 = vadd.f32 0.0, %v4066
  %4068 = vdwg.mxu0
  %4069 = vmatpush.msra.mxu0 %v4008
  %4070 = vmatpush.msra.mxu0 %v4004
  %4071 = vmatpush.msra.mxu0 %v4000
  %4072 = vmatpush.msra.mxu0 %v3996
  %4073 = vmatpush.msra.mxu0 %v3992
  %4074 = vmatpush.msra.mxu0 %v3988
  %4075 = vmatpush.msra.mxu0 %v3984
  %4076 = vmatpush.msra.mxu0 %v3980
  %4077 = vmatpush.msra.mxu0 %v3976
  %4078 = vmatpush.msra.mxu0 %v3972
  %4079 = vmatpush.msra.mxu0 %v3968
  %4080 = vmatpush.msra.mxu0 %v3964
  %4081 = vmatpush.msra.mxu0 %v3960
  %4082 = vmatpush.msra.mxu0 %v3956
  %4083 = vmatpush.msra.mxu0 %v3952
  %4084 = vmatpush.msra.mxu0 %v3948
  %4085 = vmatmul.f32.gmra.mxu0 %v3912
  %v4086 = vpop.f32.mrf.mxu0
  %v4087 = vadd.f32 0.0, %v4086
  %4088 = vdwg.mxu0
  %4090 = vrot.lane.b32.xlu0 %v4087, 17
  %v4091 = vpop.permute.xlu0 %4090
  %4096 = vrot.lane.b32.xlu0 %v4027, 17
  %v4097 = vpop.permute.xlu0 %4096
  %4098 = vrot.lane.b32.xlu0 %v4047, 17
  %v4099 = vpop.permute.xlu0 %4098
  %4100 = vrot.lane.b32.xlu0 %v4067, 17
  %v4101 = vpop.permute.xlu0 %4100
  %v4102 = vsel %vm104, %v4097, %v4099
  %v4103 = vsel %vm104, %v4099, %v4101
  %v4104 = vsel %vm104, %v4101, %v4091
  %v4109 = vsel %vm104, %v4091, %v4097
  %v4110 = vmul.f32 %v4109, %v115
  %v4111 = vmul.f32 %v4102, %v116
  %v4112 = vmul.f32 %v4103, %v117
  %v4113 = vmul.f32 %v4104, %v118
  %v4114 = vld [vmem:[%s15] sm:$0x7]
  %4115 = vrot.lane.b32.xlu0 %v4087, 16
  %v4116 = vpop.permute.xlu0 %4115
  %4118 = vrot.lane.b32.xlu0 %v4027, 16
  %v4119 = vpop.permute.xlu0 %4118
  %4120 = vrot.lane.b32.xlu0 %v4047, 16
  %v4121 = vpop.permute.xlu0 %4120
  %4122 = vrot.lane.b32.xlu0 %v4067, 16
  %v4123 = vpop.permute.xlu0 %4122
  %v4124 = vsel %vm148, %v4119, %v4121
  %v4125 = vsel %vm148, %v4121, %v4123
  %v4126 = vsel %vm148, %v4123, %v4116
  %v4131 = vsel %vm148, %v4116, %v4119
  %v4132 = vmul.f32 %v4131, %v160
  %v4133 = vmul.f32 %v4124, %v161
  %v4134 = vmul.f32 %v4125, %v162
  %v4135 = vmul.f32 %v4126, %v163
  %s4136 = scalar_lea.vmem %s15, 4
  %v4137 = vld [vmem:[%s4136] sm:$0x7]
  %v4139 = vsel %vm3206, %v4137, 0
  %v4142 = vsel %vm3869, %v4132, 0
  %v4145 = vsel %vm3869, %v4133, 0
  %v4148 = vsel %vm3869, %v4134, 0
  %v4151 = vsel %vm3869, %v4135, 0
  %4153 = vmatpush.msra.mxu0 0.0
  %4154 = vmatpush.msra.mxu0 0.0
  %4155 = vmatpush.msra.mxu0 0.0
  %4156 = vmatpush.msra.mxu0 0.0
  %4157 = vmatpush.msra.mxu0 0.0
  %4158 = vmatpush.msra.mxu0 0.0
  %4159 = vmatpush.msra.mxu0 0.0
  %4160 = vmatpush.msra.mxu0 0.0
  %4161 = vmatpush.msra.mxu0 0.0
  %4162 = vmatpush.msra.mxu0 0.0
  %4163 = vmatpush.msra.mxu0 0.0
  %4164 = vmatpush.msra.mxu0 0.0
  %4165 = vmatpush.msra.mxu0 0.0
  %4166 = vmatpush.msra.mxu0 0.0
  %4167 = vmatpush.msra.mxu0 0.0
  %4168 = vmatpush.msra.mxu0 %v4142
  %4169 = vmatmul.f32.gmra.mxu0 %v4139
  %v4170 = vpop.f32.mrf.mxu0
  %v4171 = vadd.f32 0.0, %v4170
  %4172 = vdwg.mxu0
  %4173 = vmatpush.msra.mxu0 0.0
  %4174 = vmatpush.msra.mxu0 0.0
  %4175 = vmatpush.msra.mxu0 0.0
  %4176 = vmatpush.msra.mxu0 0.0
  %4177 = vmatpush.msra.mxu0 0.0
  %4178 = vmatpush.msra.mxu0 0.0
  %4179 = vmatpush.msra.mxu0 0.0
  %4180 = vmatpush.msra.mxu0 0.0
  %4181 = vmatpush.msra.mxu0 0.0
  %4182 = vmatpush.msra.mxu0 0.0
  %4183 = vmatpush.msra.mxu0 0.0
  %4184 = vmatpush.msra.mxu0 0.0
  %4185 = vmatpush.msra.mxu0 0.0
  %4186 = vmatpush.msra.mxu0 0.0
  %4187 = vmatpush.msra.mxu0 0.0
  %4188 = vmatpush.msra.mxu0 %v4145
  %4189 = vmatmul.f32.gmra.mxu0 %v4139
  %v4190 = vpop.f32.mrf.mxu0
  %v4191 = vadd.f32 0.0, %v4190
  %4192 = vdwg.mxu0
  %4193 = vmatpush.msra.mxu0 0.0
  %4194 = vmatpush.msra.mxu0 0.0
  %4195 = vmatpush.msra.mxu0 0.0
  %4196 = vmatpush.msra.mxu0 0.0
  %4197 = vmatpush.msra.mxu0 0.0
  %4198 = vmatpush.msra.mxu0 0.0
  %4199 = vmatpush.msra.mxu0 0.0
  %4200 = vmatpush.msra.mxu0 0.0
  %4201 = vmatpush.msra.mxu0 0.0
  %4202 = vmatpush.msra.mxu0 0.0
  %4203 = vmatpush.msra.mxu0 0.0
  %4204 = vmatpush.msra.mxu0 0.0
  %4205 = vmatpush.msra.mxu0 0.0
  %4206 = vmatpush.msra.mxu0 0.0
  %4207 = vmatpush.msra.mxu0 0.0
  %4208 = vmatpush.msra.mxu0 %v4148
  %4209 = vmatmul.f32.gmra.mxu0 %v4139
  %v4210 = vpop.f32.mrf.mxu0
  %v4211 = vadd.f32 0.0, %v4210
  %4212 = vdwg.mxu0
  %4213 = vmatpush.msra.mxu0 0.0
  %4214 = vmatpush.msra.mxu0 0.0
  %4215 = vmatpush.msra.mxu0 0.0
  %4216 = vmatpush.msra.mxu0 0.0
  %4217 = vmatpush.msra.mxu0 0.0
  %4218 = vmatpush.msra.mxu0 0.0
  %4219 = vmatpush.msra.mxu0 0.0
  %4220 = vmatpush.msra.mxu0 0.0
  %4221 = vmatpush.msra.mxu0 0.0
  %4222 = vmatpush.msra.mxu0 0.0
  %4223 = vmatpush.msra.mxu0 0.0
  %4224 = vmatpush.msra.mxu0 0.0
  %4225 = vmatpush.msra.mxu0 0.0
  %4226 = vmatpush.msra.mxu0 0.0
  %4227 = vmatpush.msra.mxu0 0.0
  %4228 = vmatpush.msra.mxu0 %v4151
  %4229 = vmatmul.f32.gmra.mxu0 %v4139
  %v4230 = vpop.f32.mrf.mxu0
  %v4231 = vadd.f32 0.0, %v4230
  %4232 = vdwg.mxu0
  %v4234 = vsel %vm3206, %v4114, 0
  %v4237 = vsel %vm3869, %v4110, 0
  %v4240 = vsel %vm3869, %v4111, 0
  %v4243 = vsel %vm3869, %v4112, 0
  %v4246 = vsel %vm3869, %v4113, 0
  %4248 = vmatpush.msra.mxu0 0.0
  %4249 = vmatpush.msra.mxu0 0.0
  %4250 = vmatpush.msra.mxu0 0.0
  %4251 = vmatpush.msra.mxu0 0.0
  %4252 = vmatpush.msra.mxu0 0.0
  %4253 = vmatpush.msra.mxu0 0.0
  %4254 = vmatpush.msra.mxu0 0.0
  %4255 = vmatpush.msra.mxu0 0.0
  %4256 = vmatpush.msra.mxu0 0.0
  %4257 = vmatpush.msra.mxu0 0.0
  %4258 = vmatpush.msra.mxu0 0.0
  %4259 = vmatpush.msra.mxu0 0.0
  %4260 = vmatpush.msra.mxu0 0.0
  %4261 = vmatpush.msra.mxu0 0.0
  %4262 = vmatpush.msra.mxu0 0.0
  %4263 = vmatpush.msra.mxu0 %v4237
  %4264 = vmatmul.f32.gmra.mxu0 %v4234
  %v4265 = vpop.f32.mrf.mxu0
  %v4266 = vadd.f32 %v4171, %v4265
  %4267 = vdwg.mxu0
  %4268 = vmatpush.msra.mxu0 0.0
  %4269 = vmatpush.msra.mxu0 0.0
  %4270 = vmatpush.msra.mxu0 0.0
  %4271 = vmatpush.msra.mxu0 0.0
  %4272 = vmatpush.msra.mxu0 0.0
  %4273 = vmatpush.msra.mxu0 0.0
  %4274 = vmatpush.msra.mxu0 0.0
  %4275 = vmatpush.msra.mxu0 0.0
  %4276 = vmatpush.msra.mxu0 0.0
  %4277 = vmatpush.msra.mxu0 0.0
  %4278 = vmatpush.msra.mxu0 0.0
  %4279 = vmatpush.msra.mxu0 0.0
  %4280 = vmatpush.msra.mxu0 0.0
  %4281 = vmatpush.msra.mxu0 0.0
  %4282 = vmatpush.msra.mxu0 0.0
  %4283 = vmatpush.msra.mxu0 %v4240
  %4284 = vmatmul.f32.gmra.mxu0 %v4234
  %v4285 = vpop.f32.mrf.mxu0
  %v4286 = vadd.f32 %v4191, %v4285
  %4287 = vdwg.mxu0
  %4288 = vmatpush.msra.mxu0 0.0
  %4289 = vmatpush.msra.mxu0 0.0
  %4290 = vmatpush.msra.mxu0 0.0
  %4291 = vmatpush.msra.mxu0 0.0
  %4292 = vmatpush.msra.mxu0 0.0
  %4293 = vmatpush.msra.mxu0 0.0
  %4294 = vmatpush.msra.mxu0 0.0
  %4295 = vmatpush.msra.mxu0 0.0
  %4296 = vmatpush.msra.mxu0 0.0
  %4297 = vmatpush.msra.mxu0 0.0
  %4298 = vmatpush.msra.mxu0 0.0
  %4299 = vmatpush.msra.mxu0 0.0
  %4300 = vmatpush.msra.mxu0 0.0
  %4301 = vmatpush.msra.mxu0 0.0
  %4302 = vmatpush.msra.mxu0 0.0
  %4303 = vmatpush.msra.mxu0 %v4243
  %4304 = vmatmul.f32.gmra.mxu0 %v4234
  %v4305 = vpop.f32.mrf.mxu0
  %v4306 = vadd.f32 %v4211, %v4305
  %4307 = vdwg.mxu0
  %4308 = vmatpush.msra.mxu0 0.0
  %4309 = vmatpush.msra.mxu0 0.0
  %4310 = vmatpush.msra.mxu0 0.0
  %4311 = vmatpush.msra.mxu0 0.0
  %4312 = vmatpush.msra.mxu0 0.0
  %4313 = vmatpush.msra.mxu0 0.0
  %4314 = vmatpush.msra.mxu0 0.0
  %4315 = vmatpush.msra.mxu0 0.0
  %4316 = vmatpush.msra.mxu0 0.0
  %4317 = vmatpush.msra.mxu0 0.0
  %4318 = vmatpush.msra.mxu0 0.0
  %4319 = vmatpush.msra.mxu0 0.0
  %4320 = vmatpush.msra.mxu0 0.0
  %4321 = vmatpush.msra.mxu0 0.0
  %4322 = vmatpush.msra.mxu0 0.0
  %4323 = vmatpush.msra.mxu0 %v4246
  %4324 = vmatmul.f32.gmra.mxu0 %v4234
  %v4325 = vpop.f32.mrf.mxu0
  %v4326 = vadd.f32 %v4231, %v4325
  %4327 = vdwg.mxu0
  %4328 = vrot.lane.b32.xlu0 %v4087, 15
  %v4329 = vpop.permute.xlu0 %4328
  %4331 = vrot.lane.b32.xlu0 %v4027, 15
  %v4332 = vpop.permute.xlu0 %4331
  %4333 = vrot.lane.b32.xlu0 %v4047, 15
  %v4334 = vpop.permute.xlu0 %4333
  %4335 = vrot.lane.b32.xlu0 %v4067, 15
  %v4336 = vpop.permute.xlu0 %4335
  %v4337 = vsel %vm386, %v4332, %v4334
  %v4338 = vsel %vm386, %v4334, %v4336
  %v4339 = vsel %vm386, %v4336, %v4329
  %v4344 = vsel %vm386, %v4329, %v4332
  %v4345 = vmul.f32 %v4344, %v398
  %v4346 = vmul.f32 %v4337, %v399
  %v4347 = vmul.f32 %v4338, %v400
  %v4348 = vmul.f32 %v4339, %v401
  %s4349 = scalar_lea.vmem %s15, 8
  %v4350 = vld [vmem:[%s4349] sm:$0x7]
  %v4352 = vsel %vm3206, %v4350, 0
  %v4355 = vsel %vm3869, %v4345, 0
  %v4358 = vsel %vm3869, %v4346, 0
  %v4361 = vsel %vm3869, %v4347, 0
  %v4364 = vsel %vm3869, %v4348, 0
  %4366 = vmatpush.msra.mxu0 0.0
  %4367 = vmatpush.msra.mxu0 0.0
  %4368 = vmatpush.msra.mxu0 0.0
  %4369 = vmatpush.msra.mxu0 0.0
  %4370 = vmatpush.msra.mxu0 0.0
  %4371 = vmatpush.msra.mxu0 0.0
  %4372 = vmatpush.msra.mxu0 0.0
  %4373 = vmatpush.msra.mxu0 0.0
  %4374 = vmatpush.msra.mxu0 0.0
  %4375 = vmatpush.msra.mxu0 0.0
  %4376 = vmatpush.msra.mxu0 0.0
  %4377 = vmatpush.msra.mxu0 0.0
  %4378 = vmatpush.msra.mxu0 0.0
  %4379 = vmatpush.msra.mxu0 0.0
  %4380 = vmatpush.msra.mxu0 0.0
  %4381 = vmatpush.msra.mxu0 %v4355
  %4382 = vmatmul.f32.gmra.mxu0 %v4352
  %v4383 = vpop.f32.mrf.mxu0
  %v4384 = vadd.f32 0.0, %v4383
  %4385 = vdwg.mxu0
  %4386 = vmatpush.msra.mxu0 0.0
  %4387 = vmatpush.msra.mxu0 0.0
  %4388 = vmatpush.msra.mxu0 0.0
  %4389 = vmatpush.msra.mxu0 0.0
  %4390 = vmatpush.msra.mxu0 0.0
  %4391 = vmatpush.msra.mxu0 0.0
  %4392 = vmatpush.msra.mxu0 0.0
  %4393 = vmatpush.msra.mxu0 0.0
  %4394 = vmatpush.msra.mxu0 0.0
  %4395 = vmatpush.msra.mxu0 0.0
  %4396 = vmatpush.msra.mxu0 0.0
  %4397 = vmatpush.msra.mxu0 0.0
  %4398 = vmatpush.msra.mxu0 0.0
  %4399 = vmatpush.msra.mxu0 0.0
  %4400 = vmatpush.msra.mxu0 0.0
  %4401 = vmatpush.msra.mxu0 %v4358
  %4402 = vmatmul.f32.gmra.mxu0 %v4352
  %v4403 = vpop.f32.mrf.mxu0
  %v4404 = vadd.f32 0.0, %v4403
  %4405 = vdwg.mxu0
  %4406 = vmatpush.msra.mxu0 0.0
  %4407 = vmatpush.msra.mxu0 0.0
  %4408 = vmatpush.msra.mxu0 0.0
  %4409 = vmatpush.msra.mxu0 0.0
  %4410 = vmatpush.msra.mxu0 0.0
  %4411 = vmatpush.msra.mxu0 0.0
  %4412 = vmatpush.msra.mxu0 0.0
  %4413 = vmatpush.msra.mxu0 0.0
  %4414 = vmatpush.msra.mxu0 0.0
  %4415 = vmatpush.msra.mxu0 0.0
  %4416 = vmatpush.msra.mxu0 0.0
  %4417 = vmatpush.msra.mxu0 0.0
  %4418 = vmatpush.msra.mxu0 0.0
  %4419 = vmatpush.msra.mxu0 0.0
  %4420 = vmatpush.msra.mxu0 0.0
  %4421 = vmatpush.msra.mxu0 %v4361
  %4422 = vmatmul.f32.gmra.mxu0 %v4352
  %v4423 = vpop.f32.mrf.mxu0
  %v4424 = vadd.f32 0.0, %v4423
  %4425 = vdwg.mxu0
  %4426 = vmatpush.msra.mxu0 0.0
  %4427 = vmatpush.msra.mxu0 0.0
  %4428 = vmatpush.msra.mxu0 0.0
  %4429 = vmatpush.msra.mxu0 0.0
  %4430 = vmatpush.msra.mxu0 0.0
  %4431 = vmatpush.msra.mxu0 0.0
  %4432 = vmatpush.msra.mxu0 0.0
  %4433 = vmatpush.msra.mxu0 0.0
  %4434 = vmatpush.msra.mxu0 0.0
  %4435 = vmatpush.msra.mxu0 0.0
  %4436 = vmatpush.msra.mxu0 0.0
  %4437 = vmatpush.msra.mxu0 0.0
  %4438 = vmatpush.msra.mxu0 0.0
  %4439 = vmatpush.msra.mxu0 0.0
  %4440 = vmatpush.msra.mxu0 0.0
  %4441 = vmatpush.msra.mxu0 %v4364
  %4442 = vmatmul.f32.gmra.mxu0 %v4352
  %v4443 = vpop.f32.mrf.mxu0
  %v4444 = vadd.f32 0.0, %v4443
  %4445 = vdwg.mxu0
  %v4446 = vadd.f32 %v4266, %v4384
  %v4447 = vadd.f32 %v4286, %v4404
  %v4448 = vadd.f32 %v4306, %v4424
  %v4449 = vadd.f32 %v4326, %v4444
  %4450 = vrot.lane.b32.xlu0 %v4087, 1
  %v4451 = vpop.permute.xlu0 %4450
  %4453 = vrot.lane.b32.xlu0 %v4027, 1
  %v4454 = vpop.permute.xlu0 %4453
  %4455 = vrot.lane.b32.xlu0 %v4047, 1
  %v4456 = vpop.permute.xlu0 %4455
  %4457 = vrot.lane.b32.xlu0 %v4067, 1
  %v4458 = vpop.permute.xlu0 %4457
  %v4459 = vsel %vm531, %v4454, %v4456
  %v4460 = vsel %vm531, %v4456, %v4458
  %v4461 = vsel %vm531, %v4458, %v4451
  %v4466 = vsel %vm531, %v4451, %v4454
  %v4467 = vmul.f32 %v4466, %v543
  %v4468 = vmul.f32 %v4459, %v544
  %v4469 = vmul.f32 %v4460, %v545
  %v4470 = vmul.f32 %v4461, %v546
  %s4471 = scalar_lea.vmem %s15, 12
  %v4472 = vld [vmem:[%s4471] sm:$0x7]
  %v4474 = vsel %vm3206, %v4472, 0
  %v4477 = vsel %vm3869, %v4467, 0
  %v4480 = vsel %vm3869, %v4468, 0
  %v4483 = vsel %vm3869, %v4469, 0
  %v4486 = vsel %vm3869, %v4470, 0
  %4488 = vmatpush.msra.mxu0 0.0
  %4489 = vmatpush.msra.mxu0 0.0
  %4490 = vmatpush.msra.mxu0 0.0
  %4491 = vmatpush.msra.mxu0 0.0
  %4492 = vmatpush.msra.mxu0 0.0
  %4493 = vmatpush.msra.mxu0 0.0
  %4494 = vmatpush.msra.mxu0 0.0
  %4495 = vmatpush.msra.mxu0 0.0
  %4496 = vmatpush.msra.mxu0 0.0
  %4497 = vmatpush.msra.mxu0 0.0
  %4498 = vmatpush.msra.mxu0 0.0
  %4499 = vmatpush.msra.mxu0 0.0
  %4500 = vmatpush.msra.mxu0 0.0
  %4501 = vmatpush.msra.mxu0 0.0
  %4502 = vmatpush.msra.mxu0 0.0
  %4503 = vmatpush.msra.mxu0 %v4477
  %4504 = vmatmul.f32.gmra.mxu0 %v4474
  %v4505 = vpop.f32.mrf.mxu0
  %v4506 = vadd.f32 0.0, %v4505
  %4507 = vdwg.mxu0
  %4508 = vmatpush.msra.mxu0 0.0
  %4509 = vmatpush.msra.mxu0 0.0
  %4510 = vmatpush.msra.mxu0 0.0
  %4511 = vmatpush.msra.mxu0 0.0
  %4512 = vmatpush.msra.mxu0 0.0
  %4513 = vmatpush.msra.mxu0 0.0
  %4514 = vmatpush.msra.mxu0 0.0
  %4515 = vmatpush.msra.mxu0 0.0
  %4516 = vmatpush.msra.mxu0 0.0
  %4517 = vmatpush.msra.mxu0 0.0
  %4518 = vmatpush.msra.mxu0 0.0
  %4519 = vmatpush.msra.mxu0 0.0
  %4520 = vmatpush.msra.mxu0 0.0
  %4521 = vmatpush.msra.mxu0 0.0
  %4522 = vmatpush.msra.mxu0 0.0
  %4523 = vmatpush.msra.mxu0 %v4480
  %4524 = vmatmul.f32.gmra.mxu0 %v4474
  %v4525 = vpop.f32.mrf.mxu0
  %v4526 = vadd.f32 0.0, %v4525
  %4527 = vdwg.mxu0
  %4528 = vmatpush.msra.mxu0 0.0
  %4529 = vmatpush.msra.mxu0 0.0
  %4530 = vmatpush.msra.mxu0 0.0
  %4531 = vmatpush.msra.mxu0 0.0
  %4532 = vmatpush.msra.mxu0 0.0
  %4533 = vmatpush.msra.mxu0 0.0
  %4534 = vmatpush.msra.mxu0 0.0
  %4535 = vmatpush.msra.mxu0 0.0
  %4536 = vmatpush.msra.mxu0 0.0
  %4537 = vmatpush.msra.mxu0 0.0
  %4538 = vmatpush.msra.mxu0 0.0
  %4539 = vmatpush.msra.mxu0 0.0
  %4540 = vmatpush.msra.mxu0 0.0
  %4541 = vmatpush.msra.mxu0 0.0
  %4542 = vmatpush.msra.mxu0 0.0
  %4543 = vmatpush.msra.mxu0 %v4483
  %4544 = vmatmul.f32.gmra.mxu0 %v4474
  %v4545 = vpop.f32.mrf.mxu0
  %v4546 = vadd.f32 0.0, %v4545
  %4547 = vdwg.mxu0
  %4548 = vmatpush.msra.mxu0 0.0
  %4549 = vmatpush.msra.mxu0 0.0
  %4550 = vmatpush.msra.mxu0 0.0
  %4551 = vmatpush.msra.mxu0 0.0
  %4552 = vmatpush.msra.mxu0 0.0
  %4553 = vmatpush.msra.mxu0 0.0
  %4554 = vmatpush.msra.mxu0 0.0
  %4555 = vmatpush.msra.mxu0 0.0
  %4556 = vmatpush.msra.mxu0 0.0
  %4557 = vmatpush.msra.mxu0 0.0
  %4558 = vmatpush.msra.mxu0 0.0
  %4559 = vmatpush.msra.mxu0 0.0
  %4560 = vmatpush.msra.mxu0 0.0
  %4561 = vmatpush.msra.mxu0 0.0
  %4562 = vmatpush.msra.mxu0 0.0
  %4563 = vmatpush.msra.mxu0 %v4486
  %4564 = vmatmul.f32.gmra.mxu0 %v4474
  %v4565 = vpop.f32.mrf.mxu0
  %v4566 = vadd.f32 0.0, %v4565
  %4567 = vdwg.mxu0
  %v4568 = vadd.f32 %v4446, %v4506
  %v4569 = vadd.f32 %v4447, %v4526
  %v4570 = vadd.f32 %v4448, %v4546
  %v4571 = vadd.f32 %v4449, %v4566
  %s4572 = scalar_lea.vmem %s15, 16
  %v4573 = vld [vmem:[%s4572] sm:$0x7]
  %v4575 = vsel %vm3206, %v4573, 0
  %v4577 = vsel %vm3869, %v4027, 0
  %v4579 = vsel %vm3869, %v4047, 0
  %v4581 = vsel %vm3869, %v4067, 0
  %v4583 = vsel %vm3869, %v4087, 0
  %4585 = vmatpush.msra.mxu0 0.0
  %4586 = vmatpush.msra.mxu0 0.0
  %4587 = vmatpush.msra.mxu0 0.0
  %4588 = vmatpush.msra.mxu0 0.0
  %4589 = vmatpush.msra.mxu0 0.0
  %4590 = vmatpush.msra.mxu0 0.0
  %4591 = vmatpush.msra.mxu0 0.0
  %4592 = vmatpush.msra.mxu0 0.0
  %4593 = vmatpush.msra.mxu0 0.0
  %4594 = vmatpush.msra.mxu0 0.0
  %4595 = vmatpush.msra.mxu0 0.0
  %4596 = vmatpush.msra.mxu0 0.0
  %4597 = vmatpush.msra.mxu0 0.0
  %4598 = vmatpush.msra.mxu0 0.0
  %4599 = vmatpush.msra.mxu0 0.0
  %4600 = vmatpush.msra.mxu0 %v4577
  %4601 = vmatmul.f32.gmra.mxu0 %v4575
  %v4602 = vpop.f32.mrf.mxu0
  %v4603 = vadd.f32 0.0, %v4602
  %4604 = vdwg.mxu0
  %4605 = vmatpush.msra.mxu0 0.0
  %4606 = vmatpush.msra.mxu0 0.0
  %4607 = vmatpush.msra.mxu0 0.0
  %4608 = vmatpush.msra.mxu0 0.0
  %4609 = vmatpush.msra.mxu0 0.0
  %4610 = vmatpush.msra.mxu0 0.0
  %4611 = vmatpush.msra.mxu0 0.0
  %4612 = vmatpush.msra.mxu0 0.0
  %4613 = vmatpush.msra.mxu0 0.0
  %4614 = vmatpush.msra.mxu0 0.0
  %4615 = vmatpush.msra.mxu0 0.0
  %4616 = vmatpush.msra.mxu0 0.0
  %4617 = vmatpush.msra.mxu0 0.0
  %4618 = vmatpush.msra.mxu0 0.0
  %4619 = vmatpush.msra.mxu0 0.0
  %4620 = vmatpush.msra.mxu0 %v4579
  %4621 = vmatmul.f32.gmra.mxu0 %v4575
  %v4622 = vpop.f32.mrf.mxu0
  %v4623 = vadd.f32 0.0, %v4622
  %4624 = vdwg.mxu0
  %4625 = vmatpush.msra.mxu0 0.0
  %4626 = vmatpush.msra.mxu0 0.0
  %4627 = vmatpush.msra.mxu0 0.0
  %4628 = vmatpush.msra.mxu0 0.0
  %4629 = vmatpush.msra.mxu0 0.0
  %4630 = vmatpush.msra.mxu0 0.0
  %4631 = vmatpush.msra.mxu0 0.0
  %4632 = vmatpush.msra.mxu0 0.0
  %4633 = vmatpush.msra.mxu0 0.0
  %4634 = vmatpush.msra.mxu0 0.0
  %4635 = vmatpush.msra.mxu0 0.0
  %4636 = vmatpush.msra.mxu0 0.0
  %4637 = vmatpush.msra.mxu0 0.0
  %4638 = vmatpush.msra.mxu0 0.0
  %4639 = vmatpush.msra.mxu0 0.0
  %4640 = vmatpush.msra.mxu0 %v4581
  %4641 = vmatmul.f32.gmra.mxu0 %v4575
  %v4642 = vpop.f32.mrf.mxu0
  %v4643 = vadd.f32 0.0, %v4642
  %4644 = vdwg.mxu0
  %4645 = vmatpush.msra.mxu0 0.0
  %4646 = vmatpush.msra.mxu0 0.0
  %4647 = vmatpush.msra.mxu0 0.0
  %4648 = vmatpush.msra.mxu0 0.0
  %4649 = vmatpush.msra.mxu0 0.0
  %4650 = vmatpush.msra.mxu0 0.0
  %4651 = vmatpush.msra.mxu0 0.0
  %4652 = vmatpush.msra.mxu0 0.0
  %4653 = vmatpush.msra.mxu0 0.0
  %4654 = vmatpush.msra.mxu0 0.0
  %4655 = vmatpush.msra.mxu0 0.0
  %4656 = vmatpush.msra.mxu0 0.0
  %4657 = vmatpush.msra.mxu0 0.0
  %4658 = vmatpush.msra.mxu0 0.0
  %4659 = vmatpush.msra.mxu0 0.0
  %4660 = vmatpush.msra.mxu0 %v4583
  %4661 = vmatmul.f32.gmra.mxu0 %v4575
  %v4662 = vpop.f32.mrf.mxu0
  %v4663 = vadd.f32 0.0, %v4662
  %4664 = vdwg.mxu0
  %v4665 = vadd.f32 %v4568, %v4603
  %v4666 = vadd.f32 %v4569, %v4623
  %v4667 = vadd.f32 %v4570, %v4643
  %v4668 = vadd.f32 %v4571, %v4663
  %4669 = vrot.lane.b32.xlu0 %v4027, 127
  %v4670 = vpop.permute.xlu0 %4669
  %4671 = vrot.lane.b32.xlu0 %v4047, 127
  %v4672 = vpop.permute.xlu0 %4671
  %4673 = vrot.lane.b32.xlu0 %v4067, 127
  %v4674 = vpop.permute.xlu0 %4673
  %4675 = vrot.lane.b32.xlu0 %v4087, 127
  %v4676 = vpop.permute.xlu0 %4675
  %v4677 = vsel %vm775, %v4670, %v4672
  %v4678 = vsel %vm775, %v4672, %v4674
  %v4679 = vsel %vm775, %v4674, %v4676
  %v4685 = vsel %vm775, %v4676, %v4670
  %v4686 = vmul.f32 %v4677, %v792
  %v4687 = vmul.f32 %v4678, %v793
  %v4688 = vmul.f32 %v4679, %v794
  %v4689 = vmul.f32 %v4685, %v795
  %s4690 = scalar_lea.vmem %s15, 20
  %v4691 = vld [vmem:[%s4690] sm:$0x7]
  %v4693 = vsel %vm3206, %v4691, 0
  %v4696 = vsel %vm3869, %v4686, 0
  %v4699 = vsel %vm3869, %v4687, 0
  %v4702 = vsel %vm3869, %v4688, 0
  %v4705 = vsel %vm3869, %v4689, 0
  %4707 = vmatpush.msra.mxu0 0.0
  %4708 = vmatpush.msra.mxu0 0.0
  %4709 = vmatpush.msra.mxu0 0.0
  %4710 = vmatpush.msra.mxu0 0.0
  %4711 = vmatpush.msra.mxu0 0.0
  %4712 = vmatpush.msra.mxu0 0.0
  %4713 = vmatpush.msra.mxu0 0.0
  %4714 = vmatpush.msra.mxu0 0.0
  %4715 = vmatpush.msra.mxu0 0.0
  %4716 = vmatpush.msra.mxu0 0.0
  %4717 = vmatpush.msra.mxu0 0.0
  %4718 = vmatpush.msra.mxu0 0.0
  %4719 = vmatpush.msra.mxu0 0.0
  %4720 = vmatpush.msra.mxu0 0.0
  %4721 = vmatpush.msra.mxu0 0.0
  %4722 = vmatpush.msra.mxu0 %v4696
  %4723 = vmatmul.f32.gmra.mxu0 %v4693
  %v4724 = vpop.f32.mrf.mxu0
  %v4725 = vadd.f32 0.0, %v4724
  %4726 = vdwg.mxu0
  %4727 = vmatpush.msra.mxu0 0.0
  %4728 = vmatpush.msra.mxu0 0.0
  %4729 = vmatpush.msra.mxu0 0.0
  %4730 = vmatpush.msra.mxu0 0.0
  %4731 = vmatpush.msra.mxu0 0.0
  %4732 = vmatpush.msra.mxu0 0.0
  %4733 = vmatpush.msra.mxu0 0.0
  %4734 = vmatpush.msra.mxu0 0.0
  %4735 = vmatpush.msra.mxu0 0.0
  %4736 = vmatpush.msra.mxu0 0.0
  %4737 = vmatpush.msra.mxu0 0.0
  %4738 = vmatpush.msra.mxu0 0.0
  %4739 = vmatpush.msra.mxu0 0.0
  %4740 = vmatpush.msra.mxu0 0.0
  %4741 = vmatpush.msra.mxu0 0.0
  %4742 = vmatpush.msra.mxu0 %v4699
  %4743 = vmatmul.f32.gmra.mxu0 %v4693
  %v4744 = vpop.f32.mrf.mxu0
  %v4745 = vadd.f32 0.0, %v4744
  %4746 = vdwg.mxu0
  %4747 = vmatpush.msra.mxu0 0.0
  %4748 = vmatpush.msra.mxu0 0.0
  %4749 = vmatpush.msra.mxu0 0.0
  %4750 = vmatpush.msra.mxu0 0.0
  %4751 = vmatpush.msra.mxu0 0.0
  %4752 = vmatpush.msra.mxu0 0.0
  %4753 = vmatpush.msra.mxu0 0.0
  %4754 = vmatpush.msra.mxu0 0.0
  %4755 = vmatpush.msra.mxu0 0.0
  %4756 = vmatpush.msra.mxu0 0.0
  %4757 = vmatpush.msra.mxu0 0.0
  %4758 = vmatpush.msra.mxu0 0.0
  %4759 = vmatpush.msra.mxu0 0.0
  %4760 = vmatpush.msra.mxu0 0.0
  %4761 = vmatpush.msra.mxu0 0.0
  %4762 = vmatpush.msra.mxu0 %v4702
  %4763 = vmatmul.f32.gmra.mxu0 %v4693
  %v4764 = vpop.f32.mrf.mxu0
  %v4765 = vadd.f32 0.0, %v4764
  %4766 = vdwg.mxu0
  %4767 = vmatpush.msra.mxu0 0.0
  %4768 = vmatpush.msra.mxu0 0.0
  %4769 = vmatpush.msra.mxu0 0.0
  %4770 = vmatpush.msra.mxu0 0.0
  %4771 = vmatpush.msra.mxu0 0.0
  %4772 = vmatpush.msra.mxu0 0.0
  %4773 = vmatpush.msra.mxu0 0.0
  %4774 = vmatpush.msra.mxu0 0.0
  %4775 = vmatpush.msra.mxu0 0.0
  %4776 = vmatpush.msra.mxu0 0.0
  %4777 = vmatpush.msra.mxu0 0.0
  %4778 = vmatpush.msra.mxu0 0.0
  %4779 = vmatpush.msra.mxu0 0.0
  %4780 = vmatpush.msra.mxu0 0.0
  %4781 = vmatpush.msra.mxu0 0.0
  %4782 = vmatpush.msra.mxu0 %v4705
  %4783 = vmatmul.f32.gmra.mxu0 %v4693
  %v4784 = vpop.f32.mrf.mxu0
  %v4785 = vadd.f32 0.0, %v4784
  %4786 = vdwg.mxu0
  %v4787 = vadd.f32 %v4665, %v4725
  %v4788 = vadd.f32 %v4666, %v4745
  %v4789 = vadd.f32 %v4667, %v4765
  %v4790 = vadd.f32 %v4668, %v4785
  %4791 = vrot.lane.b32.xlu0 %v4027, 113
  %v4792 = vpop.permute.xlu0 %4791
  %4793 = vrot.lane.b32.xlu0 %v4047, 113
  %v4794 = vpop.permute.xlu0 %4793
  %4795 = vrot.lane.b32.xlu0 %v4067, 113
  %v4796 = vpop.permute.xlu0 %4795
  %4797 = vrot.lane.b32.xlu0 %v4087, 113
  %v4798 = vpop.permute.xlu0 %4797
  %v4799 = vsel %vm920, %v4792, %v4794
  %v4800 = vsel %vm920, %v4794, %v4796
  %v4801 = vsel %vm920, %v4796, %v4798
  %v4807 = vsel %vm920, %v4798, %v4792
  %v4808 = vmul.f32 %v4799, %v937
  %v4809 = vmul.f32 %v4800, %v938
  %v4810 = vmul.f32 %v4801, %v939
  %v4811 = vmul.f32 %v4807, %v940
  %s4812 = scalar_lea.vmem %s15, 24
  %v4813 = vld [vmem:[%s4812] sm:$0x7]
  %v4815 = vsel %vm3206, %v4813, 0
  %v4818 = vsel %vm3869, %v4808, 0
  %v4821 = vsel %vm3869, %v4809, 0
  %v4824 = vsel %vm3869, %v4810, 0
  %v4827 = vsel %vm3869, %v4811, 0
  %4829 = vmatpush.msra.mxu0 0.0
  %4830 = vmatpush.msra.mxu0 0.0
  %4831 = vmatpush.msra.mxu0 0.0
  %4832 = vmatpush.msra.mxu0 0.0
  %4833 = vmatpush.msra.mxu0 0.0
  %4834 = vmatpush.msra.mxu0 0.0
  %4835 = vmatpush.msra.mxu0 0.0
  %4836 = vmatpush.msra.mxu0 0.0
  %4837 = vmatpush.msra.mxu0 0.0
  %4838 = vmatpush.msra.mxu0 0.0
  %4839 = vmatpush.msra.mxu0 0.0
  %4840 = vmatpush.msra.mxu0 0.0
  %4841 = vmatpush.msra.mxu0 0.0
  %4842 = vmatpush.msra.mxu0 0.0
  %4843 = vmatpush.msra.mxu0 0.0
  %4844 = vmatpush.msra.mxu0 %v4818
  %4845 = vmatmul.f32.gmra.mxu0 %v4815
  %v4846 = vpop.f32.mrf.mxu0
  %v4847 = vadd.f32 0.0, %v4846
  %4848 = vdwg.mxu0
  %4849 = vmatpush.msra.mxu0 0.0
  %4850 = vmatpush.msra.mxu0 0.0
  %4851 = vmatpush.msra.mxu0 0.0
  %4852 = vmatpush.msra.mxu0 0.0
  %4853 = vmatpush.msra.mxu0 0.0
  %4854 = vmatpush.msra.mxu0 0.0
  %4855 = vmatpush.msra.mxu0 0.0
  %4856 = vmatpush.msra.mxu0 0.0
  %4857 = vmatpush.msra.mxu0 0.0
  %4858 = vmatpush.msra.mxu0 0.0
  %4859 = vmatpush.msra.mxu0 0.0
  %4860 = vmatpush.msra.mxu0 0.0
  %4861 = vmatpush.msra.mxu0 0.0
  %4862 = vmatpush.msra.mxu0 0.0
  %4863 = vmatpush.msra.mxu0 0.0
  %4864 = vmatpush.msra.mxu0 %v4821
  %4865 = vmatmul.f32.gmra.mxu0 %v4815
  %v4866 = vpop.f32.mrf.mxu0
  %v4867 = vadd.f32 0.0, %v4866
  %4868 = vdwg.mxu0
  %4869 = vmatpush.msra.mxu0 0.0
  %4870 = vmatpush.msra.mxu0 0.0
  %4871 = vmatpush.msra.mxu0 0.0
  %4872 = vmatpush.msra.mxu0 0.0
  %4873 = vmatpush.msra.mxu0 0.0
  %4874 = vmatpush.msra.mxu0 0.0
  %4875 = vmatpush.msra.mxu0 0.0
  %4876 = vmatpush.msra.mxu0 0.0
  %4877 = vmatpush.msra.mxu0 0.0
  %4878 = vmatpush.msra.mxu0 0.0
  %4879 = vmatpush.msra.mxu0 0.0
  %4880 = vmatpush.msra.mxu0 0.0
  %4881 = vmatpush.msra.mxu0 0.0
  %4882 = vmatpush.msra.mxu0 0.0
  %4883 = vmatpush.msra.mxu0 0.0
  %4884 = vmatpush.msra.mxu0 %v4824
  %4885 = vmatmul.f32.gmra.mxu0 %v4815
  %v4886 = vpop.f32.mrf.mxu0
  %v4887 = vadd.f32 0.0, %v4886
  %4888 = vdwg.mxu0
  %4889 = vmatpush.msra.mxu0 0.0
  %4890 = vmatpush.msra.mxu0 0.0
  %4891 = vmatpush.msra.mxu0 0.0
  %4892 = vmatpush.msra.mxu0 0.0
  %4893 = vmatpush.msra.mxu0 0.0
  %4894 = vmatpush.msra.mxu0 0.0
  %4895 = vmatpush.msra.mxu0 0.0
  %4896 = vmatpush.msra.mxu0 0.0
  %4897 = vmatpush.msra.mxu0 0.0
  %4898 = vmatpush.msra.mxu0 0.0
  %4899 = vmatpush.msra.mxu0 0.0
  %4900 = vmatpush.msra.mxu0 0.0
  %4901 = vmatpush.msra.mxu0 0.0
  %4902 = vmatpush.msra.mxu0 0.0
  %4903 = vmatpush.msra.mxu0 0.0
  %4904 = vmatpush.msra.mxu0 %v4827
  %4905 = vmatmul.f32.gmra.mxu0 %v4815
  %v4906 = vpop.f32.mrf.mxu0
  %v4907 = vadd.f32 0.0, %v4906
  %4908 = vdwg.mxu0
  %v4909 = vadd.f32 %v4787, %v4847
  %v4910 = vadd.f32 %v4788, %v4867
  %v4911 = vadd.f32 %v4789, %v4887
  %v4912 = vadd.f32 %v4790, %v4907
  %4913 = vrot.lane.b32.xlu0 %v4027, 112
  %v4914 = vpop.permute.xlu0 %4913
  %4915 = vrot.lane.b32.xlu0 %v4047, 112
  %v4916 = vpop.permute.xlu0 %4915
  %4917 = vrot.lane.b32.xlu0 %v4067, 112
  %v4918 = vpop.permute.xlu0 %4917
  %4919 = vrot.lane.b32.xlu0 %v4087, 112
  %v4920 = vpop.permute.xlu0 %4919
  %v4921 = vsel %vm1065, %v4914, %v4916
  %v4922 = vsel %vm1065, %v4916, %v4918
  %v4923 = vsel %vm1065, %v4918, %v4920
  %v4929 = vsel %vm1065, %v4920, %v4914
  %v4930 = vmul.f32 %v4921, %v1082
  %v4931 = vmul.f32 %v4922, %v1083
  %v4932 = vmul.f32 %v4923, %v1084
  %v4933 = vmul.f32 %v4929, %v1085
  %s4934 = scalar_lea.vmem %s15, 28
  %v4935 = vld [vmem:[%s4934] sm:$0x7]
  %v4937 = vsel %vm3206, %v4935, 0
  %v4940 = vsel %vm3869, %v4930, 0
  %v4943 = vsel %vm3869, %v4931, 0
  %v4946 = vsel %vm3869, %v4932, 0
  %v4949 = vsel %vm3869, %v4933, 0
  %4951 = vmatpush.msra.mxu0 0.0
  %4952 = vmatpush.msra.mxu0 0.0
  %4953 = vmatpush.msra.mxu0 0.0
  %4954 = vmatpush.msra.mxu0 0.0
  %4955 = vmatpush.msra.mxu0 0.0
  %4956 = vmatpush.msra.mxu0 0.0
  %4957 = vmatpush.msra.mxu0 0.0
  %4958 = vmatpush.msra.mxu0 0.0
  %4959 = vmatpush.msra.mxu0 0.0
  %4960 = vmatpush.msra.mxu0 0.0
  %4961 = vmatpush.msra.mxu0 0.0
  %4962 = vmatpush.msra.mxu0 0.0
  %4963 = vmatpush.msra.mxu0 0.0
  %4964 = vmatpush.msra.mxu0 0.0
  %4965 = vmatpush.msra.mxu0 0.0
  %4966 = vmatpush.msra.mxu0 %v4940
  %4967 = vmatmul.f32.gmra.mxu0 %v4937
  %v4968 = vpop.f32.mrf.mxu0
  %v4969 = vadd.f32 0.0, %v4968
  %4970 = vdwg.mxu0
  %4971 = vmatpush.msra.mxu0 0.0
  %4972 = vmatpush.msra.mxu0 0.0
  %4973 = vmatpush.msra.mxu0 0.0
  %4974 = vmatpush.msra.mxu0 0.0
  %4975 = vmatpush.msra.mxu0 0.0
  %4976 = vmatpush.msra.mxu0 0.0
  %4977 = vmatpush.msra.mxu0 0.0
  %4978 = vmatpush.msra.mxu0 0.0
  %4979 = vmatpush.msra.mxu0 0.0
  %4980 = vmatpush.msra.mxu0 0.0
  %4981 = vmatpush.msra.mxu0 0.0
  %4982 = vmatpush.msra.mxu0 0.0
  %4983 = vmatpush.msra.mxu0 0.0
  %4984 = vmatpush.msra.mxu0 0.0
  %4985 = vmatpush.msra.mxu0 0.0
  %4986 = vmatpush.msra.mxu0 %v4943
  %4987 = vmatmul.f32.gmra.mxu0 %v4937
  %v4988 = vpop.f32.mrf.mxu0
  %v4989 = vadd.f32 0.0, %v4988
  %4990 = vdwg.mxu0
  %4991 = vmatpush.msra.mxu0 0.0
  %4992 = vmatpush.msra.mxu0 0.0
  %4993 = vmatpush.msra.mxu0 0.0
  %4994 = vmatpush.msra.mxu0 0.0
  %4995 = vmatpush.msra.mxu0 0.0
  %4996 = vmatpush.msra.mxu0 0.0
  %4997 = vmatpush.msra.mxu0 0.0
  %4998 = vmatpush.msra.mxu0 0.0
  %4999 = vmatpush.msra.mxu0 0.0
  %5000 = vmatpush.msra.mxu0 0.0
  %5001 = vmatpush.msra.mxu0 0.0
  %5002 = vmatpush.msra.mxu0 0.0
  %5003 = vmatpush.msra.mxu0 0.0
  %5004 = vmatpush.msra.mxu0 0.0
  %5005 = vmatpush.msra.mxu0 0.0
  %5006 = vmatpush.msra.mxu0 %v4946
  %5007 = vmatmul.f32.gmra.mxu0 %v4937
  %v5008 = vpop.f32.mrf.mxu0
  %v5009 = vadd.f32 0.0, %v5008
  %5010 = vdwg.mxu0
  %5011 = vmatpush.msra.mxu0 0.0
  %5012 = vmatpush.msra.mxu0 0.0
  %5013 = vmatpush.msra.mxu0 0.0
  %5014 = vmatpush.msra.mxu0 0.0
  %5015 = vmatpush.msra.mxu0 0.0
  %5016 = vmatpush.msra.mxu0 0.0
  %5017 = vmatpush.msra.mxu0 0.0
  %5018 = vmatpush.msra.mxu0 0.0
  %5019 = vmatpush.msra.mxu0 0.0
  %5020 = vmatpush.msra.mxu0 0.0
  %5021 = vmatpush.msra.mxu0 0.0
  %5022 = vmatpush.msra.mxu0 0.0
  %5023 = vmatpush.msra.mxu0 0.0
  %5024 = vmatpush.msra.mxu0 0.0
  %5025 = vmatpush.msra.mxu0 0.0
  %5026 = vmatpush.msra.mxu0 %v4949
  %5027 = vmatmul.f32.gmra.mxu0 %v4937
  %v5028 = vpop.f32.mrf.mxu0
  %v5029 = vadd.f32 0.0, %v5028
  %5030 = vdwg.mxu0
  %v5031 = vadd.f32 %v4909, %v4969
  %v5032 = vadd.f32 %v4910, %v4989
  %v5033 = vadd.f32 %v4911, %v5009
  %v5034 = vadd.f32 %v4912, %v5029
  %5035 = vrot.lane.b32.xlu0 %v4027, 111
  %v5036 = vpop.permute.xlu0 %5035
  %5037 = vrot.lane.b32.xlu0 %v4047, 111
  %v5038 = vpop.permute.xlu0 %5037
  %5039 = vrot.lane.b32.xlu0 %v4067, 111
  %v5040 = vpop.permute.xlu0 %5039
  %5041 = vrot.lane.b32.xlu0 %v4087, 111
  %v5042 = vpop.permute.xlu0 %5041
  %v5043 = vsel %vm1210, %v5036, %v5038
  %v5044 = vsel %vm1210, %v5038, %v5040
  %v5045 = vsel %vm1210, %v5040, %v5042
  %v5051 = vsel %vm1210, %v5042, %v5036
  %v5052 = vmul.f32 %v5043, %v1227
  %v5053 = vmul.f32 %v5044, %v1228
  %v5054 = vmul.f32 %v5045, %v1229
  %v5055 = vmul.f32 %v5051, %v1230
  %s5056 = scalar_lea.vmem %s15, 32
  %v5057 = vld [vmem:[%s5056] sm:$0x7]
  %v5059 = vsel %vm3206, %v5057, 0
  %v5062 = vsel %vm3869, %v5052, 0
  %v5065 = vsel %vm3869, %v5053, 0
  %v5068 = vsel %vm3869, %v5054, 0
  %v5071 = vsel %vm3869, %v5055, 0
  %5073 = vmatpush.msra.mxu0 0.0
  %5074 = vmatpush.msra.mxu0 0.0
  %5075 = vmatpush.msra.mxu0 0.0
  %5076 = vmatpush.msra.mxu0 0.0
  %5077 = vmatpush.msra.mxu0 0.0
  %5078 = vmatpush.msra.mxu0 0.0
  %5079 = vmatpush.msra.mxu0 0.0
  %5080 = vmatpush.msra.mxu0 0.0
  %5081 = vmatpush.msra.mxu0 0.0
  %5082 = vmatpush.msra.mxu0 0.0
  %5083 = vmatpush.msra.mxu0 0.0
  %5084 = vmatpush.msra.mxu0 0.0
  %5085 = vmatpush.msra.mxu0 0.0
  %5086 = vmatpush.msra.mxu0 0.0
  %5087 = vmatpush.msra.mxu0 0.0
  %5088 = vmatpush.msra.mxu0 %v5062
  %5089 = vmatmul.f32.gmra.mxu0 %v5059
  %v5090 = vpop.f32.mrf.mxu0
  %v5091 = vadd.f32 0.0, %v5090
  %5092 = vdwg.mxu0
  %5093 = vmatpush.msra.mxu0 0.0
  %5094 = vmatpush.msra.mxu0 0.0
  %5095 = vmatpush.msra.mxu0 0.0
  %5096 = vmatpush.msra.mxu0 0.0
  %5097 = vmatpush.msra.mxu0 0.0
  %5098 = vmatpush.msra.mxu0 0.0
  %5099 = vmatpush.msra.mxu0 0.0
  %5100 = vmatpush.msra.mxu0 0.0
  %5101 = vmatpush.msra.mxu0 0.0
  %5102 = vmatpush.msra.mxu0 0.0
  %5103 = vmatpush.msra.mxu0 0.0
  %5104 = vmatpush.msra.mxu0 0.0
  %5105 = vmatpush.msra.mxu0 0.0
  %5106 = vmatpush.msra.mxu0 0.0
  %5107 = vmatpush.msra.mxu0 0.0
  %5108 = vmatpush.msra.mxu0 %v5065
  %5109 = vmatmul.f32.gmra.mxu0 %v5059
  %v5110 = vpop.f32.mrf.mxu0
  %v5111 = vadd.f32 0.0, %v5110
  %5112 = vdwg.mxu0
  %5113 = vmatpush.msra.mxu0 0.0
  %5114 = vmatpush.msra.mxu0 0.0
  %5115 = vmatpush.msra.mxu0 0.0
  %5116 = vmatpush.msra.mxu0 0.0
  %5117 = vmatpush.msra.mxu0 0.0
  %5118 = vmatpush.msra.mxu0 0.0
  %5119 = vmatpush.msra.mxu0 0.0
  %5120 = vmatpush.msra.mxu0 0.0
  %5121 = vmatpush.msra.mxu0 0.0
  %5122 = vmatpush.msra.mxu0 0.0
  %5123 = vmatpush.msra.mxu0 0.0
  %5124 = vmatpush.msra.mxu0 0.0
  %5125 = vmatpush.msra.mxu0 0.0
  %5126 = vmatpush.msra.mxu0 0.0
  %5127 = vmatpush.msra.mxu0 0.0
  %5128 = vmatpush.msra.mxu0 %v5068
  %5129 = vmatmul.f32.gmra.mxu0 %v5059
  %v5130 = vpop.f32.mrf.mxu0
  %v5131 = vadd.f32 0.0, %v5130
  %5132 = vdwg.mxu0
  %5133 = vmatpush.msra.mxu0 0.0
  %5134 = vmatpush.msra.mxu0 0.0
  %5135 = vmatpush.msra.mxu0 0.0
  %5136 = vmatpush.msra.mxu0 0.0
  %5137 = vmatpush.msra.mxu0 0.0
  %5138 = vmatpush.msra.mxu0 0.0
  %5139 = vmatpush.msra.mxu0 0.0
  %5140 = vmatpush.msra.mxu0 0.0
  %5141 = vmatpush.msra.mxu0 0.0
  %5142 = vmatpush.msra.mxu0 0.0
  %5143 = vmatpush.msra.mxu0 0.0
  %5144 = vmatpush.msra.mxu0 0.0
  %5145 = vmatpush.msra.mxu0 0.0
  %5146 = vmatpush.msra.mxu0 0.0
  %5147 = vmatpush.msra.mxu0 0.0
  %5148 = vmatpush.msra.mxu0 %v5071
  %5149 = vmatmul.f32.gmra.mxu0 %v5059
  %v5150 = vpop.f32.mrf.mxu0
  %v5151 = vadd.f32 0.0, %v5150
  %5152 = vdwg.mxu0
  %v5153 = vadd.f32 %v5031, %v5091
  %v5154 = vadd.f32 %v5032, %v5111
  %v5155 = vadd.f32 %v5033, %v5131
  %v5156 = vadd.f32 %v5034, %v5151
  %vm5157 = vcmp.ge.f32.partialorder %v5153, 0.0
  %vm5158 = vcmp.ge.f32.partialorder %v5154, 0.0
  %vm5159 = vcmp.ge.f32.partialorder %v5155, 0.0
  %vm5160 = vcmp.ge.f32.partialorder %v5156, 0.0
  %v5161 = vmul.f32 %v5153, 0.01
  %v5162 = vmul.f32 %v5154, 0.01
  %v5163 = vmul.f32 %v5155, 0.01
  %v5164 = vmul.f32 %v5156, 0.01
  %v5165 = vsel %vm5157, %v5153, %v5161
  %v5166 = vsel %vm5158, %v5154, %v5162
  %v5167 = vsel %vm5159, %v5155, %v5163
  %v5168 = vsel %vm5160, %v5156, %v5164
  %v5173 = vrot.slane %v5166, 4
  %v5174 = vrot.slane %v5168, 4
  %v5175 = vsel %vm3869, %v5165, %v5173
  %v5176 = vsel %vm3869, %v5167, %v5174
  %5179 = vst [vmem:[%s25] sm:$0x77] %v5175
  %5180 = vst [vmem:[%s25 + $0x8] sm:$0x77] %v5176
  // Predicated region
  $region102: #{bt_autoencoder_forward.1} parent=0 // pred_check
    _
  $region103: #{bt_autoencoder_forward.1} parent=0 // pred_check_branch
    %5182 = sbr.rel (0) target = $region105
  $region104: #{bt_autoencoder_forward.1} parent=0 // pred_region
    _
  $region105: #{bt_autoencoder_forward.1} parent=0 // pred_fallthru
    _
  // Predicated region
  $region106: #{bt_autoencoder_forward.1} parent=0 // pred_check
    _
  $region107: #{bt_autoencoder_forward.1} parent=0 // pred_check_branch
    %5184 = sbr.rel (0) target = $region109
  $region108: #{bt_autoencoder_forward.1} parent=0 // pred_region
    _
  $region109: #{bt_autoencoder_forward.1} parent=0 // pred_fallthru
    _

</llo_original>
